<compile_context>
chip_gen: v5e
topology: v5e:2x2
jax: 0.10.0
libtpu: 0.0.40
codegen_flags: <defaults>
</compile_context>

<pallas_src>
import numpy as np
import jax
import jax.numpy as jnp
from jax import lax
from jax.experimental import pallas as pl
from jax.experimental.pallas import tpu as pltpu

K = 5                      # conv kernel size (padding=2, stride=1)
H1, W1 = 32, 32            # conv1 spatial size
H2, W2 = 16, 16            # conv2 spatial size (after pool1)
H3, W3 = 8, 8              # conv3 spatial size (after pool2)
C0, C1, C2, C3 = 3, 32, 32, 64
KC1 = 128                  # layer-1 im2col K (75 real columns + zero pad -> lane dense)
COL_OFF = 6                # padded-activation column p lives at scratch column p + COL_OFF
                           # (so the activation interior starts at sublane-aligned column 8)


# ----------------------------------------------------------------------------
# The fused whole-network kernel (one image per grid step)
# ----------------------------------------------------------------------------
def _fused_kernel(p1_ref, w1_ref, b1_ref, w2_ref, b2_ref, w3_ref, b3_ref,
                  s2_ref, s3_ref, fc1_w_ref, fc1_b_ref, fc2_w_ref, fc2_b_ref,
                  o_ref, a2_ref, a3_ref):
    f32 = jnp.float32

    # ---- layer 1: conv1 as 4 parity GEMMs over prebuilt lane-dense im2col rows,
    #      2x2 max-pool = running max over parities, then bias.
    w1g = w1_ref[...]
    acc = jnp.dot(p1_ref[0, 0, :, :], w1g, preferred_element_type=f32)
    for g in range(1, 4):
        acc = jnp.maximum(acc, jnp.dot(p1_ref[0, g, :, :], w1g,
                                       preferred_element_type=f32))
    act1 = acc + b1_ref[...]                               # (256, 32) rows = (oi, oj)

    # stage layer-2 input: zero-padded activation kept entirely in VMEM scratch
    a2_ref[...] = jnp.zeros_like(a2_ref)
    a2_ref[2:2 + H2, 8:8 + W2, :] = act1.reshape(H2, W2, C1)

    # ---- layer 2: conv2 via 25 shifted-window matmuls (in-kernel im2col)
    y2 = jnp.zeros((H2 * W2, C2), f32)
    for kh in range(K):
        for kw in range(K):
            lhs = a2_ref[kh:kh + H2,
                         COL_OFF + kw:COL_OFF + kw + W2, :].reshape(H2 * W2, C1)
            y2 = y2 + jnp.dot(lhs, w2_ref[kh * K + kw], preferred_element_type=f32)
    # exact 2x2 max-pool via 0/1 selection GEMMs, then bias
    p2 = jnp.dot(s2_ref[0], y2, preferred_element_type=f32)
    for g in range(1, 4):
        p2 = jnp.maximum(p2, jnp.dot(s2_ref[g], y2, preferred_element_type=f32))
    act2 = p2 + b2_ref[...]                                # (64, 32)

    a3_ref[...] = jnp.zeros_like(a3_ref)
    a3_ref[2:2 + H3, 8:8 + W3, :] = act2.reshape(H3, W3, C2)

    # ---- layer 3
    y3 = jnp.zeros((H3 * W3, C3), f32)
    for kh in range(K):
        for kw in range(K):
            lhs = a3_ref[kh:kh + H3,
                         COL_OFF + kw:COL_OFF + kw + W3, :].reshape(H3 * W3, C2)
            y3 = y3 + jnp.dot(lhs, w3_ref[kh * K + kw], preferred_element_type=f32)
    p3 = jnp.dot(s3_ref[0], y3, preferred_element_type=f32)
    for g in range(1, 4):
        p3 = jnp.maximum(p3, jnp.dot(s3_ref[g], y3, preferred_element_type=f32))
    act3 = p3 + b3_ref[...]                                # (16, 64): rows=pixel, cols=channel

    # ---- fc1 + fc2 (torch NCHW flatten order is folded into fc1_w_ref's layout)
    h = fc1_b_ref[...]                                     # (1, 64)
    for m in range(16):                                    # 16 pooled pixels
        h = h + jnp.dot(act3[m:m + 1, :], fc1_w_ref[m], preferred_element_type=f32)
    logits = jnp.dot(h, fc2_w_ref[...], preferred_element_type=f32) + fc2_b_ref[...]  # (1, 128)
    o_ref[0] = jnp.broadcast_to(logits, (8, 128))          # lane-dense output slab


# ----------------------------------------------------------------------------
# Parameter preparation (done once, outside the jitted forward)
# ----------------------------------------------------------------------------
def _pool_select(ph, pw):
    """0/1 selection matrices (4, ph*pw, (2ph)*(2pw)) picking the 4 pool positions."""
    w = 2 * pw
    s = np.zeros((4, ph * pw, (2 * ph) * (2 * pw)), np.float32)
    for di in range(2):
        for dj in range(2):
            g = di * 2 + dj
            for oi in range(ph):
                for oj in range(pw):
                    s[g, oi * pw + oj, (2 * oi + di) * w + (2 * oj + dj)] = 1.0
    return jnp.asarray(s)


def prepare_params(params):
    def conv_w(w):  # torch (Cout, Cin, KH, KW) -> (KH*KW, Cin, Cout), tap-major
        return jnp.transpose(w, (2, 3, 1, 0)).reshape(K * K, w.shape[1], w.shape[0])

    w1 = jnp.transpose(params["w1"], (2, 3, 1, 0)).reshape(K * K * C0, C1)   # (75, 32)
    w1 = jnp.pad(w1, ((0, KC1 - K * K * C0), (0, 0)))                        # (128, 32)
    # fc1: torch flatten index is c*16 + (i*4 + j); kernel act3 is (pixel m, channel c)
    fc1_w = params["fc1_w"].reshape(64, C3, 16).transpose(2, 1, 0)           # (16, 64c, 64o)
    fc2_w = jnp.pad(params["fc2_w"].T, ((0, 0), (0, 128 - 10)))              # (64, 128)
    fc2_b = jnp.pad(params["fc2_b"], (0, 128 - 10))[None, :]                 # (1, 128)
    return {
        "w1": w1, "b1": params["b1"][None, :],
        "w2": conv_w(params["w2"]), "b2": params["b2"][None, :],
        "w3": conv_w(params["w3"]), "b3": params["b3"][None, :],
        "s2": _pool_select(H2 // 2, W2 // 2),   # (4, 64, 256)
        "s3": _pool_select(H3 // 2, W3 // 2),   # (4, 16, 64)
        "fc1_w": fc1_w, "fc1_b": params["fc1_b"][None, :],
        "fc2_w": fc2_w, "fc2_b": fc2_b,
    }


# ----------------------------------------------------------------------------
# Forward pass
# ----------------------------------------------------------------------------
@jax.jit
def my_model_forward(x_nchw, kp):
    B = x_nchw.shape[0]
    x = jnp.transpose(x_nchw, (0, 2, 3, 1))                         # NCHW -> NHWC
    # tiny XLA glue: layer-1 im2col (Cin=3), lane-padded 75 -> 128, parity-grouped rows
    xpad = jnp.pad(x, ((0, 0), (2, 2), (2, 2), (0, 0)))
    cols = [xpad[:, kh:kh + H1, kw:kw + W1, :] for kh in range(K) for kw in range(K)]
    patches = jnp.concatenate(cols, axis=-1)                        # (B, 32, 32, 75)
    patches = jnp.pad(patches, ((0, 0), (0, 0), (0, 0), (0, KC1 - K * K * C0)))
    p1 = patches.reshape(B, H2, 2, W2, 2, KC1)
    p1 = p1.transpose(0, 2, 4, 1, 3, 5).reshape(B, 4, H2 * W2, KC1)  # (B, 4, 256, 128)

    flops = B * 2 * (4 * 256 * KC1 * C1 + 25 * 256 * C1 * C2 + 4 * 64 * 256 * C2
                     + 25 * 64 * C2 * C3 + 4 * 16 * 64 * C3 + 16 * 64 * 64 + 64 * 128)
    bytes_accessed = 4 * (p1.size + kp["w1"].size + kp["w2"].size + kp["w3"].size
                          + kp["s2"].size + kp["s3"].size + kp["fc1_w"].size
                          + kp["fc2_w"].size + B * 8 * 128)

    out = pl.pallas_call(
        _fused_kernel,
        out_shape=jax.ShapeDtypeStruct((B, 8, 128), jnp.float32),
        grid_spec=pltpu.PrefetchScalarGridSpec(
            num_scalar_prefetch=0,
            grid=(B,),
            in_specs=[
                pl.BlockSpec((1, 4, H2 * W2, KC1), lambda b: (b, 0, 0, 0)),  # p1
                pl.BlockSpec((KC1, C1), lambda b: (0, 0)),                   # w1
                pl.BlockSpec((1, C1), lambda b: (0, 0)),                     # b1
                pl.BlockSpec((K * K, C1, C2), lambda b: (0, 0, 0)),          # w2
                pl.BlockSpec((1, C2), lambda b: (0, 0)),                     # b2
                pl.BlockSpec((K * K, C2, C3), lambda b: (0, 0, 0)),          # w3
                pl.BlockSpec((1, C3), lambda b: (0, 0)),                     # b3
                pl.BlockSpec((4, 64, 256), lambda b: (0, 0, 0)),             # s2
                pl.BlockSpec((4, 16, 64), lambda b: (0, 0, 0)),              # s3
                pl.BlockSpec((16, 64, 64), lambda b: (0, 0, 0)),             # fc1_w
                pl.BlockSpec((1, 64), lambda b: (0, 0)),                     # fc1_b
                pl.BlockSpec((64, 128), lambda b: (0, 0)),                   # fc2_w
                pl.BlockSpec((1, 128), lambda b: (0, 0)),                    # fc2_b
            ],
            out_specs=pl.BlockSpec((1, 8, 128), lambda b: (b, 0, 0)),
            scratch_shapes=[
                pltpu.VMEM((H2 + 4, 32, C1), jnp.float32),   # padded layer-2 input
                pltpu.VMEM((H3 + 4, 24, C2), jnp.float32),   # padded layer-3 input
            ],
        ),
        compiler_params=pltpu.CompilerParams(dimension_semantics=("parallel",)),
        cost_estimate=pl.CostEstimate(flops=flops, transcendentals=0,
                                      bytes_accessed=bytes_accessed),
    )(p1, kp["w1"], kp["b1"], kp["w2"], kp["b2"], kp["w3"], kp["b3"],
      kp["s2"], kp["s3"], kp["fc1_w"], kp["fc1_b"], kp["fc2_w"], kp["fc2_b"])
    return out[:, 0, :10]


# ----------------------------------------------------------------------------
# Parameters (deterministic, PyTorch-like uniform(-1/sqrt(fan_in), 1/sqrt(fan_in)))
# ----------------------------------------------------------------------------
def init_params(key):
    def uniform(k, shape, fan_in):
        b = 1.0 / (fan_in ** 0.5)
        return jax.random.uniform(k, shape, jnp.float32, -b, b)

    ks = jax.random.split(key, 10)
    return {
        "w1": uniform(ks[0], (32, 3, 5, 5), 3 * 25),   "b1": uniform(ks[1], (32,), 3 * 25),
        "w2": uniform(ks[2], (32, 32, 5, 5), 32 * 25), "b2": uniform(ks[3], (32,), 32 * 25),
        "w3": uniform(ks[4], (64, 32, 5, 5), 32 * 25), "b3": uniform(ks[5], (64,), 32 * 25),
        "fc1_w": uniform(ks[6], (64, 1024), 1024),     "fc1_b": uniform(ks[7], (64,), 1024),
        "fc2_w": uniform(ks[8], (10, 64), 64),         "fc2_b": uniform(ks[9], (10,), 64),
    }


# ----------------------------------------------------------------------------
# Pure-JAX reference (correctness check only)
# ----------------------------------------------------------------------------
def reference_forward(x, params):
    def conv(x, w, b):
        y = lax.conv_general_dilated(x, w, (1, 1), ((2, 2), (2, 2)),
                                     dimension_numbers=("NCHW", "OIHW", "NCHW"))
        return y + b[None, :, None, None]

    def pool(x):
        return lax.reduce_window(x, -jnp.inf, lax.max, (1, 1, 2, 2), (1, 1, 2, 2), "VALID")

    x = pool(conv(x, params["w1"], params["b1"]))
    x = pool(conv(x, params["w2"], params["b2"]))
    x = pool(conv(x, params["w3"], params["b3"]))
    x = x.reshape(x.shape[0], -1)
    x = x @ params["fc1_w"].T + params["fc1_b"]
    return x @ params["fc2_w"].T + params["fc2_b"]


if __name__ == "__main__":
    key = jax.random.PRNGKey(0)
    pkey, xkey = jax.random.split(key)
    params = init_params(pkey)
    kparams = prepare_params(params)
    # Linear(1024, 64) implies 32x32 spatial input (32 -> 16 -> 8 -> 4, 4*4*64 = 1024)
    x = jax.random.normal(xkey, (2, 3, 32, 32), jnp.float32)

    out = my_model_forward(x, kparams)
    out = jax.block_until_ready(out)
    assert out.shape == (2, 10), out.shape

    ref = reference_forward(x, params)
    np.testing.assert_allclose(np.asarray(out), np.asarray(ref), rtol=1e-3, atol=1e-3)

    print("KERNEL_OK")
</pallas_src>

<mosaic_0001>
module attributes {stable_mosaic.version = 11 : i64} {
  func.func @_fused_kernel(%arg0: i32, %arg1: memref<1x4x256x128xf32, #tpu.memory_space<vmem>>, %arg2: memref<128x32xf32, #tpu.memory_space<vmem>>, %arg3: memref<1x32xf32, #tpu.memory_space<vmem>>, %arg4: memref<25x32x32xf32, #tpu.memory_space<vmem>>, %arg5: memref<1x32xf32, #tpu.memory_space<vmem>>, %arg6: memref<25x32x64xf32, #tpu.memory_space<vmem>>, %arg7: memref<1x64xf32, #tpu.memory_space<vmem>>, %arg8: memref<4x64x256xf32, #tpu.memory_space<vmem>>, %arg9: memref<4x16x64xf32, #tpu.memory_space<vmem>>, %arg10: memref<16x64x64xf32, #tpu.memory_space<vmem>>, %arg11: memref<1x64xf32, #tpu.memory_space<vmem>>, %arg12: memref<64x128xf32, #tpu.memory_space<vmem>>, %arg13: memref<1x128xf32, #tpu.memory_space<vmem>>, %arg14: memref<1x8x128xf32, #tpu.memory_space<vmem>>, %arg15: memref<20x32x32xf32, #tpu.memory_space<vmem>>, %arg16: memref<12x24x32xf32, #tpu.memory_space<vmem>>) attributes {dimension_semantics = [#tpu.dimension_semantics<parallel>], iteration_bounds = array<i64: 2>, scalar_prefetch = 0 : i64, scratch_operands = 2 : i64, tpu.core_type = #tpu.core_type<tc>, window_params = [{transform_indices = @transform_0, window_bounds = array<i64: 1, 4, 256, 128>}, {pipeline_mode = #tpu.pipeline_mode<synchronous>, transform_indices = @transform_1, window_bounds = array<i64: 128, 32>}, {pipeline_mode = #tpu.pipeline_mode<synchronous>, transform_indices = @transform_2, window_bounds = array<i64: 1, 32>}, {pipeline_mode = #tpu.pipeline_mode<synchronous>, transform_indices = @transform_3, window_bounds = array<i64: 25, 32, 32>}, {pipeline_mode = #tpu.pipeline_mode<synchronous>, transform_indices = @transform_4, window_bounds = array<i64: 1, 32>}, {pipeline_mode = #tpu.pipeline_mode<synchronous>, transform_indices = @transform_5, window_bounds = array<i64: 25, 32, 64>}, {pipeline_mode = #tpu.pipeline_mode<synchronous>, transform_indices = @transform_6, window_bounds = array<i64: 1, 64>}, {pipeline_mode = #tpu.pipeline_mode<synchronous>, transform_indices = @transform_7, window_bounds = array<i64: 4, 64, 256>}, {pipeline_mode = #tpu.pipeline_mode<synchronous>, transform_indices = @transform_8, window_bounds = array<i64: 4, 16, 64>}, {pipeline_mode = #tpu.pipeline_mode<synchronous>, transform_indices = @transform_9, window_bounds = array<i64: 16, 64, 64>}, {pipeline_mode = #tpu.pipeline_mode<synchronous>, transform_indices = @transform_10, window_bounds = array<i64: 1, 64>}, {pipeline_mode = #tpu.pipeline_mode<synchronous>, transform_indices = @transform_11, window_bounds = array<i64: 64, 128>}, {pipeline_mode = #tpu.pipeline_mode<synchronous>, transform_indices = @transform_12, window_bounds = array<i64: 1, 128>}, {transform_indices = @transform_13, window_bounds = array<i64: 1, 8, 128>}]} {
    %c0 = arith.constant 0 : index
    %c0_0 = arith.constant 0 : index
    %0 = vector.load %arg2[%c0, %c0_0] : memref<128x32xf32, #tpu.memory_space<vmem>>, vector<128x32xf32>
    %c0_1 = arith.constant 0 : index
    %c0_2 = arith.constant 0 : index
    %c0_3 = arith.constant 0 : index
    %c0_4 = arith.constant 0 : index
    %1 = vector.load %arg1[%c0_1, %c0_2, %c0_3, %c0_4] : memref<1x4x256x128xf32, #tpu.memory_space<vmem>>, vector<1x1x256x128xf32>
    %2 = vector.shape_cast %1 : vector<1x1x256x128xf32> to vector<256x128xf32>
    %cst = arith.constant dense<0.000000e+00> : vector<256x32xf32>
    %3 = tpu.matmul %2, %0, %cst {dimension_numbers = #tpu.dot_dimension_numbers<[1], [0], [0], [1], [0, 0, 1, 1], [], []>} : vector<256x128xf32>, vector<128x32xf32>, vector<256x32xf32> -> vector<256x32xf32>
    %c0_5 = arith.constant 0 : index
    %c1 = arith.constant 1 : index
    %c0_6 = arith.constant 0 : index
    %c0_7 = arith.constant 0 : index
    %4 = vector.load %arg1[%c0_5, %c1, %c0_6, %c0_7] : memref<1x4x256x128xf32, #tpu.memory_space<vmem>>, vector<1x1x256x128xf32>
    %5 = vector.shape_cast %4 : vector<1x1x256x128xf32> to vector<256x128xf32>
    %cst_8 = arith.constant dense<0.000000e+00> : vector<256x32xf32>
    %6 = tpu.matmul %5, %0, %cst_8 {dimension_numbers = #tpu.dot_dimension_numbers<[1], [0], [0], [1], [0, 0, 1, 1], [], []>} : vector<256x128xf32>, vector<128x32xf32>, vector<256x32xf32> -> vector<256x32xf32>
    %7 = arith.maximumf %3, %6 : vector<256x32xf32>
    %c0_9 = arith.constant 0 : index
    %c2 = arith.constant 2 : index
    %c0_10 = arith.constant 0 : index
    %c0_11 = arith.constant 0 : index
    %8 = vector.load %arg1[%c0_9, %c2, %c0_10, %c0_11] : memref<1x4x256x128xf32, #tpu.memory_space<vmem>>, vector<1x1x256x128xf32>
    %9 = vector.shape_cast %8 : vector<1x1x256x128xf32> to vector<256x128xf32>
    %cst_12 = arith.constant dense<0.000000e+00> : vector<256x32xf32>
    %10 = tpu.matmul %9, %0, %cst_12 {dimension_numbers = #tpu.dot_dimension_numbers<[1], [0], [0], [1], [0, 0, 1, 1], [], []>} : vector<256x128xf32>, vector<128x32xf32>, vector<256x32xf32> -> vector<256x32xf32>
    %11 = arith.maximumf %7, %10 : vector<256x32xf32>
    %c0_13 = arith.constant 0 : index
    %c3 = arith.constant 3 : index
    %c0_14 = arith.constant 0 : index
    %c0_15 = arith.constant 0 : index
    %12 = vector.load %arg1[%c0_13, %c3, %c0_14, %c0_15] : memref<1x4x256x128xf32, #tpu.memory_space<vmem>>, vector<1x1x256x128xf32>
    %13 = vector.shape_cast %12 : vector<1x1x256x128xf32> to vector<256x128xf32>
    %cst_16 = arith.constant dense<0.000000e+00> : vector<256x32xf32>
    %14 = tpu.matmul %13, %0, %cst_16 {dimension_numbers = #tpu.dot_dimension_numbers<[1], [0], [0], [1], [0, 0, 1, 1], [], []>} : vector<256x128xf32>, vector<128x32xf32>, vector<256x32xf32> -> vector<256x32xf32>
    %15 = arith.maximumf %11, %14 : vector<256x32xf32>
    %c0_17 = arith.constant 0 : index
    %c0_18 = arith.constant 0 : index
    %16 = vector.load %arg3[%c0_17, %c0_18] : memref<1x32xf32, #tpu.memory_space<vmem>>, vector<1x32xf32>
    %17 = vector.broadcast %16 : vector<1x32xf32> to vector<256x32xf32>
    %18 = arith.addf %15, %17 : vector<256x32xf32>
    %cst_19 = arith.constant 0.000000e+00 : f32
    %19 = vector.broadcast %cst_19 : f32 to vector<20x32x32xf32>
    %c0_20 = arith.constant 0 : index
    %c0_21 = arith.constant 0 : index
    %c0_22 = arith.constant 0 : index
    %20 = vector.load %arg15[%c0_20, %c0_21, %c0_22] : memref<20x32x32xf32, #tpu.memory_space<vmem>>, vector<20x32x32xf32>
    tpu.vector_store %arg15[%c0_20, %c0_21, %c0_22], %19 {strides = array<i32>} : memref<20x32x32xf32, #tpu.memory_space<vmem>>, vector<20x32x32xf32>,
    %21 = vector.shape_cast %18 : vector<256x32xf32> to vector<16x16x32xf32>
    %c2_23 = arith.constant 2 : index
    %c8 = arith.constant 8 : index
    %c0_24 = arith.constant 0 : index
    %22 = vector.load %arg15[%c2_23, %c8, %c0_24] : memref<20x32x32xf32, #tpu.memory_space<vmem>>, vector<16x16x32xf32>
    tpu.vector_store %arg15[%c2_23, %c8, %c0_24], %21 {strides = array<i32>} : memref<20x32x32xf32, #tpu.memory_space<vmem>>, vector<16x16x32xf32>,
    %cst_25 = arith.constant 0.000000e+00 : f32
    %23 = vector.broadcast %cst_25 : f32 to vector<256x32xf32>
    %c0_26 = arith.constant 0 : index
    %c6 = arith.constant 6 : index
    %c0_27 = arith.constant 0 : index
    %24 = vector.load %arg15[%c0_26, %c6, %c0_27] : memref<20x32x32xf32, #tpu.memory_space<vmem>>, vector<16x16x32xf32>
    %25 = vector.shape_cast %24 : vector<16x16x32xf32> to vector<256x32xf32>
    %c0_28 = arith.constant 0 : index
    %c0_29 = arith.constant 0 : index
    %c0_30 = arith.constant 0 : index
    %26 = vector.load %arg4[%c0_28, %c0_29, %c0_30] : memref<25x32x32xf32, #tpu.memory_space<vmem>>, vector<1x32x32xf32>
    %27 = vector.shape_cast %26 : vector<1x32x32xf32> to vector<32x32xf32>
    %cst_31 = arith.constant dense<0.000000e+00> : vector<256x32xf32>
    %28 = tpu.matmul %25, %27, %cst_31 {dimension_numbers = #tpu.dot_dimension_numbers<[1], [0], [0], [1], [0, 0, 1, 1], [], []>} : vector<256x32xf32>, vector<32x32xf32>, vector<256x32xf32> -> vector<256x32xf32>
    %29 = arith.addf %23, %28 : vector<256x32xf32>
    %c0_32 = arith.constant 0 : index
    %c7 = arith.constant 7 : index
    %c0_33 = arith.constant 0 : index
    %30 = vector.load %arg15[%c0_32, %c7, %c0_33] : memref<20x32x32xf32, #tpu.memory_space<vmem>>, vector<16x16x32xf32>
    %31 = vector.shape_cast %30 : vector<16x16x32xf32> to vector<256x32xf32>
    %c1_34 = arith.constant 1 : index
    %c0_35 = arith.constant 0 : index
    %c0_36 = arith.constant 0 : index
    %32 = vector.load %arg4[%c1_34, %c0_35, %c0_36] : memref<25x32x32xf32, #tpu.memory_space<vmem>>, vector<1x32x32xf32>
    %33 = vector.shape_cast %32 : vector<1x32x32xf32> to vector<32x32xf32>
    %cst_37 = arith.constant dense<0.000000e+00> : vector<256x32xf32>
    %34 = tpu.matmul %31, %33, %cst_37 {dimension_numbers = #tpu.dot_dimension_numbers<[1], [0], [0], [1], [0, 0, 1, 1], [], []>} : vector<256x32xf32>, vector<32x32xf32>, vector<256x32xf32> -> vector<256x32xf32>
    %35 = arith.addf %29, %34 : vector<256x32xf32>
    %c0_38 = arith.constant 0 : index
    %c8_39 = arith.constant 8 : index
    %c0_40 = arith.constant 0 : index
    %36 = vector.load %arg15[%c0_38, %c8_39, %c0_40] : memref<20x32x32xf32, #tpu.memory_space<vmem>>, vector<16x16x32xf32>
    %37 = vector.shape_cast %36 : vector<16x16x32xf32> to vector<256x32xf32>
    %c2_41 = arith.constant 2 : index
    %c0_42 = arith.constant 0 : index
    %c0_43 = arith.constant 0 : index
    %38 = vector.load %arg4[%c2_41, %c0_42, %c0_43] : memref<25x32x32xf32, #tpu.memory_space<vmem>>, vector<1x32x32xf32>
    %39 = vector.shape_cast %38 : vector<1x32x32xf32> to vector<32x32xf32>
    %cst_44 = arith.constant dense<0.000000e+00> : vector<256x32xf32>
    %40 = tpu.matmul %37, %39, %cst_44 {dimension_numbers = #tpu.dot_dimension_numbers<[1], [0], [0], [1], [0, 0, 1, 1], [], []>} : vector<256x32xf32>, vector<32x32xf32>, vector<256x32xf32> -> vector<256x32xf32>
    %41 = arith.addf %35, %40 : vector<256x32xf32>
    %c0_45 = arith.constant 0 : index
    %c9 = arith.constant 9 : index
    %c0_46 = arith.constant 0 : index
    %42 = vector.load %arg15[%c0_45, %c9, %c0_46] : memref<20x32x32xf32, #tpu.memory_space<vmem>>, vector<16x16x32xf32>
    %43 = vector.shape_cast %42 : vector<16x16x32xf32> to vector<256x32xf32>
    %c3_47 = arith.constant 3 : index
    %c0_48 = arith.constant 0 : index
    %c0_49 = arith.constant 0 : index
    %44 = vector.load %arg4[%c3_47, %c0_48, %c0_49] : memref<25x32x32xf32, #tpu.memory_space<vmem>>, vector<1x32x32xf32>
    %45 = vector.shape_cast %44 : vector<1x32x32xf32> to vector<32x32xf32>
    %cst_50 = arith.constant dense<0.000000e+00> : vector<256x32xf32>
    %46 = tpu.matmul %43, %45, %cst_50 {dimension_numbers = #tpu.dot_dimension_numbers<[1], [0], [0], [1], [0, 0, 1, 1], [], []>} : vector<256x32xf32>, vector<32x32xf32>, vector<256x32xf32> -> vector<256x32xf32>
    %47 = arith.addf %41, %46 : vector<256x32xf32>
    %c0_51 = arith.constant 0 : index
    %c10 = arith.constant 10 : index
    %c0_52 = arith.constant 0 : index
    %48 = vector.load %arg15[%c0_51, %c10, %c0_52] : memref<20x32x32xf32, #tpu.memory_space<vmem>>, vector<16x16x32xf32>
    %49 = vector.shape_cast %48 : vector<16x16x32xf32> to vector<256x32xf32>
    %c4 = arith.constant 4 : index
    %c0_53 = arith.constant 0 : index
    %c0_54 = arith.constant 0 : index
    %50 = vector.load %arg4[%c4, %c0_53, %c0_54] : memref<25x32x32xf32, #tpu.memory_space<vmem>>, vector<1x32x32xf32>
    %51 = vector.shape_cast %50 : vector<1x32x32xf32> to vector<32x32xf32>
    %cst_55 = arith.constant dense<0.000000e+00> : vector<256x32xf32>
    %52 = tpu.matmul %49, %51, %cst_55 {dimension_numbers = #tpu.dot_dimension_numbers<[1], [0], [0], [1], [0, 0, 1, 1], [], []>} : vector<256x32xf32>, vector<32x32xf32>, vector<256x32xf32> -> vector<256x32xf32>
    %53 = arith.addf %47, %52 : vector<256x32xf32>
    %c1_56 = arith.constant 1 : index
    %c6_57 = arith.constant 6 : index
    %c0_58 = arith.constant 0 : index
    %54 = vector.load %arg15[%c1_56, %c6_57, %c0_58] : memref<20x32x32xf32, #tpu.memory_space<vmem>>, vector<16x16x32xf32>
    %55 = vector.shape_cast %54 : vector<16x16x32xf32> to vector<256x32xf32>
    %c5 = arith.constant 5 : index
    %c0_59 = arith.constant 0 : index
    %c0_60 = arith.constant 0 : index
    %56 = vector.load %arg4[%c5, %c0_59, %c0_60] : memref<25x32x32xf32, #tpu.memory_space<vmem>>, vector<1x32x32xf32>
    %57 = vector.shape_cast %56 : vector<1x32x32xf32> to vector<32x32xf32>
    %cst_61 = arith.constant dense<0.000000e+00> : vector<256x32xf32>
    %58 = tpu.matmul %55, %57, %cst_61 {dimension_numbers = #tpu.dot_dimension_numbers<[1], [0], [0], [1], [0, 0, 1, 1], [], []>} : vector<256x32xf32>, vector<32x32xf32>, vector<256x32xf32> -> vector<256x32xf32>
    %59 = arith.addf %53, %58 : vector<256x32xf32>
    %c1_62 = arith.constant 1 : index
    %c7_63 = arith.constant 7 : index
    %c0_64 = arith.constant 0 : index
    %60 = vector.load %arg15[%c1_62, %c7_63, %c0_64] : memref<20x32x32xf32, #tpu.memory_space<vmem>>, vector<16x16x32xf32>
    %61 = vector.shape_cast %60 : vector<16x16x32xf32> to vector<256x32xf32>
    %c6_65 = arith.constant 6 : index
    %c0_66 = arith.constant 0 : index
    %c0_67 = arith.constant 0 : index
    %62 = vector.load %arg4[%c6_65, %c0_66, %c0_67] : memref<25x32x32xf32, #tpu.memory_space<vmem>>, vector<1x32x32xf32>
    %63 = vector.shape_cast %62 : vector<1x32x32xf32> to vector<32x32xf32>
    %cst_68 = arith.constant dense<0.000000e+00> : vector<256x32xf32>
    %64 = tpu.matmul %61, %63, %cst_68 {dimension_numbers = #tpu.dot_dimension_numbers<[1], [0], [0], [1], [0, 0, 1, 1], [], []>} : vector<256x32xf32>, vector<32x32xf32>, vector<256x32xf32> -> vector<256x32xf32>
    %65 = arith.addf %59, %64 : vector<256x32xf32>
    %c1_69 = arith.constant 1 : index
    %c8_70 = arith.constant 8 : index
    %c0_71 = arith.constant 0 : index
    %66 = vector.load %arg15[%c1_69, %c8_70, %c0_71] : memref<20x32x32xf32, #tpu.memory_space<vmem>>, vector<16x16x32xf32>
    %67 = vector.shape_cast %66 : vector<16x16x32xf32> to vector<256x32xf32>
    %c7_72 = arith.constant 7 : index
    %c0_73 = arith.constant 0 : index
    %c0_74 = arith.constant 0 : index
    %68 = vector.load %arg4[%c7_72, %c0_73, %c0_74] : memref<25x32x32xf32, #tpu.memory_space<vmem>>, vector<1x32x32xf32>
    %69 = vector.shape_cast %68 : vector<1x32x32xf32> to vector<32x32xf32>
    %cst_75 = arith.constant dense<0.000000e+00> : vector<256x32xf32>
    %70 = tpu.matmul %67, %69, %cst_75 {dimension_numbers = #tpu.dot_dimension_numbers<[1], [0], [0], [1], [0, 0, 1, 1], [], []>} : vector<256x32xf32>, vector<32x32xf32>, vector<256x32xf32> -> vector<256x32xf32>
    %71 = arith.addf %65, %70 : vector<256x32xf32>
    %c1_76 = arith.constant 1 : index
    %c9_77 = arith.constant 9 : index
    %c0_78 = arith.constant 0 : index
    %72 = vector.load %arg15[%c1_76, %c9_77, %c0_78] : memref<20x32x32xf32, #tpu.memory_space<vmem>>, vector<16x16x32xf32>
    %73 = vector.shape_cast %72 : vector<16x16x32xf32> to vector<256x32xf32>
    %c8_79 = arith.constant 8 : index
    %c0_80 = arith.constant 0 : index
    %c0_81 = arith.constant 0 : index
    %74 = vector.load %arg4[%c8_79, %c0_80, %c0_81] : memref<25x32x32xf32, #tpu.memory_space<vmem>>, vector<1x32x32xf32>
    %75 = vector.shape_cast %74 : vector<1x32x32xf32> to vector<32x32xf32>
    %cst_82 = arith.constant dense<0.000000e+00> : vector<256x32xf32>
    %76 = tpu.matmul %73, %75, %cst_82 {dimension_numbers = #tpu.dot_dimension_numbers<[1], [0], [0], [1], [0, 0, 1, 1], [], []>} : vector<256x32xf32>, vector<32x32xf32>, vector<256x32xf32> -> vector<256x32xf32>
    %77 = arith.addf %71, %76 : vector<256x32xf32>
    %c1_83 = arith.constant 1 : index
    %c10_84 = arith.constant 10 : index
    %c0_85 = arith.constant 0 : index
    %78 = vector.load %arg15[%c1_83, %c10_84, %c0_85] : memref<20x32x32xf32, #tpu.memory_space<vmem>>, vector<16x16x32xf32>
    %79 = vector.shape_cast %78 : vector<16x16x32xf32> to vector<256x32xf32>
    %c9_86 = arith.constant 9 : index
    %c0_87 = arith.constant 0 : index
    %c0_88 = arith.constant 0 : index
    %80 = vector.load %arg4[%c9_86, %c0_87, %c0_88] : memref<25x32x32xf32, #tpu.memory_space<vmem>>, vector<1x32x32xf32>
    %81 = vector.shape_cast %80 : vector<1x32x32xf32> to vector<32x32xf32>
    %cst_89 = arith.constant dense<0.000000e+00> : vector<256x32xf32>
    %82 = tpu.matmul %79, %81, %cst_89 {dimension_numbers = #tpu.dot_dimension_numbers<[1], [0], [0], [1], [0, 0, 1, 1], [], []>} : vector<256x32xf32>, vector<32x32xf32>, vector<256x32xf32> -> vector<256x32xf32>
    %83 = arith.addf %77, %82 : vector<256x32xf32>
    %c2_90 = arith.constant 2 : index
    %c6_91 = arith.constant 6 : index
    %c0_92 = arith.constant 0 : index
    %84 = vector.load %arg15[%c2_90, %c6_91, %c0_92] : memref<20x32x32xf32, #tpu.memory_space<vmem>>, vector<16x16x32xf32>
    %85 = vector.shape_cast %84 : vector<16x16x32xf32> to vector<256x32xf32>
    %c10_93 = arith.constant 10 : index
    %c0_94 = arith.constant 0 : index
    %c0_95 = arith.constant 0 : index
    %86 = vector.load %arg4[%c10_93, %c0_94, %c0_95] : memref<25x32x32xf32, #tpu.memory_space<vmem>>, vector<1x32x32xf32>
    %87 = vector.shape_cast %86 : vector<1x32x32xf32> to vector<32x32xf32>
    %cst_96 = arith.constant dense<0.000000e+00> : vector<256x32xf32>
    %88 = tpu.matmul %85, %87, %cst_96 {dimension_numbers = #tpu.dot_dimension_numbers<[1], [0], [0], [1], [0, 0, 1, 1], [], []>} : vector<256x32xf32>, vector<32x32xf32>, vector<256x32xf32> -> vector<256x32xf32>
    %89 = arith.addf %83, %88 : vector<256x32xf32>
    %c2_97 = arith.constant 2 : index
    %c7_98 = arith.constant 7 : index
    %c0_99 = arith.constant 0 : index
    %90 = vector.load %arg15[%c2_97, %c7_98, %c0_99] : memref<20x32x32xf32, #tpu.memory_space<vmem>>, vector<16x16x32xf32>
    %91 = vector.shape_cast %90 : vector<16x16x32xf32> to vector<256x32xf32>
    %c11 = arith.constant 11 : index
    %c0_100 = arith.constant 0 : index
    %c0_101 = arith.constant 0 : index
    %92 = vector.load %arg4[%c11, %c0_100, %c0_101] : memref<25x32x32xf32, #tpu.memory_space<vmem>>, vector<1x32x32xf32>
    %93 = vector.shape_cast %92 : vector<1x32x32xf32> to vector<32x32xf32>
    %cst_102 = arith.constant dense<0.000000e+00> : vector<256x32xf32>
    %94 = tpu.matmul %91, %93, %cst_102 {dimension_numbers = #tpu.dot_dimension_numbers<[1], [0], [0], [1], [0, 0, 1, 1], [], []>} : vector<256x32xf32>, vector<32x32xf32>, vector<256x32xf32> -> vector<256x32xf32>
    %95 = arith.addf %89, %94 : vector<256x32xf32>
    %c2_103 = arith.constant 2 : index
    %c8_104 = arith.constant 8 : index
    %c0_105 = arith.constant 0 : index
    %96 = vector.load %arg15[%c2_103, %c8_104, %c0_105] : memref<20x32x32xf32, #tpu.memory_space<vmem>>, vector<16x16x32xf32>
    %97 = vector.shape_cast %96 : vector<16x16x32xf32> to vector<256x32xf32>
    %c12 = arith.constant 12 : index
    %c0_106 = arith.constant 0 : index
    %c0_107 = arith.constant 0 : index
    %98 = vector.load %arg4[%c12, %c0_106, %c0_107] : memref<25x32x32xf32, #tpu.memory_space<vmem>>, vector<1x32x32xf32>
    %99 = vector.shape_cast %98 : vector<1x32x32xf32> to vector<32x32xf32>
    %cst_108 = arith.constant dense<0.000000e+00> : vector<256x32xf32>
    %100 = tpu.matmul %97, %99, %cst_108 {dimension_numbers = #tpu.dot_dimension_numbers<[1], [0], [0], [1], [0, 0, 1, 1], [], []>} : vector<256x32xf32>, vector<32x32xf32>, vector<256x32xf32> -> vector<256x32xf32>
    %101 = arith.addf %95, %100 : vector<256x32xf32>
    %c2_109 = arith.constant 2 : index
    %c9_110 = arith.constant 9 : index
    %c0_111 = arith.constant 0 : index
    %102 = vector.load %arg15[%c2_109, %c9_110, %c0_111] : memref<20x32x32xf32, #tpu.memory_space<vmem>>, vector<16x16x32xf32>
    %103 = vector.shape_cast %102 : vector<16x16x32xf32> to vector<256x32xf32>
    %c13 = arith.constant 13 : index
    %c0_112 = arith.constant 0 : index
    %c0_113 = arith.constant 0 : index
    %104 = vector.load %arg4[%c13, %c0_112, %c0_113] : memref<25x32x32xf32, #tpu.memory_space<vmem>>, vector<1x32x32xf32>
    %105 = vector.shape_cast %104 : vector<1x32x32xf32> to vector<32x32xf32>
    %cst_114 = arith.constant dense<0.000000e+00> : vector<256x32xf32>
    %106 = tpu.matmul %103, %105, %cst_114 {dimension_numbers = #tpu.dot_dimension_numbers<[1], [0], [0], [1], [0, 0, 1, 1], [], []>} : vector<256x32xf32>, vector<32x32xf32>, vector<256x32xf32> -> vector<256x32xf32>
    %107 = arith.addf %101, %106 : vector<256x32xf32>
    %c2_115 = arith.constant 2 : index
    %c10_116 = arith.constant 10 : index
    %c0_117 = arith.constant 0 : index
    %108 = vector.load %arg15[%c2_115, %c10_116, %c0_117] : memref<20x32x32xf32, #tpu.memory_space<vmem>>, vector<16x16x32xf32>
    %109 = vector.shape_cast %108 : vector<16x16x32xf32> to vector<256x32xf32>
    %c14 = arith.constant 14 : index
    %c0_118 = arith.constant 0 : index
    %c0_119 = arith.constant 0 : index
    %110 = vector.load %arg4[%c14, %c0_118, %c0_119] : memref<25x32x32xf32, #tpu.memory_space<vmem>>, vector<1x32x32xf32>
    %111 = vector.shape_cast %110 : vector<1x32x32xf32> to vector<32x32xf32>
    %cst_120 = arith.constant dense<0.000000e+00> : vector<256x32xf32>
    %112 = tpu.matmul %109, %111, %cst_120 {dimension_numbers = #tpu.dot_dimension_numbers<[1], [0], [0], [1], [0, 0, 1, 1], [], []>} : vector<256x32xf32>, vector<32x32xf32>, vector<256x32xf32> -> vector<256x32xf32>
    %113 = arith.addf %107, %112 : vector<256x32xf32>
    %c3_121 = arith.constant 3 : index
    %c6_122 = arith.constant 6 : index
    %c0_123 = arith.constant 0 : index
    %114 = vector.load %arg15[%c3_121, %c6_122, %c0_123] : memref<20x32x32xf32, #tpu.memory_space<vmem>>, vector<16x16x32xf32>
    %115 = vector.shape_cast %114 : vector<16x16x32xf32> to vector<256x32xf32>
    %c15 = arith.constant 15 : index
    %c0_124 = arith.constant 0 : index
    %c0_125 = arith.constant 0 : index
    %116 = vector.load %arg4[%c15, %c0_124, %c0_125] : memref<25x32x32xf32, #tpu.memory_space<vmem>>, vector<1x32x32xf32>
    %117 = vector.shape_cast %116 : vector<1x32x32xf32> to vector<32x32xf32>
    %cst_126 = arith.constant dense<0.000000e+00> : vector<256x32xf32>
    %118 = tpu.matmul %115, %117, %cst_126 {dimension_numbers = #tpu.dot_dimension_numbers<[1], [0], [0], [1], [0, 0, 1, 1], [], []>} : vector<256x32xf32>, vector<32x32xf32>, vector<256x32xf32> -> vector<256x32xf32>
    %119 = arith.addf %113, %118 : vector<256x32xf32>
    %c3_127 = arith.constant 3 : index
    %c7_128 = arith.constant 7 : index
    %c0_129 = arith.constant 0 : index
    %120 = vector.load %arg15[%c3_127, %c7_128, %c0_129] : memref<20x32x32xf32, #tpu.memory_space<vmem>>, vector<16x16x32xf32>
    %121 = vector.shape_cast %120 : vector<16x16x32xf32> to vector<256x32xf32>
    %c16 = arith.constant 16 : index
    %c0_130 = arith.constant 0 : index
    %c0_131 = arith.constant 0 : index
    %122 = vector.load %arg4[%c16, %c0_130, %c0_131] : memref<25x32x32xf32, #tpu.memory_space<vmem>>, vector<1x32x32xf32>
    %123 = vector.shape_cast %122 : vector<1x32x32xf32> to vector<32x32xf32>
    %cst_132 = arith.constant dense<0.000000e+00> : vector<256x32xf32>
    %124 = tpu.matmul %121, %123, %cst_132 {dimension_numbers = #tpu.dot_dimension_numbers<[1], [0], [0], [1], [0, 0, 1, 1], [], []>} : vector<256x32xf32>, vector<32x32xf32>, vector<256x32xf32> -> vector<256x32xf32>
    %125 = arith.addf %119, %124 : vector<256x32xf32>
    %c3_133 = arith.constant 3 : index
    %c8_134 = arith.constant 8 : index
    %c0_135 = arith.constant 0 : index
    %126 = vector.load %arg15[%c3_133, %c8_134, %c0_135] : memref<20x32x32xf32, #tpu.memory_space<vmem>>, vector<16x16x32xf32>
    %127 = vector.shape_cast %126 : vector<16x16x32xf32> to vector<256x32xf32>
    %c17 = arith.constant 17 : index
    %c0_136 = arith.constant 0 : index
    %c0_137 = arith.constant 0 : index
    %128 = vector.load %arg4[%c17, %c0_136, %c0_137] : memref<25x32x32xf32, #tpu.memory_space<vmem>>, vector<1x32x32xf32>
    %129 = vector.shape_cast %128 : vector<1x32x32xf32> to vector<32x32xf32>
    %cst_138 = arith.constant dense<0.000000e+00> : vector<256x32xf32>
    %130 = tpu.matmul %127, %129, %cst_138 {dimension_numbers = #tpu.dot_dimension_numbers<[1], [0], [0], [1], [0, 0, 1, 1], [], []>} : vector<256x32xf32>, vector<32x32xf32>, vector<256x32xf32> -> vector<256x32xf32>
    %131 = arith.addf %125, %130 : vector<256x32xf32>
    %c3_139 = arith.constant 3 : index
    %c9_140 = arith.constant 9 : index
    %c0_141 = arith.constant 0 : index
    %132 = vector.load %arg15[%c3_139, %c9_140, %c0_141] : memref<20x32x32xf32, #tpu.memory_space<vmem>>, vector<16x16x32xf32>
    %133 = vector.shape_cast %132 : vector<16x16x32xf32> to vector<256x32xf32>
    %c18 = arith.constant 18 : index
    %c0_142 = arith.constant 0 : index
    %c0_143 = arith.constant 0 : index
    %134 = vector.load %arg4[%c18, %c0_142, %c0_143] : memref<25x32x32xf32, #tpu.memory_space<vmem>>, vector<1x32x32xf32>
    %135 = vector.shape_cast %134 : vector<1x32x32xf32> to vector<32x32xf32>
    %cst_144 = arith.constant dense<0.000000e+00> : vector<256x32xf32>
    %136 = tpu.matmul %133, %135, %cst_144 {dimension_numbers = #tpu.dot_dimension_numbers<[1], [0], [0], [1], [0, 0, 1, 1], [], []>} : vector<256x32xf32>, vector<32x32xf32>, vector<256x32xf32> -> vector<256x32xf32>
    %137 = arith.addf %131, %136 : vector<256x32xf32>
    %c3_145 = arith.constant 3 : index
    %c10_146 = arith.constant 10 : index
    %c0_147 = arith.constant 0 : index
    %138 = vector.load %arg15[%c3_145, %c10_146, %c0_147] : memref<20x32x32xf32, #tpu.memory_space<vmem>>, vector<16x16x32xf32>
    %139 = vector.shape_cast %138 : vector<16x16x32xf32> to vector<256x32xf32>
    %c19 = arith.constant 19 : index
    %c0_148 = arith.constant 0 : index
    %c0_149 = arith.constant 0 : index
    %140 = vector.load %arg4[%c19, %c0_148, %c0_149] : memref<25x32x32xf32, #tpu.memory_space<vmem>>, vector<1x32x32xf32>
    %141 = vector.shape_cast %140 : vector<1x32x32xf32> to vector<32x32xf32>
    %cst_150 = arith.constant dense<0.000000e+00> : vector<256x32xf32>
    %142 = tpu.matmul %139, %141, %cst_150 {dimension_numbers = #tpu.dot_dimension_numbers<[1], [0], [0], [1], [0, 0, 1, 1], [], []>} : vector<256x32xf32>, vector<32x32xf32>, vector<256x32xf32> -> vector<256x32xf32>
    %143 = arith.addf %137, %142 : vector<256x32xf32>
    %c4_151 = arith.constant 4 : index
    %c6_152 = arith.constant 6 : index
    %c0_153 = arith.constant 0 : index
    %144 = vector.load %arg15[%c4_151, %c6_152, %c0_153] : memref<20x32x32xf32, #tpu.memory_space<vmem>>, vector<16x16x32xf32>
    %145 = vector.shape_cast %144 : vector<16x16x32xf32> to vector<256x32xf32>
    %c20 = arith.constant 20 : index
    %c0_154 = arith.constant 0 : index
    %c0_155 = arith.constant 0 : index
    %146 = vector.load %arg4[%c20, %c0_154, %c0_155] : memref<25x32x32xf32, #tpu.memory_space<vmem>>, vector<1x32x32xf32>
    %147 = vector.shape_cast %146 : vector<1x32x32xf32> to vector<32x32xf32>
    %cst_156 = arith.constant dense<0.000000e+00> : vector<256x32xf32>
    %148 = tpu.matmul %145, %147, %cst_156 {dimension_numbers = #tpu.dot_dimension_numbers<[1], [0], [0], [1], [0, 0, 1, 1], [], []>} : vector<256x32xf32>, vector<32x32xf32>, vector<256x32xf32> -> vector<256x32xf32>
    %149 = arith.addf %143, %148 : vector<256x32xf32>
    %c4_157 = arith.constant 4 : index
    %c7_158 = arith.constant 7 : index
    %c0_159 = arith.constant 0 : index
    %150 = vector.load %arg15[%c4_157, %c7_158, %c0_159] : memref<20x32x32xf32, #tpu.memory_space<vmem>>, vector<16x16x32xf32>
    %151 = vector.shape_cast %150 : vector<16x16x32xf32> to vector<256x32xf32>
    %c21 = arith.constant 21 : index
    %c0_160 = arith.constant 0 : index
    %c0_161 = arith.constant 0 : index
    %152 = vector.load %arg4[%c21, %c0_160, %c0_161] : memref<25x32x32xf32, #tpu.memory_space<vmem>>, vector<1x32x32xf32>
    %153 = vector.shape_cast %152 : vector<1x32x32xf32> to vector<32x32xf32>
    %cst_162 = arith.constant dense<0.000000e+00> : vector<256x32xf32>
    %154 = tpu.matmul %151, %153, %cst_162 {dimension_numbers = #tpu.dot_dimension_numbers<[1], [0], [0], [1], [0, 0, 1, 1], [], []>} : vector<256x32xf32>, vector<32x32xf32>, vector<256x32xf32> -> vector<256x32xf32>
    %155 = arith.addf %149, %154 : vector<256x32xf32>
    %c4_163 = arith.constant 4 : index
    %c8_164 = arith.constant 8 : index
    %c0_165 = arith.constant 0 : index
    %156 = vector.load %arg15[%c4_163, %c8_164, %c0_165] : memref<20x32x32xf32, #tpu.memory_space<vmem>>, vector<16x16x32xf32>
    %157 = vector.shape_cast %156 : vector<16x16x32xf32> to vector<256x32xf32>
    %c22 = arith.constant 22 : index
    %c0_166 = arith.constant 0 : index
    %c0_167 = arith.constant 0 : index
    %158 = vector.load %arg4[%c22, %c0_166, %c0_167] : memref<25x32x32xf32, #tpu.memory_space<vmem>>, vector<1x32x32xf32>
    %159 = vector.shape_cast %158 : vector<1x32x32xf32> to vector<32x32xf32>
    %cst_168 = arith.constant dense<0.000000e+00> : vector<256x32xf32>
    %160 = tpu.matmul %157, %159, %cst_168 {dimension_numbers = #tpu.dot_dimension_numbers<[1], [0], [0], [1], [0, 0, 1, 1], [], []>} : vector<256x32xf32>, vector<32x32xf32>, vector<256x32xf32> -> vector<256x32xf32>
    %161 = arith.addf %155, %160 : vector<256x32xf32>
    %c4_169 = arith.constant 4 : index
    %c9_170 = arith.constant 9 : index
    %c0_171 = arith.constant 0 : index
    %162 = vector.load %arg15[%c4_169, %c9_170, %c0_171] : memref<20x32x32xf32, #tpu.memory_space<vmem>>, vector<16x16x32xf32>
    %163 = vector.shape_cast %162 : vector<16x16x32xf32> to vector<256x32xf32>
    %c23 = arith.constant 23 : index
    %c0_172 = arith.constant 0 : index
    %c0_173 = arith.constant 0 : index
    %164 = vector.load %arg4[%c23, %c0_172, %c0_173] : memref<25x32x32xf32, #tpu.memory_space<vmem>>, vector<1x32x32xf32>
    %165 = vector.shape_cast %164 : vector<1x32x32xf32> to vector<32x32xf32>
    %cst_174 = arith.constant dense<0.000000e+00> : vector<256x32xf32>
    %166 = tpu.matmul %163, %165, %cst_174 {dimension_numbers = #tpu.dot_dimension_numbers<[1], [0], [0], [1], [0, 0, 1, 1], [], []>} : vector<256x32xf32>, vector<32x32xf32>, vector<256x32xf32> -> vector<256x32xf32>
    %167 = arith.addf %161, %166 : vector<256x32xf32>
    %c4_175 = arith.constant 4 : index
    %c10_176 = arith.constant 10 : index
    %c0_177 = arith.constant 0 : index
    %168 = vector.load %arg15[%c4_175, %c10_176, %c0_177] : memref<20x32x32xf32, #tpu.memory_space<vmem>>, vector<16x16x32xf32>
    %169 = vector.shape_cast %168 : vector<16x16x32xf32> to vector<256x32xf32>
    %c24 = arith.constant 24 : index
    %c0_178 = arith.constant 0 : index
    %c0_179 = arith.constant 0 : index
    %170 = vector.load %arg4[%c24, %c0_178, %c0_179] : memref<25x32x32xf32, #tpu.memory_space<vmem>>, vector<1x32x32xf32>
    %171 = vector.shape_cast %170 : vector<1x32x32xf32> to vector<32x32xf32>
    %cst_180 = arith.constant dense<0.000000e+00> : vector<256x32xf32>
    %172 = tpu.matmul %169, %171, %cst_180 {dimension_numbers = #tpu.dot_dimension_numbers<[1], [0], [0], [1], [0, 0, 1, 1], [], []>} : vector<256x32xf32>, vector<32x32xf32>, vector<256x32xf32> -> vector<256x32xf32>
    %173 = arith.addf %167, %172 : vector<256x32xf32>
    %c0_181 = arith.constant 0 : index
    %c0_182 = arith.constant 0 : index
    %c0_183 = arith.constant 0 : index
    %174 = vector.load %arg8[%c0_181, %c0_182, %c0_183] : memref<4x64x256xf32, #tpu.memory_space<vmem>>, vector<1x64x256xf32>
    %175 = vector.shape_cast %174 : vector<1x64x256xf32> to vector<64x256xf32>
    %cst_184 = arith.constant dense<0.000000e+00> : vector<64x32xf32>
    %176 = tpu.matmul %175, %173, %cst_184 {dimension_numbers = #tpu.dot_dimension_numbers<[1], [0], [0], [1], [0, 0, 1, 1], [], []>} : vector<64x256xf32>, vector<256x32xf32>, vector<64x32xf32> -> vector<64x32xf32>
    %c1_185 = arith.constant 1 : index
    %c0_186 = arith.constant 0 : index
    %c0_187 = arith.constant 0 : index
    %177 = vector.load %arg8[%c1_185, %c0_186, %c0_187] : memref<4x64x256xf32, #tpu.memory_space<vmem>>, vector<1x64x256xf32>
    %178 = vector.shape_cast %177 : vector<1x64x256xf32> to vector<64x256xf32>
    %cst_188 = arith.constant dense<0.000000e+00> : vector<64x32xf32>
    %179 = tpu.matmul %178, %173, %cst_188 {dimension_numbers = #tpu.dot_dimension_numbers<[1], [0], [0], [1], [0, 0, 1, 1], [], []>} : vector<64x256xf32>, vector<256x32xf32>, vector<64x32xf32> -> vector<64x32xf32>
    %180 = arith.maximumf %176, %179 : vector<64x32xf32>
    %c2_189 = arith.constant 2 : index
    %c0_190 = arith.constant 0 : index
    %c0_191 = arith.constant 0 : index
    %181 = vector.load %arg8[%c2_189, %c0_190, %c0_191] : memref<4x64x256xf32, #tpu.memory_space<vmem>>, vector<1x64x256xf32>
    %182 = vector.shape_cast %181 : vector<1x64x256xf32> to vector<64x256xf32>
    %cst_192 = arith.constant dense<0.000000e+00> : vector<64x32xf32>
    %183 = tpu.matmul %182, %173, %cst_192 {dimension_numbers = #tpu.dot_dimension_numbers<[1], [0], [0], [1], [0, 0, 1, 1], [], []>} : vector<64x256xf32>, vector<256x32xf32>, vector<64x32xf32> -> vector<64x32xf32>
    %184 = arith.maximumf %180, %183 : vector<64x32xf32>
    %c3_193 = arith.constant 3 : index
    %c0_194 = arith.constant 0 : index
    %c0_195 = arith.constant 0 : index
    %185 = vector.load %arg8[%c3_193, %c0_194, %c0_195] : memref<4x64x256xf32, #tpu.memory_space<vmem>>, vector<1x64x256xf32>
    %186 = vector.shape_cast %185 : vector<1x64x256xf32> to vector<64x256xf32>
    %cst_196 = arith.constant dense<0.000000e+00> : vector<64x32xf32>
    %187 = tpu.matmul %186, %173, %cst_196 {dimension_numbers = #tpu.dot_dimension_numbers<[1], [0], [0], [1], [0, 0, 1, 1], [], []>} : vector<64x256xf32>, vector<256x32xf32>, vector<64x32xf32> -> vector<64x32xf32>
    %188 = arith.maximumf %184, %187 : vector<64x32xf32>
    %c0_197 = arith.constant 0 : index
    %c0_198 = arith.constant 0 : index
    %189 = vector.load %arg5[%c0_197, %c0_198] : memref<1x32xf32, #tpu.memory_space<vmem>>, vector<1x32xf32>
    %190 = vector.broadcast %189 : vector<1x32xf32> to vector<64x32xf32>
    %191 = arith.addf %188, %190 : vector<64x32xf32>
    %cst_199 = arith.constant 0.000000e+00 : f32
    %192 = vector.broadcast %cst_199 : f32 to vector<12x24x32xf32>
    %c0_200 = arith.constant 0 : index
    %c0_201 = arith.constant 0 : index
    %c0_202 = arith.constant 0 : index
    %193 = vector.load %arg16[%c0_200, %c0_201, %c0_202] : memref<12x24x32xf32, #tpu.memory_space<vmem>>, vector<12x24x32xf32>
    tpu.vector_store %arg16[%c0_200, %c0_201, %c0_202], %192 {strides = array<i32>} : memref<12x24x32xf32, #tpu.memory_space<vmem>>, vector<12x24x32xf32>,
    %194 = vector.shape_cast %191 : vector<64x32xf32> to vector<8x8x32xf32>
    %c2_203 = arith.constant 2 : index
    %c8_204 = arith.constant 8 : index
    %c0_205 = arith.constant 0 : index
    %195 = vector.load %arg16[%c2_203, %c8_204, %c0_205] : memref<12x24x32xf32, #tpu.memory_space<vmem>>, vector<8x8x32xf32>
    tpu.vector_store %arg16[%c2_203, %c8_204, %c0_205], %194 {strides = array<i32>} : memref<12x24x32xf32, #tpu.memory_space<vmem>>, vector<8x8x32xf32>,
    %cst_206 = arith.constant 0.000000e+00 : f32
    %196 = vector.broadcast %cst_206 : f32 to vector<64x64xf32>
    %c0_207 = arith.constant 0 : index
    %c6_208 = arith.constant 6 : index
    %c0_209 = arith.constant 0 : index
    %197 = vector.load %arg16[%c0_207, %c6_208, %c0_209] : memref<12x24x32xf32, #tpu.memory_space<vmem>>, vector<8x8x32xf32>
    %198 = vector.shape_cast %197 : vector<8x8x32xf32> to vector<64x32xf32>
    %c0_210 = arith.constant 0 : index
    %c0_211 = arith.constant 0 : index
    %c0_212 = arith.constant 0 : index
    %199 = vector.load %arg6[%c0_210, %c0_211, %c0_212] : memref<25x32x64xf32, #tpu.memory_space<vmem>>, vector<1x32x64xf32>
    %200 = vector.shape_cast %199 : vector<1x32x64xf32> to vector<32x64xf32>
    %cst_213 = arith.constant dense<0.000000e+00> : vector<64x64xf32>
    %201 = tpu.matmul %198, %200, %cst_213 {dimension_numbers = #tpu.dot_dimension_numbers<[1], [0], [0], [1], [0, 0, 1, 1], [], []>} : vector<64x32xf32>, vector<32x64xf32>, vector<64x64xf32> -> vector<64x64xf32>
    %202 = arith.addf %196, %201 : vector<64x64xf32>
    %c0_214 = arith.constant 0 : index
    %c7_215 = arith.constant 7 : index
    %c0_216 = arith.constant 0 : index
    %203 = vector.load %arg16[%c0_214, %c7_215, %c0_216] : memref<12x24x32xf32, #tpu.memory_space<vmem>>, vector<8x8x32xf32>
    %204 = vector.shape_cast %203 : vector<8x8x32xf32> to vector<64x32xf32>
    %c1_217 = arith.constant 1 : index
    %c0_218 = arith.constant 0 : index
    %c0_219 = arith.constant 0 : index
    %205 = vector.load %arg6[%c1_217, %c0_218, %c0_219] : memref<25x32x64xf32, #tpu.memory_space<vmem>>, vector<1x32x64xf32>
    %206 = vector.shape_cast %205 : vector<1x32x64xf32> to vector<32x64xf32>
    %cst_220 = arith.constant dense<0.000000e+00> : vector<64x64xf32>
    %207 = tpu.matmul %204, %206, %cst_220 {dimension_numbers = #tpu.dot_dimension_numbers<[1], [0], [0], [1], [0, 0, 1, 1], [], []>} : vector<64x32xf32>, vector<32x64xf32>, vector<64x64xf32> -> vector<64x64xf32>
    %208 = arith.addf %202, %207 : vector<64x64xf32>
    %c0_221 = arith.constant 0 : index
    %c8_222 = arith.constant 8 : index
    %c0_223 = arith.constant 0 : index
    %209 = vector.load %arg16[%c0_221, %c8_222, %c0_223] : memref<12x24x32xf32, #tpu.memory_space<vmem>>, vector<8x8x32xf32>
    %210 = vector.shape_cast %209 : vector<8x8x32xf32> to vector<64x32xf32>
    %c2_224 = arith.constant 2 : index
    %c0_225 = arith.constant 0 : index
    %c0_226 = arith.constant 0 : index
    %211 = vector.load %arg6[%c2_224, %c0_225, %c0_226] : memref<25x32x64xf32, #tpu.memory_space<vmem>>, vector<1x32x64xf32>
    %212 = vector.shape_cast %211 : vector<1x32x64xf32> to vector<32x64xf32>
    %cst_227 = arith.constant dense<0.000000e+00> : vector<64x64xf32>
    %213 = tpu.matmul %210, %212, %cst_227 {dimension_numbers = #tpu.dot_dimension_numbers<[1], [0], [0], [1], [0, 0, 1, 1], [], []>} : vector<64x32xf32>, vector<32x64xf32>, vector<64x64xf32> -> vector<64x64xf32>
    %214 = arith.addf %208, %213 : vector<64x64xf32>
    %c0_228 = arith.constant 0 : index
    %c9_229 = arith.constant 9 : index
    %c0_230 = arith.constant 0 : index
    %215 = vector.load %arg16[%c0_228, %c9_229, %c0_230] : memref<12x24x32xf32, #tpu.memory_space<vmem>>, vector<8x8x32xf32>
    %216 = vector.shape_cast %215 : vector<8x8x32xf32> to vector<64x32xf32>
    %c3_231 = arith.constant 3 : index
    %c0_232 = arith.constant 0 : index
    %c0_233 = arith.constant 0 : index
    %217 = vector.load %arg6[%c3_231, %c0_232, %c0_233] : memref<25x32x64xf32, #tpu.memory_space<vmem>>, vector<1x32x64xf32>
    %218 = vector.shape_cast %217 : vector<1x32x64xf32> to vector<32x64xf32>
    %cst_234 = arith.constant dense<0.000000e+00> : vector<64x64xf32>
    %219 = tpu.matmul %216, %218, %cst_234 {dimension_numbers = #tpu.dot_dimension_numbers<[1], [0], [0], [1], [0, 0, 1, 1], [], []>} : vector<64x32xf32>, vector<32x64xf32>, vector<64x64xf32> -> vector<64x64xf32>
    %220 = arith.addf %214, %219 : vector<64x64xf32>
    %c0_235 = arith.constant 0 : index
    %c10_236 = arith.constant 10 : index
    %c0_237 = arith.constant 0 : index
    %221 = vector.load %arg16[%c0_235, %c10_236, %c0_237] : memref<12x24x32xf32, #tpu.memory_space<vmem>>, vector<8x8x32xf32>
    %222 = vector.shape_cast %221 : vector<8x8x32xf32> to vector<64x32xf32>
    %c4_238 = arith.constant 4 : index
    %c0_239 = arith.constant 0 : index
    %c0_240 = arith.constant 0 : index
    %223 = vector.load %arg6[%c4_238, %c0_239, %c0_240] : memref<25x32x64xf32, #tpu.memory_space<vmem>>, vector<1x32x64xf32>
    %224 = vector.shape_cast %223 : vector<1x32x64xf32> to vector<32x64xf32>
    %cst_241 = arith.constant dense<0.000000e+00> : vector<64x64xf32>
    %225 = tpu.matmul %222, %224, %cst_241 {dimension_numbers = #tpu.dot_dimension_numbers<[1], [0], [0], [1], [0, 0, 1, 1], [], []>} : vector<64x32xf32>, vector<32x64xf32>, vector<64x64xf32> -> vector<64x64xf32>
    %226 = arith.addf %220, %225 : vector<64x64xf32>
    %c1_242 = arith.constant 1 : index
    %c6_243 = arith.constant 6 : index
    %c0_244 = arith.constant 0 : index
    %227 = vector.load %arg16[%c1_242, %c6_243, %c0_244] : memref<12x24x32xf32, #tpu.memory_space<vmem>>, vector<8x8x32xf32>
    %228 = vector.shape_cast %227 : vector<8x8x32xf32> to vector<64x32xf32>
    %c5_245 = arith.constant 5 : index
    %c0_246 = arith.constant 0 : index
    %c0_247 = arith.constant 0 : index
    %229 = vector.load %arg6[%c5_245, %c0_246, %c0_247] : memref<25x32x64xf32, #tpu.memory_space<vmem>>, vector<1x32x64xf32>
    %230 = vector.shape_cast %229 : vector<1x32x64xf32> to vector<32x64xf32>
    %cst_248 = arith.constant dense<0.000000e+00> : vector<64x64xf32>
    %231 = tpu.matmul %228, %230, %cst_248 {dimension_numbers = #tpu.dot_dimension_numbers<[1], [0], [0], [1], [0, 0, 1, 1], [], []>} : vector<64x32xf32>, vector<32x64xf32>, vector<64x64xf32> -> vector<64x64xf32>
    %232 = arith.addf %226, %231 : vector<64x64xf32>
    %c1_249 = arith.constant 1 : index
    %c7_250 = arith.constant 7 : index
    %c0_251 = arith.constant 0 : index
    %233 = vector.load %arg16[%c1_249, %c7_250, %c0_251] : memref<12x24x32xf32, #tpu.memory_space<vmem>>, vector<8x8x32xf32>
    %234 = vector.shape_cast %233 : vector<8x8x32xf32> to vector<64x32xf32>
    %c6_252 = arith.constant 6 : index
    %c0_253 = arith.constant 0 : index
    %c0_254 = arith.constant 0 : index
    %235 = vector.load %arg6[%c6_252, %c0_253, %c0_254] : memref<25x32x64xf32, #tpu.memory_space<vmem>>, vector<1x32x64xf32>
    %236 = vector.shape_cast %235 : vector<1x32x64xf32> to vector<32x64xf32>
    %cst_255 = arith.constant dense<0.000000e+00> : vector<64x64xf32>
    %237 = tpu.matmul %234, %236, %cst_255 {dimension_numbers = #tpu.dot_dimension_numbers<[1], [0], [0], [1], [0, 0, 1, 1], [], []>} : vector<64x32xf32>, vector<32x64xf32>, vector<64x64xf32> -> vector<64x64xf32>
    %238 = arith.addf %232, %237 : vector<64x64xf32>
    %c1_256 = arith.constant 1 : index
    %c8_257 = arith.constant 8 : index
    %c0_258 = arith.constant 0 : index
    %239 = vector.load %arg16[%c1_256, %c8_257, %c0_258] : memref<12x24x32xf32, #tpu.memory_space<vmem>>, vector<8x8x32xf32>
    %240 = vector.shape_cast %239 : vector<8x8x32xf32> to vector<64x32xf32>
    %c7_259 = arith.constant 7 : index
    %c0_260 = arith.constant 0 : index
    %c0_261 = arith.constant 0 : index
    %241 = vector.load %arg6[%c7_259, %c0_260, %c0_261] : memref<25x32x64xf32, #tpu.memory_space<vmem>>, vector<1x32x64xf32>
    %242 = vector.shape_cast %241 : vector<1x32x64xf32> to vector<32x64xf32>
    %cst_262 = arith.constant dense<0.000000e+00> : vector<64x64xf32>
    %243 = tpu.matmul %240, %242, %cst_262 {dimension_numbers = #tpu.dot_dimension_numbers<[1], [0], [0], [1], [0, 0, 1, 1], [], []>} : vector<64x32xf32>, vector<32x64xf32>, vector<64x64xf32> -> vector<64x64xf32>
    %244 = arith.addf %238, %243 : vector<64x64xf32>
    %c1_263 = arith.constant 1 : index
    %c9_264 = arith.constant 9 : index
    %c0_265 = arith.constant 0 : index
    %245 = vector.load %arg16[%c1_263, %c9_264, %c0_265] : memref<12x24x32xf32, #tpu.memory_space<vmem>>, vector<8x8x32xf32>
    %246 = vector.shape_cast %245 : vector<8x8x32xf32> to vector<64x32xf32>
    %c8_266 = arith.constant 8 : index
    %c0_267 = arith.constant 0 : index
    %c0_268 = arith.constant 0 : index
    %247 = vector.load %arg6[%c8_266, %c0_267, %c0_268] : memref<25x32x64xf32, #tpu.memory_space<vmem>>, vector<1x32x64xf32>
    %248 = vector.shape_cast %247 : vector<1x32x64xf32> to vector<32x64xf32>
    %cst_269 = arith.constant dense<0.000000e+00> : vector<64x64xf32>
    %249 = tpu.matmul %246, %248, %cst_269 {dimension_numbers = #tpu.dot_dimension_numbers<[1], [0], [0], [1], [0, 0, 1, 1], [], []>} : vector<64x32xf32>, vector<32x64xf32>, vector<64x64xf32> -> vector<64x64xf32>
    %250 = arith.addf %244, %249 : vector<64x64xf32>
    %c1_270 = arith.constant 1 : index
    %c10_271 = arith.constant 10 : index
    %c0_272 = arith.constant 0 : index
    %251 = vector.load %arg16[%c1_270, %c10_271, %c0_272] : memref<12x24x32xf32, #tpu.memory_space<vmem>>, vector<8x8x32xf32>
    %252 = vector.shape_cast %251 : vector<8x8x32xf32> to vector<64x32xf32>
    %c9_273 = arith.constant 9 : index
    %c0_274 = arith.constant 0 : index
    %c0_275 = arith.constant 0 : index
    %253 = vector.load %arg6[%c9_273, %c0_274, %c0_275] : memref<25x32x64xf32, #tpu.memory_space<vmem>>, vector<1x32x64xf32>
    %254 = vector.shape_cast %253 : vector<1x32x64xf32> to vector<32x64xf32>
    %cst_276 = arith.constant dense<0.000000e+00> : vector<64x64xf32>
    %255 = tpu.matmul %252, %254, %cst_276 {dimension_numbers = #tpu.dot_dimension_numbers<[1], [0], [0], [1], [0, 0, 1, 1], [], []>} : vector<64x32xf32>, vector<32x64xf32>, vector<64x64xf32> -> vector<64x64xf32>
    %256 = arith.addf %250, %255 : vector<64x64xf32>
    %c2_277 = arith.constant 2 : index
    %c6_278 = arith.constant 6 : index
    %c0_279 = arith.constant 0 : index
    %257 = vector.load %arg16[%c2_277, %c6_278, %c0_279] : memref<12x24x32xf32, #tpu.memory_space<vmem>>, vector<8x8x32xf32>
    %258 = vector.shape_cast %257 : vector<8x8x32xf32> to vector<64x32xf32>
    %c10_280 = arith.constant 10 : index
    %c0_281 = arith.constant 0 : index
    %c0_282 = arith.constant 0 : index
    %259 = vector.load %arg6[%c10_280, %c0_281, %c0_282] : memref<25x32x64xf32, #tpu.memory_space<vmem>>, vector<1x32x64xf32>
    %260 = vector.shape_cast %259 : vector<1x32x64xf32> to vector<32x64xf32>
    %cst_283 = arith.constant dense<0.000000e+00> : vector<64x64xf32>
    %261 = tpu.matmul %258, %260, %cst_283 {dimension_numbers = #tpu.dot_dimension_numbers<[1], [0], [0], [1], [0, 0, 1, 1], [], []>} : vector<64x32xf32>, vector<32x64xf32>, vector<64x64xf32> -> vector<64x64xf32>
    %262 = arith.addf %256, %261 : vector<64x64xf32>
    %c2_284 = arith.constant 2 : index
    %c7_285 = arith.constant 7 : index
    %c0_286 = arith.constant 0 : index
    %263 = vector.load %arg16[%c2_284, %c7_285, %c0_286] : memref<12x24x32xf32, #tpu.memory_space<vmem>>, vector<8x8x32xf32>
    %264 = vector.shape_cast %263 : vector<8x8x32xf32> to vector<64x32xf32>
    %c11_287 = arith.constant 11 : index
    %c0_288 = arith.constant 0 : index
    %c0_289 = arith.constant 0 : index
    %265 = vector.load %arg6[%c11_287, %c0_288, %c0_289] : memref<25x32x64xf32, #tpu.memory_space<vmem>>, vector<1x32x64xf32>
    %266 = vector.shape_cast %265 : vector<1x32x64xf32> to vector<32x64xf32>
    %cst_290 = arith.constant dense<0.000000e+00> : vector<64x64xf32>
    %267 = tpu.matmul %264, %266, %cst_290 {dimension_numbers = #tpu.dot_dimension_numbers<[1], [0], [0], [1], [0, 0, 1, 1], [], []>} : vector<64x32xf32>, vector<32x64xf32>, vector<64x64xf32> -> vector<64x64xf32>
    %268 = arith.addf %262, %267 : vector<64x64xf32>
    %c2_291 = arith.constant 2 : index
    %c8_292 = arith.constant 8 : index
    %c0_293 = arith.constant 0 : index
    %269 = vector.load %arg16[%c2_291, %c8_292, %c0_293] : memref<12x24x32xf32, #tpu.memory_space<vmem>>, vector<8x8x32xf32>
    %270 = vector.shape_cast %269 : vector<8x8x32xf32> to vector<64x32xf32>
    %c12_294 = arith.constant 12 : index
    %c0_295 = arith.constant 0 : index
    %c0_296 = arith.constant 0 : index
    %271 = vector.load %arg6[%c12_294, %c0_295, %c0_296] : memref<25x32x64xf32, #tpu.memory_space<vmem>>, vector<1x32x64xf32>
    %272 = vector.shape_cast %271 : vector<1x32x64xf32> to vector<32x64xf32>
    %cst_297 = arith.constant dense<0.000000e+00> : vector<64x64xf32>
    %273 = tpu.matmul %270, %272, %cst_297 {dimension_numbers = #tpu.dot_dimension_numbers<[1], [0], [0], [1], [0, 0, 1, 1], [], []>} : vector<64x32xf32>, vector<32x64xf32>, vector<64x64xf32> -> vector<64x64xf32>
    %274 = arith.addf %268, %273 : vector<64x64xf32>
    %c2_298 = arith.constant 2 : index
    %c9_299 = arith.constant 9 : index
    %c0_300 = arith.constant 0 : index
    %275 = vector.load %arg16[%c2_298, %c9_299, %c0_300] : memref<12x24x32xf32, #tpu.memory_space<vmem>>, vector<8x8x32xf32>
    %276 = vector.shape_cast %275 : vector<8x8x32xf32> to vector<64x32xf32>
    %c13_301 = arith.constant 13 : index
    %c0_302 = arith.constant 0 : index
    %c0_303 = arith.constant 0 : index
    %277 = vector.load %arg6[%c13_301, %c0_302, %c0_303] : memref<25x32x64xf32, #tpu.memory_space<vmem>>, vector<1x32x64xf32>
    %278 = vector.shape_cast %277 : vector<1x32x64xf32> to vector<32x64xf32>
    %cst_304 = arith.constant dense<0.000000e+00> : vector<64x64xf32>
    %279 = tpu.matmul %276, %278, %cst_304 {dimension_numbers = #tpu.dot_dimension_numbers<[1], [0], [0], [1], [0, 0, 1, 1], [], []>} : vector<64x32xf32>, vector<32x64xf32>, vector<64x64xf32> -> vector<64x64xf32>
    %280 = arith.addf %274, %279 : vector<64x64xf32>
    %c2_305 = arith.constant 2 : index
    %c10_306 = arith.constant 10 : index
    %c0_307 = arith.constant 0 : index
    %281 = vector.load %arg16[%c2_305, %c10_306, %c0_307] : memref<12x24x32xf32, #tpu.memory_space<vmem>>, vector<8x8x32xf32>
    %282 = vector.shape_cast %281 : vector<8x8x32xf32> to vector<64x32xf32>
    %c14_308 = arith.constant 14 : index
    %c0_309 = arith.constant 0 : index
    %c0_310 = arith.constant 0 : index
    %283 = vector.load %arg6[%c14_308, %c0_309, %c0_310] : memref<25x32x64xf32, #tpu.memory_space<vmem>>, vector<1x32x64xf32>
    %284 = vector.shape_cast %283 : vector<1x32x64xf32> to vector<32x64xf32>
    %cst_311 = arith.constant dense<0.000000e+00> : vector<64x64xf32>
    %285 = tpu.matmul %282, %284, %cst_311 {dimension_numbers = #tpu.dot_dimension_numbers<[1], [0], [0], [1], [0, 0, 1, 1], [], []>} : vector<64x32xf32>, vector<32x64xf32>, vector<64x64xf32> -> vector<64x64xf32>
    %286 = arith.addf %280, %285 : vector<64x64xf32>
    %c3_312 = arith.constant 3 : index
    %c6_313 = arith.constant 6 : index
    %c0_314 = arith.constant 0 : index
    %287 = vector.load %arg16[%c3_312, %c6_313, %c0_314] : memref<12x24x32xf32, #tpu.memory_space<vmem>>, vector<8x8x32xf32>
    %288 = vector.shape_cast %287 : vector<8x8x32xf32> to vector<64x32xf32>
    %c15_315 = arith.constant 15 : index
    %c0_316 = arith.constant 0 : index
    %c0_317 = arith.constant 0 : index
    %289 = vector.load %arg6[%c15_315, %c0_316, %c0_317] : memref<25x32x64xf32, #tpu.memory_space<vmem>>, vector<1x32x64xf32>
    %290 = vector.shape_cast %289 : vector<1x32x64xf32> to vector<32x64xf32>
    %cst_318 = arith.constant dense<0.000000e+00> : vector<64x64xf32>
    %291 = tpu.matmul %288, %290, %cst_318 {dimension_numbers = #tpu.dot_dimension_numbers<[1], [0], [0], [1], [0, 0, 1, 1], [], []>} : vector<64x32xf32>, vector<32x64xf32>, vector<64x64xf32> -> vector<64x64xf32>
    %292 = arith.addf %286, %291 : vector<64x64xf32>
    %c3_319 = arith.constant 3 : index
    %c7_320 = arith.constant 7 : index
    %c0_321 = arith.constant 0 : index
    %293 = vector.load %arg16[%c3_319, %c7_320, %c0_321] : memref<12x24x32xf32, #tpu.memory_space<vmem>>, vector<8x8x32xf32>
    %294 = vector.shape_cast %293 : vector<8x8x32xf32> to vector<64x32xf32>
    %c16_322 = arith.constant 16 : index
    %c0_323 = arith.constant 0 : index
    %c0_324 = arith.constant 0 : index
    %295 = vector.load %arg6[%c16_322, %c0_323, %c0_324] : memref<25x32x64xf32, #tpu.memory_space<vmem>>, vector<1x32x64xf32>
    %296 = vector.shape_cast %295 : vector<1x32x64xf32> to vector<32x64xf32>
    %cst_325 = arith.constant dense<0.000000e+00> : vector<64x64xf32>
    %297 = tpu.matmul %294, %296, %cst_325 {dimension_numbers = #tpu.dot_dimension_numbers<[1], [0], [0], [1], [0, 0, 1, 1], [], []>} : vector<64x32xf32>, vector<32x64xf32>, vector<64x64xf32> -> vector<64x64xf32>
    %298 = arith.addf %292, %297 : vector<64x64xf32>
    %c3_326 = arith.constant 3 : index
    %c8_327 = arith.constant 8 : index
    %c0_328 = arith.constant 0 : index
    %299 = vector.load %arg16[%c3_326, %c8_327, %c0_328] : memref<12x24x32xf32, #tpu.memory_space<vmem>>, vector<8x8x32xf32>
    %300 = vector.shape_cast %299 : vector<8x8x32xf32> to vector<64x32xf32>
    %c17_329 = arith.constant 17 : index
    %c0_330 = arith.constant 0 : index
    %c0_331 = arith.constant 0 : index
    %301 = vector.load %arg6[%c17_329, %c0_330, %c0_331] : memref<25x32x64xf32, #tpu.memory_space<vmem>>, vector<1x32x64xf32>
    %302 = vector.shape_cast %301 : vector<1x32x64xf32> to vector<32x64xf32>
    %cst_332 = arith.constant dense<0.000000e+00> : vector<64x64xf32>
    %303 = tpu.matmul %300, %302, %cst_332 {dimension_numbers = #tpu.dot_dimension_numbers<[1], [0], [0], [1], [0, 0, 1, 1], [], []>} : vector<64x32xf32>, vector<32x64xf32>, vector<64x64xf32> -> vector<64x64xf32>
    %304 = arith.addf %298, %303 : vector<64x64xf32>
    %c3_333 = arith.constant 3 : index
    %c9_334 = arith.constant 9 : index
    %c0_335 = arith.constant 0 : index
    %305 = vector.load %arg16[%c3_333, %c9_334, %c0_335] : memref<12x24x32xf32, #tpu.memory_space<vmem>>, vector<8x8x32xf32>
    %306 = vector.shape_cast %305 : vector<8x8x32xf32> to vector<64x32xf32>
    %c18_336 = arith.constant 18 : index
    %c0_337 = arith.constant 0 : index
    %c0_338 = arith.constant 0 : index
    %307 = vector.load %arg6[%c18_336, %c0_337, %c0_338] : memref<25x32x64xf32, #tpu.memory_space<vmem>>, vector<1x32x64xf32>
    %308 = vector.shape_cast %307 : vector<1x32x64xf32> to vector<32x64xf32>
    %cst_339 = arith.constant dense<0.000000e+00> : vector<64x64xf32>
    %309 = tpu.matmul %306, %308, %cst_339 {dimension_numbers = #tpu.dot_dimension_numbers<[1], [0], [0], [1], [0, 0, 1, 1], [], []>} : vector<64x32xf32>, vector<32x64xf32>, vector<64x64xf32> -> vector<64x64xf32>
    %310 = arith.addf %304, %309 : vector<64x64xf32>
    %c3_340 = arith.constant 3 : index
    %c10_341 = arith.constant 10 : index
    %c0_342 = arith.constant 0 : index
    %311 = vector.load %arg16[%c3_340, %c10_341, %c0_342] : memref<12x24x32xf32, #tpu.memory_space<vmem>>, vector<8x8x32xf32>
    %312 = vector.shape_cast %311 : vector<8x8x32xf32> to vector<64x32xf32>
    %c19_343 = arith.constant 19 : index
    %c0_344 = arith.constant 0 : index
    %c0_345 = arith.constant 0 : index
    %313 = vector.load %arg6[%c19_343, %c0_344, %c0_345] : memref<25x32x64xf32, #tpu.memory_space<vmem>>, vector<1x32x64xf32>
    %314 = vector.shape_cast %313 : vector<1x32x64xf32> to vector<32x64xf32>
    %cst_346 = arith.constant dense<0.000000e+00> : vector<64x64xf32>
    %315 = tpu.matmul %312, %314, %cst_346 {dimension_numbers = #tpu.dot_dimension_numbers<[1], [0], [0], [1], [0, 0, 1, 1], [], []>} : vector<64x32xf32>, vector<32x64xf32>, vector<64x64xf32> -> vector<64x64xf32>
    %316 = arith.addf %310, %315 : vector<64x64xf32>
    %c4_347 = arith.constant 4 : index
    %c6_348 = arith.constant 6 : index
    %c0_349 = arith.constant 0 : index
    %317 = vector.load %arg16[%c4_347, %c6_348, %c0_349] : memref<12x24x32xf32, #tpu.memory_space<vmem>>, vector<8x8x32xf32>
    %318 = vector.shape_cast %317 : vector<8x8x32xf32> to vector<64x32xf32>
    %c20_350 = arith.constant 20 : index
    %c0_351 = arith.constant 0 : index
    %c0_352 = arith.constant 0 : index
    %319 = vector.load %arg6[%c20_350, %c0_351, %c0_352] : memref<25x32x64xf32, #tpu.memory_space<vmem>>, vector<1x32x64xf32>
    %320 = vector.shape_cast %319 : vector<1x32x64xf32> to vector<32x64xf32>
    %cst_353 = arith.constant dense<0.000000e+00> : vector<64x64xf32>
    %321 = tpu.matmul %318, %320, %cst_353 {dimension_numbers = #tpu.dot_dimension_numbers<[1], [0], [0], [1], [0, 0, 1, 1], [], []>} : vector<64x32xf32>, vector<32x64xf32>, vector<64x64xf32> -> vector<64x64xf32>
    %322 = arith.addf %316, %321 : vector<64x64xf32>
    %c4_354 = arith.constant 4 : index
    %c7_355 = arith.constant 7 : index
    %c0_356 = arith.constant 0 : index
    %323 = vector.load %arg16[%c4_354, %c7_355, %c0_356] : memref<12x24x32xf32, #tpu.memory_space<vmem>>, vector<8x8x32xf32>
    %324 = vector.shape_cast %323 : vector<8x8x32xf32> to vector<64x32xf32>
    %c21_357 = arith.constant 21 : index
    %c0_358 = arith.constant 0 : index
    %c0_359 = arith.constant 0 : index
    %325 = vector.load %arg6[%c21_357, %c0_358, %c0_359] : memref<25x32x64xf32, #tpu.memory_space<vmem>>, vector<1x32x64xf32>
    %326 = vector.shape_cast %325 : vector<1x32x64xf32> to vector<32x64xf32>
    %cst_360 = arith.constant dense<0.000000e+00> : vector<64x64xf32>
    %327 = tpu.matmul %324, %326, %cst_360 {dimension_numbers = #tpu.dot_dimension_numbers<[1], [0], [0], [1], [0, 0, 1, 1], [], []>} : vector<64x32xf32>, vector<32x64xf32>, vector<64x64xf32> -> vector<64x64xf32>
    %328 = arith.addf %322, %327 : vector<64x64xf32>
    %c4_361 = arith.constant 4 : index
    %c8_362 = arith.constant 8 : index
    %c0_363 = arith.constant 0 : index
    %329 = vector.load %arg16[%c4_361, %c8_362, %c0_363] : memref<12x24x32xf32, #tpu.memory_space<vmem>>, vector<8x8x32xf32>
    %330 = vector.shape_cast %329 : vector<8x8x32xf32> to vector<64x32xf32>
    %c22_364 = arith.constant 22 : index
    %c0_365 = arith.constant 0 : index
    %c0_366 = arith.constant 0 : index
    %331 = vector.load %arg6[%c22_364, %c0_365, %c0_366] : memref<25x32x64xf32, #tpu.memory_space<vmem>>, vector<1x32x64xf32>
    %332 = vector.shape_cast %331 : vector<1x32x64xf32> to vector<32x64xf32>
    %cst_367 = arith.constant dense<0.000000e+00> : vector<64x64xf32>
    %333 = tpu.matmul %330, %332, %cst_367 {dimension_numbers = #tpu.dot_dimension_numbers<[1], [0], [0], [1], [0, 0, 1, 1], [], []>} : vector<64x32xf32>, vector<32x64xf32>, vector<64x64xf32> -> vector<64x64xf32>
    %334 = arith.addf %328, %333 : vector<64x64xf32>
    %c4_368 = arith.constant 4 : index
    %c9_369 = arith.constant 9 : index
    %c0_370 = arith.constant 0 : index
    %335 = vector.load %arg16[%c4_368, %c9_369, %c0_370] : memref<12x24x32xf32, #tpu.memory_space<vmem>>, vector<8x8x32xf32>
    %336 = vector.shape_cast %335 : vector<8x8x32xf32> to vector<64x32xf32>
    %c23_371 = arith.constant 23 : index
    %c0_372 = arith.constant 0 : index
    %c0_373 = arith.constant 0 : index
    %337 = vector.load %arg6[%c23_371, %c0_372, %c0_373] : memref<25x32x64xf32, #tpu.memory_space<vmem>>, vector<1x32x64xf32>
    %338 = vector.shape_cast %337 : vector<1x32x64xf32> to vector<32x64xf32>
    %cst_374 = arith.constant dense<0.000000e+00> : vector<64x64xf32>
    %339 = tpu.matmul %336, %338, %cst_374 {dimension_numbers = #tpu.dot_dimension_numbers<[1], [0], [0], [1], [0, 0, 1, 1], [], []>} : vector<64x32xf32>, vector<32x64xf32>, vector<64x64xf32> -> vector<64x64xf32>
    %340 = arith.addf %334, %339 : vector<64x64xf32>
    %c4_375 = arith.constant 4 : index
    %c10_376 = arith.constant 10 : index
    %c0_377 = arith.constant 0 : index
    %341 = vector.load %arg16[%c4_375, %c10_376, %c0_377] : memref<12x24x32xf32, #tpu.memory_space<vmem>>, vector<8x8x32xf32>
    %342 = vector.shape_cast %341 : vector<8x8x32xf32> to vector<64x32xf32>
    %c24_378 = arith.constant 24 : index
    %c0_379 = arith.constant 0 : index
    %c0_380 = arith.constant 0 : index
    %343 = vector.load %arg6[%c24_378, %c0_379, %c0_380] : memref<25x32x64xf32, #tpu.memory_space<vmem>>, vector<1x32x64xf32>
    %344 = vector.shape_cast %343 : vector<1x32x64xf32> to vector<32x64xf32>
    %cst_381 = arith.constant dense<0.000000e+00> : vector<64x64xf32>
    %345 = tpu.matmul %342, %344, %cst_381 {dimension_numbers = #tpu.dot_dimension_numbers<[1], [0], [0], [1], [0, 0, 1, 1], [], []>} : vector<64x32xf32>, vector<32x64xf32>, vector<64x64xf32> -> vector<64x64xf32>
    %346 = arith.addf %340, %345 : vector<64x64xf32>
    %c0_382 = arith.constant 0 : index
    %c0_383 = arith.constant 0 : index
    %c0_384 = arith.constant 0 : index
    %347 = vector.load %arg9[%c0_382, %c0_383, %c0_384] : memref<4x16x64xf32, #tpu.memory_space<vmem>>, vector<1x16x64xf32>
    %348 = vector.shape_cast %347 : vector<1x16x64xf32> to vector<16x64xf32>
    %cst_385 = arith.constant dense<0.000000e+00> : vector<16x64xf32>
    %349 = tpu.matmul %348, %346, %cst_385 {dimension_numbers = #tpu.dot_dimension_numbers<[1], [0], [0], [1], [0, 0, 1, 1], [], []>} : vector<16x64xf32>, vector<64x64xf32>, vector<16x64xf32> -> vector<16x64xf32>
    %c1_386 = arith.constant 1 : index
    %c0_387 = arith.constant 0 : index
    %c0_388 = arith.constant 0 : index
    %350 = vector.load %arg9[%c1_386, %c0_387, %c0_388] : memref<4x16x64xf32, #tpu.memory_space<vmem>>, vector<1x16x64xf32>
    %351 = vector.shape_cast %350 : vector<1x16x64xf32> to vector<16x64xf32>
    %cst_389 = arith.constant dense<0.000000e+00> : vector<16x64xf32>
    %352 = tpu.matmul %351, %346, %cst_389 {dimension_numbers = #tpu.dot_dimension_numbers<[1], [0], [0], [1], [0, 0, 1, 1], [], []>} : vector<16x64xf32>, vector<64x64xf32>, vector<16x64xf32> -> vector<16x64xf32>
    %353 = arith.maximumf %349, %352 : vector<16x64xf32>
    %c2_390 = arith.constant 2 : index
    %c0_391 = arith.constant 0 : index
    %c0_392 = arith.constant 0 : index
    %354 = vector.load %arg9[%c2_390, %c0_391, %c0_392] : memref<4x16x64xf32, #tpu.memory_space<vmem>>, vector<1x16x64xf32>
    %355 = vector.shape_cast %354 : vector<1x16x64xf32> to vector<16x64xf32>
    %cst_393 = arith.constant dense<0.000000e+00> : vector<16x64xf32>
    %356 = tpu.matmul %355, %346, %cst_393 {dimension_numbers = #tpu.dot_dimension_numbers<[1], [0], [0], [1], [0, 0, 1, 1], [], []>} : vector<16x64xf32>, vector<64x64xf32>, vector<16x64xf32> -> vector<16x64xf32>
    %357 = arith.maximumf %353, %356 : vector<16x64xf32>
    %c3_394 = arith.constant 3 : index
    %c0_395 = arith.constant 0 : index
    %c0_396 = arith.constant 0 : index
    %358 = vector.load %arg9[%c3_394, %c0_395, %c0_396] : memref<4x16x64xf32, #tpu.memory_space<vmem>>, vector<1x16x64xf32>
    %359 = vector.shape_cast %358 : vector<1x16x64xf32> to vector<16x64xf32>
    %cst_397 = arith.constant dense<0.000000e+00> : vector<16x64xf32>
    %360 = tpu.matmul %359, %346, %cst_397 {dimension_numbers = #tpu.dot_dimension_numbers<[1], [0], [0], [1], [0, 0, 1, 1], [], []>} : vector<16x64xf32>, vector<64x64xf32>, vector<16x64xf32> -> vector<16x64xf32>
    %361 = arith.maximumf %357, %360 : vector<16x64xf32>
    %c0_398 = arith.constant 0 : index
    %c0_399 = arith.constant 0 : index
    %362 = vector.load %arg7[%c0_398, %c0_399] : memref<1x64xf32, #tpu.memory_space<vmem>>, vector<1x64xf32>
    %363 = vector.broadcast %362 : vector<1x64xf32> to vector<16x64xf32>
    %364 = arith.addf %361, %363 : vector<16x64xf32>
    %c0_400 = arith.constant 0 : index
    %c0_401 = arith.constant 0 : index
    %365 = vector.load %arg11[%c0_400, %c0_401] : memref<1x64xf32, #tpu.memory_space<vmem>>, vector<1x64xf32>
    %366 = vector.extract_strided_slice %364 {offsets = [0, 0], sizes = [1, 64], strides = [1, 1]} : vector<16x64xf32> to vector<1x64xf32>
    %c0_402 = arith.constant 0 : index
    %c0_403 = arith.constant 0 : index
    %c0_404 = arith.constant 0 : index
    %367 = vector.load %arg10[%c0_402, %c0_403, %c0_404] : memref<16x64x64xf32, #tpu.memory_space<vmem>>, vector<1x64x64xf32>
    %368 = vector.shape_cast %367 : vector<1x64x64xf32> to vector<64x64xf32>
    %cst_405 = arith.constant dense<0.000000e+00> : vector<1x64xf32>
    %369 = tpu.matmul %366, %368, %cst_405 {dimension_numbers = #tpu.dot_dimension_numbers<[1], [0], [0], [1], [0, 0, 1, 1], [], []>} : vector<1x64xf32>, vector<64x64xf32>, vector<1x64xf32> -> vector<1x64xf32>
    %370 = arith.addf %365, %369 : vector<1x64xf32>
    %371 = vector.extract_strided_slice %364 {offsets = [1, 0], sizes = [1, 64], strides = [1, 1]} : vector<16x64xf32> to vector<1x64xf32>
    %c1_406 = arith.constant 1 : index
    %c0_407 = arith.constant 0 : index
    %c0_408 = arith.constant 0 : index
    %372 = vector.load %arg10[%c1_406, %c0_407, %c0_408] : memref<16x64x64xf32, #tpu.memory_space<vmem>>, vector<1x64x64xf32>
    %373 = vector.shape_cast %372 : vector<1x64x64xf32> to vector<64x64xf32>
    %cst_409 = arith.constant dense<0.000000e+00> : vector<1x64xf32>
    %374 = tpu.matmul %371, %373, %cst_409 {dimension_numbers = #tpu.dot_dimension_numbers<[1], [0], [0], [1], [0, 0, 1, 1], [], []>} : vector<1x64xf32>, vector<64x64xf32>, vector<1x64xf32> -> vector<1x64xf32>
    %375 = arith.addf %370, %374 : vector<1x64xf32>
    %376 = vector.extract_strided_slice %364 {offsets = [2, 0], sizes = [1, 64], strides = [1, 1]} : vector<16x64xf32> to vector<1x64xf32>
    %c2_410 = arith.constant 2 : index
    %c0_411 = arith.constant 0 : index
    %c0_412 = arith.constant 0 : index
    %377 = vector.load %arg10[%c2_410, %c0_411, %c0_412] : memref<16x64x64xf32, #tpu.memory_space<vmem>>, vector<1x64x64xf32>
    %378 = vector.shape_cast %377 : vector<1x64x64xf32> to vector<64x64xf32>
    %cst_413 = arith.constant dense<0.000000e+00> : vector<1x64xf32>
    %379 = tpu.matmul %376, %378, %cst_413 {dimension_numbers = #tpu.dot_dimension_numbers<[1], [0], [0], [1], [0, 0, 1, 1], [], []>} : vector<1x64xf32>, vector<64x64xf32>, vector<1x64xf32> -> vector<1x64xf32>
    %380 = arith.addf %375, %379 : vector<1x64xf32>
    %381 = vector.extract_strided_slice %364 {offsets = [3, 0], sizes = [1, 64], strides = [1, 1]} : vector<16x64xf32> to vector<1x64xf32>
    %c3_414 = arith.constant 3 : index
    %c0_415 = arith.constant 0 : index
    %c0_416 = arith.constant 0 : index
    %382 = vector.load %arg10[%c3_414, %c0_415, %c0_416] : memref<16x64x64xf32, #tpu.memory_space<vmem>>, vector<1x64x64xf32>
    %383 = vector.shape_cast %382 : vector<1x64x64xf32> to vector<64x64xf32>
    %cst_417 = arith.constant dense<0.000000e+00> : vector<1x64xf32>
    %384 = tpu.matmul %381, %383, %cst_417 {dimension_numbers = #tpu.dot_dimension_numbers<[1], [0], [0], [1], [0, 0, 1, 1], [], []>} : vector<1x64xf32>, vector<64x64xf32>, vector<1x64xf32> -> vector<1x64xf32>
    %385 = arith.addf %380, %384 : vector<1x64xf32>
    %386 = vector.extract_strided_slice %364 {offsets = [4, 0], sizes = [1, 64], strides = [1, 1]} : vector<16x64xf32> to vector<1x64xf32>
    %c4_418 = arith.constant 4 : index
    %c0_419 = arith.constant 0 : index
    %c0_420 = arith.constant 0 : index
    %387 = vector.load %arg10[%c4_418, %c0_419, %c0_420] : memref<16x64x64xf32, #tpu.memory_space<vmem>>, vector<1x64x64xf32>
    %388 = vector.shape_cast %387 : vector<1x64x64xf32> to vector<64x64xf32>
    %cst_421 = arith.constant dense<0.000000e+00> : vector<1x64xf32>
    %389 = tpu.matmul %386, %388, %cst_421 {dimension_numbers = #tpu.dot_dimension_numbers<[1], [0], [0], [1], [0, 0, 1, 1], [], []>} : vector<1x64xf32>, vector<64x64xf32>, vector<1x64xf32> -> vector<1x64xf32>
    %390 = arith.addf %385, %389 : vector<1x64xf32>
    %391 = vector.extract_strided_slice %364 {offsets = [5, 0], sizes = [1, 64], strides = [1, 1]} : vector<16x64xf32> to vector<1x64xf32>
    %c5_422 = arith.constant 5 : index
    %c0_423 = arith.constant 0 : index
    %c0_424 = arith.constant 0 : index
    %392 = vector.load %arg10[%c5_422, %c0_423, %c0_424] : memref<16x64x64xf32, #tpu.memory_space<vmem>>, vector<1x64x64xf32>
    %393 = vector.shape_cast %392 : vector<1x64x64xf32> to vector<64x64xf32>
    %cst_425 = arith.constant dense<0.000000e+00> : vector<1x64xf32>
    %394 = tpu.matmul %391, %393, %cst_425 {dimension_numbers = #tpu.dot_dimension_numbers<[1], [0], [0], [1], [0, 0, 1, 1], [], []>} : vector<1x64xf32>, vector<64x64xf32>, vector<1x64xf32> -> vector<1x64xf32>
    %395 = arith.addf %390, %394 : vector<1x64xf32>
    %396 = vector.extract_strided_slice %364 {offsets = [6, 0], sizes = [1, 64], strides = [1, 1]} : vector<16x64xf32> to vector<1x64xf32>
    %c6_426 = arith.constant 6 : index
    %c0_427 = arith.constant 0 : index
    %c0_428 = arith.constant 0 : index
    %397 = vector.load %arg10[%c6_426, %c0_427, %c0_428] : memref<16x64x64xf32, #tpu.memory_space<vmem>>, vector<1x64x64xf32>
    %398 = vector.shape_cast %397 : vector<1x64x64xf32> to vector<64x64xf32>
    %cst_429 = arith.constant dense<0.000000e+00> : vector<1x64xf32>
    %399 = tpu.matmul %396, %398, %cst_429 {dimension_numbers = #tpu.dot_dimension_numbers<[1], [0], [0], [1], [0, 0, 1, 1], [], []>} : vector<1x64xf32>, vector<64x64xf32>, vector<1x64xf32> -> vector<1x64xf32>
    %400 = arith.addf %395, %399 : vector<1x64xf32>
    %401 = vector.extract_strided_slice %364 {offsets = [7, 0], sizes = [1, 64], strides = [1, 1]} : vector<16x64xf32> to vector<1x64xf32>
    %c7_430 = arith.constant 7 : index
    %c0_431 = arith.constant 0 : index
    %c0_432 = arith.constant 0 : index
    %402 = vector.load %arg10[%c7_430, %c0_431, %c0_432] : memref<16x64x64xf32, #tpu.memory_space<vmem>>, vector<1x64x64xf32>
    %403 = vector.shape_cast %402 : vector<1x64x64xf32> to vector<64x64xf32>
    %cst_433 = arith.constant dense<0.000000e+00> : vector<1x64xf32>
    %404 = tpu.matmul %401, %403, %cst_433 {dimension_numbers = #tpu.dot_dimension_numbers<[1], [0], [0], [1], [0, 0, 1, 1], [], []>} : vector<1x64xf32>, vector<64x64xf32>, vector<1x64xf32> -> vector<1x64xf32>
    %405 = arith.addf %400, %404 : vector<1x64xf32>
    %406 = vector.extract_strided_slice %364 {offsets = [8, 0], sizes = [1, 64], strides = [1, 1]} : vector<16x64xf32> to vector<1x64xf32>
    %c8_434 = arith.constant 8 : index
    %c0_435 = arith.constant 0 : index
    %c0_436 = arith.constant 0 : index
    %407 = vector.load %arg10[%c8_434, %c0_435, %c0_436] : memref<16x64x64xf32, #tpu.memory_space<vmem>>, vector<1x64x64xf32>
    %408 = vector.shape_cast %407 : vector<1x64x64xf32> to vector<64x64xf32>
    %cst_437 = arith.constant dense<0.000000e+00> : vector<1x64xf32>
    %409 = tpu.matmul %406, %408, %cst_437 {dimension_numbers = #tpu.dot_dimension_numbers<[1], [0], [0], [1], [0, 0, 1, 1], [], []>} : vector<1x64xf32>, vector<64x64xf32>, vector<1x64xf32> -> vector<1x64xf32>
    %410 = arith.addf %405, %409 : vector<1x64xf32>
    %411 = vector.extract_strided_slice %364 {offsets = [9, 0], sizes = [1, 64], strides = [1, 1]} : vector<16x64xf32> to vector<1x64xf32>
    %c9_438 = arith.constant 9 : index
    %c0_439 = arith.constant 0 : index
    %c0_440 = arith.constant 0 : index
    %412 = vector.load %arg10[%c9_438, %c0_439, %c0_440] : memref<16x64x64xf32, #tpu.memory_space<vmem>>, vector<1x64x64xf32>
    %413 = vector.shape_cast %412 : vector<1x64x64xf32> to vector<64x64xf32>
    %cst_441 = arith.constant dense<0.000000e+00> : vector<1x64xf32>
    %414 = tpu.matmul %411, %413, %cst_441 {dimension_numbers = #tpu.dot_dimension_numbers<[1], [0], [0], [1], [0, 0, 1, 1], [], []>} : vector<1x64xf32>, vector<64x64xf32>, vector<1x64xf32> -> vector<1x64xf32>
    %415 = arith.addf %410, %414 : vector<1x64xf32>
    %416 = vector.extract_strided_slice %364 {offsets = [10, 0], sizes = [1, 64], strides = [1, 1]} : vector<16x64xf32> to vector<1x64xf32>
    %c10_442 = arith.constant 10 : index
    %c0_443 = arith.constant 0 : index
    %c0_444 = arith.constant 0 : index
    %417 = vector.load %arg10[%c10_442, %c0_443, %c0_444] : memref<16x64x64xf32, #tpu.memory_space<vmem>>, vector<1x64x64xf32>
    %418 = vector.shape_cast %417 : vector<1x64x64xf32> to vector<64x64xf32>
    %cst_445 = arith.constant dense<0.000000e+00> : vector<1x64xf32>
    %419 = tpu.matmul %416, %418, %cst_445 {dimension_numbers = #tpu.dot_dimension_numbers<[1], [0], [0], [1], [0, 0, 1, 1], [], []>} : vector<1x64xf32>, vector<64x64xf32>, vector<1x64xf32> -> vector<1x64xf32>
    %420 = arith.addf %415, %419 : vector<1x64xf32>
    %421 = vector.extract_strided_slice %364 {offsets = [11, 0], sizes = [1, 64], strides = [1, 1]} : vector<16x64xf32> to vector<1x64xf32>
    %c11_446 = arith.constant 11 : index
    %c0_447 = arith.constant 0 : index
    %c0_448 = arith.constant 0 : index
    %422 = vector.load %arg10[%c11_446, %c0_447, %c0_448] : memref<16x64x64xf32, #tpu.memory_space<vmem>>, vector<1x64x64xf32>
    %423 = vector.shape_cast %422 : vector<1x64x64xf32> to vector<64x64xf32>
    %cst_449 = arith.constant dense<0.000000e+00> : vector<1x64xf32>
    %424 = tpu.matmul %421, %423, %cst_449 {dimension_numbers = #tpu.dot_dimension_numbers<[1], [0], [0], [1], [0, 0, 1, 1], [], []>} : vector<1x64xf32>, vector<64x64xf32>, vector<1x64xf32> -> vector<1x64xf32>
    %425 = arith.addf %420, %424 : vector<1x64xf32>
    %426 = vector.extract_strided_slice %364 {offsets = [12, 0], sizes = [1, 64], strides = [1, 1]} : vector<16x64xf32> to vector<1x64xf32>
    %c12_450 = arith.constant 12 : index
    %c0_451 = arith.constant 0 : index
    %c0_452 = arith.constant 0 : index
    %427 = vector.load %arg10[%c12_450, %c0_451, %c0_452] : memref<16x64x64xf32, #tpu.memory_space<vmem>>, vector<1x64x64xf32>
    %428 = vector.shape_cast %427 : vector<1x64x64xf32> to vector<64x64xf32>
    %cst_453 = arith.constant dense<0.000000e+00> : vector<1x64xf32>
    %429 = tpu.matmul %426, %428, %cst_453 {dimension_numbers = #tpu.dot_dimension_numbers<[1], [0], [0], [1], [0, 0, 1, 1], [], []>} : vector<1x64xf32>, vector<64x64xf32>, vector<1x64xf32> -> vector<1x64xf32>
    %430 = arith.addf %425, %429 : vector<1x64xf32>
    %431 = vector.extract_strided_slice %364 {offsets = [13, 0], sizes = [1, 64], strides = [1, 1]} : vector<16x64xf32> to vector<1x64xf32>
    %c13_454 = arith.constant 13 : index
    %c0_455 = arith.constant 0 : index
    %c0_456 = arith.constant 0 : index
    %432 = vector.load %arg10[%c13_454, %c0_455, %c0_456] : memref<16x64x64xf32, #tpu.memory_space<vmem>>, vector<1x64x64xf32>
    %433 = vector.shape_cast %432 : vector<1x64x64xf32> to vector<64x64xf32>
    %cst_457 = arith.constant dense<0.000000e+00> : vector<1x64xf32>
    %434 = tpu.matmul %431, %433, %cst_457 {dimension_numbers = #tpu.dot_dimension_numbers<[1], [0], [0], [1], [0, 0, 1, 1], [], []>} : vector<1x64xf32>, vector<64x64xf32>, vector<1x64xf32> -> vector<1x64xf32>
    %435 = arith.addf %430, %434 : vector<1x64xf32>
    %436 = vector.extract_strided_slice %364 {offsets = [14, 0], sizes = [1, 64], strides = [1, 1]} : vector<16x64xf32> to vector<1x64xf32>
    %c14_458 = arith.constant 14 : index
    %c0_459 = arith.constant 0 : index
    %c0_460 = arith.constant 0 : index
    %437 = vector.load %arg10[%c14_458, %c0_459, %c0_460] : memref<16x64x64xf32, #tpu.memory_space<vmem>>, vector<1x64x64xf32>
    %438 = vector.shape_cast %437 : vector<1x64x64xf32> to vector<64x64xf32>
    %cst_461 = arith.constant dense<0.000000e+00> : vector<1x64xf32>
    %439 = tpu.matmul %436, %438, %cst_461 {dimension_numbers = #tpu.dot_dimension_numbers<[1], [0], [0], [1], [0, 0, 1, 1], [], []>} : vector<1x64xf32>, vector<64x64xf32>, vector<1x64xf32> -> vector<1x64xf32>
    %440 = arith.addf %435, %439 : vector<1x64xf32>
    %441 = vector.extract_strided_slice %364 {offsets = [15, 0], sizes = [1, 64], strides = [1, 1]} : vector<16x64xf32> to vector<1x64xf32>
    %c15_462 = arith.constant 15 : index
    %c0_463 = arith.constant 0 : index
    %c0_464 = arith.constant 0 : index
    %442 = vector.load %arg10[%c15_462, %c0_463, %c0_464] : memref<16x64x64xf32, #tpu.memory_space<vmem>>, vector<1x64x64xf32>
    %443 = vector.shape_cast %442 : vector<1x64x64xf32> to vector<64x64xf32>
    %cst_465 = arith.constant dense<0.000000e+00> : vector<1x64xf32>
    %444 = tpu.matmul %441, %443, %cst_465 {dimension_numbers = #tpu.dot_dimension_numbers<[1], [0], [0], [1], [0, 0, 1, 1], [], []>} : vector<1x64xf32>, vector<64x64xf32>, vector<1x64xf32> -> vector<1x64xf32>
    %445 = arith.addf %440, %444 : vector<1x64xf32>
    %c0_466 = arith.constant 0 : index
    %c0_467 = arith.constant 0 : index
    %446 = vector.load %arg12[%c0_466, %c0_467] : memref<64x128xf32, #tpu.memory_space<vmem>>, vector<64x128xf32>
    %cst_468 = arith.constant dense<0.000000e+00> : vector<1x128xf32>
    %447 = tpu.matmul %445, %446, %cst_468 {dimension_numbers = #tpu.dot_dimension_numbers<[1], [0], [0], [1], [0, 0, 1, 1], [], []>} : vector<1x64xf32>, vector<64x128xf32>, vector<1x128xf32> -> vector<1x128xf32>
    %c0_469 = arith.constant 0 : index
    %c0_470 = arith.constant 0 : index
    %448 = vector.load %arg13[%c0_469, %c0_470] : memref<1x128xf32, #tpu.memory_space<vmem>>, vector<1x128xf32>
    %449 = arith.addf %447, %448 : vector<1x128xf32>
    %450 = vector.shape_cast %449 : vector<1x128xf32> to vector<1x128xf32>
    %451 = vector.broadcast %450 : vector<1x128xf32> to vector<8x128xf32>
    %c0_471 = arith.constant 0 : index
    %c0_472 = arith.constant 0 : index
    %c0_473 = arith.constant 0 : index
    %452 = vector.load %arg14[%c0_471, %c0_472, %c0_473] : memref<1x8x128xf32, #tpu.memory_space<vmem>>, vector<1x8x128xf32>
    %453 = vector.shape_cast %452 : vector<1x8x128xf32> to vector<8x128xf32>
    %454 = vector.shape_cast %451 : vector<8x128xf32> to vector<1x8x128xf32>
    tpu.vector_store %arg14[%c0_471, %c0_472, %c0_473], %454 {strides = array<i32>} : memref<1x8x128xf32, #tpu.memory_space<vmem>>, vector<1x8x128xf32>,
    return
  }
  func.func @transform_0(%arg0: i32) -> (i32, i32, i32, i32) {
    %c0_i32 = arith.constant 0 : i32
    %c0_i32_0 = arith.constant 0 : i32
    %c0_i32_1 = arith.constant 0 : i32
    %c0_i32_2 = arith.constant 0 : i32
    return %arg0, %c0_i32, %c0_i32_0, %c0_i32_1 : i32, i32, i32, i32
  }
  func.func @transform_1(%arg0: i32) -> (i32, i32) {
    %c0_i32 = arith.constant 0 : i32
    %c0_i32_0 = arith.constant 0 : i32
    %c0_i32_1 = arith.constant 0 : i32
    return %c0_i32, %c0_i32_0 : i32, i32
  }
  func.func @transform_2(%arg0: i32) -> (i32, i32) {
    %c0_i32 = arith.constant 0 : i32
    %c0_i32_0 = arith.constant 0 : i32
    %c0_i32_1 = arith.constant 0 : i32
    return %c0_i32, %c0_i32_0 : i32, i32
  }
  func.func @transform_3(%arg0: i32) -> (i32, i32, i32) {
    %c0_i32 = arith.constant 0 : i32
    %c0_i32_0 = arith.constant 0 : i32
    %c0_i32_1 = arith.constant 0 : i32
    %c0_i32_2 = arith.constant 0 : i32
    return %c0_i32, %c0_i32_0, %c0_i32_1 : i32, i32, i32
  }
  func.func @transform_4(%arg0: i32) -> (i32, i32) {
    %c0_i32 = arith.constant 0 : i32
    %c0_i32_0 = arith.constant 0 : i32
    %c0_i32_1 = arith.constant 0 : i32
    return %c0_i32, %c0_i32_0 : i32, i32
  }
  func.func @transform_5(%arg0: i32) -> (i32, i32, i32) {
    %c0_i32 = arith.constant 0 : i32
    %c0_i32_0 = arith.constant 0 : i32
    %c0_i32_1 = arith.constant 0 : i32
    %c0_i32_2 = arith.constant 0 : i32
    return %c0_i32, %c0_i32_0, %c0_i32_1 : i32, i32, i32
  }
  func.func @transform_6(%arg0: i32) -> (i32, i32) {
    %c0_i32 = arith.constant 0 : i32
    %c0_i32_0 = arith.constant 0 : i32
    %c0_i32_1 = arith.constant 0 : i32
    return %c0_i32, %c0_i32_0 : i32, i32
  }
  func.func @transform_7(%arg0: i32) -> (i32, i32, i32) {
    %c0_i32 = arith.constant 0 : i32
    %c0_i32_0 = arith.constant 0 : i32
    %c0_i32_1 = arith.constant 0 : i32
    %c0_i32_2 = arith.constant 0 : i32
    return %c0_i32, %c0_i32_0, %c0_i32_1 : i32, i32, i32
  }
  func.func @transform_8(%arg0: i32) -> (i32, i32, i32) {
    %c0_i32 = arith.constant 0 : i32
    %c0_i32_0 = arith.constant 0 : i32
    %c0_i32_1 = arith.constant 0 : i32
    %c0_i32_2 = arith.constant 0 : i32
    return %c0_i32, %c0_i32_0, %c0_i32_1 : i32, i32, i32
  }
  func.func @transform_9(%arg0: i32) -> (i32, i32, i32) {
    %c0_i32 = arith.constant 0 : i32
    %c0_i32_0 = arith.constant 0 : i32
    %c0_i32_1 = arith.constant 0 : i32
    %c0_i32_2 = arith.constant 0 : i32
    return %c0_i32, %c0_i32_0, %c0_i32_1 : i32, i32, i32
  }
  func.func @transform_10(%arg0: i32) -> (i32, i32) {
    %c0_i32 = arith.constant 0 : i32
    %c0_i32_0 = arith.constant 0 : i32
    %c0_i32_1 = arith.constant 0 : i32
    return %c0_i32, %c0_i32_0 : i32, i32
  }
  func.func @transform_11(%arg0: i32) -> (i32, i32) {
    %c0_i32 = arith.constant 0 : i32
    %c0_i32_0 = arith.constant 0 : i32
    %c0_i32_1 = arith.constant 0 : i32
    return %c0_i32, %c0_i32_0 : i32, i32
  }
  func.func @transform_12(%arg0: i32) -> (i32, i32) {
    %c0_i32 = arith.constant 0 : i32
    %c0_i32_0 = arith.constant 0 : i32
    %c0_i32_1 = arith.constant 0 : i32
    return %c0_i32, %c0_i32_0 : i32, i32
  }
  func.func @transform_13(%arg0: i32) -> (i32, i32, i32) {
    %c0_i32 = arith.constant 0 : i32
    %c0_i32_0 = arith.constant 0 : i32
    %c0_i32_1 = arith.constant 0 : i32
    return %arg0, %c0_i32, %c0_i32_0 : i32, i32, i32
  }
}

</mosaic_0001>

<llo_original>
// kernel: my_model_forward.1
$region0: #{my_model_forward.1}
  #allocation0 [shape = 'u32[]', space=smem, size = 0x4, offset = 0x4, fixed_abs, tag = 'smem constant byte address 0x4 - core index']
  #allocation1 [shape = 'u32[72,128]{1,0:T(1,128)}', space=vmem, size = 0x9000, scoped, tag = 'internal scratch']
  #allocation2 [shape = 'f32[20,32,32]{2,1,0:T(8,128)}', space=vmem, size = 0x50000, scoped, tag = 'scratch operand']
  #allocation3 [shape = 'f32[12,24,32]{2,1,0:T(8,128)}', space=vmem, size = 0x24000, scoped, tag = 'scratch operand']
  %s0 = inlined_call_operand.vmem [shape: f32[2,4,256,128], index: 0, kind: input, shape index: {}]
  %s1 = inlined_call_operand.vmem [shape: f32[128,32], index: 1, kind: input, shape index: {}]
  %s2 = inlined_call_operand.vmem [shape: f32[1,32], index: 2, kind: input, shape index: {}]
  %s3 = inlined_call_operand.vmem [shape: f32[25,32,32], index: 3, kind: input, shape index: {}]
  %s4 = inlined_call_operand.vmem [shape: f32[1,32], index: 4, kind: input, shape index: {}]
  %s5 = inlined_call_operand.vmem [shape: f32[25,32,64], index: 5, kind: input, shape index: {}]
  %s6 = inlined_call_operand.vmem [shape: f32[1,64], index: 6, kind: input, shape index: {}]
  %s7 = inlined_call_operand.vmem [shape: f32[4,64,256], index: 7, kind: input, shape index: {}]
  %s8 = inlined_call_operand.vmem [shape: f32[4,16,64], index: 8, kind: input, shape index: {}]
  %s9 = inlined_call_operand.vmem [shape: f32[16,64,64], index: 9, kind: input, shape index: {}]
  %s10 = inlined_call_operand.vmem [shape: f32[1,64], index: 10, kind: input, shape index: {}]
  %s11 = inlined_call_operand.vmem [shape: f32[64,128], index: 11, kind: input, shape index: {}]
  %s12 = inlined_call_operand.vmem [shape: f32[1,128], index: 12, kind: input, shape index: {}]
  %s13 = inlined_call_operand.vmem [shape: f32[2,8,128], index: 13, kind: output, shape index: {}]
  %s14 = sld [smem:[#allocation0]]
  $region85: #{my_model_forward.1} parent=0
    _
  %s16 = ssub.s32 1, %s14
  %s17 = scalar_select 0, %s16, %s14
  loop: start=0, step=1, limit=4
  $region2: #{my_model_forward.1} parent=0 // loop_pre_header
    _
  $region3: #{my_model_forward.1} parent=0 // loop_header
    %s19 = sphi 0, %s23
    %p20 = scmp.ge.s32.totalorder %s19, 4
    %s29 = sphi 0, %s31
    %s32 = sphi 0, %s29
    %s33 = sphi 0, %s32
    %s49 = sphi 0, %s33
    %s53 = sphi 0, %s53
    %s55 = sphi 0, %s53
    %s56 = sphi 0, %s55
    %s70 = sphi 0, %s56
    %s74 = sphi 0, %s74
    %s76 = sphi 0, %s74
    %s77 = sphi 0, %s76
    %s91 = sphi 0, %s77
    %s95 = sphi 0, %s95
    %s97 = sphi 0, %s95
    %s98 = sphi 0, %s97
    %s112 = sphi 0, %s98
    %s116 = sphi 0, %s116
    %s118 = sphi 0, %s116
    %s119 = sphi 0, %s118
    %s133 = sphi 0, %s119
    %s137 = sphi 0, %s137
    %s139 = sphi 0, %s137
    %s140 = sphi 0, %s139
    %s154 = sphi 0, %s140
    %s158 = sphi 0, %s158
    %s160 = sphi 0, %s158
    %s161 = sphi 0, %s160
    %s175 = sphi 0, %s161
    %s179 = sphi 0, %s179
    %s181 = sphi 0, %s179
    %s182 = sphi 0, %s181
    %s196 = sphi 0, %s182
    %s200 = sphi 0, %s200
    %s202 = sphi 0, %s200
    %s203 = sphi 0, %s202
    %s217 = sphi 0, %s203
    %s221 = sphi 0, %s221
    %s223 = sphi 0, %s221
    %s224 = sphi 0, %s223
    %s238 = sphi 0, %s224
    %s242 = sphi 0, %s242
    %s244 = sphi 0, %s242
    %s245 = sphi 0, %s244
    %s259 = sphi 0, %s245
    %s263 = sphi 0, %s263
    %s265 = sphi 0, %s263
    %s266 = sphi 0, %s265
    %s280 = sphi 0, %s266
    %s284 = sphi 0, %s284
    %s286 = sphi 0, %s284
    %s287 = sphi 0, %s286
    %s301 = sphi 0, %s287
    %s307 = sphi 0, %s309
    %s310 = sphi 0, %s307
    %s311 = sphi 0, %s310
    %s327 = sphi 0, %s311
  $region4: #{my_model_forward.1} parent=0 // loop_header_branch
    %22 = sbr.rel (%p20) target = $region8
  $region5: #{my_model_forward.1} parent=0 // loop_body
    %s24 = ssub.s32 %s19, 1
    %s25 = ssub.s32 %s19, 2
    %s26 = sadd.s32 %s19, 1
    %s27 = ssub.s32 %s19, %s26
    %p28 = scmp.eq.s32.totalorder %s27, 0
    %s30 = sadd.s32 %s29, 1
    %s31 = scalar_select %p28, %s29, %s30
    %p34 = pneg %p28
    %p35 = scmp.eq.s32.totalorder %s19, 1
    %p36 = por %p34, %p35
    %p37 = scmp.ne.s32.totalorder %s29, %s32
    %p38 = scmp.eq.s32.totalorder %s19, 0
    %p39 = por %p37, %p38
    %p40 = scmp.ne.s32.totalorder %s29, %s32
    %p41 = scmp.eq.s32.totalorder %s24, 1
    %p42 = por %p40, %p41
    %p43 = scmp.ne.s32.totalorder %s32, %s33
    %p44 = scmp.eq.s32.totalorder %s24, 0
    %p45 = por %p43, %p44
    %p46 = scmp.ne.s32.totalorder %s32, %s33
    %p47 = scmp.eq.s32.totalorder %s25, 1
    %p48 = por %p46, %p47
    %p50 = scmp.ne.s32.totalorder %s33, %s49
    %p51 = scmp.eq.s32.totalorder %s25, 0
    %p52 = por %p50, %p51
    %s54 = sadd.s32 %s53, 1
    %p57 = scmp.eq.s32.totalorder %s19, 1
    %p58 = scmp.ne.s32.totalorder %s53, %s55
    %p59 = scmp.eq.s32.totalorder %s19, 0
    %p60 = por %p58, %p59
    %p61 = scmp.ne.s32.totalorder %s53, %s55
    %p62 = scmp.eq.s32.totalorder %s24, 1
    %p63 = por %p61, %p62
    %p64 = scmp.ne.s32.totalorder %s55, %s56
    %p65 = scmp.eq.s32.totalorder %s24, 0
    %p66 = por %p64, %p65
    %p67 = scmp.ne.s32.totalorder %s55, %s56
    %p68 = scmp.eq.s32.totalorder %s25, 1
    %p69 = por %p67, %p68
    %p71 = scmp.ne.s32.totalorder %s56, %s70
    %p72 = scmp.eq.s32.totalorder %s25, 0
    %p73 = por %p71, %p72
    %s75 = sadd.s32 %s74, 1
    %p78 = scmp.eq.s32.totalorder %s19, 1
    %p79 = scmp.ne.s32.totalorder %s74, %s76
    %p80 = scmp.eq.s32.totalorder %s19, 0
    %p81 = por %p79, %p80
    %p82 = scmp.ne.s32.totalorder %s74, %s76
    %p83 = scmp.eq.s32.totalorder %s24, 1
    %p84 = por %p82, %p83
    %p85 = scmp.ne.s32.totalorder %s76, %s77
    %p86 = scmp.eq.s32.totalorder %s24, 0
    %p87 = por %p85, %p86
    %p88 = scmp.ne.s32.totalorder %s76, %s77
    %p89 = scmp.eq.s32.totalorder %s25, 1
    %p90 = por %p88, %p89
    %p92 = scmp.ne.s32.totalorder %s77, %s91
    %p93 = scmp.eq.s32.totalorder %s25, 0
    %p94 = por %p92, %p93
    %s96 = sadd.s32 %s95, 1
    %p99 = scmp.eq.s32.totalorder %s19, 1
    %p100 = scmp.ne.s32.totalorder %s95, %s97
    %p101 = scmp.eq.s32.totalorder %s19, 0
    %p102 = por %p100, %p101
    %p103 = scmp.ne.s32.totalorder %s95, %s97
    %p104 = scmp.eq.s32.totalorder %s24, 1
    %p105 = por %p103, %p104
    %p106 = scmp.ne.s32.totalorder %s97, %s98
    %p107 = scmp.eq.s32.totalorder %s24, 0
    %p108 = por %p106, %p107
    %p109 = scmp.ne.s32.totalorder %s97, %s98
    %p110 = scmp.eq.s32.totalorder %s25, 1
    %p111 = por %p109, %p110
    %p113 = scmp.ne.s32.totalorder %s98, %s112
    %p114 = scmp.eq.s32.totalorder %s25, 0
    %p115 = por %p113, %p114
    %s117 = sadd.s32 %s116, 1
    %p120 = scmp.eq.s32.totalorder %s19, 1
    %p121 = scmp.ne.s32.totalorder %s116, %s118
    %p122 = scmp.eq.s32.totalorder %s19, 0
    %p123 = por %p121, %p122
    %p124 = scmp.ne.s32.totalorder %s116, %s118
    %p125 = scmp.eq.s32.totalorder %s24, 1
    %p126 = por %p124, %p125
    %p127 = scmp.ne.s32.totalorder %s118, %s119
    %p128 = scmp.eq.s32.totalorder %s24, 0
    %p129 = por %p127, %p128
    %p130 = scmp.ne.s32.totalorder %s118, %s119
    %p131 = scmp.eq.s32.totalorder %s25, 1
    %p132 = por %p130, %p131
    %p134 = scmp.ne.s32.totalorder %s119, %s133
    %p135 = scmp.eq.s32.totalorder %s25, 0
    %p136 = por %p134, %p135
    %s138 = sadd.s32 %s137, 1
    %p141 = scmp.eq.s32.totalorder %s19, 1
    %p142 = scmp.ne.s32.totalorder %s137, %s139
    %p143 = scmp.eq.s32.totalorder %s19, 0
    %p144 = por %p142, %p143
    %p145 = scmp.ne.s32.totalorder %s137, %s139
    %p146 = scmp.eq.s32.totalorder %s24, 1
    %p147 = por %p145, %p146
    %p148 = scmp.ne.s32.totalorder %s139, %s140
    %p149 = scmp.eq.s32.totalorder %s24, 0
    %p150 = por %p148, %p149
    %p151 = scmp.ne.s32.totalorder %s139, %s140
    %p152 = scmp.eq.s32.totalorder %s25, 1
    %p153 = por %p151, %p152
    %p155 = scmp.ne.s32.totalorder %s140, %s154
    %p156 = scmp.eq.s32.totalorder %s25, 0
    %p157 = por %p155, %p156
    %s159 = sadd.s32 %s158, 1
    %p162 = scmp.eq.s32.totalorder %s19, 1
    %p163 = scmp.ne.s32.totalorder %s158, %s160
    %p164 = scmp.eq.s32.totalorder %s19, 0
    %p165 = por %p163, %p164
    %p166 = scmp.ne.s32.totalorder %s158, %s160
    %p167 = scmp.eq.s32.totalorder %s24, 1
    %p168 = por %p166, %p167
    %p169 = scmp.ne.s32.totalorder %s160, %s161
    %p170 = scmp.eq.s32.totalorder %s24, 0
    %p171 = por %p169, %p170
    %p172 = scmp.ne.s32.totalorder %s160, %s161
    %p173 = scmp.eq.s32.totalorder %s25, 1
    %p174 = por %p172, %p173
    %p176 = scmp.ne.s32.totalorder %s161, %s175
    %p177 = scmp.eq.s32.totalorder %s25, 0
    %p178 = por %p176, %p177
    %s180 = sadd.s32 %s179, 1
    %p183 = scmp.eq.s32.totalorder %s19, 1
    %p184 = scmp.ne.s32.totalorder %s179, %s181
    %p185 = scmp.eq.s32.totalorder %s19, 0
    %p186 = por %p184, %p185
    %p187 = scmp.ne.s32.totalorder %s179, %s181
    %p188 = scmp.eq.s32.totalorder %s24, 1
    %p189 = por %p187, %p188
    %p190 = scmp.ne.s32.totalorder %s181, %s182
    %p191 = scmp.eq.s32.totalorder %s24, 0
    %p192 = por %p190, %p191
    %p193 = scmp.ne.s32.totalorder %s181, %s182
    %p194 = scmp.eq.s32.totalorder %s25, 1
    %p195 = por %p193, %p194
    %p197 = scmp.ne.s32.totalorder %s182, %s196
    %p198 = scmp.eq.s32.totalorder %s25, 0
    %p199 = por %p197, %p198
    %s201 = sadd.s32 %s200, 1
    %p204 = scmp.eq.s32.totalorder %s19, 1
    %p205 = scmp.ne.s32.totalorder %s200, %s202
    %p206 = scmp.eq.s32.totalorder %s19, 0
    %p207 = por %p205, %p206
    %p208 = scmp.ne.s32.totalorder %s200, %s202
    %p209 = scmp.eq.s32.totalorder %s24, 1
    %p210 = por %p208, %p209
    %p211 = scmp.ne.s32.totalorder %s202, %s203
    %p212 = scmp.eq.s32.totalorder %s24, 0
    %p213 = por %p211, %p212
    %p214 = scmp.ne.s32.totalorder %s202, %s203
    %p215 = scmp.eq.s32.totalorder %s25, 1
    %p216 = por %p214, %p215
    %p218 = scmp.ne.s32.totalorder %s203, %s217
    %p219 = scmp.eq.s32.totalorder %s25, 0
    %p220 = por %p218, %p219
    %s222 = sadd.s32 %s221, 1
    %p225 = scmp.eq.s32.totalorder %s19, 1
    %p226 = scmp.ne.s32.totalorder %s221, %s223
    %p227 = scmp.eq.s32.totalorder %s19, 0
    %p228 = por %p226, %p227
    %p229 = scmp.ne.s32.totalorder %s221, %s223
    %p230 = scmp.eq.s32.totalorder %s24, 1
    %p231 = por %p229, %p230
    %p232 = scmp.ne.s32.totalorder %s223, %s224
    %p233 = scmp.eq.s32.totalorder %s24, 0
    %p234 = por %p232, %p233
    %p235 = scmp.ne.s32.totalorder %s223, %s224
    %p236 = scmp.eq.s32.totalorder %s25, 1
    %p237 = por %p235, %p236
    %p239 = scmp.ne.s32.totalorder %s224, %s238
    %p240 = scmp.eq.s32.totalorder %s25, 0
    %p241 = por %p239, %p240
    %s243 = sadd.s32 %s242, 1
    %p246 = scmp.eq.s32.totalorder %s19, 1
    %p247 = scmp.ne.s32.totalorder %s242, %s244
    %p248 = scmp.eq.s32.totalorder %s19, 0
    %p249 = por %p247, %p248
    %p250 = scmp.ne.s32.totalorder %s242, %s244
    %p251 = scmp.eq.s32.totalorder %s24, 1
    %p252 = por %p250, %p251
    %p253 = scmp.ne.s32.totalorder %s244, %s245
    %p254 = scmp.eq.s32.totalorder %s24, 0
    %p255 = por %p253, %p254
    %p256 = scmp.ne.s32.totalorder %s244, %s245
    %p257 = scmp.eq.s32.totalorder %s25, 1
    %p258 = por %p256, %p257
    %p260 = scmp.ne.s32.totalorder %s245, %s259
    %p261 = scmp.eq.s32.totalorder %s25, 0
    %p262 = por %p260, %p261
    %s264 = sadd.s32 %s263, 1
    %p267 = scmp.eq.s32.totalorder %s19, 1
    %p268 = scmp.ne.s32.totalorder %s263, %s265
    %p269 = scmp.eq.s32.totalorder %s19, 0
    %p270 = por %p268, %p269
    %p271 = scmp.ne.s32.totalorder %s263, %s265
    %p272 = scmp.eq.s32.totalorder %s24, 1
    %p273 = por %p271, %p272
    %p274 = scmp.ne.s32.totalorder %s265, %s266
    %p275 = scmp.eq.s32.totalorder %s24, 0
    %p276 = por %p274, %p275
    %p277 = scmp.ne.s32.totalorder %s265, %s266
    %p278 = scmp.eq.s32.totalorder %s25, 1
    %p279 = por %p277, %p278
    %p281 = scmp.ne.s32.totalorder %s266, %s280
    %p282 = scmp.eq.s32.totalorder %s25, 0
    %p283 = por %p281, %p282
    %s285 = sadd.s32 %s284, 1
    %p288 = scmp.eq.s32.totalorder %s19, 1
    %p289 = scmp.ne.s32.totalorder %s284, %s286
    %p290 = scmp.eq.s32.totalorder %s19, 0
    %p291 = por %p289, %p290
    %p292 = scmp.ne.s32.totalorder %s284, %s286
    %p293 = scmp.eq.s32.totalorder %s24, 1
    %p294 = por %p292, %p293
    %p295 = scmp.ne.s32.totalorder %s286, %s287
    %p296 = scmp.eq.s32.totalorder %s24, 0
    %p297 = por %p295, %p296
    %p298 = scmp.ne.s32.totalorder %s286, %s287
    %p299 = scmp.eq.s32.totalorder %s25, 1
    %p300 = por %p298, %p299
    %p302 = scmp.ne.s32.totalorder %s287, %s301
    %p303 = scmp.eq.s32.totalorder %s25, 0
    %p304 = por %p302, %p303
    %s305 = ssub.s32 %s19, %s26
    %p306 = scmp.eq.s32.totalorder %s305, 0
    %s308 = sadd.s32 %s307, 1
    %s309 = scalar_select %p306, %s307, %s308
    %p312 = pneg %p306
    %p313 = scmp.eq.s32.totalorder %s19, 1
    %p314 = por %p312, %p313
    %p315 = scmp.ne.s32.totalorder %s307, %s310
    %p316 = scmp.eq.s32.totalorder %s19, 0
    %p317 = por %p315, %p316
    %p318 = scmp.ne.s32.totalorder %s307, %s310
    %p319 = scmp.eq.s32.totalorder %s24, 1
    %p320 = por %p318, %p319
    %p321 = scmp.ne.s32.totalorder %s310, %s311
    %p322 = scmp.eq.s32.totalorder %s24, 0
    %p323 = por %p321, %p322
    %p324 = scmp.ne.s32.totalorder %s310, %s311
    %p325 = scmp.eq.s32.totalorder %s25, 1
    %p326 = por %p324, %p325
    %p328 = scmp.ne.s32.totalorder %s311, %s327
    %p329 = scmp.eq.s32.totalorder %s25, 0
    %p330 = por %p328, %p329
    %p331 = scmp.le.s32.totalorder 1, %s19
    %p332 = scmp.lt.s32.totalorder %s19, 3
    %p333 = pnand %p331, %p332
    %p334 = pneg %p333
    // Predicated region
    $region9: #{my_model_forward.1} parent=5 // pred_check
      _
    $region10: #{my_model_forward.1} parent=5 // pred_check_branch
      %336 = sbr.rel (%p333) target = $region12
    $region11: #{my_model_forward.1} parent=5 // pred_region
      %s337 = ssub.s32 %s19, 1
      // Predicated region
      $region13: #{my_model_forward.1} parent=11 // pred_check
        %p338 = pneg %p66
      $region14: #{my_model_forward.1} parent=11 // pred_check_branch
        %340 = sbr.rel (%p338) target = $region16
      $region15: #{my_model_forward.1} parent=11 // pred_region
        _
      $region16: #{my_model_forward.1} parent=11 // pred_fallthru
        _
      // Predicated region
      $region17: #{my_model_forward.1} parent=11 // pred_check
        %p341 = pneg %p87
      $region18: #{my_model_forward.1} parent=11 // pred_check_branch
        %343 = sbr.rel (%p341) target = $region20
      $region19: #{my_model_forward.1} parent=11 // pred_region
        _
      $region20: #{my_model_forward.1} parent=11 // pred_fallthru
        _
      // Predicated region
      $region21: #{my_model_forward.1} parent=11 // pred_check
        %p344 = pneg %p108
      $region22: #{my_model_forward.1} parent=11 // pred_check_branch
        %346 = sbr.rel (%p344) target = $region24
      $region23: #{my_model_forward.1} parent=11 // pred_region
        _
      $region24: #{my_model_forward.1} parent=11 // pred_fallthru
        _
      // Predicated region
      $region25: #{my_model_forward.1} parent=11 // pred_check
        %p347 = pneg %p129
      $region26: #{my_model_forward.1} parent=11 // pred_check_branch
        %349 = sbr.rel (%p347) target = $region28
      $region27: #{my_model_forward.1} parent=11 // pred_region
        _
      $region28: #{my_model_forward.1} parent=11 // pred_fallthru
        _
      // Predicated region
      $region29: #{my_model_forward.1} parent=11 // pred_check
        %p350 = pneg %p150
      $region30: #{my_model_forward.1} parent=11 // pred_check_branch
        %352 = sbr.rel (%p350) target = $region32
      $region31: #{my_model_forward.1} parent=11 // pred_region
        _
      $region32: #{my_model_forward.1} parent=11 // pred_fallthru
        _
      // Predicated region
      $region33: #{my_model_forward.1} parent=11 // pred_check
        %p353 = pneg %p171
      $region34: #{my_model_forward.1} parent=11 // pred_check_branch
        %355 = sbr.rel (%p353) target = $region36
      $region35: #{my_model_forward.1} parent=11 // pred_region
        _
      $region36: #{my_model_forward.1} parent=11 // pred_fallthru
        _
      // Predicated region
      $region37: #{my_model_forward.1} parent=11 // pred_check
        %p356 = pneg %p192
      $region38: #{my_model_forward.1} parent=11 // pred_check_branch
        %358 = sbr.rel (%p356) target = $region40
      $region39: #{my_model_forward.1} parent=11 // pred_region
        _
      $region40: #{my_model_forward.1} parent=11 // pred_fallthru
        _
      // Predicated region
      $region41: #{my_model_forward.1} parent=11 // pred_check
        %p359 = pneg %p213
      $region42: #{my_model_forward.1} parent=11 // pred_check_branch
        %361 = sbr.rel (%p359) target = $region44
      $region43: #{my_model_forward.1} parent=11 // pred_region
        _
      $region44: #{my_model_forward.1} parent=11 // pred_fallthru
        _
      // Predicated region
      $region45: #{my_model_forward.1} parent=11 // pred_check
        %p362 = pneg %p234
      $region46: #{my_model_forward.1} parent=11 // pred_check_branch
        %364 = sbr.rel (%p362) target = $region48
      $region47: #{my_model_forward.1} parent=11 // pred_region
        _
      $region48: #{my_model_forward.1} parent=11 // pred_fallthru
        _
      // Predicated region
      $region49: #{my_model_forward.1} parent=11 // pred_check
        %p365 = pneg %p255
      $region50: #{my_model_forward.1} parent=11 // pred_check_branch
        %367 = sbr.rel (%p365) target = $region52
      $region51: #{my_model_forward.1} parent=11 // pred_region
        _
      $region52: #{my_model_forward.1} parent=11 // pred_fallthru
        _
      // Predicated region
      $region53: #{my_model_forward.1} parent=11 // pred_check
        %p368 = pneg %p276
      $region54: #{my_model_forward.1} parent=11 // pred_check_branch
        %370 = sbr.rel (%p368) target = $region56
      $region55: #{my_model_forward.1} parent=11 // pred_region
        _
      $region56: #{my_model_forward.1} parent=11 // pred_fallthru
        _
      // Predicated region
      $region57: #{my_model_forward.1} parent=11 // pred_check
        %p371 = pneg %p297
      $region58: #{my_model_forward.1} parent=11 // pred_check_branch
        %373 = sbr.rel (%p371) target = $region60
      $region59: #{my_model_forward.1} parent=11 // pred_region
        _
      $region60: #{my_model_forward.1} parent=11 // pred_fallthru
        _
    $region12: #{my_model_forward.1} parent=5 // pred_fallthru
      _
    %p374 = scmp.lt.s32.totalorder %s19, 2
    // Predicated region
    $region61: #{my_model_forward.1} parent=5 // pred_check
      %p375 = pneg %p374
    $region62: #{my_model_forward.1} parent=5 // pred_check_branch
      %377 = sbr.rel (%p375) target = $region64
    $region63: #{my_model_forward.1} parent=5 // pred_region
      // Predicated region
      $region65: #{my_model_forward.1} parent=63 // pred_check
        %p378 = pneg %p39
      $region66: #{my_model_forward.1} parent=63 // pred_check_branch
        %380 = sbr.rel (%p378) target = $region68
      $region67: #{my_model_forward.1} parent=63 // pred_region
        %p381 = scmp.lt.s32.totalorder %s19, 1
        %s382 = scalar_select %p381, %s19, 1
        %s383 = smul.addr %s382, 128
        %s384 = smul.addr %s383, 8
        %s385 = scalar_lea.vmem %s0, %s384
      $region68: #{my_model_forward.1} parent=63 // pred_fallthru
        _
    $region64: #{my_model_forward.1} parent=5 // pred_fallthru
      _
    %p386 = scmp.le.s32.totalorder 1, %s19
    %p387 = scmp.lt.s32.totalorder %s19, 3
    %p388 = pnand %p386, %p387
    %p389 = pneg %p388
    // Predicated region
    $region69: #{my_model_forward.1} parent=5 // pred_check
      _
    $region70: #{my_model_forward.1} parent=5 // pred_check_branch
      %391 = sbr.rel (%p388) target = $region72
    $region71: #{my_model_forward.1} parent=5 // pred_region
      %s392 = ssub.s32 %s19, 1
      %p393 = scmp.lt.s32.totalorder %s24, 1
      %s394 = scalar_select %p393, %s24, 1
      %s395 = smul.addr %s394, 128
      %s396 = smul.addr %s395, 8
      %s397 = scalar_lea.vmem %s0, %s396
      %p398 = pneg %p45
      %p399 = pneg %p42
      %p400 = pneg %p66
      %p401 = pneg %p63
      %p402 = pneg %p87
      %p403 = pneg %p84
      %p404 = pneg %p108
      %p405 = pneg %p105
      %p406 = pneg %p129
      %p407 = pneg %p126
      %p408 = pneg %p150
      %p409 = pneg %p147
      %p410 = pneg %p171
      %p411 = pneg %p168
      %p412 = pneg %p192
      %p413 = pneg %p189
      %p414 = pneg %p213
      %p415 = pneg %p210
      %p416 = pneg %p234
      %p417 = pneg %p231
      %p418 = pneg %p255
      %p419 = pneg %p252
      %p420 = pneg %p276
      %p421 = pneg %p273
      %p422 = pneg %p297
      %p423 = pneg %p294
      %p424 = pneg %p323
      %p425 = pneg %p320
      %p426 = scmp.lt.s32.totalorder %s24, 1
      %s427 = scalar_select %p426, %s24, 1
      %s428 = smul.addr %s427, 8
      %s429 = scalar_lea.vmem %s13, %s428
      %p430 = scmp.lt.s32.totalorder %s24, 1
      %s431 = scalar_select %p430, %s24, 1
      %s432 = smul.addr %s431, 128
      %s433 = smul.addr %s432, 8
      %s434 = scalar_lea.vmem %s0, %s433
      %p435 = scmp.lt.s32.totalorder %s24, 1
      %s436 = scalar_select %p435, %s24, 1
      %s437 = smul.addr %s436, 8
      %s438 = scalar_lea.vmem %s13, %s437
      %v439 = vld [vmem:[%s1] sm:$0xff]
      %v440 = vld [vmem:[%s1 + $0x8] sm:$0xff]
      %v441 = vld [vmem:[%s1 + $0x10] sm:$0xff]
      %v442 = vld [vmem:[%s1 + $0x18] sm:$0xff]
      %v443 = vld [vmem:[%s1 + $0x20] sm:$0xff]
      %v444 = vld [vmem:[%s1 + $0x28] sm:$0xff]
      %v445 = vld [vmem:[%s1 + $0x30] sm:$0xff]
      %v446 = vld [vmem:[%s1 + $0x38] sm:$0xff]
      %v447 = vld [vmem:[%s1 + $0x40] sm:$0xff]
      %v448 = vld [vmem:[%s1 + $0x48] sm:$0xff]
      %v449 = vld [vmem:[%s1 + $0x50] sm:$0xff]
      %v450 = vld [vmem:[%s1 + $0x58] sm:$0xff]
      %v451 = vld [vmem:[%s1 + $0x60] sm:$0xff]
      %v452 = vld [vmem:[%s1 + $0x68] sm:$0xff]
      %v453 = vld [vmem:[%s1 + $0x70] sm:$0xff]
      %v454 = vld [vmem:[%s1 + $0x78] sm:$0xff]
      %v455 = vld [vmem:[%s434] sm:$0xff]
      %v456 = vld [vmem:[%s434 + $0x8] sm:$0xff]
      %v457 = vld [vmem:[%s434 + $0x10] sm:$0xff]
      %v458 = vld [vmem:[%s434 + $0x18] sm:$0xff]
      %v459 = vld [vmem:[%s434 + $0x20] sm:$0xff]
      %v460 = vld [vmem:[%s434 + $0x28] sm:$0xff]
      %v461 = vld [vmem:[%s434 + $0x30] sm:$0xff]
      %v462 = vld [vmem:[%s434 + $0x38] sm:$0xff]
      %v463 = vld [vmem:[%s434 + $0x40] sm:$0xff]
      %v464 = vld [vmem:[%s434 + $0x48] sm:$0xff]
      %v465 = vld [vmem:[%s434 + $0x50] sm:$0xff]
      %v466 = vld [vmem:[%s434 + $0x58] sm:$0xff]
      %v467 = vld [vmem:[%s434 + $0x60] sm:$0xff]
      %v468 = vld [vmem:[%s434 + $0x68] sm:$0xff]
      %v469 = vld [vmem:[%s434 + $0x70] sm:$0xff]
      %v470 = vld [vmem:[%s434 + $0x78] sm:$0xff]
      %v471 = vld [vmem:[%s434 + $0x80] sm:$0xff]
      %v472 = vld [vmem:[%s434 + $0x88] sm:$0xff]
      %v473 = vld [vmem:[%s434 + $0x90] sm:$0xff]
      %v474 = vld [vmem:[%s434 + $0x98] sm:$0xff]
      %v475 = vld [vmem:[%s434 + $0xa0] sm:$0xff]
      %v476 = vld [vmem:[%s434 + $0xa8] sm:$0xff]
      %v477 = vld [vmem:[%s434 + $0xb0] sm:$0xff]
      %v478 = vld [vmem:[%s434 + $0xb8] sm:$0xff]
      %v479 = vld [vmem:[%s434 + $0xc0] sm:$0xff]
      %v480 = vld [vmem:[%s434 + $0xc8] sm:$0xff]
      %v481 = vld [vmem:[%s434 + $0xd0] sm:$0xff]
      %v482 = vld [vmem:[%s434 + $0xd8] sm:$0xff]
      %v483 = vld [vmem:[%s434 + $0xe0] sm:$0xff]
      %v484 = vld [vmem:[%s434 + $0xe8] sm:$0xff]
      %v485 = vld [vmem:[%s434 + $0xf0] sm:$0xff]
      %v486 = vld [vmem:[%s434 + $0xf8] sm:$0xff]
      %487 = vmatpush.msra.mxu0 %v454
      %488 = vmatpush.msra.mxu0 %v453
      %489 = vmatpush.msra.mxu0 %v452
      %490 = vmatpush.msra.mxu0 %v451
      %491 = vmatpush.msra.mxu0 %v450
      %492 = vmatpush.msra.mxu0 %v449
      %493 = vmatpush.msra.mxu0 %v448
      %494 = vmatpush.msra.mxu0 %v447
      %495 = vmatpush.msra.mxu0 %v446
      %496 = vmatpush.msra.mxu0 %v445
      %497 = vmatpush.msra.mxu0 %v444
      %498 = vmatpush.msra.mxu0 %v443
      %499 = vmatpush.msra.mxu0 %v442
      %500 = vmatpush.msra.mxu0 %v441
      %501 = vmatpush.msra.mxu0 %v440
      %502 = vmatpush.msra.mxu0 %v439
      %503 = vmatmul.f32.gmra.mxu0 %v455
      %v504 = vpop.f32.mrf.mxu0
      %v505 = vadd.f32 0.0, %v504
      %506 = vmatmul.f32.gmra.mxu0 %v456
      %v507 = vpop.f32.mrf.mxu0
      %v508 = vadd.f32 0.0, %v507
      %509 = vmatmul.f32.gmra.mxu0 %v457
      %v510 = vpop.f32.mrf.mxu0
      %v511 = vadd.f32 0.0, %v510
      %512 = vmatmul.f32.gmra.mxu0 %v458
      %v513 = vpop.f32.mrf.mxu0
      %v514 = vadd.f32 0.0, %v513
      %515 = vmatmul.f32.gmra.mxu0 %v459
      %v516 = vpop.f32.mrf.mxu0
      %v517 = vadd.f32 0.0, %v516
      %518 = vmatmul.f32.gmra.mxu0 %v460
      %v519 = vpop.f32.mrf.mxu0
      %v520 = vadd.f32 0.0, %v519
      %521 = vmatmul.f32.gmra.mxu0 %v461
      %v522 = vpop.f32.mrf.mxu0
      %v523 = vadd.f32 0.0, %v522
      %524 = vmatmul.f32.gmra.mxu0 %v462
      %v525 = vpop.f32.mrf.mxu0
      %v526 = vadd.f32 0.0, %v525
      %527 = vmatmul.f32.gmra.mxu0 %v463
      %v528 = vpop.f32.mrf.mxu0
      %v529 = vadd.f32 0.0, %v528
      %530 = vmatmul.f32.gmra.mxu0 %v464
      %v531 = vpop.f32.mrf.mxu0
      %v532 = vadd.f32 0.0, %v531
      %533 = vmatmul.f32.gmra.mxu0 %v465
      %v534 = vpop.f32.mrf.mxu0
      %v535 = vadd.f32 0.0, %v534
      %536 = vmatmul.f32.gmra.mxu0 %v466
      %v537 = vpop.f32.mrf.mxu0
      %v538 = vadd.f32 0.0, %v537
      %539 = vmatmul.f32.gmra.mxu0 %v467
      %v540 = vpop.f32.mrf.mxu0
      %v541 = vadd.f32 0.0, %v540
      %542 = vmatmul.f32.gmra.mxu0 %v468
      %v543 = vpop.f32.mrf.mxu0
      %v544 = vadd.f32 0.0, %v543
      %545 = vmatmul.f32.gmra.mxu0 %v469
      %v546 = vpop.f32.mrf.mxu0
      %v547 = vadd.f32 0.0, %v546
      %548 = vmatmul.f32.gmra.mxu0 %v470
      %v549 = vpop.f32.mrf.mxu0
      %v550 = vadd.f32 0.0, %v549
      %551 = vmatmul.f32.gmra.mxu0 %v471
      %v552 = vpop.f32.mrf.mxu0
      %v553 = vadd.f32 0.0, %v552
      %554 = vmatmul.f32.gmra.mxu0 %v472
      %v555 = vpop.f32.mrf.mxu0
      %v556 = vadd.f32 0.0, %v555
      %557 = vmatmul.f32.gmra.mxu0 %v473
      %v558 = vpop.f32.mrf.mxu0
      %v559 = vadd.f32 0.0, %v558
      %560 = vmatmul.f32.gmra.mxu0 %v474
      %v561 = vpop.f32.mrf.mxu0
      %v562 = vadd.f32 0.0, %v561
      %563 = vmatmul.f32.gmra.mxu0 %v475
      %v564 = vpop.f32.mrf.mxu0
      %v565 = vadd.f32 0.0, %v564
      %566 = vmatmul.f32.gmra.mxu0 %v476
      %v567 = vpop.f32.mrf.mxu0
      %v568 = vadd.f32 0.0, %v567
      %569 = vmatmul.f32.gmra.mxu0 %v477
      %v570 = vpop.f32.mrf.mxu0
      %v571 = vadd.f32 0.0, %v570
      %572 = vmatmul.f32.gmra.mxu0 %v478
      %v573 = vpop.f32.mrf.mxu0
      %v574 = vadd.f32 0.0, %v573
      %575 = vmatmul.f32.gmra.mxu0 %v479
      %v576 = vpop.f32.mrf.mxu0
      %v577 = vadd.f32 0.0, %v576
      %578 = vmatmul.f32.gmra.mxu0 %v480
      %v579 = vpop.f32.mrf.mxu0
      %v580 = vadd.f32 0.0, %v579
      %581 = vmatmul.f32.gmra.mxu0 %v481
      %v582 = vpop.f32.mrf.mxu0
      %v583 = vadd.f32 0.0, %v582
      %584 = vmatmul.f32.gmra.mxu0 %v482
      %v585 = vpop.f32.mrf.mxu0
      %v586 = vadd.f32 0.0, %v585
      %587 = vmatmul.f32.gmra.mxu0 %v483
      %v588 = vpop.f32.mrf.mxu0
      %v589 = vadd.f32 0.0, %v588
      %590 = vmatmul.f32.gmra.mxu0 %v484
      %v591 = vpop.f32.mrf.mxu0
      %v592 = vadd.f32 0.0, %v591
      %593 = vmatmul.f32.gmra.mxu0 %v485
      %v594 = vpop.f32.mrf.mxu0
      %v595 = vadd.f32 0.0, %v594
      %596 = vmatmul.f32.gmra.mxu0 %v486
      %v597 = vpop.f32.mrf.mxu0
      %v598 = vadd.f32 0.0, %v597
      %599 = vdwg.mxu0
      %s600 = scalar_lea.vmem %s434, 256
      %v601 = vld [vmem:[%s600] sm:$0xff]
      %v602 = vld [vmem:[%s600 + $0x8] sm:$0xff]
      %v603 = vld [vmem:[%s600 + $0x10] sm:$0xff]
      %v604 = vld [vmem:[%s600 + $0x18] sm:$0xff]
      %v605 = vld [vmem:[%s600 + $0x20] sm:$0xff]
      %v606 = vld [vmem:[%s600 + $0x28] sm:$0xff]
      %v607 = vld [vmem:[%s600 + $0x30] sm:$0xff]
      %v608 = vld [vmem:[%s600 + $0x38] sm:$0xff]
      %v609 = vld [vmem:[%s600 + $0x40] sm:$0xff]
      %v610 = vld [vmem:[%s600 + $0x48] sm:$0xff]
      %v611 = vld [vmem:[%s600 + $0x50] sm:$0xff]
      %v612 = vld [vmem:[%s600 + $0x58] sm:$0xff]
      %v613 = vld [vmem:[%s600 + $0x60] sm:$0xff]
      %v614 = vld [vmem:[%s600 + $0x68] sm:$0xff]
      %v615 = vld [vmem:[%s600 + $0x70] sm:$0xff]
      %v616 = vld [vmem:[%s600 + $0x78] sm:$0xff]
      %v617 = vld [vmem:[%s600 + $0x80] sm:$0xff]
      %v618 = vld [vmem:[%s600 + $0x88] sm:$0xff]
      %v619 = vld [vmem:[%s600 + $0x90] sm:$0xff]
      %v620 = vld [vmem:[%s600 + $0x98] sm:$0xff]
      %v621 = vld [vmem:[%s600 + $0xa0] sm:$0xff]
      %v622 = vld [vmem:[%s600 + $0xa8] sm:$0xff]
      %v623 = vld [vmem:[%s600 + $0xb0] sm:$0xff]
      %v624 = vld [vmem:[%s600 + $0xb8] sm:$0xff]
      %v625 = vld [vmem:[%s600 + $0xc0] sm:$0xff]
      %v626 = vld [vmem:[%s600 + $0xc8] sm:$0xff]
      %v627 = vld [vmem:[%s600 + $0xd0] sm:$0xff]
      %v628 = vld [vmem:[%s600 + $0xd8] sm:$0xff]
      %v629 = vld [vmem:[%s600 + $0xe0] sm:$0xff]
      %v630 = vld [vmem:[%s600 + $0xe8] sm:$0xff]
      %v631 = vld [vmem:[%s600 + $0xf0] sm:$0xff]
      %v632 = vld [vmem:[%s600 + $0xf8] sm:$0xff]
      %633 = vmatpush.msra.mxu0 %v454
      %634 = vmatpush.msra.mxu0 %v453
      %635 = vmatpush.msra.mxu0 %v452
      %636 = vmatpush.msra.mxu0 %v451
      %637 = vmatpush.msra.mxu0 %v450
      %638 = vmatpush.msra.mxu0 %v449
      %639 = vmatpush.msra.mxu0 %v448
      %640 = vmatpush.msra.mxu0 %v447
      %641 = vmatpush.msra.mxu0 %v446
      %642 = vmatpush.msra.mxu0 %v445
      %643 = vmatpush.msra.mxu0 %v444
      %644 = vmatpush.msra.mxu0 %v443
      %645 = vmatpush.msra.mxu0 %v442
      %646 = vmatpush.msra.mxu0 %v441
      %647 = vmatpush.msra.mxu0 %v440
      %648 = vmatpush.msra.mxu0 %v439
      %649 = vmatmul.f32.gmra.mxu0 %v601
      %v650 = vpop.f32.mrf.mxu0
      %v651 = vadd.f32 0.0, %v650
      %652 = vmatmul.f32.gmra.mxu0 %v602
      %v653 = vpop.f32.mrf.mxu0
      %v654 = vadd.f32 0.0, %v653
      %655 = vmatmul.f32.gmra.mxu0 %v603
      %v656 = vpop.f32.mrf.mxu0
      %v657 = vadd.f32 0.0, %v656
      %658 = vmatmul.f32.gmra.mxu0 %v604
      %v659 = vpop.f32.mrf.mxu0
      %v660 = vadd.f32 0.0, %v659
      %661 = vmatmul.f32.gmra.mxu0 %v605
      %v662 = vpop.f32.mrf.mxu0
      %v663 = vadd.f32 0.0, %v662
      %664 = vmatmul.f32.gmra.mxu0 %v606
      %v665 = vpop.f32.mrf.mxu0
      %v666 = vadd.f32 0.0, %v665
      %667 = vmatmul.f32.gmra.mxu0 %v607
      %v668 = vpop.f32.mrf.mxu0
      %v669 = vadd.f32 0.0, %v668
      %670 = vmatmul.f32.gmra.mxu0 %v608
      %v671 = vpop.f32.mrf.mxu0
      %v672 = vadd.f32 0.0, %v671
      %673 = vmatmul.f32.gmra.mxu0 %v609
      %v674 = vpop.f32.mrf.mxu0
      %v675 = vadd.f32 0.0, %v674
      %676 = vmatmul.f32.gmra.mxu0 %v610
      %v677 = vpop.f32.mrf.mxu0
      %v678 = vadd.f32 0.0, %v677
      %679 = vmatmul.f32.gmra.mxu0 %v611
      %v680 = vpop.f32.mrf.mxu0
      %v681 = vadd.f32 0.0, %v680
      %682 = vmatmul.f32.gmra.mxu0 %v612
      %v683 = vpop.f32.mrf.mxu0
      %v684 = vadd.f32 0.0, %v683
      %685 = vmatmul.f32.gmra.mxu0 %v613
      %v686 = vpop.f32.mrf.mxu0
      %v687 = vadd.f32 0.0, %v686
      %688 = vmatmul.f32.gmra.mxu0 %v614
      %v689 = vpop.f32.mrf.mxu0
      %v690 = vadd.f32 0.0, %v689
      %691 = vmatmul.f32.gmra.mxu0 %v615
      %v692 = vpop.f32.mrf.mxu0
      %v693 = vadd.f32 0.0, %v692
      %694 = vmatmul.f32.gmra.mxu0 %v616
      %v695 = vpop.f32.mrf.mxu0
      %v696 = vadd.f32 0.0, %v695
      %697 = vmatmul.f32.gmra.mxu0 %v617
      %v698 = vpop.f32.mrf.mxu0
      %v699 = vadd.f32 0.0, %v698
      %700 = vmatmul.f32.gmra.mxu0 %v618
      %v701 = vpop.f32.mrf.mxu0
      %v702 = vadd.f32 0.0, %v701
      %703 = vmatmul.f32.gmra.mxu0 %v619
      %v704 = vpop.f32.mrf.mxu0
      %v705 = vadd.f32 0.0, %v704
      %706 = vmatmul.f32.gmra.mxu0 %v620
      %v707 = vpop.f32.mrf.mxu0
      %v708 = vadd.f32 0.0, %v707
      %709 = vmatmul.f32.gmra.mxu0 %v621
      %v710 = vpop.f32.mrf.mxu0
      %v711 = vadd.f32 0.0, %v710
      %712 = vmatmul.f32.gmra.mxu0 %v622
      %v713 = vpop.f32.mrf.mxu0
      %v714 = vadd.f32 0.0, %v713
      %715 = vmatmul.f32.gmra.mxu0 %v623
      %v716 = vpop.f32.mrf.mxu0
      %v717 = vadd.f32 0.0, %v716
      %718 = vmatmul.f32.gmra.mxu0 %v624
      %v719 = vpop.f32.mrf.mxu0
      %v720 = vadd.f32 0.0, %v719
      %721 = vmatmul.f32.gmra.mxu0 %v625
      %v722 = vpop.f32.mrf.mxu0
      %v723 = vadd.f32 0.0, %v722
      %724 = vmatmul.f32.gmra.mxu0 %v626
      %v725 = vpop.f32.mrf.mxu0
      %v726 = vadd.f32 0.0, %v725
      %727 = vmatmul.f32.gmra.mxu0 %v627
      %v728 = vpop.f32.mrf.mxu0
      %v729 = vadd.f32 0.0, %v728
      %730 = vmatmul.f32.gmra.mxu0 %v628
      %v731 = vpop.f32.mrf.mxu0
      %v732 = vadd.f32 0.0, %v731
      %733 = vmatmul.f32.gmra.mxu0 %v629
      %v734 = vpop.f32.mrf.mxu0
      %v735 = vadd.f32 0.0, %v734
      %736 = vmatmul.f32.gmra.mxu0 %v630
      %v737 = vpop.f32.mrf.mxu0
      %v738 = vadd.f32 0.0, %v737
      %739 = vmatmul.f32.gmra.mxu0 %v631
      %v740 = vpop.f32.mrf.mxu0
      %v741 = vadd.f32 0.0, %v740
      %742 = vmatmul.f32.gmra.mxu0 %v632
      %v743 = vpop.f32.mrf.mxu0
      %v744 = vadd.f32 0.0, %v743
      %745 = vdwg.mxu0
      %v746 = vmax.f32 %v505, %v651
      %v747 = vmax.f32 %v508, %v654
      %v748 = vmax.f32 %v511, %v657
      %v749 = vmax.f32 %v514, %v660
      %v750 = vmax.f32 %v517, %v663
      %v751 = vmax.f32 %v520, %v666
      %v752 = vmax.f32 %v523, %v669
      %v753 = vmax.f32 %v526, %v672
      %v754 = vmax.f32 %v529, %v675
      %v755 = vmax.f32 %v532, %v678
      %v756 = vmax.f32 %v535, %v681
      %v757 = vmax.f32 %v538, %v684
      %v758 = vmax.f32 %v541, %v687
      %v759 = vmax.f32 %v544, %v690
      %v760 = vmax.f32 %v547, %v693
      %v761 = vmax.f32 %v550, %v696
      %v762 = vmax.f32 %v553, %v699
      %v763 = vmax.f32 %v556, %v702
      %v764 = vmax.f32 %v559, %v705
      %v765 = vmax.f32 %v562, %v708
      %v766 = vmax.f32 %v565, %v711
      %v767 = vmax.f32 %v568, %v714
      %v768 = vmax.f32 %v571, %v717
      %v769 = vmax.f32 %v574, %v720
      %v770 = vmax.f32 %v577, %v723
      %v771 = vmax.f32 %v580, %v726
      %v772 = vmax.f32 %v583, %v729
      %v773 = vmax.f32 %v586, %v732
      %v774 = vmax.f32 %v589, %v735
      %v775 = vmax.f32 %v592, %v738
      %v776 = vmax.f32 %v595, %v741
      %v777 = vmax.f32 %v598, %v744
      %s778 = scalar_lea.vmem %s434, 512
      %v779 = vld [vmem:[%s778] sm:$0xff]
      %v780 = vld [vmem:[%s778 + $0x8] sm:$0xff]
      %v781 = vld [vmem:[%s778 + $0x10] sm:$0xff]
      %v782 = vld [vmem:[%s778 + $0x18] sm:$0xff]
      %v783 = vld [vmem:[%s778 + $0x20] sm:$0xff]
      %v784 = vld [vmem:[%s778 + $0x28] sm:$0xff]
      %v785 = vld [vmem:[%s778 + $0x30] sm:$0xff]
      %v786 = vld [vmem:[%s778 + $0x38] sm:$0xff]
      %v787 = vld [vmem:[%s778 + $0x40] sm:$0xff]
      %v788 = vld [vmem:[%s778 + $0x48] sm:$0xff]
      %v789 = vld [vmem:[%s778 + $0x50] sm:$0xff]
      %v790 = vld [vmem:[%s778 + $0x58] sm:$0xff]
      %v791 = vld [vmem:[%s778 + $0x60] sm:$0xff]
      %v792 = vld [vmem:[%s778 + $0x68] sm:$0xff]
      %v793 = vld [vmem:[%s778 + $0x70] sm:$0xff]
      %v794 = vld [vmem:[%s778 + $0x78] sm:$0xff]
      %v795 = vld [vmem:[%s778 + $0x80] sm:$0xff]
      %v796 = vld [vmem:[%s778 + $0x88] sm:$0xff]
      %v797 = vld [vmem:[%s778 + $0x90] sm:$0xff]
      %v798 = vld [vmem:[%s778 + $0x98] sm:$0xff]
      %v799 = vld [vmem:[%s778 + $0xa0] sm:$0xff]
      %v800 = vld [vmem:[%s778 + $0xa8] sm:$0xff]
      %v801 = vld [vmem:[%s778 + $0xb0] sm:$0xff]
      %v802 = vld [vmem:[%s778 + $0xb8] sm:$0xff]
      %v803 = vld [vmem:[%s778 + $0xc0] sm:$0xff]
      %v804 = vld [vmem:[%s778 + $0xc8] sm:$0xff]
      %v805 = vld [vmem:[%s778 + $0xd0] sm:$0xff]
      %v806 = vld [vmem:[%s778 + $0xd8] sm:$0xff]
      %v807 = vld [vmem:[%s778 + $0xe0] sm:$0xff]
      %v808 = vld [vmem:[%s778 + $0xe8] sm:$0xff]
      %v809 = vld [vmem:[%s778 + $0xf0] sm:$0xff]
      %v810 = vld [vmem:[%s778 + $0xf8] sm:$0xff]
      %811 = vmatpush.msra.mxu0 %v454
      %812 = vmatpush.msra.mxu0 %v453
      %813 = vmatpush.msra.mxu0 %v452
      %814 = vmatpush.msra.mxu0 %v451
      %815 = vmatpush.msra.mxu0 %v450
      %816 = vmatpush.msra.mxu0 %v449
      %817 = vmatpush.msra.mxu0 %v448
      %818 = vmatpush.msra.mxu0 %v447
      %819 = vmatpush.msra.mxu0 %v446
      %820 = vmatpush.msra.mxu0 %v445
      %821 = vmatpush.msra.mxu0 %v444
      %822 = vmatpush.msra.mxu0 %v443
      %823 = vmatpush.msra.mxu0 %v442
      %824 = vmatpush.msra.mxu0 %v441
      %825 = vmatpush.msra.mxu0 %v440
      %826 = vmatpush.msra.mxu0 %v439
      %827 = vmatmul.f32.gmra.mxu0 %v779
      %v828 = vpop.f32.mrf.mxu0
      %v829 = vadd.f32 0.0, %v828
      %830 = vmatmul.f32.gmra.mxu0 %v780
      %v831 = vpop.f32.mrf.mxu0
      %v832 = vadd.f32 0.0, %v831
      %833 = vmatmul.f32.gmra.mxu0 %v781
      %v834 = vpop.f32.mrf.mxu0
      %v835 = vadd.f32 0.0, %v834
      %836 = vmatmul.f32.gmra.mxu0 %v782
      %v837 = vpop.f32.mrf.mxu0
      %v838 = vadd.f32 0.0, %v837
      %839 = vmatmul.f32.gmra.mxu0 %v783
      %v840 = vpop.f32.mrf.mxu0
      %v841 = vadd.f32 0.0, %v840
      %842 = vmatmul.f32.gmra.mxu0 %v784
      %v843 = vpop.f32.mrf.mxu0
      %v844 = vadd.f32 0.0, %v843
      %845 = vmatmul.f32.gmra.mxu0 %v785
      %v846 = vpop.f32.mrf.mxu0
      %v847 = vadd.f32 0.0, %v846
      %848 = vmatmul.f32.gmra.mxu0 %v786
      %v849 = vpop.f32.mrf.mxu0
      %v850 = vadd.f32 0.0, %v849
      %851 = vmatmul.f32.gmra.mxu0 %v787
      %v852 = vpop.f32.mrf.mxu0
      %v853 = vadd.f32 0.0, %v852
      %854 = vmatmul.f32.gmra.mxu0 %v788
      %v855 = vpop.f32.mrf.mxu0
      %v856 = vadd.f32 0.0, %v855
      %857 = vmatmul.f32.gmra.mxu0 %v789
      %v858 = vpop.f32.mrf.mxu0
      %v859 = vadd.f32 0.0, %v858
      %860 = vmatmul.f32.gmra.mxu0 %v790
      %v861 = vpop.f32.mrf.mxu0
      %v862 = vadd.f32 0.0, %v861
      %863 = vmatmul.f32.gmra.mxu0 %v791
      %v864 = vpop.f32.mrf.mxu0
      %v865 = vadd.f32 0.0, %v864
      %866 = vmatmul.f32.gmra.mxu0 %v792
      %v867 = vpop.f32.mrf.mxu0
      %v868 = vadd.f32 0.0, %v867
      %869 = vmatmul.f32.gmra.mxu0 %v793
      %v870 = vpop.f32.mrf.mxu0
      %v871 = vadd.f32 0.0, %v870
      %872 = vmatmul.f32.gmra.mxu0 %v794
      %v873 = vpop.f32.mrf.mxu0
      %v874 = vadd.f32 0.0, %v873
      %875 = vmatmul.f32.gmra.mxu0 %v795
      %v876 = vpop.f32.mrf.mxu0
      %v877 = vadd.f32 0.0, %v876
      %878 = vmatmul.f32.gmra.mxu0 %v796
      %v879 = vpop.f32.mrf.mxu0
      %v880 = vadd.f32 0.0, %v879
      %881 = vmatmul.f32.gmra.mxu0 %v797
      %v882 = vpop.f32.mrf.mxu0
      %v883 = vadd.f32 0.0, %v882
      %884 = vmatmul.f32.gmra.mxu0 %v798
      %v885 = vpop.f32.mrf.mxu0
      %v886 = vadd.f32 0.0, %v885
      %887 = vmatmul.f32.gmra.mxu0 %v799
      %v888 = vpop.f32.mrf.mxu0
      %v889 = vadd.f32 0.0, %v888
      %890 = vmatmul.f32.gmra.mxu0 %v800
      %v891 = vpop.f32.mrf.mxu0
      %v892 = vadd.f32 0.0, %v891
      %893 = vmatmul.f32.gmra.mxu0 %v801
      %v894 = vpop.f32.mrf.mxu0
      %v895 = vadd.f32 0.0, %v894
      %896 = vmatmul.f32.gmra.mxu0 %v802
      %v897 = vpop.f32.mrf.mxu0
      %v898 = vadd.f32 0.0, %v897
      %899 = vmatmul.f32.gmra.mxu0 %v803
      %v900 = vpop.f32.mrf.mxu0
      %v901 = vadd.f32 0.0, %v900
      %902 = vmatmul.f32.gmra.mxu0 %v804
      %v903 = vpop.f32.mrf.mxu0
      %v904 = vadd.f32 0.0, %v903
      %905 = vmatmul.f32.gmra.mxu0 %v805
      %v906 = vpop.f32.mrf.mxu0
      %v907 = vadd.f32 0.0, %v906
      %908 = vmatmul.f32.gmra.mxu0 %v806
      %v909 = vpop.f32.mrf.mxu0
      %v910 = vadd.f32 0.0, %v909
      %911 = vmatmul.f32.gmra.mxu0 %v807
      %v912 = vpop.f32.mrf.mxu0
      %v913 = vadd.f32 0.0, %v912
      %914 = vmatmul.f32.gmra.mxu0 %v808
      %v915 = vpop.f32.mrf.mxu0
      %v916 = vadd.f32 0.0, %v915
      %917 = vmatmul.f32.gmra.mxu0 %v809
      %v918 = vpop.f32.mrf.mxu0
      %v919 = vadd.f32 0.0, %v918
      %920 = vmatmul.f32.gmra.mxu0 %v810
      %v921 = vpop.f32.mrf.mxu0
      %v922 = vadd.f32 0.0, %v921
      %923 = vdwg.mxu0
      %v924 = vmax.f32 %v746, %v829
      %v925 = vmax.f32 %v747, %v832
      %v926 = vmax.f32 %v748, %v835
      %v927 = vmax.f32 %v749, %v838
      %v928 = vmax.f32 %v750, %v841
      %v929 = vmax.f32 %v751, %v844
      %v930 = vmax.f32 %v752, %v847
      %v931 = vmax.f32 %v753, %v850
      %v932 = vmax.f32 %v754, %v853
      %v933 = vmax.f32 %v755, %v856
      %v934 = vmax.f32 %v756, %v859
      %v935 = vmax.f32 %v757, %v862
      %v936 = vmax.f32 %v758, %v865
      %v937 = vmax.f32 %v759, %v868
      %v938 = vmax.f32 %v760, %v871
      %v939 = vmax.f32 %v761, %v874
      %v940 = vmax.f32 %v762, %v877
      %v941 = vmax.f32 %v763, %v880
      %v942 = vmax.f32 %v764, %v883
      %v943 = vmax.f32 %v765, %v886
      %v944 = vmax.f32 %v766, %v889
      %v945 = vmax.f32 %v767, %v892
      %v946 = vmax.f32 %v768, %v895
      %v947 = vmax.f32 %v769, %v898
      %v948 = vmax.f32 %v770, %v901
      %v949 = vmax.f32 %v771, %v904
      %v950 = vmax.f32 %v772, %v907
      %v951 = vmax.f32 %v773, %v910
      %v952 = vmax.f32 %v774, %v913
      %v953 = vmax.f32 %v775, %v916
      %v954 = vmax.f32 %v776, %v919
      %v955 = vmax.f32 %v777, %v922
      %s956 = scalar_lea.vmem %s434, 768
      %v957 = vld [vmem:[%s956] sm:$0xff]
      %v958 = vld [vmem:[%s956 + $0x8] sm:$0xff]
      %v959 = vld [vmem:[%s956 + $0x10] sm:$0xff]
      %v960 = vld [vmem:[%s956 + $0x18] sm:$0xff]
      %v961 = vld [vmem:[%s956 + $0x20] sm:$0xff]
      %v962 = vld [vmem:[%s956 + $0x28] sm:$0xff]
      %v963 = vld [vmem:[%s956 + $0x30] sm:$0xff]
      %v964 = vld [vmem:[%s956 + $0x38] sm:$0xff]
      %v965 = vld [vmem:[%s956 + $0x40] sm:$0xff]
      %v966 = vld [vmem:[%s956 + $0x48] sm:$0xff]
      %v967 = vld [vmem:[%s956 + $0x50] sm:$0xff]
      %v968 = vld [vmem:[%s956 + $0x58] sm:$0xff]
      %v969 = vld [vmem:[%s956 + $0x60] sm:$0xff]
      %v970 = vld [vmem:[%s956 + $0x68] sm:$0xff]
      %v971 = vld [vmem:[%s956 + $0x70] sm:$0xff]
      %v972 = vld [vmem:[%s956 + $0x78] sm:$0xff]
      %v973 = vld [vmem:[%s956 + $0x80] sm:$0xff]
      %v974 = vld [vmem:[%s956 + $0x88] sm:$0xff]
      %v975 = vld [vmem:[%s956 + $0x90] sm:$0xff]
      %v976 = vld [vmem:[%s956 + $0x98] sm:$0xff]
      %v977 = vld [vmem:[%s956 + $0xa0] sm:$0xff]
      %v978 = vld [vmem:[%s956 + $0xa8] sm:$0xff]
      %v979 = vld [vmem:[%s956 + $0xb0] sm:$0xff]
      %v980 = vld [vmem:[%s956 + $0xb8] sm:$0xff]
      %v981 = vld [vmem:[%s956 + $0xc0] sm:$0xff]
      %v982 = vld [vmem:[%s956 + $0xc8] sm:$0xff]
      %v983 = vld [vmem:[%s956 + $0xd0] sm:$0xff]
      %v984 = vld [vmem:[%s956 + $0xd8] sm:$0xff]
      %v985 = vld [vmem:[%s956 + $0xe0] sm:$0xff]
      %v986 = vld [vmem:[%s956 + $0xe8] sm:$0xff]
      %v987 = vld [vmem:[%s956 + $0xf0] sm:$0xff]
      %v988 = vld [vmem:[%s956 + $0xf8] sm:$0xff]
      %989 = vmatpush.msra.mxu0 %v454
      %990 = vmatpush.msra.mxu0 %v453
      %991 = vmatpush.msra.mxu0 %v452
      %992 = vmatpush.msra.mxu0 %v451
      %993 = vmatpush.msra.mxu0 %v450
      %994 = vmatpush.msra.mxu0 %v449
      %995 = vmatpush.msra.mxu0 %v448
      %996 = vmatpush.msra.mxu0 %v447
      %997 = vmatpush.msra.mxu0 %v446
      %998 = vmatpush.msra.mxu0 %v445
      %999 = vmatpush.msra.mxu0 %v444
      %1000 = vmatpush.msra.mxu0 %v443
      %1001 = vmatpush.msra.mxu0 %v442
      %1002 = vmatpush.msra.mxu0 %v441
      %1003 = vmatpush.msra.mxu0 %v440
      %1004 = vmatpush.msra.mxu0 %v439
      %1005 = vmatmul.f32.gmra.mxu0 %v957
      %v1006 = vpop.f32.mrf.mxu0
      %v1007 = vadd.f32 0.0, %v1006
      %1008 = vmatmul.f32.gmra.mxu0 %v958
      %v1009 = vpop.f32.mrf.mxu0
      %v1010 = vadd.f32 0.0, %v1009
      %1011 = vmatmul.f32.gmra.mxu0 %v959
      %v1012 = vpop.f32.mrf.mxu0
      %v1013 = vadd.f32 0.0, %v1012
      %1014 = vmatmul.f32.gmra.mxu0 %v960
      %v1015 = vpop.f32.mrf.mxu0
      %v1016 = vadd.f32 0.0, %v1015
      %1017 = vmatmul.f32.gmra.mxu0 %v961
      %v1018 = vpop.f32.mrf.mxu0
      %v1019 = vadd.f32 0.0, %v1018
      %1020 = vmatmul.f32.gmra.mxu0 %v962
      %v1021 = vpop.f32.mrf.mxu0
      %v1022 = vadd.f32 0.0, %v1021
      %1023 = vmatmul.f32.gmra.mxu0 %v963
      %v1024 = vpop.f32.mrf.mxu0
      %v1025 = vadd.f32 0.0, %v1024
      %1026 = vmatmul.f32.gmra.mxu0 %v964
      %v1027 = vpop.f32.mrf.mxu0
      %v1028 = vadd.f32 0.0, %v1027
      %1029 = vmatmul.f32.gmra.mxu0 %v965
      %v1030 = vpop.f32.mrf.mxu0
      %v1031 = vadd.f32 0.0, %v1030
      %1032 = vmatmul.f32.gmra.mxu0 %v966
      %v1033 = vpop.f32.mrf.mxu0
      %v1034 = vadd.f32 0.0, %v1033
      %1035 = vmatmul.f32.gmra.mxu0 %v967
      %v1036 = vpop.f32.mrf.mxu0
      %v1037 = vadd.f32 0.0, %v1036
      %1038 = vmatmul.f32.gmra.mxu0 %v968
      %v1039 = vpop.f32.mrf.mxu0
      %v1040 = vadd.f32 0.0, %v1039
      %1041 = vmatmul.f32.gmra.mxu0 %v969
      %v1042 = vpop.f32.mrf.mxu0
      %v1043 = vadd.f32 0.0, %v1042
      %1044 = vmatmul.f32.gmra.mxu0 %v970
      %v1045 = vpop.f32.mrf.mxu0
      %v1046 = vadd.f32 0.0, %v1045
      %1047 = vmatmul.f32.gmra.mxu0 %v971
      %v1048 = vpop.f32.mrf.mxu0
      %v1049 = vadd.f32 0.0, %v1048
      %1050 = vmatmul.f32.gmra.mxu0 %v972
      %v1051 = vpop.f32.mrf.mxu0
      %v1052 = vadd.f32 0.0, %v1051
      %1053 = vmatmul.f32.gmra.mxu0 %v973
      %v1054 = vpop.f32.mrf.mxu0
      %v1055 = vadd.f32 0.0, %v1054
      %1056 = vmatmul.f32.gmra.mxu0 %v974
      %v1057 = vpop.f32.mrf.mxu0
      %v1058 = vadd.f32 0.0, %v1057
      %1059 = vmatmul.f32.gmra.mxu0 %v975
      %v1060 = vpop.f32.mrf.mxu0
      %v1061 = vadd.f32 0.0, %v1060
      %1062 = vmatmul.f32.gmra.mxu0 %v976
      %v1063 = vpop.f32.mrf.mxu0
      %v1064 = vadd.f32 0.0, %v1063
      %1065 = vmatmul.f32.gmra.mxu0 %v977
      %v1066 = vpop.f32.mrf.mxu0
      %v1067 = vadd.f32 0.0, %v1066
      %1068 = vmatmul.f32.gmra.mxu0 %v978
      %v1069 = vpop.f32.mrf.mxu0
      %v1070 = vadd.f32 0.0, %v1069
      %1071 = vmatmul.f32.gmra.mxu0 %v979
      %v1072 = vpop.f32.mrf.mxu0
      %v1073 = vadd.f32 0.0, %v1072
      %1074 = vmatmul.f32.gmra.mxu0 %v980
      %v1075 = vpop.f32.mrf.mxu0
      %v1076 = vadd.f32 0.0, %v1075
      %1077 = vmatmul.f32.gmra.mxu0 %v981
      %v1078 = vpop.f32.mrf.mxu0
      %v1079 = vadd.f32 0.0, %v1078
      %1080 = vmatmul.f32.gmra.mxu0 %v982
      %v1081 = vpop.f32.mrf.mxu0
      %v1082 = vadd.f32 0.0, %v1081
      %1083 = vmatmul.f32.gmra.mxu0 %v983
      %v1084 = vpop.f32.mrf.mxu0
      %v1085 = vadd.f32 0.0, %v1084
      %1086 = vmatmul.f32.gmra.mxu0 %v984
      %v1087 = vpop.f32.mrf.mxu0
      %v1088 = vadd.f32 0.0, %v1087
      %1089 = vmatmul.f32.gmra.mxu0 %v985
      %v1090 = vpop.f32.mrf.mxu0
      %v1091 = vadd.f32 0.0, %v1090
      %1092 = vmatmul.f32.gmra.mxu0 %v986
      %v1093 = vpop.f32.mrf.mxu0
      %v1094 = vadd.f32 0.0, %v1093
      %1095 = vmatmul.f32.gmra.mxu0 %v987
      %v1096 = vpop.f32.mrf.mxu0
      %v1097 = vadd.f32 0.0, %v1096
      %1098 = vmatmul.f32.gmra.mxu0 %v988
      %v1099 = vpop.f32.mrf.mxu0
      %v1100 = vadd.f32 0.0, %v1099
      %1101 = vdwg.mxu0
      %v1102 = vmax.f32 %v924, %v1007
      %v1103 = vmax.f32 %v925, %v1010
      %v1104 = vmax.f32 %v926, %v1013
      %v1105 = vmax.f32 %v927, %v1016
      %v1106 = vmax.f32 %v928, %v1019
      %v1107 = vmax.f32 %v929, %v1022
      %v1108 = vmax.f32 %v930, %v1025
      %v1109 = vmax.f32 %v931, %v1028
      %v1110 = vmax.f32 %v932, %v1031
      %v1111 = vmax.f32 %v933, %v1034
      %v1112 = vmax.f32 %v934, %v1037
      %v1113 = vmax.f32 %v935, %v1040
      %v1114 = vmax.f32 %v936, %v1043
      %v1115 = vmax.f32 %v937, %v1046
      %v1116 = vmax.f32 %v938, %v1049
      %v1117 = vmax.f32 %v939, %v1052
      %v1118 = vmax.f32 %v940, %v1055
      %v1119 = vmax.f32 %v941, %v1058
      %v1120 = vmax.f32 %v942, %v1061
      %v1121 = vmax.f32 %v943, %v1064
      %v1122 = vmax.f32 %v944, %v1067
      %v1123 = vmax.f32 %v945, %v1070
      %v1124 = vmax.f32 %v946, %v1073
      %v1125 = vmax.f32 %v947, %v1076
      %v1126 = vmax.f32 %v948, %v1079
      %v1127 = vmax.f32 %v949, %v1082
      %v1128 = vmax.f32 %v950, %v1085
      %v1129 = vmax.f32 %v951, %v1088
      %v1130 = vmax.f32 %v952, %v1091
      %v1131 = vmax.f32 %v953, %v1094
      %v1132 = vmax.f32 %v954, %v1097
      %v1133 = vmax.f32 %v955, %v1100
      %v1134 = vld [vmem:[%s2] sm:$0x1]
      %v1136 = vperm.slane %v1134, 0
      %v1138 = vadd.f32 %v1102, %v1136
      %v1139 = vadd.f32 %v1103, %v1136
      %v1140 = vadd.f32 %v1104, %v1136
      %v1141 = vadd.f32 %v1105, %v1136
      %v1142 = vadd.f32 %v1106, %v1136
      %v1143 = vadd.f32 %v1107, %v1136
      %v1144 = vadd.f32 %v1108, %v1136
      %v1145 = vadd.f32 %v1109, %v1136
      %v1146 = vadd.f32 %v1110, %v1136
      %v1147 = vadd.f32 %v1111, %v1136
      %v1148 = vadd.f32 %v1112, %v1136
      %v1149 = vadd.f32 %v1113, %v1136
      %v1150 = vadd.f32 %v1114, %v1136
      %v1151 = vadd.f32 %v1115, %v1136
      %v1152 = vadd.f32 %v1116, %v1136
      %v1153 = vadd.f32 %v1117, %v1136
      %v1154 = vadd.f32 %v1118, %v1136
      %v1155 = vadd.f32 %v1119, %v1136
      %v1156 = vadd.f32 %v1120, %v1136
      %v1157 = vadd.f32 %v1121, %v1136
      %v1158 = vadd.f32 %v1122, %v1136
      %v1159 = vadd.f32 %v1123, %v1136
      %v1160 = vadd.f32 %v1124, %v1136
      %v1161 = vadd.f32 %v1125, %v1136
      %v1162 = vadd.f32 %v1126, %v1136
      %v1163 = vadd.f32 %v1127, %v1136
      %v1164 = vadd.f32 %v1128, %v1136
      %v1165 = vadd.f32 %v1129, %v1136
      %v1166 = vadd.f32 %v1130, %v1136
      %v1167 = vadd.f32 %v1131, %v1136
      %v1168 = vadd.f32 %v1132, %v1136
      %v1169 = vadd.f32 %v1133, %v1136
      %vm1170 = vcmask 261120
      %1171 = vst.msk [vmem:[#allocation2] sm:$0xff] %vm1170, 0.0
      %1172 = vst.msk [vmem:[#allocation2 + $0x8] sm:$0xff] %vm1170, 0.0
      %1173 = vst.msk [vmem:[#allocation2 + $0x10] sm:$0xff] %vm1170, 0.0
      %1174 = vst.msk [vmem:[#allocation2 + $0x18] sm:$0xff] %vm1170, 0.0
      %1175 = vst.msk [vmem:[#allocation2 + $0x20] sm:$0xff] %vm1170, 0.0
      %1176 = vst.msk [vmem:[#allocation2 + $0x28] sm:$0xff] %vm1170, 0.0
      %1177 = vst.msk [vmem:[#allocation2 + $0x30] sm:$0xff] %vm1170, 0.0
      %1178 = vst.msk [vmem:[#allocation2 + $0x38] sm:$0xff] %vm1170, 0.0
      %1179 = vst.msk [vmem:[#allocation2 + $0x40] sm:$0xff] %vm1170, 0.0
      %1180 = vst.msk [vmem:[#allocation2 + $0x48] sm:$0xff] %vm1170, 0.0
      %1181 = vst.msk [vmem:[#allocation2 + $0x50] sm:$0xff] %vm1170, 0.0
      %1182 = vst.msk [vmem:[#allocation2 + $0x58] sm:$0xff] %vm1170, 0.0
      %1183 = vst.msk [vmem:[#allocation2 + $0x60] sm:$0xff] %vm1170, 0.0
      %1184 = vst.msk [vmem:[#allocation2 + $0x68] sm:$0xff] %vm1170, 0.0
      %1185 = vst.msk [vmem:[#allocation2 + $0x70] sm:$0xff] %vm1170, 0.0
      %1186 = vst.msk [vmem:[#allocation2 + $0x78] sm:$0xff] %vm1170, 0.0
      %1187 = vst.msk [vmem:[#allocation2 + $0x80] sm:$0xff] %vm1170, 0.0
      %1188 = vst.msk [vmem:[#allocation2 + $0x88] sm:$0xff] %vm1170, 0.0
      %1189 = vst.msk [vmem:[#allocation2 + $0x90] sm:$0xff] %vm1170, 0.0
      %1190 = vst.msk [vmem:[#allocation2 + $0x98] sm:$0xff] %vm1170, 0.0
      %1191 = vst.msk [vmem:[#allocation2 + $0xa0] sm:$0xff] %vm1170, 0.0
      %1192 = vst.msk [vmem:[#allocation2 + $0xa8] sm:$0xff] %vm1170, 0.0
      %1193 = vst.msk [vmem:[#allocation2 + $0xb0] sm:$0xff] %vm1170, 0.0
      %1194 = vst.msk [vmem:[#allocation2 + $0xb8] sm:$0xff] %vm1170, 0.0
      %1195 = vst.msk [vmem:[#allocation2 + $0xc0] sm:$0xff] %vm1170, 0.0
      %1196 = vst.msk [vmem:[#allocation2 + $0xc8] sm:$0xff] %vm1170, 0.0
      %1197 = vst.msk [vmem:[#allocation2 + $0xd0] sm:$0xff] %vm1170, 0.0
      %1198 = vst.msk [vmem:[#allocation2 + $0xd8] sm:$0xff] %vm1170, 0.0
      %1199 = vst.msk [vmem:[#allocation2 + $0xe0] sm:$0xff] %vm1170, 0.0
      %1200 = vst.msk [vmem:[#allocation2 + $0xe8] sm:$0xff] %vm1170, 0.0
      %1201 = vst.msk [vmem:[#allocation2 + $0xf0] sm:$0xff] %vm1170, 0.0
      %1202 = vst.msk [vmem:[#allocation2 + $0xf8] sm:$0xff] %vm1170, 0.0
      %1203 = vst.msk [vmem:[#allocation2 + $0x100] sm:$0xff] %vm1170, 0.0
      %1204 = vst.msk [vmem:[#allocation2 + $0x108] sm:$0xff] %vm1170, 0.0
      %1205 = vst.msk [vmem:[#allocation2 + $0x110] sm:$0xff] %vm1170, 0.0
      %1206 = vst.msk [vmem:[#allocation2 + $0x118] sm:$0xff] %vm1170, 0.0
      %1207 = vst.msk [vmem:[#allocation2 + $0x120] sm:$0xff] %vm1170, 0.0
      %1208 = vst.msk [vmem:[#allocation2 + $0x128] sm:$0xff] %vm1170, 0.0
      %1209 = vst.msk [vmem:[#allocation2 + $0x130] sm:$0xff] %vm1170, 0.0
      %1210 = vst.msk [vmem:[#allocation2 + $0x138] sm:$0xff] %vm1170, 0.0
      %1211 = vst.msk [vmem:[#allocation2 + $0x140] sm:$0xff] %vm1170, 0.0
      %1212 = vst.msk [vmem:[#allocation2 + $0x148] sm:$0xff] %vm1170, 0.0
      %1213 = vst.msk [vmem:[#allocation2 + $0x150] sm:$0xff] %vm1170, 0.0
      %1214 = vst.msk [vmem:[#allocation2 + $0x158] sm:$0xff] %vm1170, 0.0
      %1215 = vst.msk [vmem:[#allocation2 + $0x160] sm:$0xff] %vm1170, 0.0
      %1216 = vst.msk [vmem:[#allocation2 + $0x168] sm:$0xff] %vm1170, 0.0
      %1217 = vst.msk [vmem:[#allocation2 + $0x170] sm:$0xff] %vm1170, 0.0
      %1218 = vst.msk [vmem:[#allocation2 + $0x178] sm:$0xff] %vm1170, 0.0
      %1219 = vst.msk [vmem:[#allocation2 + $0x180] sm:$0xff] %vm1170, 0.0
      %1220 = vst.msk [vmem:[#allocation2 + $0x188] sm:$0xff] %vm1170, 0.0
      %1221 = vst.msk [vmem:[#allocation2 + $0x190] sm:$0xff] %vm1170, 0.0
      %1222 = vst.msk [vmem:[#allocation2 + $0x198] sm:$0xff] %vm1170, 0.0
      %1223 = vst.msk [vmem:[#allocation2 + $0x1a0] sm:$0xff] %vm1170, 0.0
      %1224 = vst.msk [vmem:[#allocation2 + $0x1a8] sm:$0xff] %vm1170, 0.0
      %1225 = vst.msk [vmem:[#allocation2 + $0x1b0] sm:$0xff] %vm1170, 0.0
      %1226 = vst.msk [vmem:[#allocation2 + $0x1b8] sm:$0xff] %vm1170, 0.0
      %1227 = vst.msk [vmem:[#allocation2 + $0x1c0] sm:$0xff] %vm1170, 0.0
      %1228 = vst.msk [vmem:[#allocation2 + $0x1c8] sm:$0xff] %vm1170, 0.0
      %1229 = vst.msk [vmem:[#allocation2 + $0x1d0] sm:$0xff] %vm1170, 0.0
      %1230 = vst.msk [vmem:[#allocation2 + $0x1d8] sm:$0xff] %vm1170, 0.0
      %1231 = vst.msk [vmem:[#allocation2 + $0x1e0] sm:$0xff] %vm1170, 0.0
      %1232 = vst.msk [vmem:[#allocation2 + $0x1e8] sm:$0xff] %vm1170, 0.0
      %1233 = vst.msk [vmem:[#allocation2 + $0x1f0] sm:$0xff] %vm1170, 0.0
      %1234 = vst.msk [vmem:[#allocation2 + $0x1f8] sm:$0xff] %vm1170, 0.0
      %1235 = vst.msk [vmem:[#allocation2 + $0x200] sm:$0xff] %vm1170, 0.0
      %1236 = vst.msk [vmem:[#allocation2 + $0x208] sm:$0xff] %vm1170, 0.0
      %1237 = vst.msk [vmem:[#allocation2 + $0x210] sm:$0xff] %vm1170, 0.0
      %1238 = vst.msk [vmem:[#allocation2 + $0x218] sm:$0xff] %vm1170, 0.0
      %1239 = vst.msk [vmem:[#allocation2 + $0x220] sm:$0xff] %vm1170, 0.0
      %1240 = vst.msk [vmem:[#allocation2 + $0x228] sm:$0xff] %vm1170, 0.0
      %1241 = vst.msk [vmem:[#allocation2 + $0x230] sm:$0xff] %vm1170, 0.0
      %1242 = vst.msk [vmem:[#allocation2 + $0x238] sm:$0xff] %vm1170, 0.0
      %1243 = vst.msk [vmem:[#allocation2 + $0x240] sm:$0xff] %vm1170, 0.0
      %1244 = vst.msk [vmem:[#allocation2 + $0x248] sm:$0xff] %vm1170, 0.0
      %1245 = vst.msk [vmem:[#allocation2 + $0x250] sm:$0xff] %vm1170, 0.0
      %1246 = vst.msk [vmem:[#allocation2 + $0x258] sm:$0xff] %vm1170, 0.0
      %1247 = vst.msk [vmem:[#allocation2 + $0x260] sm:$0xff] %vm1170, 0.0
      %1248 = vst.msk [vmem:[#allocation2 + $0x268] sm:$0xff] %vm1170, 0.0
      %1249 = vst.msk [vmem:[#allocation2 + $0x270] sm:$0xff] %vm1170, 0.0
      %1250 = vst.msk [vmem:[#allocation2 + $0x278] sm:$0xff] %vm1170, 0.0
      %s1251 = scalar_lea.vmem [#allocation2], 64
      %1252 = vst.msk [vmem:[%s1251 + $0x8] sm:$0xff] %vm1170, %v1138
      %1253 = vst.msk [vmem:[%s1251 + $0x10] sm:$0xff] %vm1170, %v1139
      %1254 = vst.msk [vmem:[%s1251 + $0x28] sm:$0xff] %vm1170, %v1140
      %1255 = vst.msk [vmem:[%s1251 + $0x30] sm:$0xff] %vm1170, %v1141
      %1256 = vst.msk [vmem:[%s1251 + $0x48] sm:$0xff] %vm1170, %v1142
      %1257 = vst.msk [vmem:[%s1251 + $0x50] sm:$0xff] %vm1170, %v1143
      %1258 = vst.msk [vmem:[%s1251 + $0x68] sm:$0xff] %vm1170, %v1144
      %1259 = vst.msk [vmem:[%s1251 + $0x70] sm:$0xff] %vm1170, %v1145
      %1260 = vst.msk [vmem:[%s1251 + $0x88] sm:$0xff] %vm1170, %v1146
      %1261 = vst.msk [vmem:[%s1251 + $0x90] sm:$0xff] %vm1170, %v1147
      %1262 = vst.msk [vmem:[%s1251 + $0xa8] sm:$0xff] %vm1170, %v1148
      %1263 = vst.msk [vmem:[%s1251 + $0xb0] sm:$0xff] %vm1170, %v1149
      %1264 = vst.msk [vmem:[%s1251 + $0xc8] sm:$0xff] %vm1170, %v1150
      %1265 = vst.msk [vmem:[%s1251 + $0xd0] sm:$0xff] %vm1170, %v1151
      %1266 = vst.msk [vmem:[%s1251 + $0xe8] sm:$0xff] %vm1170, %v1152
      %1267 = vst.msk [vmem:[%s1251 + $0xf0] sm:$0xff] %vm1170, %v1153
      %1268 = vst.msk [vmem:[%s1251 + $0x108] sm:$0xff] %vm1170, %v1154
      %1269 = vst.msk [vmem:[%s1251 + $0x110] sm:$0xff] %vm1170, %v1155
      %1270 = vst.msk [vmem:[%s1251 + $0x128] sm:$0xff] %vm1170, %v1156
      %1271 = vst.msk [vmem:[%s1251 + $0x130] sm:$0xff] %vm1170, %v1157
      %1272 = vst.msk [vmem:[%s1251 + $0x148] sm:$0xff] %vm1170, %v1158
      %1273 = vst.msk [vmem:[%s1251 + $0x150] sm:$0xff] %vm1170, %v1159
      %1274 = vst.msk [vmem:[%s1251 + $0x168] sm:$0xff] %vm1170, %v1160
      %1275 = vst.msk [vmem:[%s1251 + $0x170] sm:$0xff] %vm1170, %v1161
      %1276 = vst.msk [vmem:[%s1251 + $0x188] sm:$0xff] %vm1170, %v1162
      %1277 = vst.msk [vmem:[%s1251 + $0x190] sm:$0xff] %vm1170, %v1163
      %1278 = vst.msk [vmem:[%s1251 + $0x1a8] sm:$0xff] %vm1170, %v1164
      %1279 = vst.msk [vmem:[%s1251 + $0x1b0] sm:$0xff] %vm1170, %v1165
      %1280 = vst.msk [vmem:[%s1251 + $0x1c8] sm:$0xff] %vm1170, %v1166
      %1281 = vst.msk [vmem:[%s1251 + $0x1d0] sm:$0xff] %vm1170, %v1167
      %1282 = vst.msk [vmem:[%s1251 + $0x1e8] sm:$0xff] %vm1170, %v1168
      %1283 = vst.msk [vmem:[%s1251 + $0x1f0] sm:$0xff] %vm1170, %v1169
      %v1284 = vld [vmem:[#allocation2 + $0x6] sm:$0xff]
      %v1285 = vld [vmem:[#allocation2 + $0xe] sm:$0xff]
      %v1286 = vld [vmem:[#allocation2 + $0x26] sm:$0xff]
      %v1287 = vld [vmem:[#allocation2 + $0x2e] sm:$0xff]
      %v1288 = vld [vmem:[#allocation2 + $0x46] sm:$0xff]
      %v1289 = vld [vmem:[#allocation2 + $0x4e] sm:$0xff]
      %v1290 = vld [vmem:[#allocation2 + $0x66] sm:$0xff]
      %v1291 = vld [vmem:[#allocation2 + $0x6e] sm:$0xff]
      %v1292 = vld [vmem:[#allocation2 + $0x86] sm:$0xff]
      %v1293 = vld [vmem:[#allocation2 + $0x8e] sm:$0xff]
      %v1294 = vld [vmem:[#allocation2 + $0xa6] sm:$0xff]
      %v1295 = vld [vmem:[#allocation2 + $0xae] sm:$0xff]
      %v1296 = vld [vmem:[#allocation2 + $0xc6] sm:$0xff]
      %v1297 = vld [vmem:[#allocation2 + $0xce] sm:$0xff]
      %v1298 = vld [vmem:[#allocation2 + $0xe6] sm:$0xff]
      %v1299 = vld [vmem:[#allocation2 + $0xee] sm:$0xff]
      %v1300 = vld [vmem:[#allocation2 + $0x106] sm:$0xff]
      %v1301 = vld [vmem:[#allocation2 + $0x10e] sm:$0xff]
      %v1302 = vld [vmem:[#allocation2 + $0x126] sm:$0xff]
      %v1303 = vld [vmem:[#allocation2 + $0x12e] sm:$0xff]
      %v1304 = vld [vmem:[#allocation2 + $0x146] sm:$0xff]
      %v1305 = vld [vmem:[#allocation2 + $0x14e] sm:$0xff]
      %v1306 = vld [vmem:[#allocation2 + $0x166] sm:$0xff]
      %v1307 = vld [vmem:[#allocation2 + $0x16e] sm:$0xff]
      %v1308 = vld [vmem:[#allocation2 + $0x186] sm:$0xff]
      %v1309 = vld [vmem:[#allocation2 + $0x18e] sm:$0xff]
      %v1310 = vld [vmem:[#allocation2 + $0x1a6] sm:$0xff]
      %v1311 = vld [vmem:[#allocation2 + $0x1ae] sm:$0xff]
      %v1312 = vld [vmem:[#allocation2 + $0x1c6] sm:$0xff]
      %v1313 = vld [vmem:[#allocation2 + $0x1ce] sm:$0xff]
      %v1314 = vld [vmem:[#allocation2 + $0x1e6] sm:$0xff]
      %v1315 = vld [vmem:[#allocation2 + $0x1ee] sm:$0xff]
      %v1316 = vld [vmem:[%s3] sm:$0xff]
      %v1317 = vld [vmem:[%s3 + $0x8] sm:$0xff]
      %v1318 = vld [vmem:[%s3 + $0x10] sm:$0xff]
      %v1319 = vld [vmem:[%s3 + $0x18] sm:$0xff]
      %v1320 = vld [vmem:[#allocation2 + $0x7] sm:$0xff]
      %v1321 = vld [vmem:[#allocation2 + $0xf] sm:$0xff]
      %v1322 = vld [vmem:[#allocation2 + $0x27] sm:$0xff]
      %v1323 = vld [vmem:[#allocation2 + $0x2f] sm:$0xff]
      %v1324 = vld [vmem:[#allocation2 + $0x47] sm:$0xff]
      %v1325 = vld [vmem:[#allocation2 + $0x4f] sm:$0xff]
      %v1326 = vld [vmem:[#allocation2 + $0x67] sm:$0xff]
      %v1327 = vld [vmem:[#allocation2 + $0x6f] sm:$0xff]
      %v1328 = vld [vmem:[#allocation2 + $0x87] sm:$0xff]
      %v1329 = vld [vmem:[#allocation2 + $0x8f] sm:$0xff]
      %v1330 = vld [vmem:[#allocation2 + $0xa7] sm:$0xff]
      %v1331 = vld [vmem:[#allocation2 + $0xaf] sm:$0xff]
      %v1332 = vld [vmem:[#allocation2 + $0xc7] sm:$0xff]
      %v1333 = vld [vmem:[#allocation2 + $0xcf] sm:$0xff]
      %v1334 = vld [vmem:[#allocation2 + $0xe7] sm:$0xff]
      %v1335 = vld [vmem:[#allocation2 + $0xef] sm:$0xff]
      %v1336 = vld [vmem:[#allocation2 + $0x107] sm:$0xff]
      %v1337 = vld [vmem:[#allocation2 + $0x10f] sm:$0xff]
      %v1338 = vld [vmem:[#allocation2 + $0x127] sm:$0xff]
      %v1339 = vld [vmem:[#allocation2 + $0x12f] sm:$0xff]
      %v1340 = vld [vmem:[#allocation2 + $0x147] sm:$0xff]
      %v1341 = vld [vmem:[#allocation2 + $0x14f] sm:$0xff]
      %v1342 = vld [vmem:[#allocation2 + $0x167] sm:$0xff]
      %v1343 = vld [vmem:[#allocation2 + $0x16f] sm:$0xff]
      %v1344 = vld [vmem:[#allocation2 + $0x187] sm:$0xff]
      %v1345 = vld [vmem:[#allocation2 + $0x18f] sm:$0xff]
      %v1346 = vld [vmem:[#allocation2 + $0x1a7] sm:$0xff]
      %v1347 = vld [vmem:[#allocation2 + $0x1af] sm:$0xff]
      %v1348 = vld [vmem:[#allocation2 + $0x1c7] sm:$0xff]
      %v1349 = vld [vmem:[#allocation2 + $0x1cf] sm:$0xff]
      %v1350 = vld [vmem:[#allocation2 + $0x1e7] sm:$0xff]
      %v1351 = vld [vmem:[#allocation2 + $0x1ef] sm:$0xff]
      %s1352 = scalar_lea.vmem %s3, 32
      %v1353 = vld [vmem:[%s1352] sm:$0xff]
      %v1354 = vld [vmem:[%s1352 + $0x8] sm:$0xff]
      %v1355 = vld [vmem:[%s1352 + $0x10] sm:$0xff]
      %v1356 = vld [vmem:[%s1352 + $0x18] sm:$0xff]
      %v1358 = vsel %vm1170, %v1320, 0
      %v1361 = vsel %vm1170, %v1321, 0
      %v1364 = vsel %vm1170, %v1322, 0
      %v1367 = vsel %vm1170, %v1323, 0
      %v1370 = vsel %vm1170, %v1324, 0
      %v1373 = vsel %vm1170, %v1325, 0
      %v1376 = vsel %vm1170, %v1326, 0
      %v1379 = vsel %vm1170, %v1327, 0
      %v1382 = vsel %vm1170, %v1328, 0
      %v1385 = vsel %vm1170, %v1329, 0
      %v1388 = vsel %vm1170, %v1330, 0
      %v1391 = vsel %vm1170, %v1331, 0
      %v1394 = vsel %vm1170, %v1332, 0
      %v1397 = vsel %vm1170, %v1333, 0
      %v1400 = vsel %vm1170, %v1334, 0
      %v1403 = vsel %vm1170, %v1335, 0
      %v1406 = vsel %vm1170, %v1336, 0
      %v1409 = vsel %vm1170, %v1337, 0
      %v1412 = vsel %vm1170, %v1338, 0
      %v1415 = vsel %vm1170, %v1339, 0
      %v1418 = vsel %vm1170, %v1340, 0
      %v1421 = vsel %vm1170, %v1341, 0
      %v1424 = vsel %vm1170, %v1342, 0
      %v1427 = vsel %vm1170, %v1343, 0
      %v1430 = vsel %vm1170, %v1344, 0
      %v1433 = vsel %vm1170, %v1345, 0
      %v1436 = vsel %vm1170, %v1346, 0
      %v1439 = vsel %vm1170, %v1347, 0
      %v1442 = vsel %vm1170, %v1348, 0
      %v1445 = vsel %vm1170, %v1349, 0
      %v1448 = vsel %vm1170, %v1350, 0
      %v1451 = vsel %vm1170, %v1351, 0
      %1453 = vmatpush.msra.mxu0 0.0
      %1454 = vmatpush.msra.mxu0 0.0
      %1455 = vmatpush.msra.mxu0 0.0
      %1456 = vmatpush.msra.mxu0 0.0
      %1457 = vmatpush.msra.mxu0 0.0
      %1458 = vmatpush.msra.mxu0 0.0
      %1459 = vmatpush.msra.mxu0 0.0
      %1460 = vmatpush.msra.mxu0 0.0
      %1461 = vmatpush.msra.mxu0 0.0
      %1462 = vmatpush.msra.mxu0 0.0
      %1463 = vmatpush.msra.mxu0 0.0
      %1464 = vmatpush.msra.mxu0 0.0
      %1465 = vmatpush.msra.mxu0 %v1356
      %1466 = vmatpush.msra.mxu0 %v1355
      %1467 = vmatpush.msra.mxu0 %v1354
      %1468 = vmatpush.msra.mxu0 %v1353
      %1469 = vmatmul.f32.gmra.mxu0 %v1358
      %v1470 = vpop.f32.mrf.mxu0
      %v1471 = vadd.f32 0.0, %v1470
      %1472 = vmatmul.f32.gmra.mxu0 %v1361
      %v1473 = vpop.f32.mrf.mxu0
      %v1474 = vadd.f32 0.0, %v1473
      %1475 = vmatmul.f32.gmra.mxu0 %v1364
      %v1476 = vpop.f32.mrf.mxu0
      %v1477 = vadd.f32 0.0, %v1476
      %1478 = vmatmul.f32.gmra.mxu0 %v1367
      %v1479 = vpop.f32.mrf.mxu0
      %v1480 = vadd.f32 0.0, %v1479
      %1481 = vmatmul.f32.gmra.mxu0 %v1370
      %v1482 = vpop.f32.mrf.mxu0
      %v1483 = vadd.f32 0.0, %v1482
      %1484 = vmatmul.f32.gmra.mxu0 %v1373
      %v1485 = vpop.f32.mrf.mxu0
      %v1486 = vadd.f32 0.0, %v1485
      %1487 = vmatmul.f32.gmra.mxu0 %v1376
      %v1488 = vpop.f32.mrf.mxu0
      %v1489 = vadd.f32 0.0, %v1488
      %1490 = vmatmul.f32.gmra.mxu0 %v1379
      %v1491 = vpop.f32.mrf.mxu0
      %v1492 = vadd.f32 0.0, %v1491
      %1493 = vmatmul.f32.gmra.mxu0 %v1382
      %v1494 = vpop.f32.mrf.mxu0
      %v1495 = vadd.f32 0.0, %v1494
      %1496 = vmatmul.f32.gmra.mxu0 %v1385
      %v1497 = vpop.f32.mrf.mxu0
      %v1498 = vadd.f32 0.0, %v1497
      %1499 = vmatmul.f32.gmra.mxu0 %v1388
      %v1500 = vpop.f32.mrf.mxu0
      %v1501 = vadd.f32 0.0, %v1500
      %1502 = vmatmul.f32.gmra.mxu0 %v1391
      %v1503 = vpop.f32.mrf.mxu0
      %v1504 = vadd.f32 0.0, %v1503
      %1505 = vmatmul.f32.gmra.mxu0 %v1394
      %v1506 = vpop.f32.mrf.mxu0
      %v1507 = vadd.f32 0.0, %v1506
      %1508 = vmatmul.f32.gmra.mxu0 %v1397
      %v1509 = vpop.f32.mrf.mxu0
      %v1510 = vadd.f32 0.0, %v1509
      %1511 = vmatmul.f32.gmra.mxu0 %v1400
      %v1512 = vpop.f32.mrf.mxu0
      %v1513 = vadd.f32 0.0, %v1512
      %1514 = vmatmul.f32.gmra.mxu0 %v1403
      %v1515 = vpop.f32.mrf.mxu0
      %v1516 = vadd.f32 0.0, %v1515
      %1517 = vmatmul.f32.gmra.mxu0 %v1406
      %v1518 = vpop.f32.mrf.mxu0
      %v1519 = vadd.f32 0.0, %v1518
      %1520 = vmatmul.f32.gmra.mxu0 %v1409
      %v1521 = vpop.f32.mrf.mxu0
      %v1522 = vadd.f32 0.0, %v1521
      %1523 = vmatmul.f32.gmra.mxu0 %v1412
      %v1524 = vpop.f32.mrf.mxu0
      %v1525 = vadd.f32 0.0, %v1524
      %1526 = vmatmul.f32.gmra.mxu0 %v1415
      %v1527 = vpop.f32.mrf.mxu0
      %v1528 = vadd.f32 0.0, %v1527
      %1529 = vmatmul.f32.gmra.mxu0 %v1418
      %v1530 = vpop.f32.mrf.mxu0
      %v1531 = vadd.f32 0.0, %v1530
      %1532 = vmatmul.f32.gmra.mxu0 %v1421
      %v1533 = vpop.f32.mrf.mxu0
      %v1534 = vadd.f32 0.0, %v1533
      %1535 = vmatmul.f32.gmra.mxu0 %v1424
      %v1536 = vpop.f32.mrf.mxu0
      %v1537 = vadd.f32 0.0, %v1536
      %1538 = vmatmul.f32.gmra.mxu0 %v1427
      %v1539 = vpop.f32.mrf.mxu0
      %v1540 = vadd.f32 0.0, %v1539
      %1541 = vmatmul.f32.gmra.mxu0 %v1430
      %v1542 = vpop.f32.mrf.mxu0
      %v1543 = vadd.f32 0.0, %v1542
      %1544 = vmatmul.f32.gmra.mxu0 %v1433
      %v1545 = vpop.f32.mrf.mxu0
      %v1546 = vadd.f32 0.0, %v1545
      %1547 = vmatmul.f32.gmra.mxu0 %v1436
      %v1548 = vpop.f32.mrf.mxu0
      %v1549 = vadd.f32 0.0, %v1548
      %1550 = vmatmul.f32.gmra.mxu0 %v1439
      %v1551 = vpop.f32.mrf.mxu0
      %v1552 = vadd.f32 0.0, %v1551
      %1553 = vmatmul.f32.gmra.mxu0 %v1442
      %v1554 = vpop.f32.mrf.mxu0
      %v1555 = vadd.f32 0.0, %v1554
      %1556 = vmatmul.f32.gmra.mxu0 %v1445
      %v1557 = vpop.f32.mrf.mxu0
      %v1558 = vadd.f32 0.0, %v1557
      %1559 = vmatmul.f32.gmra.mxu0 %v1448
      %v1560 = vpop.f32.mrf.mxu0
      %v1561 = vadd.f32 0.0, %v1560
      %1562 = vmatmul.f32.gmra.mxu0 %v1451
      %v1563 = vpop.f32.mrf.mxu0
      %v1564 = vadd.f32 0.0, %v1563
      %1565 = vdwg.mxu0
      %v1567 = vsel %vm1170, %v1284, 0
      %v1570 = vsel %vm1170, %v1285, 0
      %v1573 = vsel %vm1170, %v1286, 0
      %v1576 = vsel %vm1170, %v1287, 0
      %v1579 = vsel %vm1170, %v1288, 0
      %v1582 = vsel %vm1170, %v1289, 0
      %v1585 = vsel %vm1170, %v1290, 0
      %v1588 = vsel %vm1170, %v1291, 0
      %v1591 = vsel %vm1170, %v1292, 0
      %v1594 = vsel %vm1170, %v1293, 0
      %v1597 = vsel %vm1170, %v1294, 0
      %v1600 = vsel %vm1170, %v1295, 0
      %v1603 = vsel %vm1170, %v1296, 0
      %v1606 = vsel %vm1170, %v1297, 0
      %v1609 = vsel %vm1170, %v1298, 0
      %v1612 = vsel %vm1170, %v1299, 0
      %v1615 = vsel %vm1170, %v1300, 0
      %v1618 = vsel %vm1170, %v1301, 0
      %v1621 = vsel %vm1170, %v1302, 0
      %v1624 = vsel %vm1170, %v1303, 0
      %v1627 = vsel %vm1170, %v1304, 0
      %v1630 = vsel %vm1170, %v1305, 0
      %v1633 = vsel %vm1170, %v1306, 0
      %v1636 = vsel %vm1170, %v1307, 0
      %v1639 = vsel %vm1170, %v1308, 0
      %v1642 = vsel %vm1170, %v1309, 0
      %v1645 = vsel %vm1170, %v1310, 0
      %v1648 = vsel %vm1170, %v1311, 0
      %v1651 = vsel %vm1170, %v1312, 0
      %v1654 = vsel %vm1170, %v1313, 0
      %v1657 = vsel %vm1170, %v1314, 0
      %v1660 = vsel %vm1170, %v1315, 0
      %1662 = vmatpush.msra.mxu0 0.0
      %1663 = vmatpush.msra.mxu0 0.0
      %1664 = vmatpush.msra.mxu0 0.0
      %1665 = vmatpush.msra.mxu0 0.0
      %1666 = vmatpush.msra.mxu0 0.0
      %1667 = vmatpush.msra.mxu0 0.0
      %1668 = vmatpush.msra.mxu0 0.0
      %1669 = vmatpush.msra.mxu0 0.0
      %1670 = vmatpush.msra.mxu0 0.0
      %1671 = vmatpush.msra.mxu0 0.0
      %1672 = vmatpush.msra.mxu0 0.0
      %1673 = vmatpush.msra.mxu0 0.0
      %1674 = vmatpush.msra.mxu0 %v1319
      %1675 = vmatpush.msra.mxu0 %v1318
      %1676 = vmatpush.msra.mxu0 %v1317
      %1677 = vmatpush.msra.mxu0 %v1316
      %1678 = vmatmul.f32.gmra.mxu0 %v1567
      %v1679 = vpop.f32.mrf.mxu0
      %v1680 = vadd.f32 %v1471, %v1679
      %1681 = vmatmul.f32.gmra.mxu0 %v1570
      %v1682 = vpop.f32.mrf.mxu0
      %v1683 = vadd.f32 %v1474, %v1682
      %1684 = vmatmul.f32.gmra.mxu0 %v1573
      %v1685 = vpop.f32.mrf.mxu0
      %v1686 = vadd.f32 %v1477, %v1685
      %1687 = vmatmul.f32.gmra.mxu0 %v1576
      %v1688 = vpop.f32.mrf.mxu0
      %v1689 = vadd.f32 %v1480, %v1688
      %1690 = vmatmul.f32.gmra.mxu0 %v1579
      %v1691 = vpop.f32.mrf.mxu0
      %v1692 = vadd.f32 %v1483, %v1691
      %1693 = vmatmul.f32.gmra.mxu0 %v1582
      %v1694 = vpop.f32.mrf.mxu0
      %v1695 = vadd.f32 %v1486, %v1694
      %1696 = vmatmul.f32.gmra.mxu0 %v1585
      %v1697 = vpop.f32.mrf.mxu0
      %v1698 = vadd.f32 %v1489, %v1697
      %1699 = vmatmul.f32.gmra.mxu0 %v1588
      %v1700 = vpop.f32.mrf.mxu0
      %v1701 = vadd.f32 %v1492, %v1700
      %1702 = vmatmul.f32.gmra.mxu0 %v1591
      %v1703 = vpop.f32.mrf.mxu0
      %v1704 = vadd.f32 %v1495, %v1703
      %1705 = vmatmul.f32.gmra.mxu0 %v1594
      %v1706 = vpop.f32.mrf.mxu0
      %v1707 = vadd.f32 %v1498, %v1706
      %1708 = vmatmul.f32.gmra.mxu0 %v1597
      %v1709 = vpop.f32.mrf.mxu0
      %v1710 = vadd.f32 %v1501, %v1709
      %1711 = vmatmul.f32.gmra.mxu0 %v1600
      %v1712 = vpop.f32.mrf.mxu0
      %v1713 = vadd.f32 %v1504, %v1712
      %1714 = vmatmul.f32.gmra.mxu0 %v1603
      %v1715 = vpop.f32.mrf.mxu0
      %v1716 = vadd.f32 %v1507, %v1715
      %1717 = vmatmul.f32.gmra.mxu0 %v1606
      %v1718 = vpop.f32.mrf.mxu0
      %v1719 = vadd.f32 %v1510, %v1718
      %1720 = vmatmul.f32.gmra.mxu0 %v1609
      %v1721 = vpop.f32.mrf.mxu0
      %v1722 = vadd.f32 %v1513, %v1721
      %1723 = vmatmul.f32.gmra.mxu0 %v1612
      %v1724 = vpop.f32.mrf.mxu0
      %v1725 = vadd.f32 %v1516, %v1724
      %1726 = vmatmul.f32.gmra.mxu0 %v1615
      %v1727 = vpop.f32.mrf.mxu0
      %v1728 = vadd.f32 %v1519, %v1727
      %1729 = vmatmul.f32.gmra.mxu0 %v1618
      %v1730 = vpop.f32.mrf.mxu0
      %v1731 = vadd.f32 %v1522, %v1730
      %1732 = vmatmul.f32.gmra.mxu0 %v1621
      %v1733 = vpop.f32.mrf.mxu0
      %v1734 = vadd.f32 %v1525, %v1733
      %1735 = vmatmul.f32.gmra.mxu0 %v1624
      %v1736 = vpop.f32.mrf.mxu0
      %v1737 = vadd.f32 %v1528, %v1736
      %1738 = vmatmul.f32.gmra.mxu0 %v1627
      %v1739 = vpop.f32.mrf.mxu0
      %v1740 = vadd.f32 %v1531, %v1739
      %1741 = vmatmul.f32.gmra.mxu0 %v1630
      %v1742 = vpop.f32.mrf.mxu0
      %v1743 = vadd.f32 %v1534, %v1742
      %1744 = vmatmul.f32.gmra.mxu0 %v1633
      %v1745 = vpop.f32.mrf.mxu0
      %v1746 = vadd.f32 %v1537, %v1745
      %1747 = vmatmul.f32.gmra.mxu0 %v1636
      %v1748 = vpop.f32.mrf.mxu0
      %v1749 = vadd.f32 %v1540, %v1748
      %1750 = vmatmul.f32.gmra.mxu0 %v1639
      %v1751 = vpop.f32.mrf.mxu0
      %v1752 = vadd.f32 %v1543, %v1751
      %1753 = vmatmul.f32.gmra.mxu0 %v1642
      %v1754 = vpop.f32.mrf.mxu0
      %v1755 = vadd.f32 %v1546, %v1754
      %1756 = vmatmul.f32.gmra.mxu0 %v1645
      %v1757 = vpop.f32.mrf.mxu0
      %v1758 = vadd.f32 %v1549, %v1757
      %1759 = vmatmul.f32.gmra.mxu0 %v1648
      %v1760 = vpop.f32.mrf.mxu0
      %v1761 = vadd.f32 %v1552, %v1760
      %1762 = vmatmul.f32.gmra.mxu0 %v1651
      %v1763 = vpop.f32.mrf.mxu0
      %v1764 = vadd.f32 %v1555, %v1763
      %1765 = vmatmul.f32.gmra.mxu0 %v1654
      %v1766 = vpop.f32.mrf.mxu0
      %v1767 = vadd.f32 %v1558, %v1766
      %1768 = vmatmul.f32.gmra.mxu0 %v1657
      %v1769 = vpop.f32.mrf.mxu0
      %v1770 = vadd.f32 %v1561, %v1769
      %1771 = vmatmul.f32.gmra.mxu0 %v1660
      %v1772 = vpop.f32.mrf.mxu0
      %v1773 = vadd.f32 %v1564, %v1772
      %1774 = vdwg.mxu0
      %v1775 = vld [vmem:[#allocation2 + $0x8] sm:$0xff]
      %v1776 = vld [vmem:[#allocation2 + $0x10] sm:$0xff]
      %v1777 = vld [vmem:[#allocation2 + $0x28] sm:$0xff]
      %v1778 = vld [vmem:[#allocation2 + $0x30] sm:$0xff]
      %v1779 = vld [vmem:[#allocation2 + $0x48] sm:$0xff]
      %v1780 = vld [vmem:[#allocation2 + $0x50] sm:$0xff]
      %v1781 = vld [vmem:[#allocation2 + $0x68] sm:$0xff]
      %v1782 = vld [vmem:[#allocation2 + $0x70] sm:$0xff]
      %v1783 = vld [vmem:[#allocation2 + $0x88] sm:$0xff]
      %v1784 = vld [vmem:[#allocation2 + $0x90] sm:$0xff]
      %v1785 = vld [vmem:[#allocation2 + $0xa8] sm:$0xff]
      %v1786 = vld [vmem:[#allocation2 + $0xb0] sm:$0xff]
      %v1787 = vld [vmem:[#allocation2 + $0xc8] sm:$0xff]
      %v1788 = vld [vmem:[#allocation2 + $0xd0] sm:$0xff]
      %v1789 = vld [vmem:[#allocation2 + $0xe8] sm:$0xff]
      %v1790 = vld [vmem:[#allocation2 + $0xf0] sm:$0xff]
      %v1791 = vld [vmem:[#allocation2 + $0x108] sm:$0xff]
      %v1792 = vld [vmem:[#allocation2 + $0x110] sm:$0xff]
      %v1793 = vld [vmem:[#allocation2 + $0x128] sm:$0xff]
      %v1794 = vld [vmem:[#allocation2 + $0x130] sm:$0xff]
      %v1795 = vld [vmem:[#allocation2 + $0x148] sm:$0xff]
      %v1796 = vld [vmem:[#allocation2 + $0x150] sm:$0xff]
      %v1797 = vld [vmem:[#allocation2 + $0x168] sm:$0xff]
      %v1798 = vld [vmem:[#allocation2 + $0x170] sm:$0xff]
      %v1799 = vld [vmem:[#allocation2 + $0x188] sm:$0xff]
      %v1800 = vld [vmem:[#allocation2 + $0x190] sm:$0xff]
      %v1801 = vld [vmem:[#allocation2 + $0x1a8] sm:$0xff]
      %v1802 = vld [vmem:[#allocation2 + $0x1b0] sm:$0xff]
      %v1803 = vld [vmem:[#allocation2 + $0x1c8] sm:$0xff]
      %v1804 = vld [vmem:[#allocation2 + $0x1d0] sm:$0xff]
      %v1805 = vld [vmem:[#allocation2 + $0x1e8] sm:$0xff]
      %v1806 = vld [vmem:[#allocation2 + $0x1f0] sm:$0xff]
      %s1807 = scalar_lea.vmem %s3, 64
      %v1808 = vld [vmem:[%s1807] sm:$0xff]
      %v1809 = vld [vmem:[%s1807 + $0x8] sm:$0xff]
      %v1810 = vld [vmem:[%s1807 + $0x10] sm:$0xff]
      %v1811 = vld [vmem:[%s1807 + $0x18] sm:$0xff]
      %v1813 = vsel %vm1170, %v1775, 0
      %v1816 = vsel %vm1170, %v1776, 0
      %v1819 = vsel %vm1170, %v1777, 0
      %v1822 = vsel %vm1170, %v1778, 0
      %v1825 = vsel %vm1170, %v1779, 0
      %v1828 = vsel %vm1170, %v1780, 0
      %v1831 = vsel %vm1170, %v1781, 0
      %v1834 = vsel %vm1170, %v1782, 0
      %v1837 = vsel %vm1170, %v1783, 0
      %v1840 = vsel %vm1170, %v1784, 0
      %v1843 = vsel %vm1170, %v1785, 0
      %v1846 = vsel %vm1170, %v1786, 0
      %v1849 = vsel %vm1170, %v1787, 0
      %v1852 = vsel %vm1170, %v1788, 0
      %v1855 = vsel %vm1170, %v1789, 0
      %v1858 = vsel %vm1170, %v1790, 0
      %v1861 = vsel %vm1170, %v1791, 0
      %v1864 = vsel %vm1170, %v1792, 0
      %v1867 = vsel %vm1170, %v1793, 0
      %v1870 = vsel %vm1170, %v1794, 0
      %v1873 = vsel %vm1170, %v1795, 0
      %v1876 = vsel %vm1170, %v1796, 0
      %v1879 = vsel %vm1170, %v1797, 0
      %v1882 = vsel %vm1170, %v1798, 0
      %v1885 = vsel %vm1170, %v1799, 0
      %v1888 = vsel %vm1170, %v1800, 0
      %v1891 = vsel %vm1170, %v1801, 0
      %v1894 = vsel %vm1170, %v1802, 0
      %v1897 = vsel %vm1170, %v1803, 0
      %v1900 = vsel %vm1170, %v1804, 0
      %v1903 = vsel %vm1170, %v1805, 0
      %v1906 = vsel %vm1170, %v1806, 0
      %1908 = vmatpush.msra.mxu0 0.0
      %1909 = vmatpush.msra.mxu0 0.0
      %1910 = vmatpush.msra.mxu0 0.0
      %1911 = vmatpush.msra.mxu0 0.0
      %1912 = vmatpush.msra.mxu0 0.0
      %1913 = vmatpush.msra.mxu0 0.0
      %1914 = vmatpush.msra.mxu0 0.0
      %1915 = vmatpush.msra.mxu0 0.0
      %1916 = vmatpush.msra.mxu0 0.0
      %1917 = vmatpush.msra.mxu0 0.0
      %1918 = vmatpush.msra.mxu0 0.0
      %1919 = vmatpush.msra.mxu0 0.0
      %1920 = vmatpush.msra.mxu0 %v1811
      %1921 = vmatpush.msra.mxu0 %v1810
      %1922 = vmatpush.msra.mxu0 %v1809
      %1923 = vmatpush.msra.mxu0 %v1808
      %1924 = vmatmul.f32.gmra.mxu0 %v1813
      %v1925 = vpop.f32.mrf.mxu0
      %v1926 = vadd.f32 0.0, %v1925
      %1927 = vmatmul.f32.gmra.mxu0 %v1816
      %v1928 = vpop.f32.mrf.mxu0
      %v1929 = vadd.f32 0.0, %v1928
      %1930 = vmatmul.f32.gmra.mxu0 %v1819
      %v1931 = vpop.f32.mrf.mxu0
      %v1932 = vadd.f32 0.0, %v1931
      %1933 = vmatmul.f32.gmra.mxu0 %v1822
      %v1934 = vpop.f32.mrf.mxu0
      %v1935 = vadd.f32 0.0, %v1934
      %1936 = vmatmul.f32.gmra.mxu0 %v1825
      %v1937 = vpop.f32.mrf.mxu0
      %v1938 = vadd.f32 0.0, %v1937
      %1939 = vmatmul.f32.gmra.mxu0 %v1828
      %v1940 = vpop.f32.mrf.mxu0
      %v1941 = vadd.f32 0.0, %v1940
      %1942 = vmatmul.f32.gmra.mxu0 %v1831
      %v1943 = vpop.f32.mrf.mxu0
      %v1944 = vadd.f32 0.0, %v1943
      %1945 = vmatmul.f32.gmra.mxu0 %v1834
      %v1946 = vpop.f32.mrf.mxu0
      %v1947 = vadd.f32 0.0, %v1946
      %1948 = vmatmul.f32.gmra.mxu0 %v1837
      %v1949 = vpop.f32.mrf.mxu0
      %v1950 = vadd.f32 0.0, %v1949
      %1951 = vmatmul.f32.gmra.mxu0 %v1840
      %v1952 = vpop.f32.mrf.mxu0
      %v1953 = vadd.f32 0.0, %v1952
      %1954 = vmatmul.f32.gmra.mxu0 %v1843
      %v1955 = vpop.f32.mrf.mxu0
      %v1956 = vadd.f32 0.0, %v1955
      %1957 = vmatmul.f32.gmra.mxu0 %v1846
      %v1958 = vpop.f32.mrf.mxu0
      %v1959 = vadd.f32 0.0, %v1958
      %1960 = vmatmul.f32.gmra.mxu0 %v1849
      %v1961 = vpop.f32.mrf.mxu0
      %v1962 = vadd.f32 0.0, %v1961
      %1963 = vmatmul.f32.gmra.mxu0 %v1852
      %v1964 = vpop.f32.mrf.mxu0
      %v1965 = vadd.f32 0.0, %v1964
      %1966 = vmatmul.f32.gmra.mxu0 %v1855
      %v1967 = vpop.f32.mrf.mxu0
      %v1968 = vadd.f32 0.0, %v1967
      %1969 = vmatmul.f32.gmra.mxu0 %v1858
      %v1970 = vpop.f32.mrf.mxu0
      %v1971 = vadd.f32 0.0, %v1970
      %1972 = vmatmul.f32.gmra.mxu0 %v1861
      %v1973 = vpop.f32.mrf.mxu0
      %v1974 = vadd.f32 0.0, %v1973
      %1975 = vmatmul.f32.gmra.mxu0 %v1864
      %v1976 = vpop.f32.mrf.mxu0
      %v1977 = vadd.f32 0.0, %v1976
      %1978 = vmatmul.f32.gmra.mxu0 %v1867
      %v1979 = vpop.f32.mrf.mxu0
      %v1980 = vadd.f32 0.0, %v1979
      %1981 = vmatmul.f32.gmra.mxu0 %v1870
      %v1982 = vpop.f32.mrf.mxu0
      %v1983 = vadd.f32 0.0, %v1982
      %1984 = vmatmul.f32.gmra.mxu0 %v1873
      %v1985 = vpop.f32.mrf.mxu0
      %v1986 = vadd.f32 0.0, %v1985
      %1987 = vmatmul.f32.gmra.mxu0 %v1876
      %v1988 = vpop.f32.mrf.mxu0
      %v1989 = vadd.f32 0.0, %v1988
      %1990 = vmatmul.f32.gmra.mxu0 %v1879
      %v1991 = vpop.f32.mrf.mxu0
      %v1992 = vadd.f32 0.0, %v1991
      %1993 = vmatmul.f32.gmra.mxu0 %v1882
      %v1994 = vpop.f32.mrf.mxu0
      %v1995 = vadd.f32 0.0, %v1994
      %1996 = vmatmul.f32.gmra.mxu0 %v1885
      %v1997 = vpop.f32.mrf.mxu0
      %v1998 = vadd.f32 0.0, %v1997
      %1999 = vmatmul.f32.gmra.mxu0 %v1888
      %v2000 = vpop.f32.mrf.mxu0
      %v2001 = vadd.f32 0.0, %v2000
      %2002 = vmatmul.f32.gmra.mxu0 %v1891
      %v2003 = vpop.f32.mrf.mxu0
      %v2004 = vadd.f32 0.0, %v2003
      %2005 = vmatmul.f32.gmra.mxu0 %v1894
      %v2006 = vpop.f32.mrf.mxu0
      %v2007 = vadd.f32 0.0, %v2006
      %2008 = vmatmul.f32.gmra.mxu0 %v1897
      %v2009 = vpop.f32.mrf.mxu0
      %v2010 = vadd.f32 0.0, %v2009
      %2011 = vmatmul.f32.gmra.mxu0 %v1900
      %v2012 = vpop.f32.mrf.mxu0
      %v2013 = vadd.f32 0.0, %v2012
      %2014 = vmatmul.f32.gmra.mxu0 %v1903
      %v2015 = vpop.f32.mrf.mxu0
      %v2016 = vadd.f32 0.0, %v2015
      %2017 = vmatmul.f32.gmra.mxu0 %v1906
      %v2018 = vpop.f32.mrf.mxu0
      %v2019 = vadd.f32 0.0, %v2018
      %2020 = vdwg.mxu0
      %v2021 = vadd.f32 %v1680, %v1926
      %v2022 = vadd.f32 %v1683, %v1929
      %v2023 = vadd.f32 %v1686, %v1932
      %v2024 = vadd.f32 %v1689, %v1935
      %v2025 = vadd.f32 %v1692, %v1938
      %v2026 = vadd.f32 %v1695, %v1941
      %v2027 = vadd.f32 %v1698, %v1944
      %v2028 = vadd.f32 %v1701, %v1947
      %v2029 = vadd.f32 %v1704, %v1950
      %v2030 = vadd.f32 %v1707, %v1953
      %v2031 = vadd.f32 %v1710, %v1956
      %v2032 = vadd.f32 %v1713, %v1959
      %v2033 = vadd.f32 %v1716, %v1962
      %v2034 = vadd.f32 %v1719, %v1965
      %v2035 = vadd.f32 %v1722, %v1968
      %v2036 = vadd.f32 %v1725, %v1971
      %v2037 = vadd.f32 %v1728, %v1974
      %v2038 = vadd.f32 %v1731, %v1977
      %v2039 = vadd.f32 %v1734, %v1980
      %v2040 = vadd.f32 %v1737, %v1983
      %v2041 = vadd.f32 %v1740, %v1986
      %v2042 = vadd.f32 %v1743, %v1989
      %v2043 = vadd.f32 %v1746, %v1992
      %v2044 = vadd.f32 %v1749, %v1995
      %v2045 = vadd.f32 %v1752, %v1998
      %v2046 = vadd.f32 %v1755, %v2001
      %v2047 = vadd.f32 %v1758, %v2004
      %v2048 = vadd.f32 %v1761, %v2007
      %v2049 = vadd.f32 %v1764, %v2010
      %v2050 = vadd.f32 %v1767, %v2013
      %v2051 = vadd.f32 %v1770, %v2016
      %v2052 = vadd.f32 %v1773, %v2019
      %v2053 = vld [vmem:[#allocation2 + $0x9] sm:$0xff]
      %v2054 = vld [vmem:[#allocation2 + $0x11] sm:$0xff]
      %v2055 = vld [vmem:[#allocation2 + $0x29] sm:$0xff]
      %v2056 = vld [vmem:[#allocation2 + $0x31] sm:$0xff]
      %v2057 = vld [vmem:[#allocation2 + $0x49] sm:$0xff]
      %v2058 = vld [vmem:[#allocation2 + $0x51] sm:$0xff]
      %v2059 = vld [vmem:[#allocation2 + $0x69] sm:$0xff]
      %v2060 = vld [vmem:[#allocation2 + $0x71] sm:$0xff]
      %v2061 = vld [vmem:[#allocation2 + $0x89] sm:$0xff]
      %v2062 = vld [vmem:[#allocation2 + $0x91] sm:$0xff]
      %v2063 = vld [vmem:[#allocation2 + $0xa9] sm:$0xff]
      %v2064 = vld [vmem:[#allocation2 + $0xb1] sm:$0xff]
      %v2065 = vld [vmem:[#allocation2 + $0xc9] sm:$0xff]
      %v2066 = vld [vmem:[#allocation2 + $0xd1] sm:$0xff]
      %v2067 = vld [vmem:[#allocation2 + $0xe9] sm:$0xff]
      %v2068 = vld [vmem:[#allocation2 + $0xf1] sm:$0xff]
      %v2069 = vld [vmem:[#allocation2 + $0x109] sm:$0xff]
      %v2070 = vld [vmem:[#allocation2 + $0x111] sm:$0xff]
      %v2071 = vld [vmem:[#allocation2 + $0x129] sm:$0xff]
      %v2072 = vld [vmem:[#allocation2 + $0x131] sm:$0xff]
      %v2073 = vld [vmem:[#allocation2 + $0x149] sm:$0xff]
      %v2074 = vld [vmem:[#allocation2 + $0x151] sm:$0xff]
      %v2075 = vld [vmem:[#allocation2 + $0x169] sm:$0xff]
      %v2076 = vld [vmem:[#allocation2 + $0x171] sm:$0xff]
      %v2077 = vld [vmem:[#allocation2 + $0x189] sm:$0xff]
      %v2078 = vld [vmem:[#allocation2 + $0x191] sm:$0xff]
      %v2079 = vld [vmem:[#allocation2 + $0x1a9] sm:$0xff]
      %v2080 = vld [vmem:[#allocation2 + $0x1b1] sm:$0xff]
      %v2081 = vld [vmem:[#allocation2 + $0x1c9] sm:$0xff]
      %v2082 = vld [vmem:[#allocation2 + $0x1d1] sm:$0xff]
      %v2083 = vld [vmem:[#allocation2 + $0x1e9] sm:$0xff]
      %v2084 = vld [vmem:[#allocation2 + $0x1f1] sm:$0xff]
      %s2085 = scalar_lea.vmem %s3, 96
      %v2086 = vld [vmem:[%s2085] sm:$0xff]
      %v2087 = vld [vmem:[%s2085 + $0x8] sm:$0xff]
      %v2088 = vld [vmem:[%s2085 + $0x10] sm:$0xff]
      %v2089 = vld [vmem:[%s2085 + $0x18] sm:$0xff]
      %v2091 = vsel %vm1170, %v2053, 0
      %v2094 = vsel %vm1170, %v2054, 0
      %v2097 = vsel %vm1170, %v2055, 0
      %v2100 = vsel %vm1170, %v2056, 0
      %v2103 = vsel %vm1170, %v2057, 0
      %v2106 = vsel %vm1170, %v2058, 0
      %v2109 = vsel %vm1170, %v2059, 0
      %v2112 = vsel %vm1170, %v2060, 0
      %v2115 = vsel %vm1170, %v2061, 0
      %v2118 = vsel %vm1170, %v2062, 0
      %v2121 = vsel %vm1170, %v2063, 0
      %v2124 = vsel %vm1170, %v2064, 0
      %v2127 = vsel %vm1170, %v2065, 0
      %v2130 = vsel %vm1170, %v2066, 0
      %v2133 = vsel %vm1170, %v2067, 0
      %v2136 = vsel %vm1170, %v2068, 0
      %v2139 = vsel %vm1170, %v2069, 0
      %v2142 = vsel %vm1170, %v2070, 0
      %v2145 = vsel %vm1170, %v2071, 0
      %v2148 = vsel %vm1170, %v2072, 0
      %v2151 = vsel %vm1170, %v2073, 0
      %v2154 = vsel %vm1170, %v2074, 0
      %v2157 = vsel %vm1170, %v2075, 0
      %v2160 = vsel %vm1170, %v2076, 0
      %v2163 = vsel %vm1170, %v2077, 0
      %v2166 = vsel %vm1170, %v2078, 0
      %v2169 = vsel %vm1170, %v2079, 0
      %v2172 = vsel %vm1170, %v2080, 0
      %v2175 = vsel %vm1170, %v2081, 0
      %v2178 = vsel %vm1170, %v2082, 0
      %v2181 = vsel %vm1170, %v2083, 0
      %v2184 = vsel %vm1170, %v2084, 0
      %2186 = vmatpush.msra.mxu0 0.0
      %2187 = vmatpush.msra.mxu0 0.0
      %2188 = vmatpush.msra.mxu0 0.0
      %2189 = vmatpush.msra.mxu0 0.0
      %2190 = vmatpush.msra.mxu0 0.0
      %2191 = vmatpush.msra.mxu0 0.0
      %2192 = vmatpush.msra.mxu0 0.0
      %2193 = vmatpush.msra.mxu0 0.0
      %2194 = vmatpush.msra.mxu0 0.0
      %2195 = vmatpush.msra.mxu0 0.0
      %2196 = vmatpush.msra.mxu0 0.0
      %2197 = vmatpush.msra.mxu0 0.0
      %2198 = vmatpush.msra.mxu0 %v2089
      %2199 = vmatpush.msra.mxu0 %v2088
      %2200 = vmatpush.msra.mxu0 %v2087
      %2201 = vmatpush.msra.mxu0 %v2086
      %2202 = vmatmul.f32.gmra.mxu0 %v2091
      %v2203 = vpop.f32.mrf.mxu0
      %v2204 = vadd.f32 0.0, %v2203
      %2205 = vmatmul.f32.gmra.mxu0 %v2094
      %v2206 = vpop.f32.mrf.mxu0
      %v2207 = vadd.f32 0.0, %v2206
      %2208 = vmatmul.f32.gmra.mxu0 %v2097
      %v2209 = vpop.f32.mrf.mxu0
      %v2210 = vadd.f32 0.0, %v2209
      %2211 = vmatmul.f32.gmra.mxu0 %v2100
      %v2212 = vpop.f32.mrf.mxu0
      %v2213 = vadd.f32 0.0, %v2212
      %2214 = vmatmul.f32.gmra.mxu0 %v2103
      %v2215 = vpop.f32.mrf.mxu0
      %v2216 = vadd.f32 0.0, %v2215
      %2217 = vmatmul.f32.gmra.mxu0 %v2106
      %v2218 = vpop.f32.mrf.mxu0
      %v2219 = vadd.f32 0.0, %v2218
      %2220 = vmatmul.f32.gmra.mxu0 %v2109
      %v2221 = vpop.f32.mrf.mxu0
      %v2222 = vadd.f32 0.0, %v2221
      %2223 = vmatmul.f32.gmra.mxu0 %v2112
      %v2224 = vpop.f32.mrf.mxu0
      %v2225 = vadd.f32 0.0, %v2224
      %2226 = vmatmul.f32.gmra.mxu0 %v2115
      %v2227 = vpop.f32.mrf.mxu0
      %v2228 = vadd.f32 0.0, %v2227
      %2229 = vmatmul.f32.gmra.mxu0 %v2118
      %v2230 = vpop.f32.mrf.mxu0
      %v2231 = vadd.f32 0.0, %v2230
      %2232 = vmatmul.f32.gmra.mxu0 %v2121
      %v2233 = vpop.f32.mrf.mxu0
      %v2234 = vadd.f32 0.0, %v2233
      %2235 = vmatmul.f32.gmra.mxu0 %v2124
      %v2236 = vpop.f32.mrf.mxu0
      %v2237 = vadd.f32 0.0, %v2236
      %2238 = vmatmul.f32.gmra.mxu0 %v2127
      %v2239 = vpop.f32.mrf.mxu0
      %v2240 = vadd.f32 0.0, %v2239
      %2241 = vmatmul.f32.gmra.mxu0 %v2130
      %v2242 = vpop.f32.mrf.mxu0
      %v2243 = vadd.f32 0.0, %v2242
      %2244 = vmatmul.f32.gmra.mxu0 %v2133
      %v2245 = vpop.f32.mrf.mxu0
      %v2246 = vadd.f32 0.0, %v2245
      %2247 = vmatmul.f32.gmra.mxu0 %v2136
      %v2248 = vpop.f32.mrf.mxu0
      %v2249 = vadd.f32 0.0, %v2248
      %2250 = vmatmul.f32.gmra.mxu0 %v2139
      %v2251 = vpop.f32.mrf.mxu0
      %v2252 = vadd.f32 0.0, %v2251
      %2253 = vmatmul.f32.gmra.mxu0 %v2142
      %v2254 = vpop.f32.mrf.mxu0
      %v2255 = vadd.f32 0.0, %v2254
      %2256 = vmatmul.f32.gmra.mxu0 %v2145
      %v2257 = vpop.f32.mrf.mxu0
      %v2258 = vadd.f32 0.0, %v2257
      %2259 = vmatmul.f32.gmra.mxu0 %v2148
      %v2260 = vpop.f32.mrf.mxu0
      %v2261 = vadd.f32 0.0, %v2260
      %2262 = vmatmul.f32.gmra.mxu0 %v2151
      %v2263 = vpop.f32.mrf.mxu0
      %v2264 = vadd.f32 0.0, %v2263
      %2265 = vmatmul.f32.gmra.mxu0 %v2154
      %v2266 = vpop.f32.mrf.mxu0
      %v2267 = vadd.f32 0.0, %v2266
      %2268 = vmatmul.f32.gmra.mxu0 %v2157
      %v2269 = vpop.f32.mrf.mxu0
      %v2270 = vadd.f32 0.0, %v2269
      %2271 = vmatmul.f32.gmra.mxu0 %v2160
      %v2272 = vpop.f32.mrf.mxu0
      %v2273 = vadd.f32 0.0, %v2272
      %2274 = vmatmul.f32.gmra.mxu0 %v2163
      %v2275 = vpop.f32.mrf.mxu0
      %v2276 = vadd.f32 0.0, %v2275
      %2277 = vmatmul.f32.gmra.mxu0 %v2166
      %v2278 = vpop.f32.mrf.mxu0
      %v2279 = vadd.f32 0.0, %v2278
      %2280 = vmatmul.f32.gmra.mxu0 %v2169
      %v2281 = vpop.f32.mrf.mxu0
      %v2282 = vadd.f32 0.0, %v2281
      %2283 = vmatmul.f32.gmra.mxu0 %v2172
      %v2284 = vpop.f32.mrf.mxu0
      %v2285 = vadd.f32 0.0, %v2284
      %2286 = vmatmul.f32.gmra.mxu0 %v2175
      %v2287 = vpop.f32.mrf.mxu0
      %v2288 = vadd.f32 0.0, %v2287
      %2289 = vmatmul.f32.gmra.mxu0 %v2178
      %v2290 = vpop.f32.mrf.mxu0
      %v2291 = vadd.f32 0.0, %v2290
      %2292 = vmatmul.f32.gmra.mxu0 %v2181
      %v2293 = vpop.f32.mrf.mxu0
      %v2294 = vadd.f32 0.0, %v2293
      %2295 = vmatmul.f32.gmra.mxu0 %v2184
      %v2296 = vpop.f32.mrf.mxu0
      %v2297 = vadd.f32 0.0, %v2296
      %2298 = vdwg.mxu0
      %v2299 = vadd.f32 %v2021, %v2204
      %v2300 = vadd.f32 %v2022, %v2207
      %v2301 = vadd.f32 %v2023, %v2210
      %v2302 = vadd.f32 %v2024, %v2213
      %v2303 = vadd.f32 %v2025, %v2216
      %v2304 = vadd.f32 %v2026, %v2219
      %v2305 = vadd.f32 %v2027, %v2222
      %v2306 = vadd.f32 %v2028, %v2225
      %v2307 = vadd.f32 %v2029, %v2228
      %v2308 = vadd.f32 %v2030, %v2231
      %v2309 = vadd.f32 %v2031, %v2234
      %v2310 = vadd.f32 %v2032, %v2237
      %v2311 = vadd.f32 %v2033, %v2240
      %v2312 = vadd.f32 %v2034, %v2243
      %v2313 = vadd.f32 %v2035, %v2246
      %v2314 = vadd.f32 %v2036, %v2249
      %v2315 = vadd.f32 %v2037, %v2252
      %v2316 = vadd.f32 %v2038, %v2255
      %v2317 = vadd.f32 %v2039, %v2258
      %v2318 = vadd.f32 %v2040, %v2261
      %v2319 = vadd.f32 %v2041, %v2264
      %v2320 = vadd.f32 %v2042, %v2267
      %v2321 = vadd.f32 %v2043, %v2270
      %v2322 = vadd.f32 %v2044, %v2273
      %v2323 = vadd.f32 %v2045, %v2276
      %v2324 = vadd.f32 %v2046, %v2279
      %v2325 = vadd.f32 %v2047, %v2282
      %v2326 = vadd.f32 %v2048, %v2285
      %v2327 = vadd.f32 %v2049, %v2288
      %v2328 = vadd.f32 %v2050, %v2291
      %v2329 = vadd.f32 %v2051, %v2294
      %v2330 = vadd.f32 %v2052, %v2297
      %v2331 = vld [vmem:[#allocation2 + $0xa] sm:$0xff]
      %v2332 = vld [vmem:[#allocation2 + $0x12] sm:$0xff]
      %v2333 = vld [vmem:[#allocation2 + $0x2a] sm:$0xff]
      %v2334 = vld [vmem:[#allocation2 + $0x32] sm:$0xff]
      %v2335 = vld [vmem:[#allocation2 + $0x4a] sm:$0xff]
      %v2336 = vld [vmem:[#allocation2 + $0x52] sm:$0xff]
      %v2337 = vld [vmem:[#allocation2 + $0x6a] sm:$0xff]
      %v2338 = vld [vmem:[#allocation2 + $0x72] sm:$0xff]
      %v2339 = vld [vmem:[#allocation2 + $0x8a] sm:$0xff]
      %v2340 = vld [vmem:[#allocation2 + $0x92] sm:$0xff]
      %v2341 = vld [vmem:[#allocation2 + $0xaa] sm:$0xff]
      %v2342 = vld [vmem:[#allocation2 + $0xb2] sm:$0xff]
      %v2343 = vld [vmem:[#allocation2 + $0xca] sm:$0xff]
      %v2344 = vld [vmem:[#allocation2 + $0xd2] sm:$0xff]
      %v2345 = vld [vmem:[#allocation2 + $0xea] sm:$0xff]
      %v2346 = vld [vmem:[#allocation2 + $0xf2] sm:$0xff]
      %v2347 = vld [vmem:[#allocation2 + $0x10a] sm:$0xff]
      %v2348 = vld [vmem:[#allocation2 + $0x112] sm:$0xff]
      %v2349 = vld [vmem:[#allocation2 + $0x12a] sm:$0xff]
      %v2350 = vld [vmem:[#allocation2 + $0x132] sm:$0xff]
      %v2351 = vld [vmem:[#allocation2 + $0x14a] sm:$0xff]
      %v2352 = vld [vmem:[#allocation2 + $0x152] sm:$0xff]
      %v2353 = vld [vmem:[#allocation2 + $0x16a] sm:$0xff]
      %v2354 = vld [vmem:[#allocation2 + $0x172] sm:$0xff]
      %v2355 = vld [vmem:[#allocation2 + $0x18a] sm:$0xff]
      %v2356 = vld [vmem:[#allocation2 + $0x192] sm:$0xff]
      %v2357 = vld [vmem:[#allocation2 + $0x1aa] sm:$0xff]
      %v2358 = vld [vmem:[#allocation2 + $0x1b2] sm:$0xff]
      %v2359 = vld [vmem:[#allocation2 + $0x1ca] sm:$0xff]
      %v2360 = vld [vmem:[#allocation2 + $0x1d2] sm:$0xff]
      %v2361 = vld [vmem:[#allocation2 + $0x1ea] sm:$0xff]
      %v2362 = vld [vmem:[#allocation2 + $0x1f2] sm:$0xff]
      %s2363 = scalar_lea.vmem %s3, 128
      %v2364 = vld [vmem:[%s2363] sm:$0xff]
      %v2365 = vld [vmem:[%s2363 + $0x8] sm:$0xff]
      %v2366 = vld [vmem:[%s2363 + $0x10] sm:$0xff]
      %v2367 = vld [vmem:[%s2363 + $0x18] sm:$0xff]
      %v2369 = vsel %vm1170, %v2331, 0
      %v2372 = vsel %vm1170, %v2332, 0
      %v2375 = vsel %vm1170, %v2333, 0
      %v2378 = vsel %vm1170, %v2334, 0
      %v2381 = vsel %vm1170, %v2335, 0
      %v2384 = vsel %vm1170, %v2336, 0
      %v2387 = vsel %vm1170, %v2337, 0
      %v2390 = vsel %vm1170, %v2338, 0
      %v2393 = vsel %vm1170, %v2339, 0
      %v2396 = vsel %vm1170, %v2340, 0
      %v2399 = vsel %vm1170, %v2341, 0
      %v2402 = vsel %vm1170, %v2342, 0
      %v2405 = vsel %vm1170, %v2343, 0
      %v2408 = vsel %vm1170, %v2344, 0
      %v2411 = vsel %vm1170, %v2345, 0
      %v2414 = vsel %vm1170, %v2346, 0
      %v2417 = vsel %vm1170, %v2347, 0
      %v2420 = vsel %vm1170, %v2348, 0
      %v2423 = vsel %vm1170, %v2349, 0
      %v2426 = vsel %vm1170, %v2350, 0
      %v2429 = vsel %vm1170, %v2351, 0
      %v2432 = vsel %vm1170, %v2352, 0
      %v2435 = vsel %vm1170, %v2353, 0
      %v2438 = vsel %vm1170, %v2354, 0
      %v2441 = vsel %vm1170, %v2355, 0
      %v2444 = vsel %vm1170, %v2356, 0
      %v2447 = vsel %vm1170, %v2357, 0
      %v2450 = vsel %vm1170, %v2358, 0
      %v2453 = vsel %vm1170, %v2359, 0
      %v2456 = vsel %vm1170, %v2360, 0
      %v2459 = vsel %vm1170, %v2361, 0
      %v2462 = vsel %vm1170, %v2362, 0
      %2464 = vmatpush.msra.mxu0 0.0
      %2465 = vmatpush.msra.mxu0 0.0
      %2466 = vmatpush.msra.mxu0 0.0
      %2467 = vmatpush.msra.mxu0 0.0
      %2468 = vmatpush.msra.mxu0 0.0
      %2469 = vmatpush.msra.mxu0 0.0
      %2470 = vmatpush.msra.mxu0 0.0
      %2471 = vmatpush.msra.mxu0 0.0
      %2472 = vmatpush.msra.mxu0 0.0
      %2473 = vmatpush.msra.mxu0 0.0
      %2474 = vmatpush.msra.mxu0 0.0
      %2475 = vmatpush.msra.mxu0 0.0
      %2476 = vmatpush.msra.mxu0 %v2367
      %2477 = vmatpush.msra.mxu0 %v2366
      %2478 = vmatpush.msra.mxu0 %v2365
      %2479 = vmatpush.msra.mxu0 %v2364
      %2480 = vmatmul.f32.gmra.mxu0 %v2369
      %v2481 = vpop.f32.mrf.mxu0
      %v2482 = vadd.f32 0.0, %v2481
      %2483 = vmatmul.f32.gmra.mxu0 %v2372
      %v2484 = vpop.f32.mrf.mxu0
      %v2485 = vadd.f32 0.0, %v2484
      %2486 = vmatmul.f32.gmra.mxu0 %v2375
      %v2487 = vpop.f32.mrf.mxu0
      %v2488 = vadd.f32 0.0, %v2487
      %2489 = vmatmul.f32.gmra.mxu0 %v2378
      %v2490 = vpop.f32.mrf.mxu0
      %v2491 = vadd.f32 0.0, %v2490
      %2492 = vmatmul.f32.gmra.mxu0 %v2381
      %v2493 = vpop.f32.mrf.mxu0
      %v2494 = vadd.f32 0.0, %v2493
      %2495 = vmatmul.f32.gmra.mxu0 %v2384
      %v2496 = vpop.f32.mrf.mxu0
      %v2497 = vadd.f32 0.0, %v2496
      %2498 = vmatmul.f32.gmra.mxu0 %v2387
      %v2499 = vpop.f32.mrf.mxu0
      %v2500 = vadd.f32 0.0, %v2499
      %2501 = vmatmul.f32.gmra.mxu0 %v2390
      %v2502 = vpop.f32.mrf.mxu0
      %v2503 = vadd.f32 0.0, %v2502
      %2504 = vmatmul.f32.gmra.mxu0 %v2393
      %v2505 = vpop.f32.mrf.mxu0
      %v2506 = vadd.f32 0.0, %v2505
      %2507 = vmatmul.f32.gmra.mxu0 %v2396
      %v2508 = vpop.f32.mrf.mxu0
      %v2509 = vadd.f32 0.0, %v2508
      %2510 = vmatmul.f32.gmra.mxu0 %v2399
      %v2511 = vpop.f32.mrf.mxu0
      %v2512 = vadd.f32 0.0, %v2511
      %2513 = vmatmul.f32.gmra.mxu0 %v2402
      %v2514 = vpop.f32.mrf.mxu0
      %v2515 = vadd.f32 0.0, %v2514
      %2516 = vmatmul.f32.gmra.mxu0 %v2405
      %v2517 = vpop.f32.mrf.mxu0
      %v2518 = vadd.f32 0.0, %v2517
      %2519 = vmatmul.f32.gmra.mxu0 %v2408
      %v2520 = vpop.f32.mrf.mxu0
      %v2521 = vadd.f32 0.0, %v2520
      %2522 = vmatmul.f32.gmra.mxu0 %v2411
      %v2523 = vpop.f32.mrf.mxu0
      %v2524 = vadd.f32 0.0, %v2523
      %2525 = vmatmul.f32.gmra.mxu0 %v2414
      %v2526 = vpop.f32.mrf.mxu0
      %v2527 = vadd.f32 0.0, %v2526
      %2528 = vmatmul.f32.gmra.mxu0 %v2417
      %v2529 = vpop.f32.mrf.mxu0
      %v2530 = vadd.f32 0.0, %v2529
      %2531 = vmatmul.f32.gmra.mxu0 %v2420
      %v2532 = vpop.f32.mrf.mxu0
      %v2533 = vadd.f32 0.0, %v2532
      %2534 = vmatmul.f32.gmra.mxu0 %v2423
      %v2535 = vpop.f32.mrf.mxu0
      %v2536 = vadd.f32 0.0, %v2535
      %2537 = vmatmul.f32.gmra.mxu0 %v2426
      %v2538 = vpop.f32.mrf.mxu0
      %v2539 = vadd.f32 0.0, %v2538
      %2540 = vmatmul.f32.gmra.mxu0 %v2429
      %v2541 = vpop.f32.mrf.mxu0
      %v2542 = vadd.f32 0.0, %v2541
      %2543 = vmatmul.f32.gmra.mxu0 %v2432
      %v2544 = vpop.f32.mrf.mxu0
      %v2545 = vadd.f32 0.0, %v2544
      %2546 = vmatmul.f32.gmra.mxu0 %v2435
      %v2547 = vpop.f32.mrf.mxu0
      %v2548 = vadd.f32 0.0, %v2547
      %2549 = vmatmul.f32.gmra.mxu0 %v2438
      %v2550 = vpop.f32.mrf.mxu0
      %v2551 = vadd.f32 0.0, %v2550
      %2552 = vmatmul.f32.gmra.mxu0 %v2441
      %v2553 = vpop.f32.mrf.mxu0
      %v2554 = vadd.f32 0.0, %v2553
      %2555 = vmatmul.f32.gmra.mxu0 %v2444
      %v2556 = vpop.f32.mrf.mxu0
      %v2557 = vadd.f32 0.0, %v2556
      %2558 = vmatmul.f32.gmra.mxu0 %v2447
      %v2559 = vpop.f32.mrf.mxu0
      %v2560 = vadd.f32 0.0, %v2559
      %2561 = vmatmul.f32.gmra.mxu0 %v2450
      %v2562 = vpop.f32.mrf.mxu0
      %v2563 = vadd.f32 0.0, %v2562
      %2564 = vmatmul.f32.gmra.mxu0 %v2453
      %v2565 = vpop.f32.mrf.mxu0
      %v2566 = vadd.f32 0.0, %v2565
      %2567 = vmatmul.f32.gmra.mxu0 %v2456
      %v2568 = vpop.f32.mrf.mxu0
      %v2569 = vadd.f32 0.0, %v2568
      %2570 = vmatmul.f32.gmra.mxu0 %v2459
      %v2571 = vpop.f32.mrf.mxu0
      %v2572 = vadd.f32 0.0, %v2571
      %2573 = vmatmul.f32.gmra.mxu0 %v2462
      %v2574 = vpop.f32.mrf.mxu0
      %v2575 = vadd.f32 0.0, %v2574
      %2576 = vdwg.mxu0
      %v2577 = vadd.f32 %v2299, %v2482
      %v2578 = vadd.f32 %v2300, %v2485
      %v2579 = vadd.f32 %v2301, %v2488
      %v2580 = vadd.f32 %v2302, %v2491
      %v2581 = vadd.f32 %v2303, %v2494
      %v2582 = vadd.f32 %v2304, %v2497
      %v2583 = vadd.f32 %v2305, %v2500
      %v2584 = vadd.f32 %v2306, %v2503
      %v2585 = vadd.f32 %v2307, %v2506
      %v2586 = vadd.f32 %v2308, %v2509
      %v2587 = vadd.f32 %v2309, %v2512
      %v2588 = vadd.f32 %v2310, %v2515
      %v2589 = vadd.f32 %v2311, %v2518
      %v2590 = vadd.f32 %v2312, %v2521
      %v2591 = vadd.f32 %v2313, %v2524
      %v2592 = vadd.f32 %v2314, %v2527
      %v2593 = vadd.f32 %v2315, %v2530
      %v2594 = vadd.f32 %v2316, %v2533
      %v2595 = vadd.f32 %v2317, %v2536
      %v2596 = vadd.f32 %v2318, %v2539
      %v2597 = vadd.f32 %v2319, %v2542
      %v2598 = vadd.f32 %v2320, %v2545
      %v2599 = vadd.f32 %v2321, %v2548
      %v2600 = vadd.f32 %v2322, %v2551
      %v2601 = vadd.f32 %v2323, %v2554
      %v2602 = vadd.f32 %v2324, %v2557
      %v2603 = vadd.f32 %v2325, %v2560
      %v2604 = vadd.f32 %v2326, %v2563
      %v2605 = vadd.f32 %v2327, %v2566
      %v2606 = vadd.f32 %v2328, %v2569
      %v2607 = vadd.f32 %v2329, %v2572
      %v2608 = vadd.f32 %v2330, %v2575
      %s2609 = scalar_lea.vmem [#allocation2], 32
      %v2610 = vld [vmem:[%s2609 + $0x6] sm:$0xff]
      %v2611 = vld [vmem:[%s2609 + $0xe] sm:$0xff]
      %v2612 = vld [vmem:[%s2609 + $0x26] sm:$0xff]
      %v2613 = vld [vmem:[%s2609 + $0x2e] sm:$0xff]
      %v2614 = vld [vmem:[%s2609 + $0x46] sm:$0xff]
      %v2615 = vld [vmem:[%s2609 + $0x4e] sm:$0xff]
      %v2616 = vld [vmem:[%s2609 + $0x66] sm:$0xff]
      %v2617 = vld [vmem:[%s2609 + $0x6e] sm:$0xff]
      %v2618 = vld [vmem:[%s2609 + $0x86] sm:$0xff]
      %v2619 = vld [vmem:[%s2609 + $0x8e] sm:$0xff]
      %v2620 = vld [vmem:[%s2609 + $0xa6] sm:$0xff]
      %v2621 = vld [vmem:[%s2609 + $0xae] sm:$0xff]
      %v2622 = vld [vmem:[%s2609 + $0xc6] sm:$0xff]
      %v2623 = vld [vmem:[%s2609 + $0xce] sm:$0xff]
      %v2624 = vld [vmem:[%s2609 + $0xe6] sm:$0xff]
      %v2625 = vld [vmem:[%s2609 + $0xee] sm:$0xff]
      %v2626 = vld [vmem:[%s2609 + $0x106] sm:$0xff]
      %v2627 = vld [vmem:[%s2609 + $0x10e] sm:$0xff]
      %v2628 = vld [vmem:[%s2609 + $0x126] sm:$0xff]
      %v2629 = vld [vmem:[%s2609 + $0x12e] sm:$0xff]
      %v2630 = vld [vmem:[%s2609 + $0x146] sm:$0xff]
      %v2631 = vld [vmem:[%s2609 + $0x14e] sm:$0xff]
      %v2632 = vld [vmem:[%s2609 + $0x166] sm:$0xff]
      %v2633 = vld [vmem:[%s2609 + $0x16e] sm:$0xff]
      %v2634 = vld [vmem:[%s2609 + $0x186] sm:$0xff]
      %v2635 = vld [vmem:[%s2609 + $0x18e] sm:$0xff]
      %v2636 = vld [vmem:[%s2609 + $0x1a6] sm:$0xff]
      %v2637 = vld [vmem:[%s2609 + $0x1ae] sm:$0xff]
      %v2638 = vld [vmem:[%s2609 + $0x1c6] sm:$0xff]
      %v2639 = vld [vmem:[%s2609 + $0x1ce] sm:$0xff]
      %v2640 = vld [vmem:[%s2609 + $0x1e6] sm:$0xff]
      %v2641 = vld [vmem:[%s2609 + $0x1ee] sm:$0xff]
      %s2642 = scalar_lea.vmem %s3, 160
      %v2643 = vld [vmem:[%s2642] sm:$0xff]
      %v2644 = vld [vmem:[%s2642 + $0x8] sm:$0xff]
      %v2645 = vld [vmem:[%s2642 + $0x10] sm:$0xff]
      %v2646 = vld [vmem:[%s2642 + $0x18] sm:$0xff]
      %v2648 = vsel %vm1170, %v2610, 0
      %v2651 = vsel %vm1170, %v2611, 0
      %v2654 = vsel %vm1170, %v2612, 0
      %v2657 = vsel %vm1170, %v2613, 0
      %v2660 = vsel %vm1170, %v2614, 0
      %v2663 = vsel %vm1170, %v2615, 0
      %v2666 = vsel %vm1170, %v2616, 0
      %v2669 = vsel %vm1170, %v2617, 0
      %v2672 = vsel %vm1170, %v2618, 0
      %v2675 = vsel %vm1170, %v2619, 0
      %v2678 = vsel %vm1170, %v2620, 0
      %v2681 = vsel %vm1170, %v2621, 0
      %v2684 = vsel %vm1170, %v2622, 0
      %v2687 = vsel %vm1170, %v2623, 0
      %v2690 = vsel %vm1170, %v2624, 0
      %v2693 = vsel %vm1170, %v2625, 0
      %v2696 = vsel %vm1170, %v2626, 0
      %v2699 = vsel %vm1170, %v2627, 0
      %v2702 = vsel %vm1170, %v2628, 0
      %v2705 = vsel %vm1170, %v2629, 0
      %v2708 = vsel %vm1170, %v2630, 0
      %v2711 = vsel %vm1170, %v2631, 0
      %v2714 = vsel %vm1170, %v2632, 0
      %v2717 = vsel %vm1170, %v2633, 0
      %v2720 = vsel %vm1170, %v2634, 0
      %v2723 = vsel %vm1170, %v2635, 0
      %v2726 = vsel %vm1170, %v2636, 0
      %v2729 = vsel %vm1170, %v2637, 0
      %v2732 = vsel %vm1170, %v2638, 0
      %v2735 = vsel %vm1170, %v2639, 0
      %v2738 = vsel %vm1170, %v2640, 0
      %v2741 = vsel %vm1170, %v2641, 0
      %2743 = vmatpush.msra.mxu0 0.0
      %2744 = vmatpush.msra.mxu0 0.0
      %2745 = vmatpush.msra.mxu0 0.0
      %2746 = vmatpush.msra.mxu0 0.0
      %2747 = vmatpush.msra.mxu0 0.0
      %2748 = vmatpush.msra.mxu0 0.0
      %2749 = vmatpush.msra.mxu0 0.0
      %2750 = vmatpush.msra.mxu0 0.0
      %2751 = vmatpush.msra.mxu0 0.0
      %2752 = vmatpush.msra.mxu0 0.0
      %2753 = vmatpush.msra.mxu0 0.0
      %2754 = vmatpush.msra.mxu0 0.0
      %2755 = vmatpush.msra.mxu0 %v2646
      %2756 = vmatpush.msra.mxu0 %v2645
      %2757 = vmatpush.msra.mxu0 %v2644
      %2758 = vmatpush.msra.mxu0 %v2643
      %2759 = vmatmul.f32.gmra.mxu0 %v2648
      %v2760 = vpop.f32.mrf.mxu0
      %v2761 = vadd.f32 0.0, %v2760
      %2762 = vmatmul.f32.gmra.mxu0 %v2651
      %v2763 = vpop.f32.mrf.mxu0
      %v2764 = vadd.f32 0.0, %v2763
      %2765 = vmatmul.f32.gmra.mxu0 %v2654
      %v2766 = vpop.f32.mrf.mxu0
      %v2767 = vadd.f32 0.0, %v2766
      %2768 = vmatmul.f32.gmra.mxu0 %v2657
      %v2769 = vpop.f32.mrf.mxu0
      %v2770 = vadd.f32 0.0, %v2769
      %2771 = vmatmul.f32.gmra.mxu0 %v2660
      %v2772 = vpop.f32.mrf.mxu0
      %v2773 = vadd.f32 0.0, %v2772
      %2774 = vmatmul.f32.gmra.mxu0 %v2663
      %v2775 = vpop.f32.mrf.mxu0
      %v2776 = vadd.f32 0.0, %v2775
      %2777 = vmatmul.f32.gmra.mxu0 %v2666
      %v2778 = vpop.f32.mrf.mxu0
      %v2779 = vadd.f32 0.0, %v2778
      %2780 = vmatmul.f32.gmra.mxu0 %v2669
      %v2781 = vpop.f32.mrf.mxu0
      %v2782 = vadd.f32 0.0, %v2781
      %2783 = vmatmul.f32.gmra.mxu0 %v2672
      %v2784 = vpop.f32.mrf.mxu0
      %v2785 = vadd.f32 0.0, %v2784
      %2786 = vmatmul.f32.gmra.mxu0 %v2675
      %v2787 = vpop.f32.mrf.mxu0
      %v2788 = vadd.f32 0.0, %v2787
      %2789 = vmatmul.f32.gmra.mxu0 %v2678
      %v2790 = vpop.f32.mrf.mxu0
      %v2791 = vadd.f32 0.0, %v2790
      %2792 = vmatmul.f32.gmra.mxu0 %v2681
      %v2793 = vpop.f32.mrf.mxu0
      %v2794 = vadd.f32 0.0, %v2793
      %2795 = vmatmul.f32.gmra.mxu0 %v2684
      %v2796 = vpop.f32.mrf.mxu0
      %v2797 = vadd.f32 0.0, %v2796
      %2798 = vmatmul.f32.gmra.mxu0 %v2687
      %v2799 = vpop.f32.mrf.mxu0
      %v2800 = vadd.f32 0.0, %v2799
      %2801 = vmatmul.f32.gmra.mxu0 %v2690
      %v2802 = vpop.f32.mrf.mxu0
      %v2803 = vadd.f32 0.0, %v2802
      %2804 = vmatmul.f32.gmra.mxu0 %v2693
      %v2805 = vpop.f32.mrf.mxu0
      %v2806 = vadd.f32 0.0, %v2805
      %2807 = vmatmul.f32.gmra.mxu0 %v2696
      %v2808 = vpop.f32.mrf.mxu0
      %v2809 = vadd.f32 0.0, %v2808
      %2810 = vmatmul.f32.gmra.mxu0 %v2699
      %v2811 = vpop.f32.mrf.mxu0
      %v2812 = vadd.f32 0.0, %v2811
      %2813 = vmatmul.f32.gmra.mxu0 %v2702
      %v2814 = vpop.f32.mrf.mxu0
      %v2815 = vadd.f32 0.0, %v2814
      %2816 = vmatmul.f32.gmra.mxu0 %v2705
      %v2817 = vpop.f32.mrf.mxu0
      %v2818 = vadd.f32 0.0, %v2817
      %2819 = vmatmul.f32.gmra.mxu0 %v2708
      %v2820 = vpop.f32.mrf.mxu0
      %v2821 = vadd.f32 0.0, %v2820
      %2822 = vmatmul.f32.gmra.mxu0 %v2711
      %v2823 = vpop.f32.mrf.mxu0
      %v2824 = vadd.f32 0.0, %v2823
      %2825 = vmatmul.f32.gmra.mxu0 %v2714
      %v2826 = vpop.f32.mrf.mxu0
      %v2827 = vadd.f32 0.0, %v2826
      %2828 = vmatmul.f32.gmra.mxu0 %v2717
      %v2829 = vpop.f32.mrf.mxu0
      %v2830 = vadd.f32 0.0, %v2829
      %2831 = vmatmul.f32.gmra.mxu0 %v2720
      %v2832 = vpop.f32.mrf.mxu0
      %v2833 = vadd.f32 0.0, %v2832
      %2834 = vmatmul.f32.gmra.mxu0 %v2723
      %v2835 = vpop.f32.mrf.mxu0
      %v2836 = vadd.f32 0.0, %v2835
      %2837 = vmatmul.f32.gmra.mxu0 %v2726
      %v2838 = vpop.f32.mrf.mxu0
      %v2839 = vadd.f32 0.0, %v2838
      %2840 = vmatmul.f32.gmra.mxu0 %v2729
      %v2841 = vpop.f32.mrf.mxu0
      %v2842 = vadd.f32 0.0, %v2841
      %2843 = vmatmul.f32.gmra.mxu0 %v2732
      %v2844 = vpop.f32.mrf.mxu0
      %v2845 = vadd.f32 0.0, %v2844
      %2846 = vmatmul.f32.gmra.mxu0 %v2735
      %v2847 = vpop.f32.mrf.mxu0
      %v2848 = vadd.f32 0.0, %v2847
      %2849 = vmatmul.f32.gmra.mxu0 %v2738
      %v2850 = vpop.f32.mrf.mxu0
      %v2851 = vadd.f32 0.0, %v2850
      %2852 = vmatmul.f32.gmra.mxu0 %v2741
      %v2853 = vpop.f32.mrf.mxu0
      %v2854 = vadd.f32 0.0, %v2853
      %2855 = vdwg.mxu0
      %v2856 = vadd.f32 %v2577, %v2761
      %v2857 = vadd.f32 %v2578, %v2764
      %v2858 = vadd.f32 %v2579, %v2767
      %v2859 = vadd.f32 %v2580, %v2770
      %v2860 = vadd.f32 %v2581, %v2773
      %v2861 = vadd.f32 %v2582, %v2776
      %v2862 = vadd.f32 %v2583, %v2779
      %v2863 = vadd.f32 %v2584, %v2782
      %v2864 = vadd.f32 %v2585, %v2785
      %v2865 = vadd.f32 %v2586, %v2788
      %v2866 = vadd.f32 %v2587, %v2791
      %v2867 = vadd.f32 %v2588, %v2794
      %v2868 = vadd.f32 %v2589, %v2797
      %v2869 = vadd.f32 %v2590, %v2800
      %v2870 = vadd.f32 %v2591, %v2803
      %v2871 = vadd.f32 %v2592, %v2806
      %v2872 = vadd.f32 %v2593, %v2809
      %v2873 = vadd.f32 %v2594, %v2812
      %v2874 = vadd.f32 %v2595, %v2815
      %v2875 = vadd.f32 %v2596, %v2818
      %v2876 = vadd.f32 %v2597, %v2821
      %v2877 = vadd.f32 %v2598, %v2824
      %v2878 = vadd.f32 %v2599, %v2827
      %v2879 = vadd.f32 %v2600, %v2830
      %v2880 = vadd.f32 %v2601, %v2833
      %v2881 = vadd.f32 %v2602, %v2836
      %v2882 = vadd.f32 %v2603, %v2839
      %v2883 = vadd.f32 %v2604, %v2842
      %v2884 = vadd.f32 %v2605, %v2845
      %v2885 = vadd.f32 %v2606, %v2848
      %v2886 = vadd.f32 %v2607, %v2851
      %v2887 = vadd.f32 %v2608, %v2854
      %v2888 = vld [vmem:[%s2609 + $0x7] sm:$0xff]
      %v2889 = vld [vmem:[%s2609 + $0xf] sm:$0xff]
      %v2890 = vld [vmem:[%s2609 + $0x27] sm:$0xff]
      %v2891 = vld [vmem:[%s2609 + $0x2f] sm:$0xff]
      %v2892 = vld [vmem:[%s2609 + $0x47] sm:$0xff]
      %v2893 = vld [vmem:[%s2609 + $0x4f] sm:$0xff]
      %v2894 = vld [vmem:[%s2609 + $0x67] sm:$0xff]
      %v2895 = vld [vmem:[%s2609 + $0x6f] sm:$0xff]
      %v2896 = vld [vmem:[%s2609 + $0x87] sm:$0xff]
      %v2897 = vld [vmem:[%s2609 + $0x8f] sm:$0xff]
      %v2898 = vld [vmem:[%s2609 + $0xa7] sm:$0xff]
      %v2899 = vld [vmem:[%s2609 + $0xaf] sm:$0xff]
      %v2900 = vld [vmem:[%s2609 + $0xc7] sm:$0xff]
      %v2901 = vld [vmem:[%s2609 + $0xcf] sm:$0xff]
      %v2902 = vld [vmem:[%s2609 + $0xe7] sm:$0xff]
      %v2903 = vld [vmem:[%s2609 + $0xef] sm:$0xff]
      %v2904 = vld [vmem:[%s2609 + $0x107] sm:$0xff]
      %v2905 = vld [vmem:[%s2609 + $0x10f] sm:$0xff]
      %v2906 = vld [vmem:[%s2609 + $0x127] sm:$0xff]
      %v2907 = vld [vmem:[%s2609 + $0x12f] sm:$0xff]
      %v2908 = vld [vmem:[%s2609 + $0x147] sm:$0xff]
      %v2909 = vld [vmem:[%s2609 + $0x14f] sm:$0xff]
      %v2910 = vld [vmem:[%s2609 + $0x167] sm:$0xff]
      %v2911 = vld [vmem:[%s2609 + $0x16f] sm:$0xff]
      %v2912 = vld [vmem:[%s2609 + $0x187] sm:$0xff]
      %v2913 = vld [vmem:[%s2609 + $0x18f] sm:$0xff]
      %v2914 = vld [vmem:[%s2609 + $0x1a7] sm:$0xff]
      %v2915 = vld [vmem:[%s2609 + $0x1af] sm:$0xff]
      %v2916 = vld [vmem:[%s2609 + $0x1c7] sm:$0xff]
      %v2917 = vld [vmem:[%s2609 + $0x1cf] sm:$0xff]
      %v2918 = vld [vmem:[%s2609 + $0x1e7] sm:$0xff]
      %v2919 = vld [vmem:[%s2609 + $0x1ef] sm:$0xff]
      %s2920 = scalar_lea.vmem %s3, 192
      %v2921 = vld [vmem:[%s2920] sm:$0xff]
      %v2922 = vld [vmem:[%s2920 + $0x8] sm:$0xff]
      %v2923 = vld [vmem:[%s2920 + $0x10] sm:$0xff]
      %v2924 = vld [vmem:[%s2920 + $0x18] sm:$0xff]
      %v2926 = vsel %vm1170, %v2888, 0
      %v2929 = vsel %vm1170, %v2889, 0
      %v2932 = vsel %vm1170, %v2890, 0
      %v2935 = vsel %vm1170, %v2891, 0
      %v2938 = vsel %vm1170, %v2892, 0
      %v2941 = vsel %vm1170, %v2893, 0
      %v2944 = vsel %vm1170, %v2894, 0
      %v2947 = vsel %vm1170, %v2895, 0
      %v2950 = vsel %vm1170, %v2896, 0
      %v2953 = vsel %vm1170, %v2897, 0
      %v2956 = vsel %vm1170, %v2898, 0
      %v2959 = vsel %vm1170, %v2899, 0
      %v2962 = vsel %vm1170, %v2900, 0
      %v2965 = vsel %vm1170, %v2901, 0
      %v2968 = vsel %vm1170, %v2902, 0
      %v2971 = vsel %vm1170, %v2903, 0
      %v2974 = vsel %vm1170, %v2904, 0
      %v2977 = vsel %vm1170, %v2905, 0
      %v2980 = vsel %vm1170, %v2906, 0
      %v2983 = vsel %vm1170, %v2907, 0
      %v2986 = vsel %vm1170, %v2908, 0
      %v2989 = vsel %vm1170, %v2909, 0
      %v2992 = vsel %vm1170, %v2910, 0
      %v2995 = vsel %vm1170, %v2911, 0
      %v2998 = vsel %vm1170, %v2912, 0
      %v3001 = vsel %vm1170, %v2913, 0
      %v3004 = vsel %vm1170, %v2914, 0
      %v3007 = vsel %vm1170, %v2915, 0
      %v3010 = vsel %vm1170, %v2916, 0
      %v3013 = vsel %vm1170, %v2917, 0
      %v3016 = vsel %vm1170, %v2918, 0
      %v3019 = vsel %vm1170, %v2919, 0
      %3021 = vmatpush.msra.mxu0 0.0
      %3022 = vmatpush.msra.mxu0 0.0
      %3023 = vmatpush.msra.mxu0 0.0
      %3024 = vmatpush.msra.mxu0 0.0
      %3025 = vmatpush.msra.mxu0 0.0
      %3026 = vmatpush.msra.mxu0 0.0
      %3027 = vmatpush.msra.mxu0 0.0
      %3028 = vmatpush.msra.mxu0 0.0
      %3029 = vmatpush.msra.mxu0 0.0
      %3030 = vmatpush.msra.mxu0 0.0
      %3031 = vmatpush.msra.mxu0 0.0
      %3032 = vmatpush.msra.mxu0 0.0
      %3033 = vmatpush.msra.mxu0 %v2924
      %3034 = vmatpush.msra.mxu0 %v2923
      %3035 = vmatpush.msra.mxu0 %v2922
      %3036 = vmatpush.msra.mxu0 %v2921
      %3037 = vmatmul.f32.gmra.mxu0 %v2926
      %v3038 = vpop.f32.mrf.mxu0
      %v3039 = vadd.f32 0.0, %v3038
      %3040 = vmatmul.f32.gmra.mxu0 %v2929
      %v3041 = vpop.f32.mrf.mxu0
      %v3042 = vadd.f32 0.0, %v3041
      %3043 = vmatmul.f32.gmra.mxu0 %v2932
      %v3044 = vpop.f32.mrf.mxu0
      %v3045 = vadd.f32 0.0, %v3044
      %3046 = vmatmul.f32.gmra.mxu0 %v2935
      %v3047 = vpop.f32.mrf.mxu0
      %v3048 = vadd.f32 0.0, %v3047
      %3049 = vmatmul.f32.gmra.mxu0 %v2938
      %v3050 = vpop.f32.mrf.mxu0
      %v3051 = vadd.f32 0.0, %v3050
      %3052 = vmatmul.f32.gmra.mxu0 %v2941
      %v3053 = vpop.f32.mrf.mxu0
      %v3054 = vadd.f32 0.0, %v3053
      %3055 = vmatmul.f32.gmra.mxu0 %v2944
      %v3056 = vpop.f32.mrf.mxu0
      %v3057 = vadd.f32 0.0, %v3056
      %3058 = vmatmul.f32.gmra.mxu0 %v2947
      %v3059 = vpop.f32.mrf.mxu0
      %v3060 = vadd.f32 0.0, %v3059
      %3061 = vmatmul.f32.gmra.mxu0 %v2950
      %v3062 = vpop.f32.mrf.mxu0
      %v3063 = vadd.f32 0.0, %v3062
      %3064 = vmatmul.f32.gmra.mxu0 %v2953
      %v3065 = vpop.f32.mrf.mxu0
      %v3066 = vadd.f32 0.0, %v3065
      %3067 = vmatmul.f32.gmra.mxu0 %v2956
      %v3068 = vpop.f32.mrf.mxu0
      %v3069 = vadd.f32 0.0, %v3068
      %3070 = vmatmul.f32.gmra.mxu0 %v2959
      %v3071 = vpop.f32.mrf.mxu0
      %v3072 = vadd.f32 0.0, %v3071
      %3073 = vmatmul.f32.gmra.mxu0 %v2962
      %v3074 = vpop.f32.mrf.mxu0
      %v3075 = vadd.f32 0.0, %v3074
      %3076 = vmatmul.f32.gmra.mxu0 %v2965
      %v3077 = vpop.f32.mrf.mxu0
      %v3078 = vadd.f32 0.0, %v3077
      %3079 = vmatmul.f32.gmra.mxu0 %v2968
      %v3080 = vpop.f32.mrf.mxu0
      %v3081 = vadd.f32 0.0, %v3080
      %3082 = vmatmul.f32.gmra.mxu0 %v2971
      %v3083 = vpop.f32.mrf.mxu0
      %v3084 = vadd.f32 0.0, %v3083
      %3085 = vmatmul.f32.gmra.mxu0 %v2974
      %v3086 = vpop.f32.mrf.mxu0
      %v3087 = vadd.f32 0.0, %v3086
      %3088 = vmatmul.f32.gmra.mxu0 %v2977
      %v3089 = vpop.f32.mrf.mxu0
      %v3090 = vadd.f32 0.0, %v3089
      %3091 = vmatmul.f32.gmra.mxu0 %v2980
      %v3092 = vpop.f32.mrf.mxu0
      %v3093 = vadd.f32 0.0, %v3092
      %3094 = vmatmul.f32.gmra.mxu0 %v2983
      %v3095 = vpop.f32.mrf.mxu0
      %v3096 = vadd.f32 0.0, %v3095
      %3097 = vmatmul.f32.gmra.mxu0 %v2986
      %v3098 = vpop.f32.mrf.mxu0
      %v3099 = vadd.f32 0.0, %v3098
      %3100 = vmatmul.f32.gmra.mxu0 %v2989
      %v3101 = vpop.f32.mrf.mxu0
      %v3102 = vadd.f32 0.0, %v3101
      %3103 = vmatmul.f32.gmra.mxu0 %v2992
      %v3104 = vpop.f32.mrf.mxu0
      %v3105 = vadd.f32 0.0, %v3104
      %3106 = vmatmul.f32.gmra.mxu0 %v2995
      %v3107 = vpop.f32.mrf.mxu0
      %v3108 = vadd.f32 0.0, %v3107
      %3109 = vmatmul.f32.gmra.mxu0 %v2998
      %v3110 = vpop.f32.mrf.mxu0
      %v3111 = vadd.f32 0.0, %v3110
      %3112 = vmatmul.f32.gmra.mxu0 %v3001
      %v3113 = vpop.f32.mrf.mxu0
      %v3114 = vadd.f32 0.0, %v3113
      %3115 = vmatmul.f32.gmra.mxu0 %v3004
      %v3116 = vpop.f32.mrf.mxu0
      %v3117 = vadd.f32 0.0, %v3116
      %3118 = vmatmul.f32.gmra.mxu0 %v3007
      %v3119 = vpop.f32.mrf.mxu0
      %v3120 = vadd.f32 0.0, %v3119
      %3121 = vmatmul.f32.gmra.mxu0 %v3010
      %v3122 = vpop.f32.mrf.mxu0
      %v3123 = vadd.f32 0.0, %v3122
      %3124 = vmatmul.f32.gmra.mxu0 %v3013
      %v3125 = vpop.f32.mrf.mxu0
      %v3126 = vadd.f32 0.0, %v3125
      %3127 = vmatmul.f32.gmra.mxu0 %v3016
      %v3128 = vpop.f32.mrf.mxu0
      %v3129 = vadd.f32 0.0, %v3128
      %3130 = vmatmul.f32.gmra.mxu0 %v3019
      %v3131 = vpop.f32.mrf.mxu0
      %v3132 = vadd.f32 0.0, %v3131
      %3133 = vdwg.mxu0
      %v3134 = vadd.f32 %v2856, %v3039
      %v3135 = vadd.f32 %v2857, %v3042
      %v3136 = vadd.f32 %v2858, %v3045
      %v3137 = vadd.f32 %v2859, %v3048
      %v3138 = vadd.f32 %v2860, %v3051
      %v3139 = vadd.f32 %v2861, %v3054
      %v3140 = vadd.f32 %v2862, %v3057
      %v3141 = vadd.f32 %v2863, %v3060
      %v3142 = vadd.f32 %v2864, %v3063
      %v3143 = vadd.f32 %v2865, %v3066
      %v3144 = vadd.f32 %v2866, %v3069
      %v3145 = vadd.f32 %v2867, %v3072
      %v3146 = vadd.f32 %v2868, %v3075
      %v3147 = vadd.f32 %v2869, %v3078
      %v3148 = vadd.f32 %v2870, %v3081
      %v3149 = vadd.f32 %v2871, %v3084
      %v3150 = vadd.f32 %v2872, %v3087
      %v3151 = vadd.f32 %v2873, %v3090
      %v3152 = vadd.f32 %v2874, %v3093
      %v3153 = vadd.f32 %v2875, %v3096
      %v3154 = vadd.f32 %v2876, %v3099
      %v3155 = vadd.f32 %v2877, %v3102
      %v3156 = vadd.f32 %v2878, %v3105
      %v3157 = vadd.f32 %v2879, %v3108
      %v3158 = vadd.f32 %v2880, %v3111
      %v3159 = vadd.f32 %v2881, %v3114
      %v3160 = vadd.f32 %v2882, %v3117
      %v3161 = vadd.f32 %v2883, %v3120
      %v3162 = vadd.f32 %v2884, %v3123
      %v3163 = vadd.f32 %v2885, %v3126
      %v3164 = vadd.f32 %v2886, %v3129
      %v3165 = vadd.f32 %v2887, %v3132
      %v3166 = vld [vmem:[%s2609 + $0x8] sm:$0xff]
      %v3167 = vld [vmem:[%s2609 + $0x10] sm:$0xff]
      %v3168 = vld [vmem:[%s2609 + $0x28] sm:$0xff]
      %v3169 = vld [vmem:[%s2609 + $0x30] sm:$0xff]
      %v3170 = vld [vmem:[%s2609 + $0x48] sm:$0xff]
      %v3171 = vld [vmem:[%s2609 + $0x50] sm:$0xff]
      %v3172 = vld [vmem:[%s2609 + $0x68] sm:$0xff]
      %v3173 = vld [vmem:[%s2609 + $0x70] sm:$0xff]
      %v3174 = vld [vmem:[%s2609 + $0x88] sm:$0xff]
      %v3175 = vld [vmem:[%s2609 + $0x90] sm:$0xff]
      %v3176 = vld [vmem:[%s2609 + $0xa8] sm:$0xff]
      %v3177 = vld [vmem:[%s2609 + $0xb0] sm:$0xff]
      %v3178 = vld [vmem:[%s2609 + $0xc8] sm:$0xff]
      %v3179 = vld [vmem:[%s2609 + $0xd0] sm:$0xff]
      %v3180 = vld [vmem:[%s2609 + $0xe8] sm:$0xff]
      %v3181 = vld [vmem:[%s2609 + $0xf0] sm:$0xff]
      %v3182 = vld [vmem:[%s2609 + $0x108] sm:$0xff]
      %v3183 = vld [vmem:[%s2609 + $0x110] sm:$0xff]
      %v3184 = vld [vmem:[%s2609 + $0x128] sm:$0xff]
      %v3185 = vld [vmem:[%s2609 + $0x130] sm:$0xff]
      %v3186 = vld [vmem:[%s2609 + $0x148] sm:$0xff]
      %v3187 = vld [vmem:[%s2609 + $0x150] sm:$0xff]
      %v3188 = vld [vmem:[%s2609 + $0x168] sm:$0xff]
      %v3189 = vld [vmem:[%s2609 + $0x170] sm:$0xff]
      %v3190 = vld [vmem:[%s2609 + $0x188] sm:$0xff]
      %v3191 = vld [vmem:[%s2609 + $0x190] sm:$0xff]
      %v3192 = vld [vmem:[%s2609 + $0x1a8] sm:$0xff]
      %v3193 = vld [vmem:[%s2609 + $0x1b0] sm:$0xff]
      %v3194 = vld [vmem:[%s2609 + $0x1c8] sm:$0xff]
      %v3195 = vld [vmem:[%s2609 + $0x1d0] sm:$0xff]
      %v3196 = vld [vmem:[%s2609 + $0x1e8] sm:$0xff]
      %v3197 = vld [vmem:[%s2609 + $0x1f0] sm:$0xff]
      %s3198 = scalar_lea.vmem %s3, 224
      %v3199 = vld [vmem:[%s3198] sm:$0xff]
      %v3200 = vld [vmem:[%s3198 + $0x8] sm:$0xff]
      %v3201 = vld [vmem:[%s3198 + $0x10] sm:$0xff]
      %v3202 = vld [vmem:[%s3198 + $0x18] sm:$0xff]
      %v3204 = vsel %vm1170, %v3166, 0
      %v3207 = vsel %vm1170, %v3167, 0
      %v3210 = vsel %vm1170, %v3168, 0
      %v3213 = vsel %vm1170, %v3169, 0
      %v3216 = vsel %vm1170, %v3170, 0
      %v3219 = vsel %vm1170, %v3171, 0
      %v3222 = vsel %vm1170, %v3172, 0
      %v3225 = vsel %vm1170, %v3173, 0
      %v3228 = vsel %vm1170, %v3174, 0
      %v3231 = vsel %vm1170, %v3175, 0
      %v3234 = vsel %vm1170, %v3176, 0
      %v3237 = vsel %vm1170, %v3177, 0
      %v3240 = vsel %vm1170, %v3178, 0
      %v3243 = vsel %vm1170, %v3179, 0
      %v3246 = vsel %vm1170, %v3180, 0
      %v3249 = vsel %vm1170, %v3181, 0
      %v3252 = vsel %vm1170, %v3182, 0
      %v3255 = vsel %vm1170, %v3183, 0
      %v3258 = vsel %vm1170, %v3184, 0
      %v3261 = vsel %vm1170, %v3185, 0
      %v3264 = vsel %vm1170, %v3186, 0
      %v3267 = vsel %vm1170, %v3187, 0
      %v3270 = vsel %vm1170, %v3188, 0
      %v3273 = vsel %vm1170, %v3189, 0
      %v3276 = vsel %vm1170, %v3190, 0
      %v3279 = vsel %vm1170, %v3191, 0
      %v3282 = vsel %vm1170, %v3192, 0
      %v3285 = vsel %vm1170, %v3193, 0
      %v3288 = vsel %vm1170, %v3194, 0
      %v3291 = vsel %vm1170, %v3195, 0
      %v3294 = vsel %vm1170, %v3196, 0
      %v3297 = vsel %vm1170, %v3197, 0
      %3299 = vmatpush.msra.mxu0 0.0
      %3300 = vmatpush.msra.mxu0 0.0
      %3301 = vmatpush.msra.mxu0 0.0
      %3302 = vmatpush.msra.mxu0 0.0
      %3303 = vmatpush.msra.mxu0 0.0
      %3304 = vmatpush.msra.mxu0 0.0
      %3305 = vmatpush.msra.mxu0 0.0
      %3306 = vmatpush.msra.mxu0 0.0
      %3307 = vmatpush.msra.mxu0 0.0
      %3308 = vmatpush.msra.mxu0 0.0
      %3309 = vmatpush.msra.mxu0 0.0
      %3310 = vmatpush.msra.mxu0 0.0
      %3311 = vmatpush.msra.mxu0 %v3202
      %3312 = vmatpush.msra.mxu0 %v3201
      %3313 = vmatpush.msra.mxu0 %v3200
      %3314 = vmatpush.msra.mxu0 %v3199
      %3315 = vmatmul.f32.gmra.mxu0 %v3204
      %v3316 = vpop.f32.mrf.mxu0
      %v3317 = vadd.f32 0.0, %v3316
      %3318 = vmatmul.f32.gmra.mxu0 %v3207
      %v3319 = vpop.f32.mrf.mxu0
      %v3320 = vadd.f32 0.0, %v3319
      %3321 = vmatmul.f32.gmra.mxu0 %v3210
      %v3322 = vpop.f32.mrf.mxu0
      %v3323 = vadd.f32 0.0, %v3322
      %3324 = vmatmul.f32.gmra.mxu0 %v3213
      %v3325 = vpop.f32.mrf.mxu0
      %v3326 = vadd.f32 0.0, %v3325
      %3327 = vmatmul.f32.gmra.mxu0 %v3216
      %v3328 = vpop.f32.mrf.mxu0
      %v3329 = vadd.f32 0.0, %v3328
      %3330 = vmatmul.f32.gmra.mxu0 %v3219
      %v3331 = vpop.f32.mrf.mxu0
      %v3332 = vadd.f32 0.0, %v3331
      %3333 = vmatmul.f32.gmra.mxu0 %v3222
      %v3334 = vpop.f32.mrf.mxu0
      %v3335 = vadd.f32 0.0, %v3334
      %3336 = vmatmul.f32.gmra.mxu0 %v3225
      %v3337 = vpop.f32.mrf.mxu0
      %v3338 = vadd.f32 0.0, %v3337
      %3339 = vmatmul.f32.gmra.mxu0 %v3228
      %v3340 = vpop.f32.mrf.mxu0
      %v3341 = vadd.f32 0.0, %v3340
      %3342 = vmatmul.f32.gmra.mxu0 %v3231
      %v3343 = vpop.f32.mrf.mxu0
      %v3344 = vadd.f32 0.0, %v3343
      %3345 = vmatmul.f32.gmra.mxu0 %v3234
      %v3346 = vpop.f32.mrf.mxu0
      %v3347 = vadd.f32 0.0, %v3346
      %3348 = vmatmul.f32.gmra.mxu0 %v3237
      %v3349 = vpop.f32.mrf.mxu0
      %v3350 = vadd.f32 0.0, %v3349
      %3351 = vmatmul.f32.gmra.mxu0 %v3240
      %v3352 = vpop.f32.mrf.mxu0
      %v3353 = vadd.f32 0.0, %v3352
      %3354 = vmatmul.f32.gmra.mxu0 %v3243
      %v3355 = vpop.f32.mrf.mxu0
      %v3356 = vadd.f32 0.0, %v3355
      %3357 = vmatmul.f32.gmra.mxu0 %v3246
      %v3358 = vpop.f32.mrf.mxu0
      %v3359 = vadd.f32 0.0, %v3358
      %3360 = vmatmul.f32.gmra.mxu0 %v3249
      %v3361 = vpop.f32.mrf.mxu0
      %v3362 = vadd.f32 0.0, %v3361
      %3363 = vmatmul.f32.gmra.mxu0 %v3252
      %v3364 = vpop.f32.mrf.mxu0
      %v3365 = vadd.f32 0.0, %v3364
      %3366 = vmatmul.f32.gmra.mxu0 %v3255
      %v3367 = vpop.f32.mrf.mxu0
      %v3368 = vadd.f32 0.0, %v3367
      %3369 = vmatmul.f32.gmra.mxu0 %v3258
      %v3370 = vpop.f32.mrf.mxu0
      %v3371 = vadd.f32 0.0, %v3370
      %3372 = vmatmul.f32.gmra.mxu0 %v3261
      %v3373 = vpop.f32.mrf.mxu0
      %v3374 = vadd.f32 0.0, %v3373
      %3375 = vmatmul.f32.gmra.mxu0 %v3264
      %v3376 = vpop.f32.mrf.mxu0
      %v3377 = vadd.f32 0.0, %v3376
      %3378 = vmatmul.f32.gmra.mxu0 %v3267
      %v3379 = vpop.f32.mrf.mxu0
      %v3380 = vadd.f32 0.0, %v3379
      %3381 = vmatmul.f32.gmra.mxu0 %v3270
      %v3382 = vpop.f32.mrf.mxu0
      %v3383 = vadd.f32 0.0, %v3382
      %3384 = vmatmul.f32.gmra.mxu0 %v3273
      %v3385 = vpop.f32.mrf.mxu0
      %v3386 = vadd.f32 0.0, %v3385
      %3387 = vmatmul.f32.gmra.mxu0 %v3276
      %v3388 = vpop.f32.mrf.mxu0
      %v3389 = vadd.f32 0.0, %v3388
      %3390 = vmatmul.f32.gmra.mxu0 %v3279
      %v3391 = vpop.f32.mrf.mxu0
      %v3392 = vadd.f32 0.0, %v3391
      %3393 = vmatmul.f32.gmra.mxu0 %v3282
      %v3394 = vpop.f32.mrf.mxu0
      %v3395 = vadd.f32 0.0, %v3394
      %3396 = vmatmul.f32.gmra.mxu0 %v3285
      %v3397 = vpop.f32.mrf.mxu0
      %v3398 = vadd.f32 0.0, %v3397
      %3399 = vmatmul.f32.gmra.mxu0 %v3288
      %v3400 = vpop.f32.mrf.mxu0
      %v3401 = vadd.f32 0.0, %v3400
      %3402 = vmatmul.f32.gmra.mxu0 %v3291
      %v3403 = vpop.f32.mrf.mxu0
      %v3404 = vadd.f32 0.0, %v3403
      %3405 = vmatmul.f32.gmra.mxu0 %v3294
      %v3406 = vpop.f32.mrf.mxu0
      %v3407 = vadd.f32 0.0, %v3406
      %3408 = vmatmul.f32.gmra.mxu0 %v3297
      %v3409 = vpop.f32.mrf.mxu0
      %v3410 = vadd.f32 0.0, %v3409
      %3411 = vdwg.mxu0
      %v3412 = vadd.f32 %v3134, %v3317
      %v3413 = vadd.f32 %v3135, %v3320
      %v3414 = vadd.f32 %v3136, %v3323
      %v3415 = vadd.f32 %v3137, %v3326
      %v3416 = vadd.f32 %v3138, %v3329
      %v3417 = vadd.f32 %v3139, %v3332
      %v3418 = vadd.f32 %v3140, %v3335
      %v3419 = vadd.f32 %v3141, %v3338
      %v3420 = vadd.f32 %v3142, %v3341
      %v3421 = vadd.f32 %v3143, %v3344
      %v3422 = vadd.f32 %v3144, %v3347
      %v3423 = vadd.f32 %v3145, %v3350
      %v3424 = vadd.f32 %v3146, %v3353
      %v3425 = vadd.f32 %v3147, %v3356
      %v3426 = vadd.f32 %v3148, %v3359
      %v3427 = vadd.f32 %v3149, %v3362
      %v3428 = vadd.f32 %v3150, %v3365
      %v3429 = vadd.f32 %v3151, %v3368
      %v3430 = vadd.f32 %v3152, %v3371
      %v3431 = vadd.f32 %v3153, %v3374
      %v3432 = vadd.f32 %v3154, %v3377
      %v3433 = vadd.f32 %v3155, %v3380
      %v3434 = vadd.f32 %v3156, %v3383
      %v3435 = vadd.f32 %v3157, %v3386
      %v3436 = vadd.f32 %v3158, %v3389
      %v3437 = vadd.f32 %v3159, %v3392
      %v3438 = vadd.f32 %v3160, %v3395
      %v3439 = vadd.f32 %v3161, %v3398
      %v3440 = vadd.f32 %v3162, %v3401
      %v3441 = vadd.f32 %v3163, %v3404
      %v3442 = vadd.f32 %v3164, %v3407
      %v3443 = vadd.f32 %v3165, %v3410
      %v3444 = vld [vmem:[%s2609 + $0x9] sm:$0xff]
      %v3445 = vld [vmem:[%s2609 + $0x11] sm:$0xff]
      %v3446 = vld [vmem:[%s2609 + $0x29] sm:$0xff]
      %v3447 = vld [vmem:[%s2609 + $0x31] sm:$0xff]
      %v3448 = vld [vmem:[%s2609 + $0x49] sm:$0xff]
      %v3449 = vld [vmem:[%s2609 + $0x51] sm:$0xff]
      %v3450 = vld [vmem:[%s2609 + $0x69] sm:$0xff]
      %v3451 = vld [vmem:[%s2609 + $0x71] sm:$0xff]
      %v3452 = vld [vmem:[%s2609 + $0x89] sm:$0xff]
      %v3453 = vld [vmem:[%s2609 + $0x91] sm:$0xff]
      %v3454 = vld [vmem:[%s2609 + $0xa9] sm:$0xff]
      %v3455 = vld [vmem:[%s2609 + $0xb1] sm:$0xff]
      %v3456 = vld [vmem:[%s2609 + $0xc9] sm:$0xff]
      %v3457 = vld [vmem:[%s2609 + $0xd1] sm:$0xff]
      %v3458 = vld [vmem:[%s2609 + $0xe9] sm:$0xff]
      %v3459 = vld [vmem:[%s2609 + $0xf1] sm:$0xff]
      %v3460 = vld [vmem:[%s2609 + $0x109] sm:$0xff]
      %v3461 = vld [vmem:[%s2609 + $0x111] sm:$0xff]
      %v3462 = vld [vmem:[%s2609 + $0x129] sm:$0xff]
      %v3463 = vld [vmem:[%s2609 + $0x131] sm:$0xff]
      %v3464 = vld [vmem:[%s2609 + $0x149] sm:$0xff]
      %v3465 = vld [vmem:[%s2609 + $0x151] sm:$0xff]
      %v3466 = vld [vmem:[%s2609 + $0x169] sm:$0xff]
      %v3467 = vld [vmem:[%s2609 + $0x171] sm:$0xff]
      %v3468 = vld [vmem:[%s2609 + $0x189] sm:$0xff]
      %v3469 = vld [vmem:[%s2609 + $0x191] sm:$0xff]
      %v3470 = vld [vmem:[%s2609 + $0x1a9] sm:$0xff]
      %v3471 = vld [vmem:[%s2609 + $0x1b1] sm:$0xff]
      %v3472 = vld [vmem:[%s2609 + $0x1c9] sm:$0xff]
      %v3473 = vld [vmem:[%s2609 + $0x1d1] sm:$0xff]
      %v3474 = vld [vmem:[%s2609 + $0x1e9] sm:$0xff]
      %v3475 = vld [vmem:[%s2609 + $0x1f1] sm:$0xff]
      %s3476 = scalar_lea.vmem %s3, 256
      %v3477 = vld [vmem:[%s3476] sm:$0xff]
      %v3478 = vld [vmem:[%s3476 + $0x8] sm:$0xff]
      %v3479 = vld [vmem:[%s3476 + $0x10] sm:$0xff]
      %v3480 = vld [vmem:[%s3476 + $0x18] sm:$0xff]
      %v3482 = vsel %vm1170, %v3444, 0
      %v3485 = vsel %vm1170, %v3445, 0
      %v3488 = vsel %vm1170, %v3446, 0
      %v3491 = vsel %vm1170, %v3447, 0
      %v3494 = vsel %vm1170, %v3448, 0
      %v3497 = vsel %vm1170, %v3449, 0
      %v3500 = vsel %vm1170, %v3450, 0
      %v3503 = vsel %vm1170, %v3451, 0
      %v3506 = vsel %vm1170, %v3452, 0
      %v3509 = vsel %vm1170, %v3453, 0
      %v3512 = vsel %vm1170, %v3454, 0
      %v3515 = vsel %vm1170, %v3455, 0
      %v3518 = vsel %vm1170, %v3456, 0
      %v3521 = vsel %vm1170, %v3457, 0
      %v3524 = vsel %vm1170, %v3458, 0
      %v3527 = vsel %vm1170, %v3459, 0
      %v3530 = vsel %vm1170, %v3460, 0
      %v3533 = vsel %vm1170, %v3461, 0
      %v3536 = vsel %vm1170, %v3462, 0
      %v3539 = vsel %vm1170, %v3463, 0
      %v3542 = vsel %vm1170, %v3464, 0
      %v3545 = vsel %vm1170, %v3465, 0
      %v3548 = vsel %vm1170, %v3466, 0
      %v3551 = vsel %vm1170, %v3467, 0
      %v3554 = vsel %vm1170, %v3468, 0
      %v3557 = vsel %vm1170, %v3469, 0
      %v3560 = vsel %vm1170, %v3470, 0
      %v3563 = vsel %vm1170, %v3471, 0
      %v3566 = vsel %vm1170, %v3472, 0
      %v3569 = vsel %vm1170, %v3473, 0
      %v3572 = vsel %vm1170, %v3474, 0
      %v3575 = vsel %vm1170, %v3475, 0
      %3577 = vmatpush.msra.mxu0 0.0
      %3578 = vmatpush.msra.mxu0 0.0
      %3579 = vmatpush.msra.mxu0 0.0
      %3580 = vmatpush.msra.mxu0 0.0
      %3581 = vmatpush.msra.mxu0 0.0
      %3582 = vmatpush.msra.mxu0 0.0
      %3583 = vmatpush.msra.mxu0 0.0
      %3584 = vmatpush.msra.mxu0 0.0
      %3585 = vmatpush.msra.mxu0 0.0
      %3586 = vmatpush.msra.mxu0 0.0
      %3587 = vmatpush.msra.mxu0 0.0
      %3588 = vmatpush.msra.mxu0 0.0
      %3589 = vmatpush.msra.mxu0 %v3480
      %3590 = vmatpush.msra.mxu0 %v3479
      %3591 = vmatpush.msra.mxu0 %v3478
      %3592 = vmatpush.msra.mxu0 %v3477
      %3593 = vmatmul.f32.gmra.mxu0 %v3482
      %v3594 = vpop.f32.mrf.mxu0
      %v3595 = vadd.f32 0.0, %v3594
      %3596 = vmatmul.f32.gmra.mxu0 %v3485
      %v3597 = vpop.f32.mrf.mxu0
      %v3598 = vadd.f32 0.0, %v3597
      %3599 = vmatmul.f32.gmra.mxu0 %v3488
      %v3600 = vpop.f32.mrf.mxu0
      %v3601 = vadd.f32 0.0, %v3600
      %3602 = vmatmul.f32.gmra.mxu0 %v3491
      %v3603 = vpop.f32.mrf.mxu0
      %v3604 = vadd.f32 0.0, %v3603
      %3605 = vmatmul.f32.gmra.mxu0 %v3494
      %v3606 = vpop.f32.mrf.mxu0
      %v3607 = vadd.f32 0.0, %v3606
      %3608 = vmatmul.f32.gmra.mxu0 %v3497
      %v3609 = vpop.f32.mrf.mxu0
      %v3610 = vadd.f32 0.0, %v3609
      %3611 = vmatmul.f32.gmra.mxu0 %v3500
      %v3612 = vpop.f32.mrf.mxu0
      %v3613 = vadd.f32 0.0, %v3612
      %3614 = vmatmul.f32.gmra.mxu0 %v3503
      %v3615 = vpop.f32.mrf.mxu0
      %v3616 = vadd.f32 0.0, %v3615
      %3617 = vmatmul.f32.gmra.mxu0 %v3506
      %v3618 = vpop.f32.mrf.mxu0
      %v3619 = vadd.f32 0.0, %v3618
      %3620 = vmatmul.f32.gmra.mxu0 %v3509
      %v3621 = vpop.f32.mrf.mxu0
      %v3622 = vadd.f32 0.0, %v3621
      %3623 = vmatmul.f32.gmra.mxu0 %v3512
      %v3624 = vpop.f32.mrf.mxu0
      %v3625 = vadd.f32 0.0, %v3624
      %3626 = vmatmul.f32.gmra.mxu0 %v3515
      %v3627 = vpop.f32.mrf.mxu0
      %v3628 = vadd.f32 0.0, %v3627
      %3629 = vmatmul.f32.gmra.mxu0 %v3518
      %v3630 = vpop.f32.mrf.mxu0
      %v3631 = vadd.f32 0.0, %v3630
      %3632 = vmatmul.f32.gmra.mxu0 %v3521
      %v3633 = vpop.f32.mrf.mxu0
      %v3634 = vadd.f32 0.0, %v3633
      %3635 = vmatmul.f32.gmra.mxu0 %v3524
      %v3636 = vpop.f32.mrf.mxu0
      %v3637 = vadd.f32 0.0, %v3636
      %3638 = vmatmul.f32.gmra.mxu0 %v3527
      %v3639 = vpop.f32.mrf.mxu0
      %v3640 = vadd.f32 0.0, %v3639
      %3641 = vmatmul.f32.gmra.mxu0 %v3530
      %v3642 = vpop.f32.mrf.mxu0
      %v3643 = vadd.f32 0.0, %v3642
      %3644 = vmatmul.f32.gmra.mxu0 %v3533
      %v3645 = vpop.f32.mrf.mxu0
      %v3646 = vadd.f32 0.0, %v3645
      %3647 = vmatmul.f32.gmra.mxu0 %v3536
      %v3648 = vpop.f32.mrf.mxu0
      %v3649 = vadd.f32 0.0, %v3648
      %3650 = vmatmul.f32.gmra.mxu0 %v3539
      %v3651 = vpop.f32.mrf.mxu0
      %v3652 = vadd.f32 0.0, %v3651
      %3653 = vmatmul.f32.gmra.mxu0 %v3542
      %v3654 = vpop.f32.mrf.mxu0
      %v3655 = vadd.f32 0.0, %v3654
      %3656 = vmatmul.f32.gmra.mxu0 %v3545
      %v3657 = vpop.f32.mrf.mxu0
      %v3658 = vadd.f32 0.0, %v3657
      %3659 = vmatmul.f32.gmra.mxu0 %v3548
      %v3660 = vpop.f32.mrf.mxu0
      %v3661 = vadd.f32 0.0, %v3660
      %3662 = vmatmul.f32.gmra.mxu0 %v3551
      %v3663 = vpop.f32.mrf.mxu0
      %v3664 = vadd.f32 0.0, %v3663
      %3665 = vmatmul.f32.gmra.mxu0 %v3554
      %v3666 = vpop.f32.mrf.mxu0
      %v3667 = vadd.f32 0.0, %v3666
      %3668 = vmatmul.f32.gmra.mxu0 %v3557
      %v3669 = vpop.f32.mrf.mxu0
      %v3670 = vadd.f32 0.0, %v3669
      %3671 = vmatmul.f32.gmra.mxu0 %v3560
      %v3672 = vpop.f32.mrf.mxu0
      %v3673 = vadd.f32 0.0, %v3672
      %3674 = vmatmul.f32.gmra.mxu0 %v3563
      %v3675 = vpop.f32.mrf.mxu0
      %v3676 = vadd.f32 0.0, %v3675
      %3677 = vmatmul.f32.gmra.mxu0 %v3566
      %v3678 = vpop.f32.mrf.mxu0
      %v3679 = vadd.f32 0.0, %v3678
      %3680 = vmatmul.f32.gmra.mxu0 %v3569
      %v3681 = vpop.f32.mrf.mxu0
      %v3682 = vadd.f32 0.0, %v3681
      %3683 = vmatmul.f32.gmra.mxu0 %v3572
      %v3684 = vpop.f32.mrf.mxu0
      %v3685 = vadd.f32 0.0, %v3684
      %3686 = vmatmul.f32.gmra.mxu0 %v3575
      %v3687 = vpop.f32.mrf.mxu0
      %v3688 = vadd.f32 0.0, %v3687
      %3689 = vdwg.mxu0
      %v3690 = vadd.f32 %v3412, %v3595
      %v3691 = vadd.f32 %v3413, %v3598
      %v3692 = vadd.f32 %v3414, %v3601
      %v3693 = vadd.f32 %v3415, %v3604
      %v3694 = vadd.f32 %v3416, %v3607
      %v3695 = vadd.f32 %v3417, %v3610
      %v3696 = vadd.f32 %v3418, %v3613
      %v3697 = vadd.f32 %v3419, %v3616
      %v3698 = vadd.f32 %v3420, %v3619
      %v3699 = vadd.f32 %v3421, %v3622
      %v3700 = vadd.f32 %v3422, %v3625
      %v3701 = vadd.f32 %v3423, %v3628
      %v3702 = vadd.f32 %v3424, %v3631
      %v3703 = vadd.f32 %v3425, %v3634
      %v3704 = vadd.f32 %v3426, %v3637
      %v3705 = vadd.f32 %v3427, %v3640
      %v3706 = vadd.f32 %v3428, %v3643
      %v3707 = vadd.f32 %v3429, %v3646
      %v3708 = vadd.f32 %v3430, %v3649
      %v3709 = vadd.f32 %v3431, %v3652
      %v3710 = vadd.f32 %v3432, %v3655
      %v3711 = vadd.f32 %v3433, %v3658
      %v3712 = vadd.f32 %v3434, %v3661
      %v3713 = vadd.f32 %v3435, %v3664
      %v3714 = vadd.f32 %v3436, %v3667
      %v3715 = vadd.f32 %v3437, %v3670
      %v3716 = vadd.f32 %v3438, %v3673
      %v3717 = vadd.f32 %v3439, %v3676
      %v3718 = vadd.f32 %v3440, %v3679
      %v3719 = vadd.f32 %v3441, %v3682
      %v3720 = vadd.f32 %v3442, %v3685
      %v3721 = vadd.f32 %v3443, %v3688
      %v3722 = vld [vmem:[%s2609 + $0xa] sm:$0xff]
      %v3723 = vld [vmem:[%s2609 + $0x12] sm:$0xff]
      %v3724 = vld [vmem:[%s2609 + $0x2a] sm:$0xff]
      %v3725 = vld [vmem:[%s2609 + $0x32] sm:$0xff]
      %v3726 = vld [vmem:[%s2609 + $0x4a] sm:$0xff]
      %v3727 = vld [vmem:[%s2609 + $0x52] sm:$0xff]
      %v3728 = vld [vmem:[%s2609 + $0x6a] sm:$0xff]
      %v3729 = vld [vmem:[%s2609 + $0x72] sm:$0xff]
      %v3730 = vld [vmem:[%s2609 + $0x8a] sm:$0xff]
      %v3731 = vld [vmem:[%s2609 + $0x92] sm:$0xff]
      %v3732 = vld [vmem:[%s2609 + $0xaa] sm:$0xff]
      %v3733 = vld [vmem:[%s2609 + $0xb2] sm:$0xff]
      %v3734 = vld [vmem:[%s2609 + $0xca] sm:$0xff]
      %v3735 = vld [vmem:[%s2609 + $0xd2] sm:$0xff]
      %v3736 = vld [vmem:[%s2609 + $0xea] sm:$0xff]
      %v3737 = vld [vmem:[%s2609 + $0xf2] sm:$0xff]
      %v3738 = vld [vmem:[%s2609 + $0x10a] sm:$0xff]
      %v3739 = vld [vmem:[%s2609 + $0x112] sm:$0xff]
      %v3740 = vld [vmem:[%s2609 + $0x12a] sm:$0xff]
      %v3741 = vld [vmem:[%s2609 + $0x132] sm:$0xff]
      %v3742 = vld [vmem:[%s2609 + $0x14a] sm:$0xff]
      %v3743 = vld [vmem:[%s2609 + $0x152] sm:$0xff]
      %v3744 = vld [vmem:[%s2609 + $0x16a] sm:$0xff]
      %v3745 = vld [vmem:[%s2609 + $0x172] sm:$0xff]
      %v3746 = vld [vmem:[%s2609 + $0x18a] sm:$0xff]
      %v3747 = vld [vmem:[%s2609 + $0x192] sm:$0xff]
      %v3748 = vld [vmem:[%s2609 + $0x1aa] sm:$0xff]
      %v3749 = vld [vmem:[%s2609 + $0x1b2] sm:$0xff]
      %v3750 = vld [vmem:[%s2609 + $0x1ca] sm:$0xff]
      %v3751 = vld [vmem:[%s2609 + $0x1d2] sm:$0xff]
      %v3752 = vld [vmem:[%s2609 + $0x1ea] sm:$0xff]
      %v3753 = vld [vmem:[%s2609 + $0x1f2] sm:$0xff]
      %s3754 = scalar_lea.vmem %s3, 288
      %v3755 = vld [vmem:[%s3754] sm:$0xff]
      %v3756 = vld [vmem:[%s3754 + $0x8] sm:$0xff]
      %v3757 = vld [vmem:[%s3754 + $0x10] sm:$0xff]
      %v3758 = vld [vmem:[%s3754 + $0x18] sm:$0xff]
      %v3760 = vsel %vm1170, %v3722, 0
      %v3763 = vsel %vm1170, %v3723, 0
      %v3766 = vsel %vm1170, %v3724, 0
      %v3769 = vsel %vm1170, %v3725, 0
      %v3772 = vsel %vm1170, %v3726, 0
      %v3775 = vsel %vm1170, %v3727, 0
      %v3778 = vsel %vm1170, %v3728, 0
      %v3781 = vsel %vm1170, %v3729, 0
      %v3784 = vsel %vm1170, %v3730, 0
      %v3787 = vsel %vm1170, %v3731, 0
      %v3790 = vsel %vm1170, %v3732, 0
      %v3793 = vsel %vm1170, %v3733, 0
      %v3796 = vsel %vm1170, %v3734, 0
      %v3799 = vsel %vm1170, %v3735, 0
      %v3802 = vsel %vm1170, %v3736, 0
      %v3805 = vsel %vm1170, %v3737, 0
      %v3808 = vsel %vm1170, %v3738, 0
      %v3811 = vsel %vm1170, %v3739, 0
      %v3814 = vsel %vm1170, %v3740, 0
      %v3817 = vsel %vm1170, %v3741, 0
      %v3820 = vsel %vm1170, %v3742, 0
      %v3823 = vsel %vm1170, %v3743, 0
      %v3826 = vsel %vm1170, %v3744, 0
      %v3829 = vsel %vm1170, %v3745, 0
      %v3832 = vsel %vm1170, %v3746, 0
      %v3835 = vsel %vm1170, %v3747, 0
      %v3838 = vsel %vm1170, %v3748, 0
      %v3841 = vsel %vm1170, %v3749, 0
      %v3844 = vsel %vm1170, %v3750, 0
      %v3847 = vsel %vm1170, %v3751, 0
      %v3850 = vsel %vm1170, %v3752, 0
      %v3853 = vsel %vm1170, %v3753, 0
      %3855 = vmatpush.msra.mxu0 0.0
      %3856 = vmatpush.msra.mxu0 0.0
      %3857 = vmatpush.msra.mxu0 0.0
      %3858 = vmatpush.msra.mxu0 0.0
      %3859 = vmatpush.msra.mxu0 0.0
      %3860 = vmatpush.msra.mxu0 0.0
      %3861 = vmatpush.msra.mxu0 0.0
      %3862 = vmatpush.msra.mxu0 0.0
      %3863 = vmatpush.msra.mxu0 0.0
      %3864 = vmatpush.msra.mxu0 0.0
      %3865 = vmatpush.msra.mxu0 0.0
      %3866 = vmatpush.msra.mxu0 0.0
      %3867 = vmatpush.msra.mxu0 %v3758
      %3868 = vmatpush.msra.mxu0 %v3757
      %3869 = vmatpush.msra.mxu0 %v3756
      %3870 = vmatpush.msra.mxu0 %v3755
      %3871 = vmatmul.f32.gmra.mxu0 %v3760
      %v3872 = vpop.f32.mrf.mxu0
      %v3873 = vadd.f32 0.0, %v3872
      %3874 = vmatmul.f32.gmra.mxu0 %v3763
      %v3875 = vpop.f32.mrf.mxu0
      %v3876 = vadd.f32 0.0, %v3875
      %3877 = vmatmul.f32.gmra.mxu0 %v3766
      %v3878 = vpop.f32.mrf.mxu0
      %v3879 = vadd.f32 0.0, %v3878
      %3880 = vmatmul.f32.gmra.mxu0 %v3769
      %v3881 = vpop.f32.mrf.mxu0
      %v3882 = vadd.f32 0.0, %v3881
      %3883 = vmatmul.f32.gmra.mxu0 %v3772
      %v3884 = vpop.f32.mrf.mxu0
      %v3885 = vadd.f32 0.0, %v3884
      %3886 = vmatmul.f32.gmra.mxu0 %v3775
      %v3887 = vpop.f32.mrf.mxu0
      %v3888 = vadd.f32 0.0, %v3887
      %3889 = vmatmul.f32.gmra.mxu0 %v3778
      %v3890 = vpop.f32.mrf.mxu0
      %v3891 = vadd.f32 0.0, %v3890
      %3892 = vmatmul.f32.gmra.mxu0 %v3781
      %v3893 = vpop.f32.mrf.mxu0
      %v3894 = vadd.f32 0.0, %v3893
      %3895 = vmatmul.f32.gmra.mxu0 %v3784
      %v3896 = vpop.f32.mrf.mxu0
      %v3897 = vadd.f32 0.0, %v3896
      %3898 = vmatmul.f32.gmra.mxu0 %v3787
      %v3899 = vpop.f32.mrf.mxu0
      %v3900 = vadd.f32 0.0, %v3899
      %3901 = vmatmul.f32.gmra.mxu0 %v3790
      %v3902 = vpop.f32.mrf.mxu0
      %v3903 = vadd.f32 0.0, %v3902
      %3904 = vmatmul.f32.gmra.mxu0 %v3793
      %v3905 = vpop.f32.mrf.mxu0
      %v3906 = vadd.f32 0.0, %v3905
      %3907 = vmatmul.f32.gmra.mxu0 %v3796
      %v3908 = vpop.f32.mrf.mxu0
      %v3909 = vadd.f32 0.0, %v3908
      %3910 = vmatmul.f32.gmra.mxu0 %v3799
      %v3911 = vpop.f32.mrf.mxu0
      %v3912 = vadd.f32 0.0, %v3911
      %3913 = vmatmul.f32.gmra.mxu0 %v3802
      %v3914 = vpop.f32.mrf.mxu0
      %v3915 = vadd.f32 0.0, %v3914
      %3916 = vmatmul.f32.gmra.mxu0 %v3805
      %v3917 = vpop.f32.mrf.mxu0
      %v3918 = vadd.f32 0.0, %v3917
      %3919 = vmatmul.f32.gmra.mxu0 %v3808
      %v3920 = vpop.f32.mrf.mxu0
      %v3921 = vadd.f32 0.0, %v3920
      %3922 = vmatmul.f32.gmra.mxu0 %v3811
      %v3923 = vpop.f32.mrf.mxu0
      %v3924 = vadd.f32 0.0, %v3923
      %3925 = vmatmul.f32.gmra.mxu0 %v3814
      %v3926 = vpop.f32.mrf.mxu0
      %v3927 = vadd.f32 0.0, %v3926
      %3928 = vmatmul.f32.gmra.mxu0 %v3817
      %v3929 = vpop.f32.mrf.mxu0
      %v3930 = vadd.f32 0.0, %v3929
      %3931 = vmatmul.f32.gmra.mxu0 %v3820
      %v3932 = vpop.f32.mrf.mxu0
      %v3933 = vadd.f32 0.0, %v3932
      %3934 = vmatmul.f32.gmra.mxu0 %v3823
      %v3935 = vpop.f32.mrf.mxu0
      %v3936 = vadd.f32 0.0, %v3935
      %3937 = vmatmul.f32.gmra.mxu0 %v3826
      %v3938 = vpop.f32.mrf.mxu0
      %v3939 = vadd.f32 0.0, %v3938
      %3940 = vmatmul.f32.gmra.mxu0 %v3829
      %v3941 = vpop.f32.mrf.mxu0
      %v3942 = vadd.f32 0.0, %v3941
      %3943 = vmatmul.f32.gmra.mxu0 %v3832
      %v3944 = vpop.f32.mrf.mxu0
      %v3945 = vadd.f32 0.0, %v3944
      %3946 = vmatmul.f32.gmra.mxu0 %v3835
      %v3947 = vpop.f32.mrf.mxu0
      %v3948 = vadd.f32 0.0, %v3947
      %3949 = vmatmul.f32.gmra.mxu0 %v3838
      %v3950 = vpop.f32.mrf.mxu0
      %v3951 = vadd.f32 0.0, %v3950
      %3952 = vmatmul.f32.gmra.mxu0 %v3841
      %v3953 = vpop.f32.mrf.mxu0
      %v3954 = vadd.f32 0.0, %v3953
      %3955 = vmatmul.f32.gmra.mxu0 %v3844
      %v3956 = vpop.f32.mrf.mxu0
      %v3957 = vadd.f32 0.0, %v3956
      %3958 = vmatmul.f32.gmra.mxu0 %v3847
      %v3959 = vpop.f32.mrf.mxu0
      %v3960 = vadd.f32 0.0, %v3959
      %3961 = vmatmul.f32.gmra.mxu0 %v3850
      %v3962 = vpop.f32.mrf.mxu0
      %v3963 = vadd.f32 0.0, %v3962
      %3964 = vmatmul.f32.gmra.mxu0 %v3853
      %v3965 = vpop.f32.mrf.mxu0
      %v3966 = vadd.f32 0.0, %v3965
      %3967 = vdwg.mxu0
      %v3968 = vadd.f32 %v3690, %v3873
      %v3969 = vadd.f32 %v3691, %v3876
      %v3970 = vadd.f32 %v3692, %v3879
      %v3971 = vadd.f32 %v3693, %v3882
      %v3972 = vadd.f32 %v3694, %v3885
      %v3973 = vadd.f32 %v3695, %v3888
      %v3974 = vadd.f32 %v3696, %v3891
      %v3975 = vadd.f32 %v3697, %v3894
      %v3976 = vadd.f32 %v3698, %v3897
      %v3977 = vadd.f32 %v3699, %v3900
      %v3978 = vadd.f32 %v3700, %v3903
      %v3979 = vadd.f32 %v3701, %v3906
      %v3980 = vadd.f32 %v3702, %v3909
      %v3981 = vadd.f32 %v3703, %v3912
      %v3982 = vadd.f32 %v3704, %v3915
      %v3983 = vadd.f32 %v3705, %v3918
      %v3984 = vadd.f32 %v3706, %v3921
      %v3985 = vadd.f32 %v3707, %v3924
      %v3986 = vadd.f32 %v3708, %v3927
      %v3987 = vadd.f32 %v3709, %v3930
      %v3988 = vadd.f32 %v3710, %v3933
      %v3989 = vadd.f32 %v3711, %v3936
      %v3990 = vadd.f32 %v3712, %v3939
      %v3991 = vadd.f32 %v3713, %v3942
      %v3992 = vadd.f32 %v3714, %v3945
      %v3993 = vadd.f32 %v3715, %v3948
      %v3994 = vadd.f32 %v3716, %v3951
      %v3995 = vadd.f32 %v3717, %v3954
      %v3996 = vadd.f32 %v3718, %v3957
      %v3997 = vadd.f32 %v3719, %v3960
      %v3998 = vadd.f32 %v3720, %v3963
      %v3999 = vadd.f32 %v3721, %v3966
      %v4000 = vld [vmem:[%s1251 + $0x6] sm:$0xff]
      %v4001 = vld [vmem:[%s1251 + $0xe] sm:$0xff]
      %v4002 = vld [vmem:[%s1251 + $0x26] sm:$0xff]
      %v4003 = vld [vmem:[%s1251 + $0x2e] sm:$0xff]
      %v4004 = vld [vmem:[%s1251 + $0x46] sm:$0xff]
      %v4005 = vld [vmem:[%s1251 + $0x4e] sm:$0xff]
      %v4006 = vld [vmem:[%s1251 + $0x66] sm:$0xff]
      %v4007 = vld [vmem:[%s1251 + $0x6e] sm:$0xff]
      %v4008 = vld [vmem:[%s1251 + $0x86] sm:$0xff]
      %v4009 = vld [vmem:[%s1251 + $0x8e] sm:$0xff]
      %v4010 = vld [vmem:[%s1251 + $0xa6] sm:$0xff]
      %v4011 = vld [vmem:[%s1251 + $0xae] sm:$0xff]
      %v4012 = vld [vmem:[%s1251 + $0xc6] sm:$0xff]
      %v4013 = vld [vmem:[%s1251 + $0xce] sm:$0xff]
      %v4014 = vld [vmem:[%s1251 + $0xe6] sm:$0xff]
      %v4015 = vld [vmem:[%s1251 + $0xee] sm:$0xff]
      %v4016 = vld [vmem:[%s1251 + $0x106] sm:$0xff]
      %v4017 = vld [vmem:[%s1251 + $0x10e] sm:$0xff]
      %v4018 = vld [vmem:[%s1251 + $0x126] sm:$0xff]
      %v4019 = vld [vmem:[%s1251 + $0x12e] sm:$0xff]
      %v4020 = vld [vmem:[%s1251 + $0x146] sm:$0xff]
      %v4021 = vld [vmem:[%s1251 + $0x14e] sm:$0xff]
      %v4022 = vld [vmem:[%s1251 + $0x166] sm:$0xff]
      %v4023 = vld [vmem:[%s1251 + $0x16e] sm:$0xff]
      %v4024 = vld [vmem:[%s1251 + $0x186] sm:$0xff]
      %v4025 = vld [vmem:[%s1251 + $0x18e] sm:$0xff]
      %v4026 = vld [vmem:[%s1251 + $0x1a6] sm:$0xff]
      %v4027 = vld [vmem:[%s1251 + $0x1ae] sm:$0xff]
      %v4028 = vld [vmem:[%s1251 + $0x1c6] sm:$0xff]
      %v4029 = vld [vmem:[%s1251 + $0x1ce] sm:$0xff]
      %v4030 = vld [vmem:[%s1251 + $0x1e6] sm:$0xff]
      %v4031 = vld [vmem:[%s1251 + $0x1ee] sm:$0xff]
      %s4032 = scalar_lea.vmem %s3, 320
      %v4033 = vld [vmem:[%s4032] sm:$0xff]
      %v4034 = vld [vmem:[%s4032 + $0x8] sm:$0xff]
      %v4035 = vld [vmem:[%s4032 + $0x10] sm:$0xff]
      %v4036 = vld [vmem:[%s4032 + $0x18] sm:$0xff]
      %v4038 = vsel %vm1170, %v4000, 0
      %v4041 = vsel %vm1170, %v4001, 0
      %v4044 = vsel %vm1170, %v4002, 0
      %v4047 = vsel %vm1170, %v4003, 0
      %v4050 = vsel %vm1170, %v4004, 0
      %v4053 = vsel %vm1170, %v4005, 0
      %v4056 = vsel %vm1170, %v4006, 0
      %v4059 = vsel %vm1170, %v4007, 0
      %v4062 = vsel %vm1170, %v4008, 0
      %v4065 = vsel %vm1170, %v4009, 0
      %v4068 = vsel %vm1170, %v4010, 0
      %v4071 = vsel %vm1170, %v4011, 0
      %v4074 = vsel %vm1170, %v4012, 0
      %v4077 = vsel %vm1170, %v4013, 0
      %v4080 = vsel %vm1170, %v4014, 0
      %v4083 = vsel %vm1170, %v4015, 0
      %v4086 = vsel %vm1170, %v4016, 0
      %v4089 = vsel %vm1170, %v4017, 0
      %v4092 = vsel %vm1170, %v4018, 0
      %v4095 = vsel %vm1170, %v4019, 0
      %v4098 = vsel %vm1170, %v4020, 0
      %v4101 = vsel %vm1170, %v4021, 0
      %v4104 = vsel %vm1170, %v4022, 0
      %v4107 = vsel %vm1170, %v4023, 0
      %v4110 = vsel %vm1170, %v4024, 0
      %v4113 = vsel %vm1170, %v4025, 0
      %v4116 = vsel %vm1170, %v4026, 0
      %v4119 = vsel %vm1170, %v4027, 0
      %v4122 = vsel %vm1170, %v4028, 0
      %v4125 = vsel %vm1170, %v4029, 0
      %v4128 = vsel %vm1170, %v4030, 0
      %v4131 = vsel %vm1170, %v4031, 0
      %4133 = vmatpush.msra.mxu0 0.0
      %4134 = vmatpush.msra.mxu0 0.0
      %4135 = vmatpush.msra.mxu0 0.0
      %4136 = vmatpush.msra.mxu0 0.0
      %4137 = vmatpush.msra.mxu0 0.0
      %4138 = vmatpush.msra.mxu0 0.0
      %4139 = vmatpush.msra.mxu0 0.0
      %4140 = vmatpush.msra.mxu0 0.0
      %4141 = vmatpush.msra.mxu0 0.0
      %4142 = vmatpush.msra.mxu0 0.0
      %4143 = vmatpush.msra.mxu0 0.0
      %4144 = vmatpush.msra.mxu0 0.0
      %4145 = vmatpush.msra.mxu0 %v4036
      %4146 = vmatpush.msra.mxu0 %v4035
      %4147 = vmatpush.msra.mxu0 %v4034
      %4148 = vmatpush.msra.mxu0 %v4033
      %4149 = vmatmul.f32.gmra.mxu0 %v4038
      %v4150 = vpop.f32.mrf.mxu0
      %v4151 = vadd.f32 0.0, %v4150
      %4152 = vmatmul.f32.gmra.mxu0 %v4041
      %v4153 = vpop.f32.mrf.mxu0
      %v4154 = vadd.f32 0.0, %v4153
      %4155 = vmatmul.f32.gmra.mxu0 %v4044
      %v4156 = vpop.f32.mrf.mxu0
      %v4157 = vadd.f32 0.0, %v4156
      %4158 = vmatmul.f32.gmra.mxu0 %v4047
      %v4159 = vpop.f32.mrf.mxu0
      %v4160 = vadd.f32 0.0, %v4159
      %4161 = vmatmul.f32.gmra.mxu0 %v4050
      %v4162 = vpop.f32.mrf.mxu0
      %v4163 = vadd.f32 0.0, %v4162
      %4164 = vmatmul.f32.gmra.mxu0 %v4053
      %v4165 = vpop.f32.mrf.mxu0
      %v4166 = vadd.f32 0.0, %v4165
      %4167 = vmatmul.f32.gmra.mxu0 %v4056
      %v4168 = vpop.f32.mrf.mxu0
      %v4169 = vadd.f32 0.0, %v4168
      %4170 = vmatmul.f32.gmra.mxu0 %v4059
      %v4171 = vpop.f32.mrf.mxu0
      %v4172 = vadd.f32 0.0, %v4171
      %4173 = vmatmul.f32.gmra.mxu0 %v4062
      %v4174 = vpop.f32.mrf.mxu0
      %v4175 = vadd.f32 0.0, %v4174
      %4176 = vmatmul.f32.gmra.mxu0 %v4065
      %v4177 = vpop.f32.mrf.mxu0
      %v4178 = vadd.f32 0.0, %v4177
      %4179 = vmatmul.f32.gmra.mxu0 %v4068
      %v4180 = vpop.f32.mrf.mxu0
      %v4181 = vadd.f32 0.0, %v4180
      %4182 = vmatmul.f32.gmra.mxu0 %v4071
      %v4183 = vpop.f32.mrf.mxu0
      %v4184 = vadd.f32 0.0, %v4183
      %4185 = vmatmul.f32.gmra.mxu0 %v4074
      %v4186 = vpop.f32.mrf.mxu0
      %v4187 = vadd.f32 0.0, %v4186
      %4188 = vmatmul.f32.gmra.mxu0 %v4077
      %v4189 = vpop.f32.mrf.mxu0
      %v4190 = vadd.f32 0.0, %v4189
      %4191 = vmatmul.f32.gmra.mxu0 %v4080
      %v4192 = vpop.f32.mrf.mxu0
      %v4193 = vadd.f32 0.0, %v4192
      %4194 = vmatmul.f32.gmra.mxu0 %v4083
      %v4195 = vpop.f32.mrf.mxu0
      %v4196 = vadd.f32 0.0, %v4195
      %4197 = vmatmul.f32.gmra.mxu0 %v4086
      %v4198 = vpop.f32.mrf.mxu0
      %v4199 = vadd.f32 0.0, %v4198
      %4200 = vmatmul.f32.gmra.mxu0 %v4089
      %v4201 = vpop.f32.mrf.mxu0
      %v4202 = vadd.f32 0.0, %v4201
      %4203 = vmatmul.f32.gmra.mxu0 %v4092
      %v4204 = vpop.f32.mrf.mxu0
      %v4205 = vadd.f32 0.0, %v4204
      %4206 = vmatmul.f32.gmra.mxu0 %v4095
      %v4207 = vpop.f32.mrf.mxu0
      %v4208 = vadd.f32 0.0, %v4207
      %4209 = vmatmul.f32.gmra.mxu0 %v4098
      %v4210 = vpop.f32.mrf.mxu0
      %v4211 = vadd.f32 0.0, %v4210
      %4212 = vmatmul.f32.gmra.mxu0 %v4101
      %v4213 = vpop.f32.mrf.mxu0
      %v4214 = vadd.f32 0.0, %v4213
      %4215 = vmatmul.f32.gmra.mxu0 %v4104
      %v4216 = vpop.f32.mrf.mxu0
      %v4217 = vadd.f32 0.0, %v4216
      %4218 = vmatmul.f32.gmra.mxu0 %v4107
      %v4219 = vpop.f32.mrf.mxu0
      %v4220 = vadd.f32 0.0, %v4219
      %4221 = vmatmul.f32.gmra.mxu0 %v4110
      %v4222 = vpop.f32.mrf.mxu0
      %v4223 = vadd.f32 0.0, %v4222
      %4224 = vmatmul.f32.gmra.mxu0 %v4113
      %v4225 = vpop.f32.mrf.mxu0
      %v4226 = vadd.f32 0.0, %v4225
      %4227 = vmatmul.f32.gmra.mxu0 %v4116
      %v4228 = vpop.f32.mrf.mxu0
      %v4229 = vadd.f32 0.0, %v4228
      %4230 = vmatmul.f32.gmra.mxu0 %v4119
      %v4231 = vpop.f32.mrf.mxu0
      %v4232 = vadd.f32 0.0, %v4231
      %4233 = vmatmul.f32.gmra.mxu0 %v4122
      %v4234 = vpop.f32.mrf.mxu0
      %v4235 = vadd.f32 0.0, %v4234
      %4236 = vmatmul.f32.gmra.mxu0 %v4125
      %v4237 = vpop.f32.mrf.mxu0
      %v4238 = vadd.f32 0.0, %v4237
      %4239 = vmatmul.f32.gmra.mxu0 %v4128
      %v4240 = vpop.f32.mrf.mxu0
      %v4241 = vadd.f32 0.0, %v4240
      %4242 = vmatmul.f32.gmra.mxu0 %v4131
      %v4243 = vpop.f32.mrf.mxu0
      %v4244 = vadd.f32 0.0, %v4243
      %4245 = vdwg.mxu0
      %v4246 = vadd.f32 %v3968, %v4151
      %v4247 = vadd.f32 %v3969, %v4154
      %v4248 = vadd.f32 %v3970, %v4157
      %v4249 = vadd.f32 %v3971, %v4160
      %v4250 = vadd.f32 %v3972, %v4163
      %v4251 = vadd.f32 %v3973, %v4166
      %v4252 = vadd.f32 %v3974, %v4169
      %v4253 = vadd.f32 %v3975, %v4172
      %v4254 = vadd.f32 %v3976, %v4175
      %v4255 = vadd.f32 %v3977, %v4178
      %v4256 = vadd.f32 %v3978, %v4181
      %v4257 = vadd.f32 %v3979, %v4184
      %v4258 = vadd.f32 %v3980, %v4187
      %v4259 = vadd.f32 %v3981, %v4190
      %v4260 = vadd.f32 %v3982, %v4193
      %v4261 = vadd.f32 %v3983, %v4196
      %v4262 = vadd.f32 %v3984, %v4199
      %v4263 = vadd.f32 %v3985, %v4202
      %v4264 = vadd.f32 %v3986, %v4205
      %v4265 = vadd.f32 %v3987, %v4208
      %v4266 = vadd.f32 %v3988, %v4211
      %v4267 = vadd.f32 %v3989, %v4214
      %v4268 = vadd.f32 %v3990, %v4217
      %v4269 = vadd.f32 %v3991, %v4220
      %v4270 = vadd.f32 %v3992, %v4223
      %v4271 = vadd.f32 %v3993, %v4226
      %v4272 = vadd.f32 %v3994, %v4229
      %v4273 = vadd.f32 %v3995, %v4232
      %v4274 = vadd.f32 %v3996, %v4235
      %v4275 = vadd.f32 %v3997, %v4238
      %v4276 = vadd.f32 %v3998, %v4241
      %v4277 = vadd.f32 %v3999, %v4244
      %v4278 = vld [vmem:[%s1251 + $0x7] sm:$0xff]
      %v4279 = vld [vmem:[%s1251 + $0xf] sm:$0xff]
      %v4280 = vld [vmem:[%s1251 + $0x27] sm:$0xff]
      %v4281 = vld [vmem:[%s1251 + $0x2f] sm:$0xff]
      %v4282 = vld [vmem:[%s1251 + $0x47] sm:$0xff]
      %v4283 = vld [vmem:[%s1251 + $0x4f] sm:$0xff]
      %v4284 = vld [vmem:[%s1251 + $0x67] sm:$0xff]
      %v4285 = vld [vmem:[%s1251 + $0x6f] sm:$0xff]
      %v4286 = vld [vmem:[%s1251 + $0x87] sm:$0xff]
      %v4287 = vld [vmem:[%s1251 + $0x8f] sm:$0xff]
      %v4288 = vld [vmem:[%s1251 + $0xa7] sm:$0xff]
      %v4289 = vld [vmem:[%s1251 + $0xaf] sm:$0xff]
      %v4290 = vld [vmem:[%s1251 + $0xc7] sm:$0xff]
      %v4291 = vld [vmem:[%s1251 + $0xcf] sm:$0xff]
      %v4292 = vld [vmem:[%s1251 + $0xe7] sm:$0xff]
      %v4293 = vld [vmem:[%s1251 + $0xef] sm:$0xff]
      %v4294 = vld [vmem:[%s1251 + $0x107] sm:$0xff]
      %v4295 = vld [vmem:[%s1251 + $0x10f] sm:$0xff]
      %v4296 = vld [vmem:[%s1251 + $0x127] sm:$0xff]
      %v4297 = vld [vmem:[%s1251 + $0x12f] sm:$0xff]
      %v4298 = vld [vmem:[%s1251 + $0x147] sm:$0xff]
      %v4299 = vld [vmem:[%s1251 + $0x14f] sm:$0xff]
      %v4300 = vld [vmem:[%s1251 + $0x167] sm:$0xff]
      %v4301 = vld [vmem:[%s1251 + $0x16f] sm:$0xff]
      %v4302 = vld [vmem:[%s1251 + $0x187] sm:$0xff]
      %v4303 = vld [vmem:[%s1251 + $0x18f] sm:$0xff]
      %v4304 = vld [vmem:[%s1251 + $0x1a7] sm:$0xff]
      %v4305 = vld [vmem:[%s1251 + $0x1af] sm:$0xff]
      %v4306 = vld [vmem:[%s1251 + $0x1c7] sm:$0xff]
      %v4307 = vld [vmem:[%s1251 + $0x1cf] sm:$0xff]
      %v4308 = vld [vmem:[%s1251 + $0x1e7] sm:$0xff]
      %v4309 = vld [vmem:[%s1251 + $0x1ef] sm:$0xff]
      %s4310 = scalar_lea.vmem %s3, 352
      %v4311 = vld [vmem:[%s4310] sm:$0xff]
      %v4312 = vld [vmem:[%s4310 + $0x8] sm:$0xff]
      %v4313 = vld [vmem:[%s4310 + $0x10] sm:$0xff]
      %v4314 = vld [vmem:[%s4310 + $0x18] sm:$0xff]
      %v4316 = vsel %vm1170, %v4278, 0
      %v4319 = vsel %vm1170, %v4279, 0
      %v4322 = vsel %vm1170, %v4280, 0
      %v4325 = vsel %vm1170, %v4281, 0
      %v4328 = vsel %vm1170, %v4282, 0
      %v4331 = vsel %vm1170, %v4283, 0
      %v4334 = vsel %vm1170, %v4284, 0
      %v4337 = vsel %vm1170, %v4285, 0
      %v4340 = vsel %vm1170, %v4286, 0
      %v4343 = vsel %vm1170, %v4287, 0
      %v4346 = vsel %vm1170, %v4288, 0
      %v4349 = vsel %vm1170, %v4289, 0
      %v4352 = vsel %vm1170, %v4290, 0
      %v4355 = vsel %vm1170, %v4291, 0
      %v4358 = vsel %vm1170, %v4292, 0
      %v4361 = vsel %vm1170, %v4293, 0
      %v4364 = vsel %vm1170, %v4294, 0
      %v4367 = vsel %vm1170, %v4295, 0
      %v4370 = vsel %vm1170, %v4296, 0
      %v4373 = vsel %vm1170, %v4297, 0
      %v4376 = vsel %vm1170, %v4298, 0
      %v4379 = vsel %vm1170, %v4299, 0
      %v4382 = vsel %vm1170, %v4300, 0
      %v4385 = vsel %vm1170, %v4301, 0
      %v4388 = vsel %vm1170, %v4302, 0
      %v4391 = vsel %vm1170, %v4303, 0
      %v4394 = vsel %vm1170, %v4304, 0
      %v4397 = vsel %vm1170, %v4305, 0
      %v4400 = vsel %vm1170, %v4306, 0
      %v4403 = vsel %vm1170, %v4307, 0
      %v4406 = vsel %vm1170, %v4308, 0
      %v4409 = vsel %vm1170, %v4309, 0
      %4411 = vmatpush.msra.mxu0 0.0
      %4412 = vmatpush.msra.mxu0 0.0
      %4413 = vmatpush.msra.mxu0 0.0
      %4414 = vmatpush.msra.mxu0 0.0
      %4415 = vmatpush.msra.mxu0 0.0
      %4416 = vmatpush.msra.mxu0 0.0
      %4417 = vmatpush.msra.mxu0 0.0
      %4418 = vmatpush.msra.mxu0 0.0
      %4419 = vmatpush.msra.mxu0 0.0
      %4420 = vmatpush.msra.mxu0 0.0
      %4421 = vmatpush.msra.mxu0 0.0
      %4422 = vmatpush.msra.mxu0 0.0
      %4423 = vmatpush.msra.mxu0 %v4314
      %4424 = vmatpush.msra.mxu0 %v4313
      %4425 = vmatpush.msra.mxu0 %v4312
      %4426 = vmatpush.msra.mxu0 %v4311
      %4427 = vmatmul.f32.gmra.mxu0 %v4316
      %v4428 = vpop.f32.mrf.mxu0
      %v4429 = vadd.f32 0.0, %v4428
      %4430 = vmatmul.f32.gmra.mxu0 %v4319
      %v4431 = vpop.f32.mrf.mxu0
      %v4432 = vadd.f32 0.0, %v4431
      %4433 = vmatmul.f32.gmra.mxu0 %v4322
      %v4434 = vpop.f32.mrf.mxu0
      %v4435 = vadd.f32 0.0, %v4434
      %4436 = vmatmul.f32.gmra.mxu0 %v4325
      %v4437 = vpop.f32.mrf.mxu0
      %v4438 = vadd.f32 0.0, %v4437
      %4439 = vmatmul.f32.gmra.mxu0 %v4328
      %v4440 = vpop.f32.mrf.mxu0
      %v4441 = vadd.f32 0.0, %v4440
      %4442 = vmatmul.f32.gmra.mxu0 %v4331
      %v4443 = vpop.f32.mrf.mxu0
      %v4444 = vadd.f32 0.0, %v4443
      %4445 = vmatmul.f32.gmra.mxu0 %v4334
      %v4446 = vpop.f32.mrf.mxu0
      %v4447 = vadd.f32 0.0, %v4446
      %4448 = vmatmul.f32.gmra.mxu0 %v4337
      %v4449 = vpop.f32.mrf.mxu0
      %v4450 = vadd.f32 0.0, %v4449
      %4451 = vmatmul.f32.gmra.mxu0 %v4340
      %v4452 = vpop.f32.mrf.mxu0
      %v4453 = vadd.f32 0.0, %v4452
      %4454 = vmatmul.f32.gmra.mxu0 %v4343
      %v4455 = vpop.f32.mrf.mxu0
      %v4456 = vadd.f32 0.0, %v4455
      %4457 = vmatmul.f32.gmra.mxu0 %v4346
      %v4458 = vpop.f32.mrf.mxu0
      %v4459 = vadd.f32 0.0, %v4458
      %4460 = vmatmul.f32.gmra.mxu0 %v4349
      %v4461 = vpop.f32.mrf.mxu0
      %v4462 = vadd.f32 0.0, %v4461
      %4463 = vmatmul.f32.gmra.mxu0 %v4352
      %v4464 = vpop.f32.mrf.mxu0
      %v4465 = vadd.f32 0.0, %v4464
      %4466 = vmatmul.f32.gmra.mxu0 %v4355
      %v4467 = vpop.f32.mrf.mxu0
      %v4468 = vadd.f32 0.0, %v4467
      %4469 = vmatmul.f32.gmra.mxu0 %v4358
      %v4470 = vpop.f32.mrf.mxu0
      %v4471 = vadd.f32 0.0, %v4470
      %4472 = vmatmul.f32.gmra.mxu0 %v4361
      %v4473 = vpop.f32.mrf.mxu0
      %v4474 = vadd.f32 0.0, %v4473
      %4475 = vmatmul.f32.gmra.mxu0 %v4364
      %v4476 = vpop.f32.mrf.mxu0
      %v4477 = vadd.f32 0.0, %v4476
      %4478 = vmatmul.f32.gmra.mxu0 %v4367
      %v4479 = vpop.f32.mrf.mxu0
      %v4480 = vadd.f32 0.0, %v4479
      %4481 = vmatmul.f32.gmra.mxu0 %v4370
      %v4482 = vpop.f32.mrf.mxu0
      %v4483 = vadd.f32 0.0, %v4482
      %4484 = vmatmul.f32.gmra.mxu0 %v4373
      %v4485 = vpop.f32.mrf.mxu0
      %v4486 = vadd.f32 0.0, %v4485
      %4487 = vmatmul.f32.gmra.mxu0 %v4376
      %v4488 = vpop.f32.mrf.mxu0
      %v4489 = vadd.f32 0.0, %v4488
      %4490 = vmatmul.f32.gmra.mxu0 %v4379
      %v4491 = vpop.f32.mrf.mxu0
      %v4492 = vadd.f32 0.0, %v4491
      %4493 = vmatmul.f32.gmra.mxu0 %v4382
      %v4494 = vpop.f32.mrf.mxu0
      %v4495 = vadd.f32 0.0, %v4494
      %4496 = vmatmul.f32.gmra.mxu0 %v4385
      %v4497 = vpop.f32.mrf.mxu0
      %v4498 = vadd.f32 0.0, %v4497
      %4499 = vmatmul.f32.gmra.mxu0 %v4388
      %v4500 = vpop.f32.mrf.mxu0
      %v4501 = vadd.f32 0.0, %v4500
      %4502 = vmatmul.f32.gmra.mxu0 %v4391
      %v4503 = vpop.f32.mrf.mxu0
      %v4504 = vadd.f32 0.0, %v4503
      %4505 = vmatmul.f32.gmra.mxu0 %v4394
      %v4506 = vpop.f32.mrf.mxu0
      %v4507 = vadd.f32 0.0, %v4506
      %4508 = vmatmul.f32.gmra.mxu0 %v4397
      %v4509 = vpop.f32.mrf.mxu0
      %v4510 = vadd.f32 0.0, %v4509
      %4511 = vmatmul.f32.gmra.mxu0 %v4400
      %v4512 = vpop.f32.mrf.mxu0
      %v4513 = vadd.f32 0.0, %v4512
      %4514 = vmatmul.f32.gmra.mxu0 %v4403
      %v4515 = vpop.f32.mrf.mxu0
      %v4516 = vadd.f32 0.0, %v4515
      %4517 = vmatmul.f32.gmra.mxu0 %v4406
      %v4518 = vpop.f32.mrf.mxu0
      %v4519 = vadd.f32 0.0, %v4518
      %4520 = vmatmul.f32.gmra.mxu0 %v4409
      %v4521 = vpop.f32.mrf.mxu0
      %v4522 = vadd.f32 0.0, %v4521
      %4523 = vdwg.mxu0
      %v4524 = vadd.f32 %v4246, %v4429
      %v4525 = vadd.f32 %v4247, %v4432
      %v4526 = vadd.f32 %v4248, %v4435
      %v4527 = vadd.f32 %v4249, %v4438
      %v4528 = vadd.f32 %v4250, %v4441
      %v4529 = vadd.f32 %v4251, %v4444
      %v4530 = vadd.f32 %v4252, %v4447
      %v4531 = vadd.f32 %v4253, %v4450
      %v4532 = vadd.f32 %v4254, %v4453
      %v4533 = vadd.f32 %v4255, %v4456
      %v4534 = vadd.f32 %v4256, %v4459
      %v4535 = vadd.f32 %v4257, %v4462
      %v4536 = vadd.f32 %v4258, %v4465
      %v4537 = vadd.f32 %v4259, %v4468
      %v4538 = vadd.f32 %v4260, %v4471
      %v4539 = vadd.f32 %v4261, %v4474
      %v4540 = vadd.f32 %v4262, %v4477
      %v4541 = vadd.f32 %v4263, %v4480
      %v4542 = vadd.f32 %v4264, %v4483
      %v4543 = vadd.f32 %v4265, %v4486
      %v4544 = vadd.f32 %v4266, %v4489
      %v4545 = vadd.f32 %v4267, %v4492
      %v4546 = vadd.f32 %v4268, %v4495
      %v4547 = vadd.f32 %v4269, %v4498
      %v4548 = vadd.f32 %v4270, %v4501
      %v4549 = vadd.f32 %v4271, %v4504
      %v4550 = vadd.f32 %v4272, %v4507
      %v4551 = vadd.f32 %v4273, %v4510
      %v4552 = vadd.f32 %v4274, %v4513
      %v4553 = vadd.f32 %v4275, %v4516
      %v4554 = vadd.f32 %v4276, %v4519
      %v4555 = vadd.f32 %v4277, %v4522
      %v4556 = vld [vmem:[%s1251 + $0x8] sm:$0xff]
      %v4557 = vld [vmem:[%s1251 + $0x10] sm:$0xff]
      %v4558 = vld [vmem:[%s1251 + $0x28] sm:$0xff]
      %v4559 = vld [vmem:[%s1251 + $0x30] sm:$0xff]
      %v4560 = vld [vmem:[%s1251 + $0x48] sm:$0xff]
      %v4561 = vld [vmem:[%s1251 + $0x50] sm:$0xff]
      %v4562 = vld [vmem:[%s1251 + $0x68] sm:$0xff]
      %v4563 = vld [vmem:[%s1251 + $0x70] sm:$0xff]
      %v4564 = vld [vmem:[%s1251 + $0x88] sm:$0xff]
      %v4565 = vld [vmem:[%s1251 + $0x90] sm:$0xff]
      %v4566 = vld [vmem:[%s1251 + $0xa8] sm:$0xff]
      %v4567 = vld [vmem:[%s1251 + $0xb0] sm:$0xff]
      %v4568 = vld [vmem:[%s1251 + $0xc8] sm:$0xff]
      %v4569 = vld [vmem:[%s1251 + $0xd0] sm:$0xff]
      %v4570 = vld [vmem:[%s1251 + $0xe8] sm:$0xff]
      %v4571 = vld [vmem:[%s1251 + $0xf0] sm:$0xff]
      %v4572 = vld [vmem:[%s1251 + $0x108] sm:$0xff]
      %v4573 = vld [vmem:[%s1251 + $0x110] sm:$0xff]
      %v4574 = vld [vmem:[%s1251 + $0x128] sm:$0xff]
      %v4575 = vld [vmem:[%s1251 + $0x130] sm:$0xff]
      %v4576 = vld [vmem:[%s1251 + $0x148] sm:$0xff]
      %v4577 = vld [vmem:[%s1251 + $0x150] sm:$0xff]
      %v4578 = vld [vmem:[%s1251 + $0x168] sm:$0xff]
      %v4579 = vld [vmem:[%s1251 + $0x170] sm:$0xff]
      %v4580 = vld [vmem:[%s1251 + $0x188] sm:$0xff]
      %v4581 = vld [vmem:[%s1251 + $0x190] sm:$0xff]
      %v4582 = vld [vmem:[%s1251 + $0x1a8] sm:$0xff]
      %v4583 = vld [vmem:[%s1251 + $0x1b0] sm:$0xff]
      %v4584 = vld [vmem:[%s1251 + $0x1c8] sm:$0xff]
      %v4585 = vld [vmem:[%s1251 + $0x1d0] sm:$0xff]
      %v4586 = vld [vmem:[%s1251 + $0x1e8] sm:$0xff]
      %v4587 = vld [vmem:[%s1251 + $0x1f0] sm:$0xff]
      %s4588 = scalar_lea.vmem %s3, 384
      %v4589 = vld [vmem:[%s4588] sm:$0xff]
      %v4590 = vld [vmem:[%s4588 + $0x8] sm:$0xff]
      %v4591 = vld [vmem:[%s4588 + $0x10] sm:$0xff]
      %v4592 = vld [vmem:[%s4588 + $0x18] sm:$0xff]
      %v4594 = vsel %vm1170, %v4556, 0
      %v4597 = vsel %vm1170, %v4557, 0
      %v4600 = vsel %vm1170, %v4558, 0
      %v4603 = vsel %vm1170, %v4559, 0
      %v4606 = vsel %vm1170, %v4560, 0
      %v4609 = vsel %vm1170, %v4561, 0
      %v4612 = vsel %vm1170, %v4562, 0
      %v4615 = vsel %vm1170, %v4563, 0
      %v4618 = vsel %vm1170, %v4564, 0
      %v4621 = vsel %vm1170, %v4565, 0
      %v4624 = vsel %vm1170, %v4566, 0
      %v4627 = vsel %vm1170, %v4567, 0
      %v4630 = vsel %vm1170, %v4568, 0
      %v4633 = vsel %vm1170, %v4569, 0
      %v4636 = vsel %vm1170, %v4570, 0
      %v4639 = vsel %vm1170, %v4571, 0
      %v4642 = vsel %vm1170, %v4572, 0
      %v4645 = vsel %vm1170, %v4573, 0
      %v4648 = vsel %vm1170, %v4574, 0
      %v4651 = vsel %vm1170, %v4575, 0
      %v4654 = vsel %vm1170, %v4576, 0
      %v4657 = vsel %vm1170, %v4577, 0
      %v4660 = vsel %vm1170, %v4578, 0
      %v4663 = vsel %vm1170, %v4579, 0
      %v4666 = vsel %vm1170, %v4580, 0
      %v4669 = vsel %vm1170, %v4581, 0
      %v4672 = vsel %vm1170, %v4582, 0
      %v4675 = vsel %vm1170, %v4583, 0
      %v4678 = vsel %vm1170, %v4584, 0
      %v4681 = vsel %vm1170, %v4585, 0
      %v4684 = vsel %vm1170, %v4586, 0
      %v4687 = vsel %vm1170, %v4587, 0
      %4689 = vmatpush.msra.mxu0 0.0
      %4690 = vmatpush.msra.mxu0 0.0
      %4691 = vmatpush.msra.mxu0 0.0
      %4692 = vmatpush.msra.mxu0 0.0
      %4693 = vmatpush.msra.mxu0 0.0
      %4694 = vmatpush.msra.mxu0 0.0
      %4695 = vmatpush.msra.mxu0 0.0
      %4696 = vmatpush.msra.mxu0 0.0
      %4697 = vmatpush.msra.mxu0 0.0
      %4698 = vmatpush.msra.mxu0 0.0
      %4699 = vmatpush.msra.mxu0 0.0
      %4700 = vmatpush.msra.mxu0 0.0
      %4701 = vmatpush.msra.mxu0 %v4592
      %4702 = vmatpush.msra.mxu0 %v4591
      %4703 = vmatpush.msra.mxu0 %v4590
      %4704 = vmatpush.msra.mxu0 %v4589
      %4705 = vmatmul.f32.gmra.mxu0 %v4594
      %v4706 = vpop.f32.mrf.mxu0
      %v4707 = vadd.f32 0.0, %v4706
      %4708 = vmatmul.f32.gmra.mxu0 %v4597
      %v4709 = vpop.f32.mrf.mxu0
      %v4710 = vadd.f32 0.0, %v4709
      %4711 = vmatmul.f32.gmra.mxu0 %v4600
      %v4712 = vpop.f32.mrf.mxu0
      %v4713 = vadd.f32 0.0, %v4712
      %4714 = vmatmul.f32.gmra.mxu0 %v4603
      %v4715 = vpop.f32.mrf.mxu0
      %v4716 = vadd.f32 0.0, %v4715
      %4717 = vmatmul.f32.gmra.mxu0 %v4606
      %v4718 = vpop.f32.mrf.mxu0
      %v4719 = vadd.f32 0.0, %v4718
      %4720 = vmatmul.f32.gmra.mxu0 %v4609
      %v4721 = vpop.f32.mrf.mxu0
      %v4722 = vadd.f32 0.0, %v4721
      %4723 = vmatmul.f32.gmra.mxu0 %v4612
      %v4724 = vpop.f32.mrf.mxu0
      %v4725 = vadd.f32 0.0, %v4724
      %4726 = vmatmul.f32.gmra.mxu0 %v4615
      %v4727 = vpop.f32.mrf.mxu0
      %v4728 = vadd.f32 0.0, %v4727
      %4729 = vmatmul.f32.gmra.mxu0 %v4618
      %v4730 = vpop.f32.mrf.mxu0
      %v4731 = vadd.f32 0.0, %v4730
      %4732 = vmatmul.f32.gmra.mxu0 %v4621
      %v4733 = vpop.f32.mrf.mxu0
      %v4734 = vadd.f32 0.0, %v4733
      %4735 = vmatmul.f32.gmra.mxu0 %v4624
      %v4736 = vpop.f32.mrf.mxu0
      %v4737 = vadd.f32 0.0, %v4736
      %4738 = vmatmul.f32.gmra.mxu0 %v4627
      %v4739 = vpop.f32.mrf.mxu0
      %v4740 = vadd.f32 0.0, %v4739
      %4741 = vmatmul.f32.gmra.mxu0 %v4630
      %v4742 = vpop.f32.mrf.mxu0
      %v4743 = vadd.f32 0.0, %v4742
      %4744 = vmatmul.f32.gmra.mxu0 %v4633
      %v4745 = vpop.f32.mrf.mxu0
      %v4746 = vadd.f32 0.0, %v4745
      %4747 = vmatmul.f32.gmra.mxu0 %v4636
      %v4748 = vpop.f32.mrf.mxu0
      %v4749 = vadd.f32 0.0, %v4748
      %4750 = vmatmul.f32.gmra.mxu0 %v4639
      %v4751 = vpop.f32.mrf.mxu0
      %v4752 = vadd.f32 0.0, %v4751
      %4753 = vmatmul.f32.gmra.mxu0 %v4642
      %v4754 = vpop.f32.mrf.mxu0
      %v4755 = vadd.f32 0.0, %v4754
      %4756 = vmatmul.f32.gmra.mxu0 %v4645
      %v4757 = vpop.f32.mrf.mxu0
      %v4758 = vadd.f32 0.0, %v4757
      %4759 = vmatmul.f32.gmra.mxu0 %v4648
      %v4760 = vpop.f32.mrf.mxu0
      %v4761 = vadd.f32 0.0, %v4760
      %4762 = vmatmul.f32.gmra.mxu0 %v4651
      %v4763 = vpop.f32.mrf.mxu0
      %v4764 = vadd.f32 0.0, %v4763
      %4765 = vmatmul.f32.gmra.mxu0 %v4654
      %v4766 = vpop.f32.mrf.mxu0
      %v4767 = vadd.f32 0.0, %v4766
      %4768 = vmatmul.f32.gmra.mxu0 %v4657
      %v4769 = vpop.f32.mrf.mxu0
      %v4770 = vadd.f32 0.0, %v4769
      %4771 = vmatmul.f32.gmra.mxu0 %v4660
      %v4772 = vpop.f32.mrf.mxu0
      %v4773 = vadd.f32 0.0, %v4772
      %4774 = vmatmul.f32.gmra.mxu0 %v4663
      %v4775 = vpop.f32.mrf.mxu0
      %v4776 = vadd.f32 0.0, %v4775
      %4777 = vmatmul.f32.gmra.mxu0 %v4666
      %v4778 = vpop.f32.mrf.mxu0
      %v4779 = vadd.f32 0.0, %v4778
      %4780 = vmatmul.f32.gmra.mxu0 %v4669
      %v4781 = vpop.f32.mrf.mxu0
      %v4782 = vadd.f32 0.0, %v4781
      %4783 = vmatmul.f32.gmra.mxu0 %v4672
      %v4784 = vpop.f32.mrf.mxu0
      %v4785 = vadd.f32 0.0, %v4784
      %4786 = vmatmul.f32.gmra.mxu0 %v4675
      %v4787 = vpop.f32.mrf.mxu0
      %v4788 = vadd.f32 0.0, %v4787
      %4789 = vmatmul.f32.gmra.mxu0 %v4678
      %v4790 = vpop.f32.mrf.mxu0
      %v4791 = vadd.f32 0.0, %v4790
      %4792 = vmatmul.f32.gmra.mxu0 %v4681
      %v4793 = vpop.f32.mrf.mxu0
      %v4794 = vadd.f32 0.0, %v4793
      %4795 = vmatmul.f32.gmra.mxu0 %v4684
      %v4796 = vpop.f32.mrf.mxu0
      %v4797 = vadd.f32 0.0, %v4796
      %4798 = vmatmul.f32.gmra.mxu0 %v4687
      %v4799 = vpop.f32.mrf.mxu0
      %v4800 = vadd.f32 0.0, %v4799
      %4801 = vdwg.mxu0
      %v4802 = vadd.f32 %v4524, %v4707
      %v4803 = vadd.f32 %v4525, %v4710
      %v4804 = vadd.f32 %v4526, %v4713
      %v4805 = vadd.f32 %v4527, %v4716
      %v4806 = vadd.f32 %v4528, %v4719
      %v4807 = vadd.f32 %v4529, %v4722
      %v4808 = vadd.f32 %v4530, %v4725
      %v4809 = vadd.f32 %v4531, %v4728
      %v4810 = vadd.f32 %v4532, %v4731
      %v4811 = vadd.f32 %v4533, %v4734
      %v4812 = vadd.f32 %v4534, %v4737
      %v4813 = vadd.f32 %v4535, %v4740
      %v4814 = vadd.f32 %v4536, %v4743
      %v4815 = vadd.f32 %v4537, %v4746
      %v4816 = vadd.f32 %v4538, %v4749
      %v4817 = vadd.f32 %v4539, %v4752
      %v4818 = vadd.f32 %v4540, %v4755
      %v4819 = vadd.f32 %v4541, %v4758
      %v4820 = vadd.f32 %v4542, %v4761
      %v4821 = vadd.f32 %v4543, %v4764
      %v4822 = vadd.f32 %v4544, %v4767
      %v4823 = vadd.f32 %v4545, %v4770
      %v4824 = vadd.f32 %v4546, %v4773
      %v4825 = vadd.f32 %v4547, %v4776
      %v4826 = vadd.f32 %v4548, %v4779
      %v4827 = vadd.f32 %v4549, %v4782
      %v4828 = vadd.f32 %v4550, %v4785
      %v4829 = vadd.f32 %v4551, %v4788
      %v4830 = vadd.f32 %v4552, %v4791
      %v4831 = vadd.f32 %v4553, %v4794
      %v4832 = vadd.f32 %v4554, %v4797
      %v4833 = vadd.f32 %v4555, %v4800
      %v4834 = vld [vmem:[%s1251 + $0x9] sm:$0xff]
      %v4835 = vld [vmem:[%s1251 + $0x11] sm:$0xff]
      %v4836 = vld [vmem:[%s1251 + $0x29] sm:$0xff]
      %v4837 = vld [vmem:[%s1251 + $0x31] sm:$0xff]
      %v4838 = vld [vmem:[%s1251 + $0x49] sm:$0xff]
      %v4839 = vld [vmem:[%s1251 + $0x51] sm:$0xff]
      %v4840 = vld [vmem:[%s1251 + $0x69] sm:$0xff]
      %v4841 = vld [vmem:[%s1251 + $0x71] sm:$0xff]
      %v4842 = vld [vmem:[%s1251 + $0x89] sm:$0xff]
      %v4843 = vld [vmem:[%s1251 + $0x91] sm:$0xff]
      %v4844 = vld [vmem:[%s1251 + $0xa9] sm:$0xff]
      %v4845 = vld [vmem:[%s1251 + $0xb1] sm:$0xff]
      %v4846 = vld [vmem:[%s1251 + $0xc9] sm:$0xff]
      %v4847 = vld [vmem:[%s1251 + $0xd1] sm:$0xff]
      %v4848 = vld [vmem:[%s1251 + $0xe9] sm:$0xff]
      %v4849 = vld [vmem:[%s1251 + $0xf1] sm:$0xff]
      %v4850 = vld [vmem:[%s1251 + $0x109] sm:$0xff]
      %v4851 = vld [vmem:[%s1251 + $0x111] sm:$0xff]
      %v4852 = vld [vmem:[%s1251 + $0x129] sm:$0xff]
      %v4853 = vld [vmem:[%s1251 + $0x131] sm:$0xff]
      %v4854 = vld [vmem:[%s1251 + $0x149] sm:$0xff]
      %v4855 = vld [vmem:[%s1251 + $0x151] sm:$0xff]
      %v4856 = vld [vmem:[%s1251 + $0x169] sm:$0xff]
      %v4857 = vld [vmem:[%s1251 + $0x171] sm:$0xff]
      %v4858 = vld [vmem:[%s1251 + $0x189] sm:$0xff]
      %v4859 = vld [vmem:[%s1251 + $0x191] sm:$0xff]
      %v4860 = vld [vmem:[%s1251 + $0x1a9] sm:$0xff]
      %v4861 = vld [vmem:[%s1251 + $0x1b1] sm:$0xff]
      %v4862 = vld [vmem:[%s1251 + $0x1c9] sm:$0xff]
      %v4863 = vld [vmem:[%s1251 + $0x1d1] sm:$0xff]
      %v4864 = vld [vmem:[%s1251 + $0x1e9] sm:$0xff]
      %v4865 = vld [vmem:[%s1251 + $0x1f1] sm:$0xff]
      %s4866 = scalar_lea.vmem %s3, 416
      %v4867 = vld [vmem:[%s4866] sm:$0xff]
      %v4868 = vld [vmem:[%s4866 + $0x8] sm:$0xff]
      %v4869 = vld [vmem:[%s4866 + $0x10] sm:$0xff]
      %v4870 = vld [vmem:[%s4866 + $0x18] sm:$0xff]
      %v4872 = vsel %vm1170, %v4834, 0
      %v4875 = vsel %vm1170, %v4835, 0
      %v4878 = vsel %vm1170, %v4836, 0
      %v4881 = vsel %vm1170, %v4837, 0
      %v4884 = vsel %vm1170, %v4838, 0
      %v4887 = vsel %vm1170, %v4839, 0
      %v4890 = vsel %vm1170, %v4840, 0
      %v4893 = vsel %vm1170, %v4841, 0
      %v4896 = vsel %vm1170, %v4842, 0
      %v4899 = vsel %vm1170, %v4843, 0
      %v4902 = vsel %vm1170, %v4844, 0
      %v4905 = vsel %vm1170, %v4845, 0
      %v4908 = vsel %vm1170, %v4846, 0
      %v4911 = vsel %vm1170, %v4847, 0
      %v4914 = vsel %vm1170, %v4848, 0
      %v4917 = vsel %vm1170, %v4849, 0
      %v4920 = vsel %vm1170, %v4850, 0
      %v4923 = vsel %vm1170, %v4851, 0
      %v4926 = vsel %vm1170, %v4852, 0
      %v4929 = vsel %vm1170, %v4853, 0
      %v4932 = vsel %vm1170, %v4854, 0
      %v4935 = vsel %vm1170, %v4855, 0
      %v4938 = vsel %vm1170, %v4856, 0
      %v4941 = vsel %vm1170, %v4857, 0
      %v4944 = vsel %vm1170, %v4858, 0
      %v4947 = vsel %vm1170, %v4859, 0
      %v4950 = vsel %vm1170, %v4860, 0
      %v4953 = vsel %vm1170, %v4861, 0
      %v4956 = vsel %vm1170, %v4862, 0
      %v4959 = vsel %vm1170, %v4863, 0
      %v4962 = vsel %vm1170, %v4864, 0
      %v4965 = vsel %vm1170, %v4865, 0
      %4967 = vmatpush.msra.mxu0 0.0
      %4968 = vmatpush.msra.mxu0 0.0
      %4969 = vmatpush.msra.mxu0 0.0
      %4970 = vmatpush.msra.mxu0 0.0
      %4971 = vmatpush.msra.mxu0 0.0
      %4972 = vmatpush.msra.mxu0 0.0
      %4973 = vmatpush.msra.mxu0 0.0
      %4974 = vmatpush.msra.mxu0 0.0
      %4975 = vmatpush.msra.mxu0 0.0
      %4976 = vmatpush.msra.mxu0 0.0
      %4977 = vmatpush.msra.mxu0 0.0
      %4978 = vmatpush.msra.mxu0 0.0
      %4979 = vmatpush.msra.mxu0 %v4870
      %4980 = vmatpush.msra.mxu0 %v4869
      %4981 = vmatpush.msra.mxu0 %v4868
      %4982 = vmatpush.msra.mxu0 %v4867
      %4983 = vmatmul.f32.gmra.mxu0 %v4872
      %v4984 = vpop.f32.mrf.mxu0
      %v4985 = vadd.f32 0.0, %v4984
      %4986 = vmatmul.f32.gmra.mxu0 %v4875
      %v4987 = vpop.f32.mrf.mxu0
      %v4988 = vadd.f32 0.0, %v4987
      %4989 = vmatmul.f32.gmra.mxu0 %v4878
      %v4990 = vpop.f32.mrf.mxu0
      %v4991 = vadd.f32 0.0, %v4990
      %4992 = vmatmul.f32.gmra.mxu0 %v4881
      %v4993 = vpop.f32.mrf.mxu0
      %v4994 = vadd.f32 0.0, %v4993
      %4995 = vmatmul.f32.gmra.mxu0 %v4884
      %v4996 = vpop.f32.mrf.mxu0
      %v4997 = vadd.f32 0.0, %v4996
      %4998 = vmatmul.f32.gmra.mxu0 %v4887
      %v4999 = vpop.f32.mrf.mxu0
      %v5000 = vadd.f32 0.0, %v4999
      %5001 = vmatmul.f32.gmra.mxu0 %v4890
      %v5002 = vpop.f32.mrf.mxu0
      %v5003 = vadd.f32 0.0, %v5002
      %5004 = vmatmul.f32.gmra.mxu0 %v4893
      %v5005 = vpop.f32.mrf.mxu0
      %v5006 = vadd.f32 0.0, %v5005
      %5007 = vmatmul.f32.gmra.mxu0 %v4896
      %v5008 = vpop.f32.mrf.mxu0
      %v5009 = vadd.f32 0.0, %v5008
      %5010 = vmatmul.f32.gmra.mxu0 %v4899
      %v5011 = vpop.f32.mrf.mxu0
      %v5012 = vadd.f32 0.0, %v5011
      %5013 = vmatmul.f32.gmra.mxu0 %v4902
      %v5014 = vpop.f32.mrf.mxu0
      %v5015 = vadd.f32 0.0, %v5014
      %5016 = vmatmul.f32.gmra.mxu0 %v4905
      %v5017 = vpop.f32.mrf.mxu0
      %v5018 = vadd.f32 0.0, %v5017
      %5019 = vmatmul.f32.gmra.mxu0 %v4908
      %v5020 = vpop.f32.mrf.mxu0
      %v5021 = vadd.f32 0.0, %v5020
      %5022 = vmatmul.f32.gmra.mxu0 %v4911
      %v5023 = vpop.f32.mrf.mxu0
      %v5024 = vadd.f32 0.0, %v5023
      %5025 = vmatmul.f32.gmra.mxu0 %v4914
      %v5026 = vpop.f32.mrf.mxu0
      %v5027 = vadd.f32 0.0, %v5026
      %5028 = vmatmul.f32.gmra.mxu0 %v4917
      %v5029 = vpop.f32.mrf.mxu0
      %v5030 = vadd.f32 0.0, %v5029
      %5031 = vmatmul.f32.gmra.mxu0 %v4920
      %v5032 = vpop.f32.mrf.mxu0
      %v5033 = vadd.f32 0.0, %v5032
      %5034 = vmatmul.f32.gmra.mxu0 %v4923
      %v5035 = vpop.f32.mrf.mxu0
      %v5036 = vadd.f32 0.0, %v5035
      %5037 = vmatmul.f32.gmra.mxu0 %v4926
      %v5038 = vpop.f32.mrf.mxu0
      %v5039 = vadd.f32 0.0, %v5038
      %5040 = vmatmul.f32.gmra.mxu0 %v4929
      %v5041 = vpop.f32.mrf.mxu0
      %v5042 = vadd.f32 0.0, %v5041
      %5043 = vmatmul.f32.gmra.mxu0 %v4932
      %v5044 = vpop.f32.mrf.mxu0
      %v5045 = vadd.f32 0.0, %v5044
      %5046 = vmatmul.f32.gmra.mxu0 %v4935
      %v5047 = vpop.f32.mrf.mxu0
      %v5048 = vadd.f32 0.0, %v5047
      %5049 = vmatmul.f32.gmra.mxu0 %v4938
      %v5050 = vpop.f32.mrf.mxu0
      %v5051 = vadd.f32 0.0, %v5050
      %5052 = vmatmul.f32.gmra.mxu0 %v4941
      %v5053 = vpop.f32.mrf.mxu0
      %v5054 = vadd.f32 0.0, %v5053
      %5055 = vmatmul.f32.gmra.mxu0 %v4944
      %v5056 = vpop.f32.mrf.mxu0
      %v5057 = vadd.f32 0.0, %v5056
      %5058 = vmatmul.f32.gmra.mxu0 %v4947
      %v5059 = vpop.f32.mrf.mxu0
      %v5060 = vadd.f32 0.0, %v5059
      %5061 = vmatmul.f32.gmra.mxu0 %v4950
      %v5062 = vpop.f32.mrf.mxu0
      %v5063 = vadd.f32 0.0, %v5062
      %5064 = vmatmul.f32.gmra.mxu0 %v4953
      %v5065 = vpop.f32.mrf.mxu0
      %v5066 = vadd.f32 0.0, %v5065
      %5067 = vmatmul.f32.gmra.mxu0 %v4956
      %v5068 = vpop.f32.mrf.mxu0
      %v5069 = vadd.f32 0.0, %v5068
      %5070 = vmatmul.f32.gmra.mxu0 %v4959
      %v5071 = vpop.f32.mrf.mxu0
      %v5072 = vadd.f32 0.0, %v5071
      %5073 = vmatmul.f32.gmra.mxu0 %v4962
      %v5074 = vpop.f32.mrf.mxu0
      %v5075 = vadd.f32 0.0, %v5074
      %5076 = vmatmul.f32.gmra.mxu0 %v4965
      %v5077 = vpop.f32.mrf.mxu0
      %v5078 = vadd.f32 0.0, %v5077
      %5079 = vdwg.mxu0
      %v5080 = vadd.f32 %v4802, %v4985
      %v5081 = vadd.f32 %v4803, %v4988
      %v5082 = vadd.f32 %v4804, %v4991
      %v5083 = vadd.f32 %v4805, %v4994
      %v5084 = vadd.f32 %v4806, %v4997
      %v5085 = vadd.f32 %v4807, %v5000
      %v5086 = vadd.f32 %v4808, %v5003
      %v5087 = vadd.f32 %v4809, %v5006
      %v5088 = vadd.f32 %v4810, %v5009
      %v5089 = vadd.f32 %v4811, %v5012
      %v5090 = vadd.f32 %v4812, %v5015
      %v5091 = vadd.f32 %v4813, %v5018
      %v5092 = vadd.f32 %v4814, %v5021
      %v5093 = vadd.f32 %v4815, %v5024
      %v5094 = vadd.f32 %v4816, %v5027
      %v5095 = vadd.f32 %v4817, %v5030
      %v5096 = vadd.f32 %v4818, %v5033
      %v5097 = vadd.f32 %v4819, %v5036
      %v5098 = vadd.f32 %v4820, %v5039
      %v5099 = vadd.f32 %v4821, %v5042
      %v5100 = vadd.f32 %v4822, %v5045
      %v5101 = vadd.f32 %v4823, %v5048
      %v5102 = vadd.f32 %v4824, %v5051
      %v5103 = vadd.f32 %v4825, %v5054
      %v5104 = vadd.f32 %v4826, %v5057
      %v5105 = vadd.f32 %v4827, %v5060
      %v5106 = vadd.f32 %v4828, %v5063
      %v5107 = vadd.f32 %v4829, %v5066
      %v5108 = vadd.f32 %v4830, %v5069
      %v5109 = vadd.f32 %v4831, %v5072
      %v5110 = vadd.f32 %v4832, %v5075
      %v5111 = vadd.f32 %v4833, %v5078
      %v5112 = vld [vmem:[%s1251 + $0xa] sm:$0xff]
      %v5113 = vld [vmem:[%s1251 + $0x12] sm:$0xff]
      %v5114 = vld [vmem:[%s1251 + $0x2a] sm:$0xff]
      %v5115 = vld [vmem:[%s1251 + $0x32] sm:$0xff]
      %v5116 = vld [vmem:[%s1251 + $0x4a] sm:$0xff]
      %v5117 = vld [vmem:[%s1251 + $0x52] sm:$0xff]
      %v5118 = vld [vmem:[%s1251 + $0x6a] sm:$0xff]
      %v5119 = vld [vmem:[%s1251 + $0x72] sm:$0xff]
      %v5120 = vld [vmem:[%s1251 + $0x8a] sm:$0xff]
      %v5121 = vld [vmem:[%s1251 + $0x92] sm:$0xff]
      %v5122 = vld [vmem:[%s1251 + $0xaa] sm:$0xff]
      %v5123 = vld [vmem:[%s1251 + $0xb2] sm:$0xff]
      %v5124 = vld [vmem:[%s1251 + $0xca] sm:$0xff]
      %v5125 = vld [vmem:[%s1251 + $0xd2] sm:$0xff]
      %v5126 = vld [vmem:[%s1251 + $0xea] sm:$0xff]
      %v5127 = vld [vmem:[%s1251 + $0xf2] sm:$0xff]
      %v5128 = vld [vmem:[%s1251 + $0x10a] sm:$0xff]
      %v5129 = vld [vmem:[%s1251 + $0x112] sm:$0xff]
      %v5130 = vld [vmem:[%s1251 + $0x12a] sm:$0xff]
      %v5131 = vld [vmem:[%s1251 + $0x132] sm:$0xff]
      %v5132 = vld [vmem:[%s1251 + $0x14a] sm:$0xff]
      %v5133 = vld [vmem:[%s1251 + $0x152] sm:$0xff]
      %v5134 = vld [vmem:[%s1251 + $0x16a] sm:$0xff]
      %v5135 = vld [vmem:[%s1251 + $0x172] sm:$0xff]
      %v5136 = vld [vmem:[%s1251 + $0x18a] sm:$0xff]
      %v5137 = vld [vmem:[%s1251 + $0x192] sm:$0xff]
      %v5138 = vld [vmem:[%s1251 + $0x1aa] sm:$0xff]
      %v5139 = vld [vmem:[%s1251 + $0x1b2] sm:$0xff]
      %v5140 = vld [vmem:[%s1251 + $0x1ca] sm:$0xff]
      %v5141 = vld [vmem:[%s1251 + $0x1d2] sm:$0xff]
      %v5142 = vld [vmem:[%s1251 + $0x1ea] sm:$0xff]
      %v5143 = vld [vmem:[%s1251 + $0x1f2] sm:$0xff]
      %s5144 = scalar_lea.vmem %s3, 448
      %v5145 = vld [vmem:[%s5144] sm:$0xff]
      %v5146 = vld [vmem:[%s5144 + $0x8] sm:$0xff]
      %v5147 = vld [vmem:[%s5144 + $0x10] sm:$0xff]
      %v5148 = vld [vmem:[%s5144 + $0x18] sm:$0xff]
      %v5150 = vsel %vm1170, %v5112, 0
      %v5153 = vsel %vm1170, %v5113, 0
      %v5156 = vsel %vm1170, %v5114, 0
      %v5159 = vsel %vm1170, %v5115, 0
      %v5162 = vsel %vm1170, %v5116, 0
      %v5165 = vsel %vm1170, %v5117, 0
      %v5168 = vsel %vm1170, %v5118, 0
      %v5171 = vsel %vm1170, %v5119, 0
      %v5174 = vsel %vm1170, %v5120, 0
      %v5177 = vsel %vm1170, %v5121, 0
      %v5180 = vsel %vm1170, %v5122, 0
      %v5183 = vsel %vm1170, %v5123, 0
      %v5186 = vsel %vm1170, %v5124, 0
      %v5189 = vsel %vm1170, %v5125, 0
      %v5192 = vsel %vm1170, %v5126, 0
      %v5195 = vsel %vm1170, %v5127, 0
      %v5198 = vsel %vm1170, %v5128, 0
      %v5201 = vsel %vm1170, %v5129, 0
      %v5204 = vsel %vm1170, %v5130, 0
      %v5207 = vsel %vm1170, %v5131, 0
      %v5210 = vsel %vm1170, %v5132, 0
      %v5213 = vsel %vm1170, %v5133, 0
      %v5216 = vsel %vm1170, %v5134, 0
      %v5219 = vsel %vm1170, %v5135, 0
      %v5222 = vsel %vm1170, %v5136, 0
      %v5225 = vsel %vm1170, %v5137, 0
      %v5228 = vsel %vm1170, %v5138, 0
      %v5231 = vsel %vm1170, %v5139, 0
      %v5234 = vsel %vm1170, %v5140, 0
      %v5237 = vsel %vm1170, %v5141, 0
      %v5240 = vsel %vm1170, %v5142, 0
      %v5243 = vsel %vm1170, %v5143, 0
      %5245 = vmatpush.msra.mxu0 0.0
      %5246 = vmatpush.msra.mxu0 0.0
      %5247 = vmatpush.msra.mxu0 0.0
      %5248 = vmatpush.msra.mxu0 0.0
      %5249 = vmatpush.msra.mxu0 0.0
      %5250 = vmatpush.msra.mxu0 0.0
      %5251 = vmatpush.msra.mxu0 0.0
      %5252 = vmatpush.msra.mxu0 0.0
      %5253 = vmatpush.msra.mxu0 0.0
      %5254 = vmatpush.msra.mxu0 0.0
      %5255 = vmatpush.msra.mxu0 0.0
      %5256 = vmatpush.msra.mxu0 0.0
      %5257 = vmatpush.msra.mxu0 %v5148
      %5258 = vmatpush.msra.mxu0 %v5147
      %5259 = vmatpush.msra.mxu0 %v5146
      %5260 = vmatpush.msra.mxu0 %v5145
      %5261 = vmatmul.f32.gmra.mxu0 %v5150
      %v5262 = vpop.f32.mrf.mxu0
      %v5263 = vadd.f32 0.0, %v5262
      %5264 = vmatmul.f32.gmra.mxu0 %v5153
      %v5265 = vpop.f32.mrf.mxu0
      %v5266 = vadd.f32 0.0, %v5265
      %5267 = vmatmul.f32.gmra.mxu0 %v5156
      %v5268 = vpop.f32.mrf.mxu0
      %v5269 = vadd.f32 0.0, %v5268
      %5270 = vmatmul.f32.gmra.mxu0 %v5159
      %v5271 = vpop.f32.mrf.mxu0
      %v5272 = vadd.f32 0.0, %v5271
      %5273 = vmatmul.f32.gmra.mxu0 %v5162
      %v5274 = vpop.f32.mrf.mxu0
      %v5275 = vadd.f32 0.0, %v5274
      %5276 = vmatmul.f32.gmra.mxu0 %v5165
      %v5277 = vpop.f32.mrf.mxu0
      %v5278 = vadd.f32 0.0, %v5277
      %5279 = vmatmul.f32.gmra.mxu0 %v5168
      %v5280 = vpop.f32.mrf.mxu0
      %v5281 = vadd.f32 0.0, %v5280
      %5282 = vmatmul.f32.gmra.mxu0 %v5171
      %v5283 = vpop.f32.mrf.mxu0
      %v5284 = vadd.f32 0.0, %v5283
      %5285 = vmatmul.f32.gmra.mxu0 %v5174
      %v5286 = vpop.f32.mrf.mxu0
      %v5287 = vadd.f32 0.0, %v5286
      %5288 = vmatmul.f32.gmra.mxu0 %v5177
      %v5289 = vpop.f32.mrf.mxu0
      %v5290 = vadd.f32 0.0, %v5289
      %5291 = vmatmul.f32.gmra.mxu0 %v5180
      %v5292 = vpop.f32.mrf.mxu0
      %v5293 = vadd.f32 0.0, %v5292
      %5294 = vmatmul.f32.gmra.mxu0 %v5183
      %v5295 = vpop.f32.mrf.mxu0
      %v5296 = vadd.f32 0.0, %v5295
      %5297 = vmatmul.f32.gmra.mxu0 %v5186
      %v5298 = vpop.f32.mrf.mxu0
      %v5299 = vadd.f32 0.0, %v5298
      %5300 = vmatmul.f32.gmra.mxu0 %v5189
      %v5301 = vpop.f32.mrf.mxu0
      %v5302 = vadd.f32 0.0, %v5301
      %5303 = vmatmul.f32.gmra.mxu0 %v5192
      %v5304 = vpop.f32.mrf.mxu0
      %v5305 = vadd.f32 0.0, %v5304
      %5306 = vmatmul.f32.gmra.mxu0 %v5195
      %v5307 = vpop.f32.mrf.mxu0
      %v5308 = vadd.f32 0.0, %v5307
      %5309 = vmatmul.f32.gmra.mxu0 %v5198
      %v5310 = vpop.f32.mrf.mxu0
      %v5311 = vadd.f32 0.0, %v5310
      %5312 = vmatmul.f32.gmra.mxu0 %v5201
      %v5313 = vpop.f32.mrf.mxu0
      %v5314 = vadd.f32 0.0, %v5313
      %5315 = vmatmul.f32.gmra.mxu0 %v5204
      %v5316 = vpop.f32.mrf.mxu0
      %v5317 = vadd.f32 0.0, %v5316
      %5318 = vmatmul.f32.gmra.mxu0 %v5207
      %v5319 = vpop.f32.mrf.mxu0
      %v5320 = vadd.f32 0.0, %v5319
      %5321 = vmatmul.f32.gmra.mxu0 %v5210
      %v5322 = vpop.f32.mrf.mxu0
      %v5323 = vadd.f32 0.0, %v5322
      %5324 = vmatmul.f32.gmra.mxu0 %v5213
      %v5325 = vpop.f32.mrf.mxu0
      %v5326 = vadd.f32 0.0, %v5325
      %5327 = vmatmul.f32.gmra.mxu0 %v5216
      %v5328 = vpop.f32.mrf.mxu0
      %v5329 = vadd.f32 0.0, %v5328
      %5330 = vmatmul.f32.gmra.mxu0 %v5219
      %v5331 = vpop.f32.mrf.mxu0
      %v5332 = vadd.f32 0.0, %v5331
      %5333 = vmatmul.f32.gmra.mxu0 %v5222
      %v5334 = vpop.f32.mrf.mxu0
      %v5335 = vadd.f32 0.0, %v5334
      %5336 = vmatmul.f32.gmra.mxu0 %v5225
      %v5337 = vpop.f32.mrf.mxu0
      %v5338 = vadd.f32 0.0, %v5337
      %5339 = vmatmul.f32.gmra.mxu0 %v5228
      %v5340 = vpop.f32.mrf.mxu0
      %v5341 = vadd.f32 0.0, %v5340
      %5342 = vmatmul.f32.gmra.mxu0 %v5231
      %v5343 = vpop.f32.mrf.mxu0
      %v5344 = vadd.f32 0.0, %v5343
      %5345 = vmatmul.f32.gmra.mxu0 %v5234
      %v5346 = vpop.f32.mrf.mxu0
      %v5347 = vadd.f32 0.0, %v5346
      %5348 = vmatmul.f32.gmra.mxu0 %v5237
      %v5349 = vpop.f32.mrf.mxu0
      %v5350 = vadd.f32 0.0, %v5349
      %5351 = vmatmul.f32.gmra.mxu0 %v5240
      %v5352 = vpop.f32.mrf.mxu0
      %v5353 = vadd.f32 0.0, %v5352
      %5354 = vmatmul.f32.gmra.mxu0 %v5243
      %v5355 = vpop.f32.mrf.mxu0
      %v5356 = vadd.f32 0.0, %v5355
      %5357 = vdwg.mxu0
      %v5358 = vadd.f32 %v5080, %v5263
      %v5359 = vadd.f32 %v5081, %v5266
      %v5360 = vadd.f32 %v5082, %v5269
      %v5361 = vadd.f32 %v5083, %v5272
      %v5362 = vadd.f32 %v5084, %v5275
      %v5363 = vadd.f32 %v5085, %v5278
      %v5364 = vadd.f32 %v5086, %v5281
      %v5365 = vadd.f32 %v5087, %v5284
      %v5366 = vadd.f32 %v5088, %v5287
      %v5367 = vadd.f32 %v5089, %v5290
      %v5368 = vadd.f32 %v5090, %v5293
      %v5369 = vadd.f32 %v5091, %v5296
      %v5370 = vadd.f32 %v5092, %v5299
      %v5371 = vadd.f32 %v5093, %v5302
      %v5372 = vadd.f32 %v5094, %v5305
      %v5373 = vadd.f32 %v5095, %v5308
      %v5374 = vadd.f32 %v5096, %v5311
      %v5375 = vadd.f32 %v5097, %v5314
      %v5376 = vadd.f32 %v5098, %v5317
      %v5377 = vadd.f32 %v5099, %v5320
      %v5378 = vadd.f32 %v5100, %v5323
      %v5379 = vadd.f32 %v5101, %v5326
      %v5380 = vadd.f32 %v5102, %v5329
      %v5381 = vadd.f32 %v5103, %v5332
      %v5382 = vadd.f32 %v5104, %v5335
      %v5383 = vadd.f32 %v5105, %v5338
      %v5384 = vadd.f32 %v5106, %v5341
      %v5385 = vadd.f32 %v5107, %v5344
      %v5386 = vadd.f32 %v5108, %v5347
      %v5387 = vadd.f32 %v5109, %v5350
      %v5388 = vadd.f32 %v5110, %v5353
      %v5389 = vadd.f32 %v5111, %v5356
      %s5390 = scalar_lea.vmem [#allocation2], 96
      %v5391 = vld [vmem:[%s5390 + $0x6] sm:$0xff]
      %v5392 = vld [vmem:[%s5390 + $0xe] sm:$0xff]
      %v5393 = vld [vmem:[%s5390 + $0x26] sm:$0xff]
      %v5394 = vld [vmem:[%s5390 + $0x2e] sm:$0xff]
      %v5395 = vld [vmem:[%s5390 + $0x46] sm:$0xff]
      %v5396 = vld [vmem:[%s5390 + $0x4e] sm:$0xff]
      %v5397 = vld [vmem:[%s5390 + $0x66] sm:$0xff]
      %v5398 = vld [vmem:[%s5390 + $0x6e] sm:$0xff]
      %v5399 = vld [vmem:[%s5390 + $0x86] sm:$0xff]
      %v5400 = vld [vmem:[%s5390 + $0x8e] sm:$0xff]
      %v5401 = vld [vmem:[%s5390 + $0xa6] sm:$0xff]
      %v5402 = vld [vmem:[%s5390 + $0xae] sm:$0xff]
      %v5403 = vld [vmem:[%s5390 + $0xc6] sm:$0xff]
      %v5404 = vld [vmem:[%s5390 + $0xce] sm:$0xff]
      %v5405 = vld [vmem:[%s5390 + $0xe6] sm:$0xff]
      %v5406 = vld [vmem:[%s5390 + $0xee] sm:$0xff]
      %v5407 = vld [vmem:[%s5390 + $0x106] sm:$0xff]
      %v5408 = vld [vmem:[%s5390 + $0x10e] sm:$0xff]
      %v5409 = vld [vmem:[%s5390 + $0x126] sm:$0xff]
      %v5410 = vld [vmem:[%s5390 + $0x12e] sm:$0xff]
      %v5411 = vld [vmem:[%s5390 + $0x146] sm:$0xff]
      %v5412 = vld [vmem:[%s5390 + $0x14e] sm:$0xff]
      %v5413 = vld [vmem:[%s5390 + $0x166] sm:$0xff]
      %v5414 = vld [vmem:[%s5390 + $0x16e] sm:$0xff]
      %v5415 = vld [vmem:[%s5390 + $0x186] sm:$0xff]
      %v5416 = vld [vmem:[%s5390 + $0x18e] sm:$0xff]
      %v5417 = vld [vmem:[%s5390 + $0x1a6] sm:$0xff]
      %v5418 = vld [vmem:[%s5390 + $0x1ae] sm:$0xff]
      %v5419 = vld [vmem:[%s5390 + $0x1c6] sm:$0xff]
      %v5420 = vld [vmem:[%s5390 + $0x1ce] sm:$0xff]
      %v5421 = vld [vmem:[%s5390 + $0x1e6] sm:$0xff]
      %v5422 = vld [vmem:[%s5390 + $0x1ee] sm:$0xff]
      %s5423 = scalar_lea.vmem %s3, 480
      %v5424 = vld [vmem:[%s5423] sm:$0xff]
      %v5425 = vld [vmem:[%s5423 + $0x8] sm:$0xff]
      %v5426 = vld [vmem:[%s5423 + $0x10] sm:$0xff]
      %v5427 = vld [vmem:[%s5423 + $0x18] sm:$0xff]
      %v5429 = vsel %vm1170, %v5391, 0
      %v5432 = vsel %vm1170, %v5392, 0
      %v5435 = vsel %vm1170, %v5393, 0
      %v5438 = vsel %vm1170, %v5394, 0
      %v5441 = vsel %vm1170, %v5395, 0
      %v5444 = vsel %vm1170, %v5396, 0
      %v5447 = vsel %vm1170, %v5397, 0
      %v5450 = vsel %vm1170, %v5398, 0
      %v5453 = vsel %vm1170, %v5399, 0
      %v5456 = vsel %vm1170, %v5400, 0
      %v5459 = vsel %vm1170, %v5401, 0
      %v5462 = vsel %vm1170, %v5402, 0
      %v5465 = vsel %vm1170, %v5403, 0
      %v5468 = vsel %vm1170, %v5404, 0
      %v5471 = vsel %vm1170, %v5405, 0
      %v5474 = vsel %vm1170, %v5406, 0
      %v5477 = vsel %vm1170, %v5407, 0
      %v5480 = vsel %vm1170, %v5408, 0
      %v5483 = vsel %vm1170, %v5409, 0
      %v5486 = vsel %vm1170, %v5410, 0
      %v5489 = vsel %vm1170, %v5411, 0
      %v5492 = vsel %vm1170, %v5412, 0
      %v5495 = vsel %vm1170, %v5413, 0
      %v5498 = vsel %vm1170, %v5414, 0
      %v5501 = vsel %vm1170, %v5415, 0
      %v5504 = vsel %vm1170, %v5416, 0
      %v5507 = vsel %vm1170, %v5417, 0
      %v5510 = vsel %vm1170, %v5418, 0
      %v5513 = vsel %vm1170, %v5419, 0
      %v5516 = vsel %vm1170, %v5420, 0
      %v5519 = vsel %vm1170, %v5421, 0
      %v5522 = vsel %vm1170, %v5422, 0
      %5524 = vmatpush.msra.mxu0 0.0
      %5525 = vmatpush.msra.mxu0 0.0
      %5526 = vmatpush.msra.mxu0 0.0
      %5527 = vmatpush.msra.mxu0 0.0
      %5528 = vmatpush.msra.mxu0 0.0
      %5529 = vmatpush.msra.mxu0 0.0
      %5530 = vmatpush.msra.mxu0 0.0
      %5531 = vmatpush.msra.mxu0 0.0
      %5532 = vmatpush.msra.mxu0 0.0
      %5533 = vmatpush.msra.mxu0 0.0
      %5534 = vmatpush.msra.mxu0 0.0
      %5535 = vmatpush.msra.mxu0 0.0
      %5536 = vmatpush.msra.mxu0 %v5427
      %5537 = vmatpush.msra.mxu0 %v5426
      %5538 = vmatpush.msra.mxu0 %v5425
      %5539 = vmatpush.msra.mxu0 %v5424
      %5540 = vmatmul.f32.gmra.mxu0 %v5429
      %v5541 = vpop.f32.mrf.mxu0
      %v5542 = vadd.f32 0.0, %v5541
      %5543 = vmatmul.f32.gmra.mxu0 %v5432
      %v5544 = vpop.f32.mrf.mxu0
      %v5545 = vadd.f32 0.0, %v5544
      %5546 = vmatmul.f32.gmra.mxu0 %v5435
      %v5547 = vpop.f32.mrf.mxu0
      %v5548 = vadd.f32 0.0, %v5547
      %5549 = vmatmul.f32.gmra.mxu0 %v5438
      %v5550 = vpop.f32.mrf.mxu0
      %v5551 = vadd.f32 0.0, %v5550
      %5552 = vmatmul.f32.gmra.mxu0 %v5441
      %v5553 = vpop.f32.mrf.mxu0
      %v5554 = vadd.f32 0.0, %v5553
      %5555 = vmatmul.f32.gmra.mxu0 %v5444
      %v5556 = vpop.f32.mrf.mxu0
      %v5557 = vadd.f32 0.0, %v5556
      %5558 = vmatmul.f32.gmra.mxu0 %v5447
      %v5559 = vpop.f32.mrf.mxu0
      %v5560 = vadd.f32 0.0, %v5559
      %5561 = vmatmul.f32.gmra.mxu0 %v5450
      %v5562 = vpop.f32.mrf.mxu0
      %v5563 = vadd.f32 0.0, %v5562
      %5564 = vmatmul.f32.gmra.mxu0 %v5453
      %v5565 = vpop.f32.mrf.mxu0
      %v5566 = vadd.f32 0.0, %v5565
      %5567 = vmatmul.f32.gmra.mxu0 %v5456
      %v5568 = vpop.f32.mrf.mxu0
      %v5569 = vadd.f32 0.0, %v5568
      %5570 = vmatmul.f32.gmra.mxu0 %v5459
      %v5571 = vpop.f32.mrf.mxu0
      %v5572 = vadd.f32 0.0, %v5571
      %5573 = vmatmul.f32.gmra.mxu0 %v5462
      %v5574 = vpop.f32.mrf.mxu0
      %v5575 = vadd.f32 0.0, %v5574
      %5576 = vmatmul.f32.gmra.mxu0 %v5465
      %v5577 = vpop.f32.mrf.mxu0
      %v5578 = vadd.f32 0.0, %v5577
      %5579 = vmatmul.f32.gmra.mxu0 %v5468
      %v5580 = vpop.f32.mrf.mxu0
      %v5581 = vadd.f32 0.0, %v5580
      %5582 = vmatmul.f32.gmra.mxu0 %v5471
      %v5583 = vpop.f32.mrf.mxu0
      %v5584 = vadd.f32 0.0, %v5583
      %5585 = vmatmul.f32.gmra.mxu0 %v5474
      %v5586 = vpop.f32.mrf.mxu0
      %v5587 = vadd.f32 0.0, %v5586
      %5588 = vmatmul.f32.gmra.mxu0 %v5477
      %v5589 = vpop.f32.mrf.mxu0
      %v5590 = vadd.f32 0.0, %v5589
      %5591 = vmatmul.f32.gmra.mxu0 %v5480
      %v5592 = vpop.f32.mrf.mxu0
      %v5593 = vadd.f32 0.0, %v5592
      %5594 = vmatmul.f32.gmra.mxu0 %v5483
      %v5595 = vpop.f32.mrf.mxu0
      %v5596 = vadd.f32 0.0, %v5595
      %5597 = vmatmul.f32.gmra.mxu0 %v5486
      %v5598 = vpop.f32.mrf.mxu0
      %v5599 = vadd.f32 0.0, %v5598
      %5600 = vmatmul.f32.gmra.mxu0 %v5489
      %v5601 = vpop.f32.mrf.mxu0
      %v5602 = vadd.f32 0.0, %v5601
      %5603 = vmatmul.f32.gmra.mxu0 %v5492
      %v5604 = vpop.f32.mrf.mxu0
      %v5605 = vadd.f32 0.0, %v5604
      %5606 = vmatmul.f32.gmra.mxu0 %v5495
      %v5607 = vpop.f32.mrf.mxu0
      %v5608 = vadd.f32 0.0, %v5607
      %5609 = vmatmul.f32.gmra.mxu0 %v5498
      %v5610 = vpop.f32.mrf.mxu0
      %v5611 = vadd.f32 0.0, %v5610
      %5612 = vmatmul.f32.gmra.mxu0 %v5501
      %v5613 = vpop.f32.mrf.mxu0
      %v5614 = vadd.f32 0.0, %v5613
      %5615 = vmatmul.f32.gmra.mxu0 %v5504
      %v5616 = vpop.f32.mrf.mxu0
      %v5617 = vadd.f32 0.0, %v5616
      %5618 = vmatmul.f32.gmra.mxu0 %v5507
      %v5619 = vpop.f32.mrf.mxu0
      %v5620 = vadd.f32 0.0, %v5619
      %5621 = vmatmul.f32.gmra.mxu0 %v5510
      %v5622 = vpop.f32.mrf.mxu0
      %v5623 = vadd.f32 0.0, %v5622
      %5624 = vmatmul.f32.gmra.mxu0 %v5513
      %v5625 = vpop.f32.mrf.mxu0
      %v5626 = vadd.f32 0.0, %v5625
      %5627 = vmatmul.f32.gmra.mxu0 %v5516
      %v5628 = vpop.f32.mrf.mxu0
      %v5629 = vadd.f32 0.0, %v5628
      %5630 = vmatmul.f32.gmra.mxu0 %v5519
      %v5631 = vpop.f32.mrf.mxu0
      %v5632 = vadd.f32 0.0, %v5631
      %5633 = vmatmul.f32.gmra.mxu0 %v5522
      %v5634 = vpop.f32.mrf.mxu0
      %v5635 = vadd.f32 0.0, %v5634
      %5636 = vdwg.mxu0
      %v5637 = vadd.f32 %v5358, %v5542
      %v5638 = vadd.f32 %v5359, %v5545
      %v5639 = vadd.f32 %v5360, %v5548
      %v5640 = vadd.f32 %v5361, %v5551
      %v5641 = vadd.f32 %v5362, %v5554
      %v5642 = vadd.f32 %v5363, %v5557
      %v5643 = vadd.f32 %v5364, %v5560
      %v5644 = vadd.f32 %v5365, %v5563
      %v5645 = vadd.f32 %v5366, %v5566
      %v5646 = vadd.f32 %v5367, %v5569
      %v5647 = vadd.f32 %v5368, %v5572
      %v5648 = vadd.f32 %v5369, %v5575
      %v5649 = vadd.f32 %v5370, %v5578
      %v5650 = vadd.f32 %v5371, %v5581
      %v5651 = vadd.f32 %v5372, %v5584
      %v5652 = vadd.f32 %v5373, %v5587
      %v5653 = vadd.f32 %v5374, %v5590
      %v5654 = vadd.f32 %v5375, %v5593
      %v5655 = vadd.f32 %v5376, %v5596
      %v5656 = vadd.f32 %v5377, %v5599
      %v5657 = vadd.f32 %v5378, %v5602
      %v5658 = vadd.f32 %v5379, %v5605
      %v5659 = vadd.f32 %v5380, %v5608
      %v5660 = vadd.f32 %v5381, %v5611
      %v5661 = vadd.f32 %v5382, %v5614
      %v5662 = vadd.f32 %v5383, %v5617
      %v5663 = vadd.f32 %v5384, %v5620
      %v5664 = vadd.f32 %v5385, %v5623
      %v5665 = vadd.f32 %v5386, %v5626
      %v5666 = vadd.f32 %v5387, %v5629
      %v5667 = vadd.f32 %v5388, %v5632
      %v5668 = vadd.f32 %v5389, %v5635
      %v5669 = vld [vmem:[%s5390 + $0x7] sm:$0xff]
      %v5670 = vld [vmem:[%s5390 + $0xf] sm:$0xff]
      %v5671 = vld [vmem:[%s5390 + $0x27] sm:$0xff]
      %v5672 = vld [vmem:[%s5390 + $0x2f] sm:$0xff]
      %v5673 = vld [vmem:[%s5390 + $0x47] sm:$0xff]
      %v5674 = vld [vmem:[%s5390 + $0x4f] sm:$0xff]
      %v5675 = vld [vmem:[%s5390 + $0x67] sm:$0xff]
      %v5676 = vld [vmem:[%s5390 + $0x6f] sm:$0xff]
      %v5677 = vld [vmem:[%s5390 + $0x87] sm:$0xff]
      %v5678 = vld [vmem:[%s5390 + $0x8f] sm:$0xff]
      %v5679 = vld [vmem:[%s5390 + $0xa7] sm:$0xff]
      %v5680 = vld [vmem:[%s5390 + $0xaf] sm:$0xff]
      %v5681 = vld [vmem:[%s5390 + $0xc7] sm:$0xff]
      %v5682 = vld [vmem:[%s5390 + $0xcf] sm:$0xff]
      %v5683 = vld [vmem:[%s5390 + $0xe7] sm:$0xff]
      %v5684 = vld [vmem:[%s5390 + $0xef] sm:$0xff]
      %v5685 = vld [vmem:[%s5390 + $0x107] sm:$0xff]
      %v5686 = vld [vmem:[%s5390 + $0x10f] sm:$0xff]
      %v5687 = vld [vmem:[%s5390 + $0x127] sm:$0xff]
      %v5688 = vld [vmem:[%s5390 + $0x12f] sm:$0xff]
      %v5689 = vld [vmem:[%s5390 + $0x147] sm:$0xff]
      %v5690 = vld [vmem:[%s5390 + $0x14f] sm:$0xff]
      %v5691 = vld [vmem:[%s5390 + $0x167] sm:$0xff]
      %v5692 = vld [vmem:[%s5390 + $0x16f] sm:$0xff]
      %v5693 = vld [vmem:[%s5390 + $0x187] sm:$0xff]
      %v5694 = vld [vmem:[%s5390 + $0x18f] sm:$0xff]
      %v5695 = vld [vmem:[%s5390 + $0x1a7] sm:$0xff]
      %v5696 = vld [vmem:[%s5390 + $0x1af] sm:$0xff]
      %v5697 = vld [vmem:[%s5390 + $0x1c7] sm:$0xff]
      %v5698 = vld [vmem:[%s5390 + $0x1cf] sm:$0xff]
      %v5699 = vld [vmem:[%s5390 + $0x1e7] sm:$0xff]
      %v5700 = vld [vmem:[%s5390 + $0x1ef] sm:$0xff]
      %s5701 = scalar_lea.vmem %s3, 512
      %v5702 = vld [vmem:[%s5701] sm:$0xff]
      %v5703 = vld [vmem:[%s5701 + $0x8] sm:$0xff]
      %v5704 = vld [vmem:[%s5701 + $0x10] sm:$0xff]
      %v5705 = vld [vmem:[%s5701 + $0x18] sm:$0xff]
      %v5707 = vsel %vm1170, %v5669, 0
      %v5710 = vsel %vm1170, %v5670, 0
      %v5713 = vsel %vm1170, %v5671, 0
      %v5716 = vsel %vm1170, %v5672, 0
      %v5719 = vsel %vm1170, %v5673, 0
      %v5722 = vsel %vm1170, %v5674, 0
      %v5725 = vsel %vm1170, %v5675, 0
      %v5728 = vsel %vm1170, %v5676, 0
      %v5731 = vsel %vm1170, %v5677, 0
      %v5734 = vsel %vm1170, %v5678, 0
      %v5737 = vsel %vm1170, %v5679, 0
      %v5740 = vsel %vm1170, %v5680, 0
      %v5743 = vsel %vm1170, %v5681, 0
      %v5746 = vsel %vm1170, %v5682, 0
      %v5749 = vsel %vm1170, %v5683, 0
      %v5752 = vsel %vm1170, %v5684, 0
      %v5755 = vsel %vm1170, %v5685, 0
      %v5758 = vsel %vm1170, %v5686, 0
      %v5761 = vsel %vm1170, %v5687, 0
      %v5764 = vsel %vm1170, %v5688, 0
      %v5767 = vsel %vm1170, %v5689, 0
      %v5770 = vsel %vm1170, %v5690, 0
      %v5773 = vsel %vm1170, %v5691, 0
      %v5776 = vsel %vm1170, %v5692, 0
      %v5779 = vsel %vm1170, %v5693, 0
      %v5782 = vsel %vm1170, %v5694, 0
      %v5785 = vsel %vm1170, %v5695, 0
      %v5788 = vsel %vm1170, %v5696, 0
      %v5791 = vsel %vm1170, %v5697, 0
      %v5794 = vsel %vm1170, %v5698, 0
      %v5797 = vsel %vm1170, %v5699, 0
      %v5800 = vsel %vm1170, %v5700, 0
      %5802 = vmatpush.msra.mxu0 0.0
      %5803 = vmatpush.msra.mxu0 0.0
      %5804 = vmatpush.msra.mxu0 0.0
      %5805 = vmatpush.msra.mxu0 0.0
      %5806 = vmatpush.msra.mxu0 0.0
      %5807 = vmatpush.msra.mxu0 0.0
      %5808 = vmatpush.msra.mxu0 0.0
      %5809 = vmatpush.msra.mxu0 0.0
      %5810 = vmatpush.msra.mxu0 0.0
      %5811 = vmatpush.msra.mxu0 0.0
      %5812 = vmatpush.msra.mxu0 0.0
      %5813 = vmatpush.msra.mxu0 0.0
      %5814 = vmatpush.msra.mxu0 %v5705
      %5815 = vmatpush.msra.mxu0 %v5704
      %5816 = vmatpush.msra.mxu0 %v5703
      %5817 = vmatpush.msra.mxu0 %v5702
      %5818 = vmatmul.f32.gmra.mxu0 %v5707
      %v5819 = vpop.f32.mrf.mxu0
      %v5820 = vadd.f32 0.0, %v5819
      %5821 = vmatmul.f32.gmra.mxu0 %v5710
      %v5822 = vpop.f32.mrf.mxu0
      %v5823 = vadd.f32 0.0, %v5822
      %5824 = vmatmul.f32.gmra.mxu0 %v5713
      %v5825 = vpop.f32.mrf.mxu0
      %v5826 = vadd.f32 0.0, %v5825
      %5827 = vmatmul.f32.gmra.mxu0 %v5716
      %v5828 = vpop.f32.mrf.mxu0
      %v5829 = vadd.f32 0.0, %v5828
      %5830 = vmatmul.f32.gmra.mxu0 %v5719
      %v5831 = vpop.f32.mrf.mxu0
      %v5832 = vadd.f32 0.0, %v5831
      %5833 = vmatmul.f32.gmra.mxu0 %v5722
      %v5834 = vpop.f32.mrf.mxu0
      %v5835 = vadd.f32 0.0, %v5834
      %5836 = vmatmul.f32.gmra.mxu0 %v5725
      %v5837 = vpop.f32.mrf.mxu0
      %v5838 = vadd.f32 0.0, %v5837
      %5839 = vmatmul.f32.gmra.mxu0 %v5728
      %v5840 = vpop.f32.mrf.mxu0
      %v5841 = vadd.f32 0.0, %v5840
      %5842 = vmatmul.f32.gmra.mxu0 %v5731
      %v5843 = vpop.f32.mrf.mxu0
      %v5844 = vadd.f32 0.0, %v5843
      %5845 = vmatmul.f32.gmra.mxu0 %v5734
      %v5846 = vpop.f32.mrf.mxu0
      %v5847 = vadd.f32 0.0, %v5846
      %5848 = vmatmul.f32.gmra.mxu0 %v5737
      %v5849 = vpop.f32.mrf.mxu0
      %v5850 = vadd.f32 0.0, %v5849
      %5851 = vmatmul.f32.gmra.mxu0 %v5740
      %v5852 = vpop.f32.mrf.mxu0
      %v5853 = vadd.f32 0.0, %v5852
      %5854 = vmatmul.f32.gmra.mxu0 %v5743
      %v5855 = vpop.f32.mrf.mxu0
      %v5856 = vadd.f32 0.0, %v5855
      %5857 = vmatmul.f32.gmra.mxu0 %v5746
      %v5858 = vpop.f32.mrf.mxu0
      %v5859 = vadd.f32 0.0, %v5858
      %5860 = vmatmul.f32.gmra.mxu0 %v5749
      %v5861 = vpop.f32.mrf.mxu0
      %v5862 = vadd.f32 0.0, %v5861
      %5863 = vmatmul.f32.gmra.mxu0 %v5752
      %v5864 = vpop.f32.mrf.mxu0
      %v5865 = vadd.f32 0.0, %v5864
      %5866 = vmatmul.f32.gmra.mxu0 %v5755
      %v5867 = vpop.f32.mrf.mxu0
      %v5868 = vadd.f32 0.0, %v5867
      %5869 = vmatmul.f32.gmra.mxu0 %v5758
      %v5870 = vpop.f32.mrf.mxu0
      %v5871 = vadd.f32 0.0, %v5870
      %5872 = vmatmul.f32.gmra.mxu0 %v5761
      %v5873 = vpop.f32.mrf.mxu0
      %v5874 = vadd.f32 0.0, %v5873
      %5875 = vmatmul.f32.gmra.mxu0 %v5764
      %v5876 = vpop.f32.mrf.mxu0
      %v5877 = vadd.f32 0.0, %v5876
      %5878 = vmatmul.f32.gmra.mxu0 %v5767
      %v5879 = vpop.f32.mrf.mxu0
      %v5880 = vadd.f32 0.0, %v5879
      %5881 = vmatmul.f32.gmra.mxu0 %v5770
      %v5882 = vpop.f32.mrf.mxu0
      %v5883 = vadd.f32 0.0, %v5882
      %5884 = vmatmul.f32.gmra.mxu0 %v5773
      %v5885 = vpop.f32.mrf.mxu0
      %v5886 = vadd.f32 0.0, %v5885
      %5887 = vmatmul.f32.gmra.mxu0 %v5776
      %v5888 = vpop.f32.mrf.mxu0
      %v5889 = vadd.f32 0.0, %v5888
      %5890 = vmatmul.f32.gmra.mxu0 %v5779
      %v5891 = vpop.f32.mrf.mxu0
      %v5892 = vadd.f32 0.0, %v5891
      %5893 = vmatmul.f32.gmra.mxu0 %v5782
      %v5894 = vpop.f32.mrf.mxu0
      %v5895 = vadd.f32 0.0, %v5894
      %5896 = vmatmul.f32.gmra.mxu0 %v5785
      %v5897 = vpop.f32.mrf.mxu0
      %v5898 = vadd.f32 0.0, %v5897
      %5899 = vmatmul.f32.gmra.mxu0 %v5788
      %v5900 = vpop.f32.mrf.mxu0
      %v5901 = vadd.f32 0.0, %v5900
      %5902 = vmatmul.f32.gmra.mxu0 %v5791
      %v5903 = vpop.f32.mrf.mxu0
      %v5904 = vadd.f32 0.0, %v5903
      %5905 = vmatmul.f32.gmra.mxu0 %v5794
      %v5906 = vpop.f32.mrf.mxu0
      %v5907 = vadd.f32 0.0, %v5906
      %5908 = vmatmul.f32.gmra.mxu0 %v5797
      %v5909 = vpop.f32.mrf.mxu0
      %v5910 = vadd.f32 0.0, %v5909
      %5911 = vmatmul.f32.gmra.mxu0 %v5800
      %v5912 = vpop.f32.mrf.mxu0
      %v5913 = vadd.f32 0.0, %v5912
      %5914 = vdwg.mxu0
      %v5915 = vadd.f32 %v5637, %v5820
      %v5916 = vadd.f32 %v5638, %v5823
      %v5917 = vadd.f32 %v5639, %v5826
      %v5918 = vadd.f32 %v5640, %v5829
      %v5919 = vadd.f32 %v5641, %v5832
      %v5920 = vadd.f32 %v5642, %v5835
      %v5921 = vadd.f32 %v5643, %v5838
      %v5922 = vadd.f32 %v5644, %v5841
      %v5923 = vadd.f32 %v5645, %v5844
      %v5924 = vadd.f32 %v5646, %v5847
      %v5925 = vadd.f32 %v5647, %v5850
      %v5926 = vadd.f32 %v5648, %v5853
      %v5927 = vadd.f32 %v5649, %v5856
      %v5928 = vadd.f32 %v5650, %v5859
      %v5929 = vadd.f32 %v5651, %v5862
      %v5930 = vadd.f32 %v5652, %v5865
      %v5931 = vadd.f32 %v5653, %v5868
      %v5932 = vadd.f32 %v5654, %v5871
      %v5933 = vadd.f32 %v5655, %v5874
      %v5934 = vadd.f32 %v5656, %v5877
      %v5935 = vadd.f32 %v5657, %v5880
      %v5936 = vadd.f32 %v5658, %v5883
      %v5937 = vadd.f32 %v5659, %v5886
      %v5938 = vadd.f32 %v5660, %v5889
      %v5939 = vadd.f32 %v5661, %v5892
      %v5940 = vadd.f32 %v5662, %v5895
      %v5941 = vadd.f32 %v5663, %v5898
      %v5942 = vadd.f32 %v5664, %v5901
      %v5943 = vadd.f32 %v5665, %v5904
      %v5944 = vadd.f32 %v5666, %v5907
      %v5945 = vadd.f32 %v5667, %v5910
      %v5946 = vadd.f32 %v5668, %v5913
      %v5947 = vld [vmem:[%s5390 + $0x8] sm:$0xff]
      %v5948 = vld [vmem:[%s5390 + $0x10] sm:$0xff]
      %v5949 = vld [vmem:[%s5390 + $0x28] sm:$0xff]
      %v5950 = vld [vmem:[%s5390 + $0x30] sm:$0xff]
      %v5951 = vld [vmem:[%s5390 + $0x48] sm:$0xff]
      %v5952 = vld [vmem:[%s5390 + $0x50] sm:$0xff]
      %v5953 = vld [vmem:[%s5390 + $0x68] sm:$0xff]
      %v5954 = vld [vmem:[%s5390 + $0x70] sm:$0xff]
      %v5955 = vld [vmem:[%s5390 + $0x88] sm:$0xff]
      %v5956 = vld [vmem:[%s5390 + $0x90] sm:$0xff]
      %v5957 = vld [vmem:[%s5390 + $0xa8] sm:$0xff]
      %v5958 = vld [vmem:[%s5390 + $0xb0] sm:$0xff]
      %v5959 = vld [vmem:[%s5390 + $0xc8] sm:$0xff]
      %v5960 = vld [vmem:[%s5390 + $0xd0] sm:$0xff]
      %v5961 = vld [vmem:[%s5390 + $0xe8] sm:$0xff]
      %v5962 = vld [vmem:[%s5390 + $0xf0] sm:$0xff]
      %v5963 = vld [vmem:[%s5390 + $0x108] sm:$0xff]
      %v5964 = vld [vmem:[%s5390 + $0x110] sm:$0xff]
      %v5965 = vld [vmem:[%s5390 + $0x128] sm:$0xff]
      %v5966 = vld [vmem:[%s5390 + $0x130] sm:$0xff]
      %v5967 = vld [vmem:[%s5390 + $0x148] sm:$0xff]
      %v5968 = vld [vmem:[%s5390 + $0x150] sm:$0xff]
      %v5969 = vld [vmem:[%s5390 + $0x168] sm:$0xff]
      %v5970 = vld [vmem:[%s5390 + $0x170] sm:$0xff]
      %v5971 = vld [vmem:[%s5390 + $0x188] sm:$0xff]
      %v5972 = vld [vmem:[%s5390 + $0x190] sm:$0xff]
      %v5973 = vld [vmem:[%s5390 + $0x1a8] sm:$0xff]
      %v5974 = vld [vmem:[%s5390 + $0x1b0] sm:$0xff]
      %v5975 = vld [vmem:[%s5390 + $0x1c8] sm:$0xff]
      %v5976 = vld [vmem:[%s5390 + $0x1d0] sm:$0xff]
      %v5977 = vld [vmem:[%s5390 + $0x1e8] sm:$0xff]
      %v5978 = vld [vmem:[%s5390 + $0x1f0] sm:$0xff]
      %s5979 = scalar_lea.vmem %s3, 544
      %v5980 = vld [vmem:[%s5979] sm:$0xff]
      %v5981 = vld [vmem:[%s5979 + $0x8] sm:$0xff]
      %v5982 = vld [vmem:[%s5979 + $0x10] sm:$0xff]
      %v5983 = vld [vmem:[%s5979 + $0x18] sm:$0xff]
      %v5985 = vsel %vm1170, %v5947, 0
      %v5988 = vsel %vm1170, %v5948, 0
      %v5991 = vsel %vm1170, %v5949, 0
      %v5994 = vsel %vm1170, %v5950, 0
      %v5997 = vsel %vm1170, %v5951, 0
      %v6000 = vsel %vm1170, %v5952, 0
      %v6003 = vsel %vm1170, %v5953, 0
      %v6006 = vsel %vm1170, %v5954, 0
      %v6009 = vsel %vm1170, %v5955, 0
      %v6012 = vsel %vm1170, %v5956, 0
      %v6015 = vsel %vm1170, %v5957, 0
      %v6018 = vsel %vm1170, %v5958, 0
      %v6021 = vsel %vm1170, %v5959, 0
      %v6024 = vsel %vm1170, %v5960, 0
      %v6027 = vsel %vm1170, %v5961, 0
      %v6030 = vsel %vm1170, %v5962, 0
      %v6033 = vsel %vm1170, %v5963, 0
      %v6036 = vsel %vm1170, %v5964, 0
      %v6039 = vsel %vm1170, %v5965, 0
      %v6042 = vsel %vm1170, %v5966, 0
      %v6045 = vsel %vm1170, %v5967, 0
      %v6048 = vsel %vm1170, %v5968, 0
      %v6051 = vsel %vm1170, %v5969, 0
      %v6054 = vsel %vm1170, %v5970, 0
      %v6057 = vsel %vm1170, %v5971, 0
      %v6060 = vsel %vm1170, %v5972, 0
      %v6063 = vsel %vm1170, %v5973, 0
      %v6066 = vsel %vm1170, %v5974, 0
      %v6069 = vsel %vm1170, %v5975, 0
      %v6072 = vsel %vm1170, %v5976, 0
      %v6075 = vsel %vm1170, %v5977, 0
      %v6078 = vsel %vm1170, %v5978, 0
      %6080 = vmatpush.msra.mxu0 0.0
      %6081 = vmatpush.msra.mxu0 0.0
      %6082 = vmatpush.msra.mxu0 0.0
      %6083 = vmatpush.msra.mxu0 0.0
      %6084 = vmatpush.msra.mxu0 0.0
      %6085 = vmatpush.msra.mxu0 0.0
      %6086 = vmatpush.msra.mxu0 0.0
      %6087 = vmatpush.msra.mxu0 0.0
      %6088 = vmatpush.msra.mxu0 0.0
      %6089 = vmatpush.msra.mxu0 0.0
      %6090 = vmatpush.msra.mxu0 0.0
      %6091 = vmatpush.msra.mxu0 0.0
      %6092 = vmatpush.msra.mxu0 %v5983
      %6093 = vmatpush.msra.mxu0 %v5982
      %6094 = vmatpush.msra.mxu0 %v5981
      %6095 = vmatpush.msra.mxu0 %v5980
      %6096 = vmatmul.f32.gmra.mxu0 %v5985
      %v6097 = vpop.f32.mrf.mxu0
      %v6098 = vadd.f32 0.0, %v6097
      %6099 = vmatmul.f32.gmra.mxu0 %v5988
      %v6100 = vpop.f32.mrf.mxu0
      %v6101 = vadd.f32 0.0, %v6100
      %6102 = vmatmul.f32.gmra.mxu0 %v5991
      %v6103 = vpop.f32.mrf.mxu0
      %v6104 = vadd.f32 0.0, %v6103
      %6105 = vmatmul.f32.gmra.mxu0 %v5994
      %v6106 = vpop.f32.mrf.mxu0
      %v6107 = vadd.f32 0.0, %v6106
      %6108 = vmatmul.f32.gmra.mxu0 %v5997
      %v6109 = vpop.f32.mrf.mxu0
      %v6110 = vadd.f32 0.0, %v6109
      %6111 = vmatmul.f32.gmra.mxu0 %v6000
      %v6112 = vpop.f32.mrf.mxu0
      %v6113 = vadd.f32 0.0, %v6112
      %6114 = vmatmul.f32.gmra.mxu0 %v6003
      %v6115 = vpop.f32.mrf.mxu0
      %v6116 = vadd.f32 0.0, %v6115
      %6117 = vmatmul.f32.gmra.mxu0 %v6006
      %v6118 = vpop.f32.mrf.mxu0
      %v6119 = vadd.f32 0.0, %v6118
      %6120 = vmatmul.f32.gmra.mxu0 %v6009
      %v6121 = vpop.f32.mrf.mxu0
      %v6122 = vadd.f32 0.0, %v6121
      %6123 = vmatmul.f32.gmra.mxu0 %v6012
      %v6124 = vpop.f32.mrf.mxu0
      %v6125 = vadd.f32 0.0, %v6124
      %6126 = vmatmul.f32.gmra.mxu0 %v6015
      %v6127 = vpop.f32.mrf.mxu0
      %v6128 = vadd.f32 0.0, %v6127
      %6129 = vmatmul.f32.gmra.mxu0 %v6018
      %v6130 = vpop.f32.mrf.mxu0
      %v6131 = vadd.f32 0.0, %v6130
      %6132 = vmatmul.f32.gmra.mxu0 %v6021
      %v6133 = vpop.f32.mrf.mxu0
      %v6134 = vadd.f32 0.0, %v6133
      %6135 = vmatmul.f32.gmra.mxu0 %v6024
      %v6136 = vpop.f32.mrf.mxu0
      %v6137 = vadd.f32 0.0, %v6136
      %6138 = vmatmul.f32.gmra.mxu0 %v6027
      %v6139 = vpop.f32.mrf.mxu0
      %v6140 = vadd.f32 0.0, %v6139
      %6141 = vmatmul.f32.gmra.mxu0 %v6030
      %v6142 = vpop.f32.mrf.mxu0
      %v6143 = vadd.f32 0.0, %v6142
      %6144 = vmatmul.f32.gmra.mxu0 %v6033
      %v6145 = vpop.f32.mrf.mxu0
      %v6146 = vadd.f32 0.0, %v6145
      %6147 = vmatmul.f32.gmra.mxu0 %v6036
      %v6148 = vpop.f32.mrf.mxu0
      %v6149 = vadd.f32 0.0, %v6148
      %6150 = vmatmul.f32.gmra.mxu0 %v6039
      %v6151 = vpop.f32.mrf.mxu0
      %v6152 = vadd.f32 0.0, %v6151
      %6153 = vmatmul.f32.gmra.mxu0 %v6042
      %v6154 = vpop.f32.mrf.mxu0
      %v6155 = vadd.f32 0.0, %v6154
      %6156 = vmatmul.f32.gmra.mxu0 %v6045
      %v6157 = vpop.f32.mrf.mxu0
      %v6158 = vadd.f32 0.0, %v6157
      %6159 = vmatmul.f32.gmra.mxu0 %v6048
      %v6160 = vpop.f32.mrf.mxu0
      %v6161 = vadd.f32 0.0, %v6160
      %6162 = vmatmul.f32.gmra.mxu0 %v6051
      %v6163 = vpop.f32.mrf.mxu0
      %v6164 = vadd.f32 0.0, %v6163
      %6165 = vmatmul.f32.gmra.mxu0 %v6054
      %v6166 = vpop.f32.mrf.mxu0
      %v6167 = vadd.f32 0.0, %v6166
      %6168 = vmatmul.f32.gmra.mxu0 %v6057
      %v6169 = vpop.f32.mrf.mxu0
      %v6170 = vadd.f32 0.0, %v6169
      %6171 = vmatmul.f32.gmra.mxu0 %v6060
      %v6172 = vpop.f32.mrf.mxu0
      %v6173 = vadd.f32 0.0, %v6172
      %6174 = vmatmul.f32.gmra.mxu0 %v6063
      %v6175 = vpop.f32.mrf.mxu0
      %v6176 = vadd.f32 0.0, %v6175
      %6177 = vmatmul.f32.gmra.mxu0 %v6066
      %v6178 = vpop.f32.mrf.mxu0
      %v6179 = vadd.f32 0.0, %v6178
      %6180 = vmatmul.f32.gmra.mxu0 %v6069
      %v6181 = vpop.f32.mrf.mxu0
      %v6182 = vadd.f32 0.0, %v6181
      %6183 = vmatmul.f32.gmra.mxu0 %v6072
      %v6184 = vpop.f32.mrf.mxu0
      %v6185 = vadd.f32 0.0, %v6184
      %6186 = vmatmul.f32.gmra.mxu0 %v6075
      %v6187 = vpop.f32.mrf.mxu0
      %v6188 = vadd.f32 0.0, %v6187
      %6189 = vmatmul.f32.gmra.mxu0 %v6078
      %v6190 = vpop.f32.mrf.mxu0
      %v6191 = vadd.f32 0.0, %v6190
      %6192 = vdwg.mxu0
      %v6193 = vadd.f32 %v5915, %v6098
      %v6194 = vadd.f32 %v5916, %v6101
      %v6195 = vadd.f32 %v5917, %v6104
      %v6196 = vadd.f32 %v5918, %v6107
      %v6197 = vadd.f32 %v5919, %v6110
      %v6198 = vadd.f32 %v5920, %v6113
      %v6199 = vadd.f32 %v5921, %v6116
      %v6200 = vadd.f32 %v5922, %v6119
      %v6201 = vadd.f32 %v5923, %v6122
      %v6202 = vadd.f32 %v5924, %v6125
      %v6203 = vadd.f32 %v5925, %v6128
      %v6204 = vadd.f32 %v5926, %v6131
      %v6205 = vadd.f32 %v5927, %v6134
      %v6206 = vadd.f32 %v5928, %v6137
      %v6207 = vadd.f32 %v5929, %v6140
      %v6208 = vadd.f32 %v5930, %v6143
      %v6209 = vadd.f32 %v5931, %v6146
      %v6210 = vadd.f32 %v5932, %v6149
      %v6211 = vadd.f32 %v5933, %v6152
      %v6212 = vadd.f32 %v5934, %v6155
      %v6213 = vadd.f32 %v5935, %v6158
      %v6214 = vadd.f32 %v5936, %v6161
      %v6215 = vadd.f32 %v5937, %v6164
      %v6216 = vadd.f32 %v5938, %v6167
      %v6217 = vadd.f32 %v5939, %v6170
      %v6218 = vadd.f32 %v5940, %v6173
      %v6219 = vadd.f32 %v5941, %v6176
      %v6220 = vadd.f32 %v5942, %v6179
      %v6221 = vadd.f32 %v5943, %v6182
      %v6222 = vadd.f32 %v5944, %v6185
      %v6223 = vadd.f32 %v5945, %v6188
      %v6224 = vadd.f32 %v5946, %v6191
      %v6225 = vld [vmem:[%s5390 + $0x9] sm:$0xff]
      %v6226 = vld [vmem:[%s5390 + $0x11] sm:$0xff]
      %v6227 = vld [vmem:[%s5390 + $0x29] sm:$0xff]
      %v6228 = vld [vmem:[%s5390 + $0x31] sm:$0xff]
      %v6229 = vld [vmem:[%s5390 + $0x49] sm:$0xff]
      %v6230 = vld [vmem:[%s5390 + $0x51] sm:$0xff]
      %v6231 = vld [vmem:[%s5390 + $0x69] sm:$0xff]
      %v6232 = vld [vmem:[%s5390 + $0x71] sm:$0xff]
      %v6233 = vld [vmem:[%s5390 + $0x89] sm:$0xff]
      %v6234 = vld [vmem:[%s5390 + $0x91] sm:$0xff]
      %v6235 = vld [vmem:[%s5390 + $0xa9] sm:$0xff]
      %v6236 = vld [vmem:[%s5390 + $0xb1] sm:$0xff]
      %v6237 = vld [vmem:[%s5390 + $0xc9] sm:$0xff]
      %v6238 = vld [vmem:[%s5390 + $0xd1] sm:$0xff]
      %v6239 = vld [vmem:[%s5390 + $0xe9] sm:$0xff]
      %v6240 = vld [vmem:[%s5390 + $0xf1] sm:$0xff]
      %v6241 = vld [vmem:[%s5390 + $0x109] sm:$0xff]
      %v6242 = vld [vmem:[%s5390 + $0x111] sm:$0xff]
      %v6243 = vld [vmem:[%s5390 + $0x129] sm:$0xff]
      %v6244 = vld [vmem:[%s5390 + $0x131] sm:$0xff]
      %v6245 = vld [vmem:[%s5390 + $0x149] sm:$0xff]
      %v6246 = vld [vmem:[%s5390 + $0x151] sm:$0xff]
      %v6247 = vld [vmem:[%s5390 + $0x169] sm:$0xff]
      %v6248 = vld [vmem:[%s5390 + $0x171] sm:$0xff]
      %v6249 = vld [vmem:[%s5390 + $0x189] sm:$0xff]
      %v6250 = vld [vmem:[%s5390 + $0x191] sm:$0xff]
      %v6251 = vld [vmem:[%s5390 + $0x1a9] sm:$0xff]
      %v6252 = vld [vmem:[%s5390 + $0x1b1] sm:$0xff]
      %v6253 = vld [vmem:[%s5390 + $0x1c9] sm:$0xff]
      %v6254 = vld [vmem:[%s5390 + $0x1d1] sm:$0xff]
      %v6255 = vld [vmem:[%s5390 + $0x1e9] sm:$0xff]
      %v6256 = vld [vmem:[%s5390 + $0x1f1] sm:$0xff]
      %s6257 = scalar_lea.vmem %s3, 576
      %v6258 = vld [vmem:[%s6257] sm:$0xff]
      %v6259 = vld [vmem:[%s6257 + $0x8] sm:$0xff]
      %v6260 = vld [vmem:[%s6257 + $0x10] sm:$0xff]
      %v6261 = vld [vmem:[%s6257 + $0x18] sm:$0xff]
      %v6263 = vsel %vm1170, %v6225, 0
      %v6266 = vsel %vm1170, %v6226, 0
      %v6269 = vsel %vm1170, %v6227, 0
      %v6272 = vsel %vm1170, %v6228, 0
      %v6275 = vsel %vm1170, %v6229, 0
      %v6278 = vsel %vm1170, %v6230, 0
      %v6281 = vsel %vm1170, %v6231, 0
      %v6284 = vsel %vm1170, %v6232, 0
      %v6287 = vsel %vm1170, %v6233, 0
      %v6290 = vsel %vm1170, %v6234, 0
      %v6293 = vsel %vm1170, %v6235, 0
      %v6296 = vsel %vm1170, %v6236, 0
      %v6299 = vsel %vm1170, %v6237, 0
      %v6302 = vsel %vm1170, %v6238, 0
      %v6305 = vsel %vm1170, %v6239, 0
      %v6308 = vsel %vm1170, %v6240, 0
      %v6311 = vsel %vm1170, %v6241, 0
      %v6314 = vsel %vm1170, %v6242, 0
      %v6317 = vsel %vm1170, %v6243, 0
      %v6320 = vsel %vm1170, %v6244, 0
      %v6323 = vsel %vm1170, %v6245, 0
      %v6326 = vsel %vm1170, %v6246, 0
      %v6329 = vsel %vm1170, %v6247, 0
      %v6332 = vsel %vm1170, %v6248, 0
      %v6335 = vsel %vm1170, %v6249, 0
      %v6338 = vsel %vm1170, %v6250, 0
      %v6341 = vsel %vm1170, %v6251, 0
      %v6344 = vsel %vm1170, %v6252, 0
      %v6347 = vsel %vm1170, %v6253, 0
      %v6350 = vsel %vm1170, %v6254, 0
      %v6353 = vsel %vm1170, %v6255, 0
      %v6356 = vsel %vm1170, %v6256, 0
      %6358 = vmatpush.msra.mxu0 0.0
      %6359 = vmatpush.msra.mxu0 0.0
      %6360 = vmatpush.msra.mxu0 0.0
      %6361 = vmatpush.msra.mxu0 0.0
      %6362 = vmatpush.msra.mxu0 0.0
      %6363 = vmatpush.msra.mxu0 0.0
      %6364 = vmatpush.msra.mxu0 0.0
      %6365 = vmatpush.msra.mxu0 0.0
      %6366 = vmatpush.msra.mxu0 0.0
      %6367 = vmatpush.msra.mxu0 0.0
      %6368 = vmatpush.msra.mxu0 0.0
      %6369 = vmatpush.msra.mxu0 0.0
      %6370 = vmatpush.msra.mxu0 %v6261
      %6371 = vmatpush.msra.mxu0 %v6260
      %6372 = vmatpush.msra.mxu0 %v6259
      %6373 = vmatpush.msra.mxu0 %v6258
      %6374 = vmatmul.f32.gmra.mxu0 %v6263
      %v6375 = vpop.f32.mrf.mxu0
      %v6376 = vadd.f32 0.0, %v6375
      %6377 = vmatmul.f32.gmra.mxu0 %v6266
      %v6378 = vpop.f32.mrf.mxu0
      %v6379 = vadd.f32 0.0, %v6378
      %6380 = vmatmul.f32.gmra.mxu0 %v6269
      %v6381 = vpop.f32.mrf.mxu0
      %v6382 = vadd.f32 0.0, %v6381
      %6383 = vmatmul.f32.gmra.mxu0 %v6272
      %v6384 = vpop.f32.mrf.mxu0
      %v6385 = vadd.f32 0.0, %v6384
      %6386 = vmatmul.f32.gmra.mxu0 %v6275
      %v6387 = vpop.f32.mrf.mxu0
      %v6388 = vadd.f32 0.0, %v6387
      %6389 = vmatmul.f32.gmra.mxu0 %v6278
      %v6390 = vpop.f32.mrf.mxu0
      %v6391 = vadd.f32 0.0, %v6390
      %6392 = vmatmul.f32.gmra.mxu0 %v6281
      %v6393 = vpop.f32.mrf.mxu0
      %v6394 = vadd.f32 0.0, %v6393
      %6395 = vmatmul.f32.gmra.mxu0 %v6284
      %v6396 = vpop.f32.mrf.mxu0
      %v6397 = vadd.f32 0.0, %v6396
      %6398 = vmatmul.f32.gmra.mxu0 %v6287
      %v6399 = vpop.f32.mrf.mxu0
      %v6400 = vadd.f32 0.0, %v6399
      %6401 = vmatmul.f32.gmra.mxu0 %v6290
      %v6402 = vpop.f32.mrf.mxu0
      %v6403 = vadd.f32 0.0, %v6402
      %6404 = vmatmul.f32.gmra.mxu0 %v6293
      %v6405 = vpop.f32.mrf.mxu0
      %v6406 = vadd.f32 0.0, %v6405
      %6407 = vmatmul.f32.gmra.mxu0 %v6296
      %v6408 = vpop.f32.mrf.mxu0
      %v6409 = vadd.f32 0.0, %v6408
      %6410 = vmatmul.f32.gmra.mxu0 %v6299
      %v6411 = vpop.f32.mrf.mxu0
      %v6412 = vadd.f32 0.0, %v6411
      %6413 = vmatmul.f32.gmra.mxu0 %v6302
      %v6414 = vpop.f32.mrf.mxu0
      %v6415 = vadd.f32 0.0, %v6414
      %6416 = vmatmul.f32.gmra.mxu0 %v6305
      %v6417 = vpop.f32.mrf.mxu0
      %v6418 = vadd.f32 0.0, %v6417
      %6419 = vmatmul.f32.gmra.mxu0 %v6308
      %v6420 = vpop.f32.mrf.mxu0
      %v6421 = vadd.f32 0.0, %v6420
      %6422 = vmatmul.f32.gmra.mxu0 %v6311
      %v6423 = vpop.f32.mrf.mxu0
      %v6424 = vadd.f32 0.0, %v6423
      %6425 = vmatmul.f32.gmra.mxu0 %v6314
      %v6426 = vpop.f32.mrf.mxu0
      %v6427 = vadd.f32 0.0, %v6426
      %6428 = vmatmul.f32.gmra.mxu0 %v6317
      %v6429 = vpop.f32.mrf.mxu0
      %v6430 = vadd.f32 0.0, %v6429
      %6431 = vmatmul.f32.gmra.mxu0 %v6320
      %v6432 = vpop.f32.mrf.mxu0
      %v6433 = vadd.f32 0.0, %v6432
      %6434 = vmatmul.f32.gmra.mxu0 %v6323
      %v6435 = vpop.f32.mrf.mxu0
      %v6436 = vadd.f32 0.0, %v6435
      %6437 = vmatmul.f32.gmra.mxu0 %v6326
      %v6438 = vpop.f32.mrf.mxu0
      %v6439 = vadd.f32 0.0, %v6438
      %6440 = vmatmul.f32.gmra.mxu0 %v6329
      %v6441 = vpop.f32.mrf.mxu0
      %v6442 = vadd.f32 0.0, %v6441
      %6443 = vmatmul.f32.gmra.mxu0 %v6332
      %v6444 = vpop.f32.mrf.mxu0
      %v6445 = vadd.f32 0.0, %v6444
      %6446 = vmatmul.f32.gmra.mxu0 %v6335
      %v6447 = vpop.f32.mrf.mxu0
      %v6448 = vadd.f32 0.0, %v6447
      %6449 = vmatmul.f32.gmra.mxu0 %v6338
      %v6450 = vpop.f32.mrf.mxu0
      %v6451 = vadd.f32 0.0, %v6450
      %6452 = vmatmul.f32.gmra.mxu0 %v6341
      %v6453 = vpop.f32.mrf.mxu0
      %v6454 = vadd.f32 0.0, %v6453
      %6455 = vmatmul.f32.gmra.mxu0 %v6344
      %v6456 = vpop.f32.mrf.mxu0
      %v6457 = vadd.f32 0.0, %v6456
      %6458 = vmatmul.f32.gmra.mxu0 %v6347
      %v6459 = vpop.f32.mrf.mxu0
      %v6460 = vadd.f32 0.0, %v6459
      %6461 = vmatmul.f32.gmra.mxu0 %v6350
      %v6462 = vpop.f32.mrf.mxu0
      %v6463 = vadd.f32 0.0, %v6462
      %6464 = vmatmul.f32.gmra.mxu0 %v6353
      %v6465 = vpop.f32.mrf.mxu0
      %v6466 = vadd.f32 0.0, %v6465
      %6467 = vmatmul.f32.gmra.mxu0 %v6356
      %v6468 = vpop.f32.mrf.mxu0
      %v6469 = vadd.f32 0.0, %v6468
      %6470 = vdwg.mxu0
      %v6471 = vadd.f32 %v6193, %v6376
      %v6472 = vadd.f32 %v6194, %v6379
      %v6473 = vadd.f32 %v6195, %v6382
      %v6474 = vadd.f32 %v6196, %v6385
      %v6475 = vadd.f32 %v6197, %v6388
      %v6476 = vadd.f32 %v6198, %v6391
      %v6477 = vadd.f32 %v6199, %v6394
      %v6478 = vadd.f32 %v6200, %v6397
      %v6479 = vadd.f32 %v6201, %v6400
      %v6480 = vadd.f32 %v6202, %v6403
      %v6481 = vadd.f32 %v6203, %v6406
      %v6482 = vadd.f32 %v6204, %v6409
      %v6483 = vadd.f32 %v6205, %v6412
      %v6484 = vadd.f32 %v6206, %v6415
      %v6485 = vadd.f32 %v6207, %v6418
      %v6486 = vadd.f32 %v6208, %v6421
      %v6487 = vadd.f32 %v6209, %v6424
      %v6488 = vadd.f32 %v6210, %v6427
      %v6489 = vadd.f32 %v6211, %v6430
      %v6490 = vadd.f32 %v6212, %v6433
      %v6491 = vadd.f32 %v6213, %v6436
      %v6492 = vadd.f32 %v6214, %v6439
      %v6493 = vadd.f32 %v6215, %v6442
      %v6494 = vadd.f32 %v6216, %v6445
      %v6495 = vadd.f32 %v6217, %v6448
      %v6496 = vadd.f32 %v6218, %v6451
      %v6497 = vadd.f32 %v6219, %v6454
      %v6498 = vadd.f32 %v6220, %v6457
      %v6499 = vadd.f32 %v6221, %v6460
      %v6500 = vadd.f32 %v6222, %v6463
      %v6501 = vadd.f32 %v6223, %v6466
      %v6502 = vadd.f32 %v6224, %v6469
      %v6503 = vld [vmem:[%s5390 + $0xa] sm:$0xff]
      %v6504 = vld [vmem:[%s5390 + $0x12] sm:$0xff]
      %v6505 = vld [vmem:[%s5390 + $0x2a] sm:$0xff]
      %v6506 = vld [vmem:[%s5390 + $0x32] sm:$0xff]
      %v6507 = vld [vmem:[%s5390 + $0x4a] sm:$0xff]
      %v6508 = vld [vmem:[%s5390 + $0x52] sm:$0xff]
      %v6509 = vld [vmem:[%s5390 + $0x6a] sm:$0xff]
      %v6510 = vld [vmem:[%s5390 + $0x72] sm:$0xff]
      %v6511 = vld [vmem:[%s5390 + $0x8a] sm:$0xff]
      %v6512 = vld [vmem:[%s5390 + $0x92] sm:$0xff]
      %v6513 = vld [vmem:[%s5390 + $0xaa] sm:$0xff]
      %v6514 = vld [vmem:[%s5390 + $0xb2] sm:$0xff]
      %v6515 = vld [vmem:[%s5390 + $0xca] sm:$0xff]
      %v6516 = vld [vmem:[%s5390 + $0xd2] sm:$0xff]
      %v6517 = vld [vmem:[%s5390 + $0xea] sm:$0xff]
      %v6518 = vld [vmem:[%s5390 + $0xf2] sm:$0xff]
      %v6519 = vld [vmem:[%s5390 + $0x10a] sm:$0xff]
      %v6520 = vld [vmem:[%s5390 + $0x112] sm:$0xff]
      %v6521 = vld [vmem:[%s5390 + $0x12a] sm:$0xff]
      %v6522 = vld [vmem:[%s5390 + $0x132] sm:$0xff]
      %v6523 = vld [vmem:[%s5390 + $0x14a] sm:$0xff]
      %v6524 = vld [vmem:[%s5390 + $0x152] sm:$0xff]
      %v6525 = vld [vmem:[%s5390 + $0x16a] sm:$0xff]
      %v6526 = vld [vmem:[%s5390 + $0x172] sm:$0xff]
      %v6527 = vld [vmem:[%s5390 + $0x18a] sm:$0xff]
      %v6528 = vld [vmem:[%s5390 + $0x192] sm:$0xff]
      %v6529 = vld [vmem:[%s5390 + $0x1aa] sm:$0xff]
      %v6530 = vld [vmem:[%s5390 + $0x1b2] sm:$0xff]
      %v6531 = vld [vmem:[%s5390 + $0x1ca] sm:$0xff]
      %v6532 = vld [vmem:[%s5390 + $0x1d2] sm:$0xff]
      %v6533 = vld [vmem:[%s5390 + $0x1ea] sm:$0xff]
      %v6534 = vld [vmem:[%s5390 + $0x1f2] sm:$0xff]
      %s6535 = scalar_lea.vmem %s3, 608
      %v6536 = vld [vmem:[%s6535] sm:$0xff]
      %v6537 = vld [vmem:[%s6535 + $0x8] sm:$0xff]
      %v6538 = vld [vmem:[%s6535 + $0x10] sm:$0xff]
      %v6539 = vld [vmem:[%s6535 + $0x18] sm:$0xff]
      %v6541 = vsel %vm1170, %v6503, 0
      %v6544 = vsel %vm1170, %v6504, 0
      %v6547 = vsel %vm1170, %v6505, 0
      %v6550 = vsel %vm1170, %v6506, 0
      %v6553 = vsel %vm1170, %v6507, 0
      %v6556 = vsel %vm1170, %v6508, 0
      %v6559 = vsel %vm1170, %v6509, 0
      %v6562 = vsel %vm1170, %v6510, 0
      %v6565 = vsel %vm1170, %v6511, 0
      %v6568 = vsel %vm1170, %v6512, 0
      %v6571 = vsel %vm1170, %v6513, 0
      %v6574 = vsel %vm1170, %v6514, 0
      %v6577 = vsel %vm1170, %v6515, 0
      %v6580 = vsel %vm1170, %v6516, 0
      %v6583 = vsel %vm1170, %v6517, 0
      %v6586 = vsel %vm1170, %v6518, 0
      %v6589 = vsel %vm1170, %v6519, 0
      %v6592 = vsel %vm1170, %v6520, 0
      %v6595 = vsel %vm1170, %v6521, 0
      %v6598 = vsel %vm1170, %v6522, 0
      %v6601 = vsel %vm1170, %v6523, 0
      %v6604 = vsel %vm1170, %v6524, 0
      %v6607 = vsel %vm1170, %v6525, 0
      %v6610 = vsel %vm1170, %v6526, 0
      %v6613 = vsel %vm1170, %v6527, 0
      %v6616 = vsel %vm1170, %v6528, 0
      %v6619 = vsel %vm1170, %v6529, 0
      %v6622 = vsel %vm1170, %v6530, 0
      %v6625 = vsel %vm1170, %v6531, 0
      %v6628 = vsel %vm1170, %v6532, 0
      %v6631 = vsel %vm1170, %v6533, 0
      %v6634 = vsel %vm1170, %v6534, 0
      %6636 = vmatpush.msra.mxu0 0.0
      %6637 = vmatpush.msra.mxu0 0.0
      %6638 = vmatpush.msra.mxu0 0.0
      %6639 = vmatpush.msra.mxu0 0.0
      %6640 = vmatpush.msra.mxu0 0.0
      %6641 = vmatpush.msra.mxu0 0.0
      %6642 = vmatpush.msra.mxu0 0.0
      %6643 = vmatpush.msra.mxu0 0.0
      %6644 = vmatpush.msra.mxu0 0.0
      %6645 = vmatpush.msra.mxu0 0.0
      %6646 = vmatpush.msra.mxu0 0.0
      %6647 = vmatpush.msra.mxu0 0.0
      %6648 = vmatpush.msra.mxu0 %v6539
      %6649 = vmatpush.msra.mxu0 %v6538
      %6650 = vmatpush.msra.mxu0 %v6537
      %6651 = vmatpush.msra.mxu0 %v6536
      %6652 = vmatmul.f32.gmra.mxu0 %v6541
      %v6653 = vpop.f32.mrf.mxu0
      %v6654 = vadd.f32 0.0, %v6653
      %6655 = vmatmul.f32.gmra.mxu0 %v6544
      %v6656 = vpop.f32.mrf.mxu0
      %v6657 = vadd.f32 0.0, %v6656
      %6658 = vmatmul.f32.gmra.mxu0 %v6547
      %v6659 = vpop.f32.mrf.mxu0
      %v6660 = vadd.f32 0.0, %v6659
      %6661 = vmatmul.f32.gmra.mxu0 %v6550
      %v6662 = vpop.f32.mrf.mxu0
      %v6663 = vadd.f32 0.0, %v6662
      %6664 = vmatmul.f32.gmra.mxu0 %v6553
      %v6665 = vpop.f32.mrf.mxu0
      %v6666 = vadd.f32 0.0, %v6665
      %6667 = vmatmul.f32.gmra.mxu0 %v6556
      %v6668 = vpop.f32.mrf.mxu0
      %v6669 = vadd.f32 0.0, %v6668
      %6670 = vmatmul.f32.gmra.mxu0 %v6559
      %v6671 = vpop.f32.mrf.mxu0
      %v6672 = vadd.f32 0.0, %v6671
      %6673 = vmatmul.f32.gmra.mxu0 %v6562
      %v6674 = vpop.f32.mrf.mxu0
      %v6675 = vadd.f32 0.0, %v6674
      %6676 = vmatmul.f32.gmra.mxu0 %v6565
      %v6677 = vpop.f32.mrf.mxu0
      %v6678 = vadd.f32 0.0, %v6677
      %6679 = vmatmul.f32.gmra.mxu0 %v6568
      %v6680 = vpop.f32.mrf.mxu0
      %v6681 = vadd.f32 0.0, %v6680
      %6682 = vmatmul.f32.gmra.mxu0 %v6571
      %v6683 = vpop.f32.mrf.mxu0
      %v6684 = vadd.f32 0.0, %v6683
      %6685 = vmatmul.f32.gmra.mxu0 %v6574
      %v6686 = vpop.f32.mrf.mxu0
      %v6687 = vadd.f32 0.0, %v6686
      %6688 = vmatmul.f32.gmra.mxu0 %v6577
      %v6689 = vpop.f32.mrf.mxu0
      %v6690 = vadd.f32 0.0, %v6689
      %6691 = vmatmul.f32.gmra.mxu0 %v6580
      %v6692 = vpop.f32.mrf.mxu0
      %v6693 = vadd.f32 0.0, %v6692
      %6694 = vmatmul.f32.gmra.mxu0 %v6583
      %v6695 = vpop.f32.mrf.mxu0
      %v6696 = vadd.f32 0.0, %v6695
      %6697 = vmatmul.f32.gmra.mxu0 %v6586
      %v6698 = vpop.f32.mrf.mxu0
      %v6699 = vadd.f32 0.0, %v6698
      %6700 = vmatmul.f32.gmra.mxu0 %v6589
      %v6701 = vpop.f32.mrf.mxu0
      %v6702 = vadd.f32 0.0, %v6701
      %6703 = vmatmul.f32.gmra.mxu0 %v6592
      %v6704 = vpop.f32.mrf.mxu0
      %v6705 = vadd.f32 0.0, %v6704
      %6706 = vmatmul.f32.gmra.mxu0 %v6595
      %v6707 = vpop.f32.mrf.mxu0
      %v6708 = vadd.f32 0.0, %v6707
      %6709 = vmatmul.f32.gmra.mxu0 %v6598
      %v6710 = vpop.f32.mrf.mxu0
      %v6711 = vadd.f32 0.0, %v6710
      %6712 = vmatmul.f32.gmra.mxu0 %v6601
      %v6713 = vpop.f32.mrf.mxu0
      %v6714 = vadd.f32 0.0, %v6713
      %6715 = vmatmul.f32.gmra.mxu0 %v6604
      %v6716 = vpop.f32.mrf.mxu0
      %v6717 = vadd.f32 0.0, %v6716
      %6718 = vmatmul.f32.gmra.mxu0 %v6607
      %v6719 = vpop.f32.mrf.mxu0
      %v6720 = vadd.f32 0.0, %v6719
      %6721 = vmatmul.f32.gmra.mxu0 %v6610
      %v6722 = vpop.f32.mrf.mxu0
      %v6723 = vadd.f32 0.0, %v6722
      %6724 = vmatmul.f32.gmra.mxu0 %v6613
      %v6725 = vpop.f32.mrf.mxu0
      %v6726 = vadd.f32 0.0, %v6725
      %6727 = vmatmul.f32.gmra.mxu0 %v6616
      %v6728 = vpop.f32.mrf.mxu0
      %v6729 = vadd.f32 0.0, %v6728
      %6730 = vmatmul.f32.gmra.mxu0 %v6619
      %v6731 = vpop.f32.mrf.mxu0
      %v6732 = vadd.f32 0.0, %v6731
      %6733 = vmatmul.f32.gmra.mxu0 %v6622
      %v6734 = vpop.f32.mrf.mxu0
      %v6735 = vadd.f32 0.0, %v6734
      %6736 = vmatmul.f32.gmra.mxu0 %v6625
      %v6737 = vpop.f32.mrf.mxu0
      %v6738 = vadd.f32 0.0, %v6737
      %6739 = vmatmul.f32.gmra.mxu0 %v6628
      %v6740 = vpop.f32.mrf.mxu0
      %v6741 = vadd.f32 0.0, %v6740
      %6742 = vmatmul.f32.gmra.mxu0 %v6631
      %v6743 = vpop.f32.mrf.mxu0
      %v6744 = vadd.f32 0.0, %v6743
      %6745 = vmatmul.f32.gmra.mxu0 %v6634
      %v6746 = vpop.f32.mrf.mxu0
      %v6747 = vadd.f32 0.0, %v6746
      %6748 = vdwg.mxu0
      %v6749 = vadd.f32 %v6471, %v6654
      %v6750 = vadd.f32 %v6472, %v6657
      %v6751 = vadd.f32 %v6473, %v6660
      %v6752 = vadd.f32 %v6474, %v6663
      %v6753 = vadd.f32 %v6475, %v6666
      %v6754 = vadd.f32 %v6476, %v6669
      %v6755 = vadd.f32 %v6477, %v6672
      %v6756 = vadd.f32 %v6478, %v6675
      %v6757 = vadd.f32 %v6479, %v6678
      %v6758 = vadd.f32 %v6480, %v6681
      %v6759 = vadd.f32 %v6481, %v6684
      %v6760 = vadd.f32 %v6482, %v6687
      %v6761 = vadd.f32 %v6483, %v6690
      %v6762 = vadd.f32 %v6484, %v6693
      %v6763 = vadd.f32 %v6485, %v6696
      %v6764 = vadd.f32 %v6486, %v6699
      %v6765 = vadd.f32 %v6487, %v6702
      %v6766 = vadd.f32 %v6488, %v6705
      %v6767 = vadd.f32 %v6489, %v6708
      %v6768 = vadd.f32 %v6490, %v6711
      %v6769 = vadd.f32 %v6491, %v6714
      %v6770 = vadd.f32 %v6492, %v6717
      %v6771 = vadd.f32 %v6493, %v6720
      %v6772 = vadd.f32 %v6494, %v6723
      %v6773 = vadd.f32 %v6495, %v6726
      %v6774 = vadd.f32 %v6496, %v6729
      %v6775 = vadd.f32 %v6497, %v6732
      %v6776 = vadd.f32 %v6498, %v6735
      %v6777 = vadd.f32 %v6499, %v6738
      %v6778 = vadd.f32 %v6500, %v6741
      %v6779 = vadd.f32 %v6501, %v6744
      %v6780 = vadd.f32 %v6502, %v6747
      %s6781 = scalar_lea.vmem [#allocation2], 128
      %v6782 = vld [vmem:[%s6781 + $0x6] sm:$0xff]
      %v6783 = vld [vmem:[%s6781 + $0xe] sm:$0xff]
      %v6784 = vld [vmem:[%s6781 + $0x26] sm:$0xff]
      %v6785 = vld [vmem:[%s6781 + $0x2e] sm:$0xff]
      %v6786 = vld [vmem:[%s6781 + $0x46] sm:$0xff]
      %v6787 = vld [vmem:[%s6781 + $0x4e] sm:$0xff]
      %v6788 = vld [vmem:[%s6781 + $0x66] sm:$0xff]
      %v6789 = vld [vmem:[%s6781 + $0x6e] sm:$0xff]
      %v6790 = vld [vmem:[%s6781 + $0x86] sm:$0xff]
      %v6791 = vld [vmem:[%s6781 + $0x8e] sm:$0xff]
      %v6792 = vld [vmem:[%s6781 + $0xa6] sm:$0xff]
      %v6793 = vld [vmem:[%s6781 + $0xae] sm:$0xff]
      %v6794 = vld [vmem:[%s6781 + $0xc6] sm:$0xff]
      %v6795 = vld [vmem:[%s6781 + $0xce] sm:$0xff]
      %v6796 = vld [vmem:[%s6781 + $0xe6] sm:$0xff]
      %v6797 = vld [vmem:[%s6781 + $0xee] sm:$0xff]
      %v6798 = vld [vmem:[%s6781 + $0x106] sm:$0xff]
      %v6799 = vld [vmem:[%s6781 + $0x10e] sm:$0xff]
      %v6800 = vld [vmem:[%s6781 + $0x126] sm:$0xff]
      %v6801 = vld [vmem:[%s6781 + $0x12e] sm:$0xff]
      %v6802 = vld [vmem:[%s6781 + $0x146] sm:$0xff]
      %v6803 = vld [vmem:[%s6781 + $0x14e] sm:$0xff]
      %v6804 = vld [vmem:[%s6781 + $0x166] sm:$0xff]
      %v6805 = vld [vmem:[%s6781 + $0x16e] sm:$0xff]
      %v6806 = vld [vmem:[%s6781 + $0x186] sm:$0xff]
      %v6807 = vld [vmem:[%s6781 + $0x18e] sm:$0xff]
      %v6808 = vld [vmem:[%s6781 + $0x1a6] sm:$0xff]
      %v6809 = vld [vmem:[%s6781 + $0x1ae] sm:$0xff]
      %v6810 = vld [vmem:[%s6781 + $0x1c6] sm:$0xff]
      %v6811 = vld [vmem:[%s6781 + $0x1ce] sm:$0xff]
      %v6812 = vld [vmem:[%s6781 + $0x1e6] sm:$0xff]
      %v6813 = vld [vmem:[%s6781 + $0x1ee] sm:$0xff]
      %s6814 = scalar_lea.vmem %s3, 640
      %v6815 = vld [vmem:[%s6814] sm:$0xff]
      %v6816 = vld [vmem:[%s6814 + $0x8] sm:$0xff]
      %v6817 = vld [vmem:[%s6814 + $0x10] sm:$0xff]
      %v6818 = vld [vmem:[%s6814 + $0x18] sm:$0xff]
      %v6820 = vsel %vm1170, %v6782, 0
      %v6823 = vsel %vm1170, %v6783, 0
      %v6826 = vsel %vm1170, %v6784, 0
      %v6829 = vsel %vm1170, %v6785, 0
      %v6832 = vsel %vm1170, %v6786, 0
      %v6835 = vsel %vm1170, %v6787, 0
      %v6838 = vsel %vm1170, %v6788, 0
      %v6841 = vsel %vm1170, %v6789, 0
      %v6844 = vsel %vm1170, %v6790, 0
      %v6847 = vsel %vm1170, %v6791, 0
      %v6850 = vsel %vm1170, %v6792, 0
      %v6853 = vsel %vm1170, %v6793, 0
      %v6856 = vsel %vm1170, %v6794, 0
      %v6859 = vsel %vm1170, %v6795, 0
      %v6862 = vsel %vm1170, %v6796, 0
      %v6865 = vsel %vm1170, %v6797, 0
      %v6868 = vsel %vm1170, %v6798, 0
      %v6871 = vsel %vm1170, %v6799, 0
      %v6874 = vsel %vm1170, %v6800, 0
      %v6877 = vsel %vm1170, %v6801, 0
      %v6880 = vsel %vm1170, %v6802, 0
      %v6883 = vsel %vm1170, %v6803, 0
      %v6886 = vsel %vm1170, %v6804, 0
      %v6889 = vsel %vm1170, %v6805, 0
      %v6892 = vsel %vm1170, %v6806, 0
      %v6895 = vsel %vm1170, %v6807, 0
      %v6898 = vsel %vm1170, %v6808, 0
      %v6901 = vsel %vm1170, %v6809, 0
      %v6904 = vsel %vm1170, %v6810, 0
      %v6907 = vsel %vm1170, %v6811, 0
      %v6910 = vsel %vm1170, %v6812, 0
      %v6913 = vsel %vm1170, %v6813, 0
      %6915 = vmatpush.msra.mxu0 0.0
      %6916 = vmatpush.msra.mxu0 0.0
      %6917 = vmatpush.msra.mxu0 0.0
      %6918 = vmatpush.msra.mxu0 0.0
      %6919 = vmatpush.msra.mxu0 0.0
      %6920 = vmatpush.msra.mxu0 0.0
      %6921 = vmatpush.msra.mxu0 0.0
      %6922 = vmatpush.msra.mxu0 0.0
      %6923 = vmatpush.msra.mxu0 0.0
      %6924 = vmatpush.msra.mxu0 0.0
      %6925 = vmatpush.msra.mxu0 0.0
      %6926 = vmatpush.msra.mxu0 0.0
      %6927 = vmatpush.msra.mxu0 %v6818
      %6928 = vmatpush.msra.mxu0 %v6817
      %6929 = vmatpush.msra.mxu0 %v6816
      %6930 = vmatpush.msra.mxu0 %v6815
      %6931 = vmatmul.f32.gmra.mxu0 %v6820
      %v6932 = vpop.f32.mrf.mxu0
      %v6933 = vadd.f32 0.0, %v6932
      %6934 = vmatmul.f32.gmra.mxu0 %v6823
      %v6935 = vpop.f32.mrf.mxu0
      %v6936 = vadd.f32 0.0, %v6935
      %6937 = vmatmul.f32.gmra.mxu0 %v6826
      %v6938 = vpop.f32.mrf.mxu0
      %v6939 = vadd.f32 0.0, %v6938
      %6940 = vmatmul.f32.gmra.mxu0 %v6829
      %v6941 = vpop.f32.mrf.mxu0
      %v6942 = vadd.f32 0.0, %v6941
      %6943 = vmatmul.f32.gmra.mxu0 %v6832
      %v6944 = vpop.f32.mrf.mxu0
      %v6945 = vadd.f32 0.0, %v6944
      %6946 = vmatmul.f32.gmra.mxu0 %v6835
      %v6947 = vpop.f32.mrf.mxu0
      %v6948 = vadd.f32 0.0, %v6947
      %6949 = vmatmul.f32.gmra.mxu0 %v6838
      %v6950 = vpop.f32.mrf.mxu0
      %v6951 = vadd.f32 0.0, %v6950
      %6952 = vmatmul.f32.gmra.mxu0 %v6841
      %v6953 = vpop.f32.mrf.mxu0
      %v6954 = vadd.f32 0.0, %v6953
      %6955 = vmatmul.f32.gmra.mxu0 %v6844
      %v6956 = vpop.f32.mrf.mxu0
      %v6957 = vadd.f32 0.0, %v6956
      %6958 = vmatmul.f32.gmra.mxu0 %v6847
      %v6959 = vpop.f32.mrf.mxu0
      %v6960 = vadd.f32 0.0, %v6959
      %6961 = vmatmul.f32.gmra.mxu0 %v6850
      %v6962 = vpop.f32.mrf.mxu0
      %v6963 = vadd.f32 0.0, %v6962
      %6964 = vmatmul.f32.gmra.mxu0 %v6853
      %v6965 = vpop.f32.mrf.mxu0
      %v6966 = vadd.f32 0.0, %v6965
      %6967 = vmatmul.f32.gmra.mxu0 %v6856
      %v6968 = vpop.f32.mrf.mxu0
      %v6969 = vadd.f32 0.0, %v6968
      %6970 = vmatmul.f32.gmra.mxu0 %v6859
      %v6971 = vpop.f32.mrf.mxu0
      %v6972 = vadd.f32 0.0, %v6971
      %6973 = vmatmul.f32.gmra.mxu0 %v6862
      %v6974 = vpop.f32.mrf.mxu0
      %v6975 = vadd.f32 0.0, %v6974
      %6976 = vmatmul.f32.gmra.mxu0 %v6865
      %v6977 = vpop.f32.mrf.mxu0
      %v6978 = vadd.f32 0.0, %v6977
      %6979 = vmatmul.f32.gmra.mxu0 %v6868
      %v6980 = vpop.f32.mrf.mxu0
      %v6981 = vadd.f32 0.0, %v6980
      %6982 = vmatmul.f32.gmra.mxu0 %v6871
      %v6983 = vpop.f32.mrf.mxu0
      %v6984 = vadd.f32 0.0, %v6983
      %6985 = vmatmul.f32.gmra.mxu0 %v6874
      %v6986 = vpop.f32.mrf.mxu0
      %v6987 = vadd.f32 0.0, %v6986
      %6988 = vmatmul.f32.gmra.mxu0 %v6877
      %v6989 = vpop.f32.mrf.mxu0
      %v6990 = vadd.f32 0.0, %v6989
      %6991 = vmatmul.f32.gmra.mxu0 %v6880
      %v6992 = vpop.f32.mrf.mxu0
      %v6993 = vadd.f32 0.0, %v6992
      %6994 = vmatmul.f32.gmra.mxu0 %v6883
      %v6995 = vpop.f32.mrf.mxu0
      %v6996 = vadd.f32 0.0, %v6995
      %6997 = vmatmul.f32.gmra.mxu0 %v6886
      %v6998 = vpop.f32.mrf.mxu0
      %v6999 = vadd.f32 0.0, %v6998
      %7000 = vmatmul.f32.gmra.mxu0 %v6889
      %v7001 = vpop.f32.mrf.mxu0
      %v7002 = vadd.f32 0.0, %v7001
      %7003 = vmatmul.f32.gmra.mxu0 %v6892
      %v7004 = vpop.f32.mrf.mxu0
      %v7005 = vadd.f32 0.0, %v7004
      %7006 = vmatmul.f32.gmra.mxu0 %v6895
      %v7007 = vpop.f32.mrf.mxu0
      %v7008 = vadd.f32 0.0, %v7007
      %7009 = vmatmul.f32.gmra.mxu0 %v6898
      %v7010 = vpop.f32.mrf.mxu0
      %v7011 = vadd.f32 0.0, %v7010
      %7012 = vmatmul.f32.gmra.mxu0 %v6901
      %v7013 = vpop.f32.mrf.mxu0
      %v7014 = vadd.f32 0.0, %v7013
      %7015 = vmatmul.f32.gmra.mxu0 %v6904
      %v7016 = vpop.f32.mrf.mxu0
      %v7017 = vadd.f32 0.0, %v7016
      %7018 = vmatmul.f32.gmra.mxu0 %v6907
      %v7019 = vpop.f32.mrf.mxu0
      %v7020 = vadd.f32 0.0, %v7019
      %7021 = vmatmul.f32.gmra.mxu0 %v6910
      %v7022 = vpop.f32.mrf.mxu0
      %v7023 = vadd.f32 0.0, %v7022
      %7024 = vmatmul.f32.gmra.mxu0 %v6913
      %v7025 = vpop.f32.mrf.mxu0
      %v7026 = vadd.f32 0.0, %v7025
      %7027 = vdwg.mxu0
      %v7028 = vadd.f32 %v6749, %v6933
      %v7029 = vadd.f32 %v6750, %v6936
      %v7030 = vadd.f32 %v6751, %v6939
      %v7031 = vadd.f32 %v6752, %v6942
      %v7032 = vadd.f32 %v6753, %v6945
      %v7033 = vadd.f32 %v6754, %v6948
      %v7034 = vadd.f32 %v6755, %v6951
      %v7035 = vadd.f32 %v6756, %v6954
      %v7036 = vadd.f32 %v6757, %v6957
      %v7037 = vadd.f32 %v6758, %v6960
      %v7038 = vadd.f32 %v6759, %v6963
      %v7039 = vadd.f32 %v6760, %v6966
      %v7040 = vadd.f32 %v6761, %v6969
      %v7041 = vadd.f32 %v6762, %v6972
      %v7042 = vadd.f32 %v6763, %v6975
      %v7043 = vadd.f32 %v6764, %v6978
      %v7044 = vadd.f32 %v6765, %v6981
      %v7045 = vadd.f32 %v6766, %v6984
      %v7046 = vadd.f32 %v6767, %v6987
      %v7047 = vadd.f32 %v6768, %v6990
      %v7048 = vadd.f32 %v6769, %v6993
      %v7049 = vadd.f32 %v6770, %v6996
      %v7050 = vadd.f32 %v6771, %v6999
      %v7051 = vadd.f32 %v6772, %v7002
      %v7052 = vadd.f32 %v6773, %v7005
      %v7053 = vadd.f32 %v6774, %v7008
      %v7054 = vadd.f32 %v6775, %v7011
      %v7055 = vadd.f32 %v6776, %v7014
      %v7056 = vadd.f32 %v6777, %v7017
      %v7057 = vadd.f32 %v6778, %v7020
      %v7058 = vadd.f32 %v6779, %v7023
      %v7059 = vadd.f32 %v6780, %v7026
      %v7060 = vld [vmem:[%s6781 + $0x7] sm:$0xff]
      %v7061 = vld [vmem:[%s6781 + $0xf] sm:$0xff]
      %v7062 = vld [vmem:[%s6781 + $0x27] sm:$0xff]
      %v7063 = vld [vmem:[%s6781 + $0x2f] sm:$0xff]
      %v7064 = vld [vmem:[%s6781 + $0x47] sm:$0xff]
      %v7065 = vld [vmem:[%s6781 + $0x4f] sm:$0xff]
      %v7066 = vld [vmem:[%s6781 + $0x67] sm:$0xff]
      %v7067 = vld [vmem:[%s6781 + $0x6f] sm:$0xff]
      %v7068 = vld [vmem:[%s6781 + $0x87] sm:$0xff]
      %v7069 = vld [vmem:[%s6781 + $0x8f] sm:$0xff]
      %v7070 = vld [vmem:[%s6781 + $0xa7] sm:$0xff]
      %v7071 = vld [vmem:[%s6781 + $0xaf] sm:$0xff]
      %v7072 = vld [vmem:[%s6781 + $0xc7] sm:$0xff]
      %v7073 = vld [vmem:[%s6781 + $0xcf] sm:$0xff]
      %v7074 = vld [vmem:[%s6781 + $0xe7] sm:$0xff]
      %v7075 = vld [vmem:[%s6781 + $0xef] sm:$0xff]
      %v7076 = vld [vmem:[%s6781 + $0x107] sm:$0xff]
      %v7077 = vld [vmem:[%s6781 + $0x10f] sm:$0xff]
      %v7078 = vld [vmem:[%s6781 + $0x127] sm:$0xff]
      %v7079 = vld [vmem:[%s6781 + $0x12f] sm:$0xff]
      %v7080 = vld [vmem:[%s6781 + $0x147] sm:$0xff]
      %v7081 = vld [vmem:[%s6781 + $0x14f] sm:$0xff]
      %v7082 = vld [vmem:[%s6781 + $0x167] sm:$0xff]
      %v7083 = vld [vmem:[%s6781 + $0x16f] sm:$0xff]
      %v7084 = vld [vmem:[%s6781 + $0x187] sm:$0xff]
      %v7085 = vld [vmem:[%s6781 + $0x18f] sm:$0xff]
      %v7086 = vld [vmem:[%s6781 + $0x1a7] sm:$0xff]
      %v7087 = vld [vmem:[%s6781 + $0x1af] sm:$0xff]
      %v7088 = vld [vmem:[%s6781 + $0x1c7] sm:$0xff]
      %v7089 = vld [vmem:[%s6781 + $0x1cf] sm:$0xff]
      %v7090 = vld [vmem:[%s6781 + $0x1e7] sm:$0xff]
      %v7091 = vld [vmem:[%s6781 + $0x1ef] sm:$0xff]
      %s7092 = scalar_lea.vmem %s3, 672
      %v7093 = vld [vmem:[%s7092] sm:$0xff]
      %v7094 = vld [vmem:[%s7092 + $0x8] sm:$0xff]
      %v7095 = vld [vmem:[%s7092 + $0x10] sm:$0xff]
      %v7096 = vld [vmem:[%s7092 + $0x18] sm:$0xff]
      %v7098 = vsel %vm1170, %v7060, 0
      %v7101 = vsel %vm1170, %v7061, 0
      %v7104 = vsel %vm1170, %v7062, 0
      %v7107 = vsel %vm1170, %v7063, 0
      %v7110 = vsel %vm1170, %v7064, 0
      %v7113 = vsel %vm1170, %v7065, 0
      %v7116 = vsel %vm1170, %v7066, 0
      %v7119 = vsel %vm1170, %v7067, 0
      %v7122 = vsel %vm1170, %v7068, 0
      %v7125 = vsel %vm1170, %v7069, 0
      %v7128 = vsel %vm1170, %v7070, 0
      %v7131 = vsel %vm1170, %v7071, 0
      %v7134 = vsel %vm1170, %v7072, 0
      %v7137 = vsel %vm1170, %v7073, 0
      %v7140 = vsel %vm1170, %v7074, 0
      %v7143 = vsel %vm1170, %v7075, 0
      %v7146 = vsel %vm1170, %v7076, 0
      %v7149 = vsel %vm1170, %v7077, 0
      %v7152 = vsel %vm1170, %v7078, 0
      %v7155 = vsel %vm1170, %v7079, 0
      %v7158 = vsel %vm1170, %v7080, 0
      %v7161 = vsel %vm1170, %v7081, 0
      %v7164 = vsel %vm1170, %v7082, 0
      %v7167 = vsel %vm1170, %v7083, 0
      %v7170 = vsel %vm1170, %v7084, 0
      %v7173 = vsel %vm1170, %v7085, 0
      %v7176 = vsel %vm1170, %v7086, 0
      %v7179 = vsel %vm1170, %v7087, 0
      %v7182 = vsel %vm1170, %v7088, 0
      %v7185 = vsel %vm1170, %v7089, 0
      %v7188 = vsel %vm1170, %v7090, 0
      %v7191 = vsel %vm1170, %v7091, 0
      %7193 = vmatpush.msra.mxu0 0.0
      %7194 = vmatpush.msra.mxu0 0.0
      %7195 = vmatpush.msra.mxu0 0.0
      %7196 = vmatpush.msra.mxu0 0.0
      %7197 = vmatpush.msra.mxu0 0.0
      %7198 = vmatpush.msra.mxu0 0.0
      %7199 = vmatpush.msra.mxu0 0.0
      %7200 = vmatpush.msra.mxu0 0.0
      %7201 = vmatpush.msra.mxu0 0.0
      %7202 = vmatpush.msra.mxu0 0.0
      %7203 = vmatpush.msra.mxu0 0.0
      %7204 = vmatpush.msra.mxu0 0.0
      %7205 = vmatpush.msra.mxu0 %v7096
      %7206 = vmatpush.msra.mxu0 %v7095
      %7207 = vmatpush.msra.mxu0 %v7094
      %7208 = vmatpush.msra.mxu0 %v7093
      %7209 = vmatmul.f32.gmra.mxu0 %v7098
      %v7210 = vpop.f32.mrf.mxu0
      %v7211 = vadd.f32 0.0, %v7210
      %7212 = vmatmul.f32.gmra.mxu0 %v7101
      %v7213 = vpop.f32.mrf.mxu0
      %v7214 = vadd.f32 0.0, %v7213
      %7215 = vmatmul.f32.gmra.mxu0 %v7104
      %v7216 = vpop.f32.mrf.mxu0
      %v7217 = vadd.f32 0.0, %v7216
      %7218 = vmatmul.f32.gmra.mxu0 %v7107
      %v7219 = vpop.f32.mrf.mxu0
      %v7220 = vadd.f32 0.0, %v7219
      %7221 = vmatmul.f32.gmra.mxu0 %v7110
      %v7222 = vpop.f32.mrf.mxu0
      %v7223 = vadd.f32 0.0, %v7222
      %7224 = vmatmul.f32.gmra.mxu0 %v7113
      %v7225 = vpop.f32.mrf.mxu0
      %v7226 = vadd.f32 0.0, %v7225
      %7227 = vmatmul.f32.gmra.mxu0 %v7116
      %v7228 = vpop.f32.mrf.mxu0
      %v7229 = vadd.f32 0.0, %v7228
      %7230 = vmatmul.f32.gmra.mxu0 %v7119
      %v7231 = vpop.f32.mrf.mxu0
      %v7232 = vadd.f32 0.0, %v7231
      %7233 = vmatmul.f32.gmra.mxu0 %v7122
      %v7234 = vpop.f32.mrf.mxu0
      %v7235 = vadd.f32 0.0, %v7234
      %7236 = vmatmul.f32.gmra.mxu0 %v7125
      %v7237 = vpop.f32.mrf.mxu0
      %v7238 = vadd.f32 0.0, %v7237
      %7239 = vmatmul.f32.gmra.mxu0 %v7128
      %v7240 = vpop.f32.mrf.mxu0
      %v7241 = vadd.f32 0.0, %v7240
      %7242 = vmatmul.f32.gmra.mxu0 %v7131
      %v7243 = vpop.f32.mrf.mxu0
      %v7244 = vadd.f32 0.0, %v7243
      %7245 = vmatmul.f32.gmra.mxu0 %v7134
      %v7246 = vpop.f32.mrf.mxu0
      %v7247 = vadd.f32 0.0, %v7246
      %7248 = vmatmul.f32.gmra.mxu0 %v7137
      %v7249 = vpop.f32.mrf.mxu0
      %v7250 = vadd.f32 0.0, %v7249
      %7251 = vmatmul.f32.gmra.mxu0 %v7140
      %v7252 = vpop.f32.mrf.mxu0
      %v7253 = vadd.f32 0.0, %v7252
      %7254 = vmatmul.f32.gmra.mxu0 %v7143
      %v7255 = vpop.f32.mrf.mxu0
      %v7256 = vadd.f32 0.0, %v7255
      %7257 = vmatmul.f32.gmra.mxu0 %v7146
      %v7258 = vpop.f32.mrf.mxu0
      %v7259 = vadd.f32 0.0, %v7258
      %7260 = vmatmul.f32.gmra.mxu0 %v7149
      %v7261 = vpop.f32.mrf.mxu0
      %v7262 = vadd.f32 0.0, %v7261
      %7263 = vmatmul.f32.gmra.mxu0 %v7152
      %v7264 = vpop.f32.mrf.mxu0
      %v7265 = vadd.f32 0.0, %v7264
      %7266 = vmatmul.f32.gmra.mxu0 %v7155
      %v7267 = vpop.f32.mrf.mxu0
      %v7268 = vadd.f32 0.0, %v7267
      %7269 = vmatmul.f32.gmra.mxu0 %v7158
      %v7270 = vpop.f32.mrf.mxu0
      %v7271 = vadd.f32 0.0, %v7270
      %7272 = vmatmul.f32.gmra.mxu0 %v7161
      %v7273 = vpop.f32.mrf.mxu0
      %v7274 = vadd.f32 0.0, %v7273
      %7275 = vmatmul.f32.gmra.mxu0 %v7164
      %v7276 = vpop.f32.mrf.mxu0
      %v7277 = vadd.f32 0.0, %v7276
      %7278 = vmatmul.f32.gmra.mxu0 %v7167
      %v7279 = vpop.f32.mrf.mxu0
      %v7280 = vadd.f32 0.0, %v7279
      %7281 = vmatmul.f32.gmra.mxu0 %v7170
      %v7282 = vpop.f32.mrf.mxu0
      %v7283 = vadd.f32 0.0, %v7282
      %7284 = vmatmul.f32.gmra.mxu0 %v7173
      %v7285 = vpop.f32.mrf.mxu0
      %v7286 = vadd.f32 0.0, %v7285
      %7287 = vmatmul.f32.gmra.mxu0 %v7176
      %v7288 = vpop.f32.mrf.mxu0
      %v7289 = vadd.f32 0.0, %v7288
      %7290 = vmatmul.f32.gmra.mxu0 %v7179
      %v7291 = vpop.f32.mrf.mxu0
      %v7292 = vadd.f32 0.0, %v7291
      %7293 = vmatmul.f32.gmra.mxu0 %v7182
      %v7294 = vpop.f32.mrf.mxu0
      %v7295 = vadd.f32 0.0, %v7294
      %7296 = vmatmul.f32.gmra.mxu0 %v7185
      %v7297 = vpop.f32.mrf.mxu0
      %v7298 = vadd.f32 0.0, %v7297
      %7299 = vmatmul.f32.gmra.mxu0 %v7188
      %v7300 = vpop.f32.mrf.mxu0
      %v7301 = vadd.f32 0.0, %v7300
      %7302 = vmatmul.f32.gmra.mxu0 %v7191
      %v7303 = vpop.f32.mrf.mxu0
      %v7304 = vadd.f32 0.0, %v7303
      %7305 = vdwg.mxu0
      %v7306 = vadd.f32 %v7028, %v7211
      %v7307 = vadd.f32 %v7029, %v7214
      %v7308 = vadd.f32 %v7030, %v7217
      %v7309 = vadd.f32 %v7031, %v7220
      %v7310 = vadd.f32 %v7032, %v7223
      %v7311 = vadd.f32 %v7033, %v7226
      %v7312 = vadd.f32 %v7034, %v7229
      %v7313 = vadd.f32 %v7035, %v7232
      %v7314 = vadd.f32 %v7036, %v7235
      %v7315 = vadd.f32 %v7037, %v7238
      %v7316 = vadd.f32 %v7038, %v7241
      %v7317 = vadd.f32 %v7039, %v7244
      %v7318 = vadd.f32 %v7040, %v7247
      %v7319 = vadd.f32 %v7041, %v7250
      %v7320 = vadd.f32 %v7042, %v7253
      %v7321 = vadd.f32 %v7043, %v7256
      %v7322 = vadd.f32 %v7044, %v7259
      %v7323 = vadd.f32 %v7045, %v7262
      %v7324 = vadd.f32 %v7046, %v7265
      %v7325 = vadd.f32 %v7047, %v7268
      %v7326 = vadd.f32 %v7048, %v7271
      %v7327 = vadd.f32 %v7049, %v7274
      %v7328 = vadd.f32 %v7050, %v7277
      %v7329 = vadd.f32 %v7051, %v7280
      %v7330 = vadd.f32 %v7052, %v7283
      %v7331 = vadd.f32 %v7053, %v7286
      %v7332 = vadd.f32 %v7054, %v7289
      %v7333 = vadd.f32 %v7055, %v7292
      %v7334 = vadd.f32 %v7056, %v7295
      %v7335 = vadd.f32 %v7057, %v7298
      %v7336 = vadd.f32 %v7058, %v7301
      %v7337 = vadd.f32 %v7059, %v7304
      %v7338 = vld [vmem:[%s6781 + $0x8] sm:$0xff]
      %v7339 = vld [vmem:[%s6781 + $0x10] sm:$0xff]
      %v7340 = vld [vmem:[%s6781 + $0x28] sm:$0xff]
      %v7341 = vld [vmem:[%s6781 + $0x30] sm:$0xff]
      %v7342 = vld [vmem:[%s6781 + $0x48] sm:$0xff]
      %v7343 = vld [vmem:[%s6781 + $0x50] sm:$0xff]
      %v7344 = vld [vmem:[%s6781 + $0x68] sm:$0xff]
      %v7345 = vld [vmem:[%s6781 + $0x70] sm:$0xff]
      %v7346 = vld [vmem:[%s6781 + $0x88] sm:$0xff]
      %v7347 = vld [vmem:[%s6781 + $0x90] sm:$0xff]
      %v7348 = vld [vmem:[%s6781 + $0xa8] sm:$0xff]
      %v7349 = vld [vmem:[%s6781 + $0xb0] sm:$0xff]
      %v7350 = vld [vmem:[%s6781 + $0xc8] sm:$0xff]
      %v7351 = vld [vmem:[%s6781 + $0xd0] sm:$0xff]
      %v7352 = vld [vmem:[%s6781 + $0xe8] sm:$0xff]
      %v7353 = vld [vmem:[%s6781 + $0xf0] sm:$0xff]
      %v7354 = vld [vmem:[%s6781 + $0x108] sm:$0xff]
      %v7355 = vld [vmem:[%s6781 + $0x110] sm:$0xff]
      %v7356 = vld [vmem:[%s6781 + $0x128] sm:$0xff]
      %v7357 = vld [vmem:[%s6781 + $0x130] sm:$0xff]
      %v7358 = vld [vmem:[%s6781 + $0x148] sm:$0xff]
      %v7359 = vld [vmem:[%s6781 + $0x150] sm:$0xff]
      %v7360 = vld [vmem:[%s6781 + $0x168] sm:$0xff]
      %v7361 = vld [vmem:[%s6781 + $0x170] sm:$0xff]
      %v7362 = vld [vmem:[%s6781 + $0x188] sm:$0xff]
      %v7363 = vld [vmem:[%s6781 + $0x190] sm:$0xff]
      %v7364 = vld [vmem:[%s6781 + $0x1a8] sm:$0xff]
      %v7365 = vld [vmem:[%s6781 + $0x1b0] sm:$0xff]
      %v7366 = vld [vmem:[%s6781 + $0x1c8] sm:$0xff]
      %v7367 = vld [vmem:[%s6781 + $0x1d0] sm:$0xff]
      %v7368 = vld [vmem:[%s6781 + $0x1e8] sm:$0xff]
      %v7369 = vld [vmem:[%s6781 + $0x1f0] sm:$0xff]
      %s7370 = scalar_lea.vmem %s3, 704
      %v7371 = vld [vmem:[%s7370] sm:$0xff]
      %v7372 = vld [vmem:[%s7370 + $0x8] sm:$0xff]
      %v7373 = vld [vmem:[%s7370 + $0x10] sm:$0xff]
      %v7374 = vld [vmem:[%s7370 + $0x18] sm:$0xff]
      %v7376 = vsel %vm1170, %v7338, 0
      %v7379 = vsel %vm1170, %v7339, 0
      %v7382 = vsel %vm1170, %v7340, 0
      %v7385 = vsel %vm1170, %v7341, 0
      %v7388 = vsel %vm1170, %v7342, 0
      %v7391 = vsel %vm1170, %v7343, 0
      %v7394 = vsel %vm1170, %v7344, 0
      %v7397 = vsel %vm1170, %v7345, 0
      %v7400 = vsel %vm1170, %v7346, 0
      %v7403 = vsel %vm1170, %v7347, 0
      %v7406 = vsel %vm1170, %v7348, 0
      %v7409 = vsel %vm1170, %v7349, 0
      %v7412 = vsel %vm1170, %v7350, 0
      %v7415 = vsel %vm1170, %v7351, 0
      %v7418 = vsel %vm1170, %v7352, 0
      %v7421 = vsel %vm1170, %v7353, 0
      %v7424 = vsel %vm1170, %v7354, 0
      %v7427 = vsel %vm1170, %v7355, 0
      %v7430 = vsel %vm1170, %v7356, 0
      %v7433 = vsel %vm1170, %v7357, 0
      %v7436 = vsel %vm1170, %v7358, 0
      %v7439 = vsel %vm1170, %v7359, 0
      %v7442 = vsel %vm1170, %v7360, 0
      %v7445 = vsel %vm1170, %v7361, 0
      %v7448 = vsel %vm1170, %v7362, 0
      %v7451 = vsel %vm1170, %v7363, 0
      %v7454 = vsel %vm1170, %v7364, 0
      %v7457 = vsel %vm1170, %v7365, 0
      %v7460 = vsel %vm1170, %v7366, 0
      %v7463 = vsel %vm1170, %v7367, 0
      %v7466 = vsel %vm1170, %v7368, 0
      %v7469 = vsel %vm1170, %v7369, 0
      %7471 = vmatpush.msra.mxu0 0.0
      %7472 = vmatpush.msra.mxu0 0.0
      %7473 = vmatpush.msra.mxu0 0.0
      %7474 = vmatpush.msra.mxu0 0.0
      %7475 = vmatpush.msra.mxu0 0.0
      %7476 = vmatpush.msra.mxu0 0.0
      %7477 = vmatpush.msra.mxu0 0.0
      %7478 = vmatpush.msra.mxu0 0.0
      %7479 = vmatpush.msra.mxu0 0.0
      %7480 = vmatpush.msra.mxu0 0.0
      %7481 = vmatpush.msra.mxu0 0.0
      %7482 = vmatpush.msra.mxu0 0.0
      %7483 = vmatpush.msra.mxu0 %v7374
      %7484 = vmatpush.msra.mxu0 %v7373
      %7485 = vmatpush.msra.mxu0 %v7372
      %7486 = vmatpush.msra.mxu0 %v7371
      %7487 = vmatmul.f32.gmra.mxu0 %v7376
      %v7488 = vpop.f32.mrf.mxu0
      %v7489 = vadd.f32 0.0, %v7488
      %7490 = vmatmul.f32.gmra.mxu0 %v7379
      %v7491 = vpop.f32.mrf.mxu0
      %v7492 = vadd.f32 0.0, %v7491
      %7493 = vmatmul.f32.gmra.mxu0 %v7382
      %v7494 = vpop.f32.mrf.mxu0
      %v7495 = vadd.f32 0.0, %v7494
      %7496 = vmatmul.f32.gmra.mxu0 %v7385
      %v7497 = vpop.f32.mrf.mxu0
      %v7498 = vadd.f32 0.0, %v7497
      %7499 = vmatmul.f32.gmra.mxu0 %v7388
      %v7500 = vpop.f32.mrf.mxu0
      %v7501 = vadd.f32 0.0, %v7500
      %7502 = vmatmul.f32.gmra.mxu0 %v7391
      %v7503 = vpop.f32.mrf.mxu0
      %v7504 = vadd.f32 0.0, %v7503
      %7505 = vmatmul.f32.gmra.mxu0 %v7394
      %v7506 = vpop.f32.mrf.mxu0
      %v7507 = vadd.f32 0.0, %v7506
      %7508 = vmatmul.f32.gmra.mxu0 %v7397
      %v7509 = vpop.f32.mrf.mxu0
      %v7510 = vadd.f32 0.0, %v7509
      %7511 = vmatmul.f32.gmra.mxu0 %v7400
      %v7512 = vpop.f32.mrf.mxu0
      %v7513 = vadd.f32 0.0, %v7512
      %7514 = vmatmul.f32.gmra.mxu0 %v7403
      %v7515 = vpop.f32.mrf.mxu0
      %v7516 = vadd.f32 0.0, %v7515
      %7517 = vmatmul.f32.gmra.mxu0 %v7406
      %v7518 = vpop.f32.mrf.mxu0
      %v7519 = vadd.f32 0.0, %v7518
      %7520 = vmatmul.f32.gmra.mxu0 %v7409
      %v7521 = vpop.f32.mrf.mxu0
      %v7522 = vadd.f32 0.0, %v7521
      %7523 = vmatmul.f32.gmra.mxu0 %v7412
      %v7524 = vpop.f32.mrf.mxu0
      %v7525 = vadd.f32 0.0, %v7524
      %7526 = vmatmul.f32.gmra.mxu0 %v7415
      %v7527 = vpop.f32.mrf.mxu0
      %v7528 = vadd.f32 0.0, %v7527
      %7529 = vmatmul.f32.gmra.mxu0 %v7418
      %v7530 = vpop.f32.mrf.mxu0
      %v7531 = vadd.f32 0.0, %v7530
      %7532 = vmatmul.f32.gmra.mxu0 %v7421
      %v7533 = vpop.f32.mrf.mxu0
      %v7534 = vadd.f32 0.0, %v7533
      %7535 = vmatmul.f32.gmra.mxu0 %v7424
      %v7536 = vpop.f32.mrf.mxu0
      %v7537 = vadd.f32 0.0, %v7536
      %7538 = vmatmul.f32.gmra.mxu0 %v7427
      %v7539 = vpop.f32.mrf.mxu0
      %v7540 = vadd.f32 0.0, %v7539
      %7541 = vmatmul.f32.gmra.mxu0 %v7430
      %v7542 = vpop.f32.mrf.mxu0
      %v7543 = vadd.f32 0.0, %v7542
      %7544 = vmatmul.f32.gmra.mxu0 %v7433
      %v7545 = vpop.f32.mrf.mxu0
      %v7546 = vadd.f32 0.0, %v7545
      %7547 = vmatmul.f32.gmra.mxu0 %v7436
      %v7548 = vpop.f32.mrf.mxu0
      %v7549 = vadd.f32 0.0, %v7548
      %7550 = vmatmul.f32.gmra.mxu0 %v7439
      %v7551 = vpop.f32.mrf.mxu0
      %v7552 = vadd.f32 0.0, %v7551
      %7553 = vmatmul.f32.gmra.mxu0 %v7442
      %v7554 = vpop.f32.mrf.mxu0
      %v7555 = vadd.f32 0.0, %v7554
      %7556 = vmatmul.f32.gmra.mxu0 %v7445
      %v7557 = vpop.f32.mrf.mxu0
      %v7558 = vadd.f32 0.0, %v7557
      %7559 = vmatmul.f32.gmra.mxu0 %v7448
      %v7560 = vpop.f32.mrf.mxu0
      %v7561 = vadd.f32 0.0, %v7560
      %7562 = vmatmul.f32.gmra.mxu0 %v7451
      %v7563 = vpop.f32.mrf.mxu0
      %v7564 = vadd.f32 0.0, %v7563
      %7565 = vmatmul.f32.gmra.mxu0 %v7454
      %v7566 = vpop.f32.mrf.mxu0
      %v7567 = vadd.f32 0.0, %v7566
      %7568 = vmatmul.f32.gmra.mxu0 %v7457
      %v7569 = vpop.f32.mrf.mxu0
      %v7570 = vadd.f32 0.0, %v7569
      %7571 = vmatmul.f32.gmra.mxu0 %v7460
      %v7572 = vpop.f32.mrf.mxu0
      %v7573 = vadd.f32 0.0, %v7572
      %7574 = vmatmul.f32.gmra.mxu0 %v7463
      %v7575 = vpop.f32.mrf.mxu0
      %v7576 = vadd.f32 0.0, %v7575
      %7577 = vmatmul.f32.gmra.mxu0 %v7466
      %v7578 = vpop.f32.mrf.mxu0
      %v7579 = vadd.f32 0.0, %v7578
      %7580 = vmatmul.f32.gmra.mxu0 %v7469
      %v7581 = vpop.f32.mrf.mxu0
      %v7582 = vadd.f32 0.0, %v7581
      %7583 = vdwg.mxu0
      %v7584 = vadd.f32 %v7306, %v7489
      %v7585 = vadd.f32 %v7307, %v7492
      %v7586 = vadd.f32 %v7308, %v7495
      %v7587 = vadd.f32 %v7309, %v7498
      %v7588 = vadd.f32 %v7310, %v7501
      %v7589 = vadd.f32 %v7311, %v7504
      %v7590 = vadd.f32 %v7312, %v7507
      %v7591 = vadd.f32 %v7313, %v7510
      %v7592 = vadd.f32 %v7314, %v7513
      %v7593 = vadd.f32 %v7315, %v7516
      %v7594 = vadd.f32 %v7316, %v7519
      %v7595 = vadd.f32 %v7317, %v7522
      %v7596 = vadd.f32 %v7318, %v7525
      %v7597 = vadd.f32 %v7319, %v7528
      %v7598 = vadd.f32 %v7320, %v7531
      %v7599 = vadd.f32 %v7321, %v7534
      %v7600 = vadd.f32 %v7322, %v7537
      %v7601 = vadd.f32 %v7323, %v7540
      %v7602 = vadd.f32 %v7324, %v7543
      %v7603 = vadd.f32 %v7325, %v7546
      %v7604 = vadd.f32 %v7326, %v7549
      %v7605 = vadd.f32 %v7327, %v7552
      %v7606 = vadd.f32 %v7328, %v7555
      %v7607 = vadd.f32 %v7329, %v7558
      %v7608 = vadd.f32 %v7330, %v7561
      %v7609 = vadd.f32 %v7331, %v7564
      %v7610 = vadd.f32 %v7332, %v7567
      %v7611 = vadd.f32 %v7333, %v7570
      %v7612 = vadd.f32 %v7334, %v7573
      %v7613 = vadd.f32 %v7335, %v7576
      %v7614 = vadd.f32 %v7336, %v7579
      %v7615 = vadd.f32 %v7337, %v7582
      %v7616 = vld [vmem:[%s6781 + $0x9] sm:$0xff]
      %v7617 = vld [vmem:[%s6781 + $0x11] sm:$0xff]
      %v7618 = vld [vmem:[%s6781 + $0x29] sm:$0xff]
      %v7619 = vld [vmem:[%s6781 + $0x31] sm:$0xff]
      %v7620 = vld [vmem:[%s6781 + $0x49] sm:$0xff]
      %v7621 = vld [vmem:[%s6781 + $0x51] sm:$0xff]
      %v7622 = vld [vmem:[%s6781 + $0x69] sm:$0xff]
      %v7623 = vld [vmem:[%s6781 + $0x71] sm:$0xff]
      %v7624 = vld [vmem:[%s6781 + $0x89] sm:$0xff]
      %v7625 = vld [vmem:[%s6781 + $0x91] sm:$0xff]
      %v7626 = vld [vmem:[%s6781 + $0xa9] sm:$0xff]
      %v7627 = vld [vmem:[%s6781 + $0xb1] sm:$0xff]
      %v7628 = vld [vmem:[%s6781 + $0xc9] sm:$0xff]
      %v7629 = vld [vmem:[%s6781 + $0xd1] sm:$0xff]
      %v7630 = vld [vmem:[%s6781 + $0xe9] sm:$0xff]
      %v7631 = vld [vmem:[%s6781 + $0xf1] sm:$0xff]
      %v7632 = vld [vmem:[%s6781 + $0x109] sm:$0xff]
      %v7633 = vld [vmem:[%s6781 + $0x111] sm:$0xff]
      %v7634 = vld [vmem:[%s6781 + $0x129] sm:$0xff]
      %v7635 = vld [vmem:[%s6781 + $0x131] sm:$0xff]
      %v7636 = vld [vmem:[%s6781 + $0x149] sm:$0xff]
      %v7637 = vld [vmem:[%s6781 + $0x151] sm:$0xff]
      %v7638 = vld [vmem:[%s6781 + $0x169] sm:$0xff]
      %v7639 = vld [vmem:[%s6781 + $0x171] sm:$0xff]
      %v7640 = vld [vmem:[%s6781 + $0x189] sm:$0xff]
      %v7641 = vld [vmem:[%s6781 + $0x191] sm:$0xff]
      %v7642 = vld [vmem:[%s6781 + $0x1a9] sm:$0xff]
      %v7643 = vld [vmem:[%s6781 + $0x1b1] sm:$0xff]
      %v7644 = vld [vmem:[%s6781 + $0x1c9] sm:$0xff]
      %v7645 = vld [vmem:[%s6781 + $0x1d1] sm:$0xff]
      %v7646 = vld [vmem:[%s6781 + $0x1e9] sm:$0xff]
      %v7647 = vld [vmem:[%s6781 + $0x1f1] sm:$0xff]
      %s7648 = scalar_lea.vmem %s3, 736
      %v7649 = vld [vmem:[%s7648] sm:$0xff]
      %v7650 = vld [vmem:[%s7648 + $0x8] sm:$0xff]
      %v7651 = vld [vmem:[%s7648 + $0x10] sm:$0xff]
      %v7652 = vld [vmem:[%s7648 + $0x18] sm:$0xff]
      %v7654 = vsel %vm1170, %v7616, 0
      %v7657 = vsel %vm1170, %v7617, 0
      %v7660 = vsel %vm1170, %v7618, 0
      %v7663 = vsel %vm1170, %v7619, 0
      %v7666 = vsel %vm1170, %v7620, 0
      %v7669 = vsel %vm1170, %v7621, 0
      %v7672 = vsel %vm1170, %v7622, 0
      %v7675 = vsel %vm1170, %v7623, 0
      %v7678 = vsel %vm1170, %v7624, 0
      %v7681 = vsel %vm1170, %v7625, 0
      %v7684 = vsel %vm1170, %v7626, 0
      %v7687 = vsel %vm1170, %v7627, 0
      %v7690 = vsel %vm1170, %v7628, 0
      %v7693 = vsel %vm1170, %v7629, 0
      %v7696 = vsel %vm1170, %v7630, 0
      %v7699 = vsel %vm1170, %v7631, 0
      %v7702 = vsel %vm1170, %v7632, 0
      %v7705 = vsel %vm1170, %v7633, 0
      %v7708 = vsel %vm1170, %v7634, 0
      %v7711 = vsel %vm1170, %v7635, 0
      %v7714 = vsel %vm1170, %v7636, 0
      %v7717 = vsel %vm1170, %v7637, 0
      %v7720 = vsel %vm1170, %v7638, 0
      %v7723 = vsel %vm1170, %v7639, 0
      %v7726 = vsel %vm1170, %v7640, 0
      %v7729 = vsel %vm1170, %v7641, 0
      %v7732 = vsel %vm1170, %v7642, 0
      %v7735 = vsel %vm1170, %v7643, 0
      %v7738 = vsel %vm1170, %v7644, 0
      %v7741 = vsel %vm1170, %v7645, 0
      %v7744 = vsel %vm1170, %v7646, 0
      %v7747 = vsel %vm1170, %v7647, 0
      %7749 = vmatpush.msra.mxu0 0.0
      %7750 = vmatpush.msra.mxu0 0.0
      %7751 = vmatpush.msra.mxu0 0.0
      %7752 = vmatpush.msra.mxu0 0.0
      %7753 = vmatpush.msra.mxu0 0.0
      %7754 = vmatpush.msra.mxu0 0.0
      %7755 = vmatpush.msra.mxu0 0.0
      %7756 = vmatpush.msra.mxu0 0.0
      %7757 = vmatpush.msra.mxu0 0.0
      %7758 = vmatpush.msra.mxu0 0.0
      %7759 = vmatpush.msra.mxu0 0.0
      %7760 = vmatpush.msra.mxu0 0.0
      %7761 = vmatpush.msra.mxu0 %v7652
      %7762 = vmatpush.msra.mxu0 %v7651
      %7763 = vmatpush.msra.mxu0 %v7650
      %7764 = vmatpush.msra.mxu0 %v7649
      %7765 = vmatmul.f32.gmra.mxu0 %v7654
      %v7766 = vpop.f32.mrf.mxu0
      %v7767 = vadd.f32 0.0, %v7766
      %7768 = vmatmul.f32.gmra.mxu0 %v7657
      %v7769 = vpop.f32.mrf.mxu0
      %v7770 = vadd.f32 0.0, %v7769
      %7771 = vmatmul.f32.gmra.mxu0 %v7660
      %v7772 = vpop.f32.mrf.mxu0
      %v7773 = vadd.f32 0.0, %v7772
      %7774 = vmatmul.f32.gmra.mxu0 %v7663
      %v7775 = vpop.f32.mrf.mxu0
      %v7776 = vadd.f32 0.0, %v7775
      %7777 = vmatmul.f32.gmra.mxu0 %v7666
      %v7778 = vpop.f32.mrf.mxu0
      %v7779 = vadd.f32 0.0, %v7778
      %7780 = vmatmul.f32.gmra.mxu0 %v7669
      %v7781 = vpop.f32.mrf.mxu0
      %v7782 = vadd.f32 0.0, %v7781
      %7783 = vmatmul.f32.gmra.mxu0 %v7672
      %v7784 = vpop.f32.mrf.mxu0
      %v7785 = vadd.f32 0.0, %v7784
      %7786 = vmatmul.f32.gmra.mxu0 %v7675
      %v7787 = vpop.f32.mrf.mxu0
      %v7788 = vadd.f32 0.0, %v7787
      %7789 = vmatmul.f32.gmra.mxu0 %v7678
      %v7790 = vpop.f32.mrf.mxu0
      %v7791 = vadd.f32 0.0, %v7790
      %7792 = vmatmul.f32.gmra.mxu0 %v7681
      %v7793 = vpop.f32.mrf.mxu0
      %v7794 = vadd.f32 0.0, %v7793
      %7795 = vmatmul.f32.gmra.mxu0 %v7684
      %v7796 = vpop.f32.mrf.mxu0
      %v7797 = vadd.f32 0.0, %v7796
      %7798 = vmatmul.f32.gmra.mxu0 %v7687
      %v7799 = vpop.f32.mrf.mxu0
      %v7800 = vadd.f32 0.0, %v7799
      %7801 = vmatmul.f32.gmra.mxu0 %v7690
      %v7802 = vpop.f32.mrf.mxu0
      %v7803 = vadd.f32 0.0, %v7802
      %7804 = vmatmul.f32.gmra.mxu0 %v7693
      %v7805 = vpop.f32.mrf.mxu0
      %v7806 = vadd.f32 0.0, %v7805
      %7807 = vmatmul.f32.gmra.mxu0 %v7696
      %v7808 = vpop.f32.mrf.mxu0
      %v7809 = vadd.f32 0.0, %v7808
      %7810 = vmatmul.f32.gmra.mxu0 %v7699
      %v7811 = vpop.f32.mrf.mxu0
      %v7812 = vadd.f32 0.0, %v7811
      %7813 = vmatmul.f32.gmra.mxu0 %v7702
      %v7814 = vpop.f32.mrf.mxu0
      %v7815 = vadd.f32 0.0, %v7814
      %7816 = vmatmul.f32.gmra.mxu0 %v7705
      %v7817 = vpop.f32.mrf.mxu0
      %v7818 = vadd.f32 0.0, %v7817
      %7819 = vmatmul.f32.gmra.mxu0 %v7708
      %v7820 = vpop.f32.mrf.mxu0
      %v7821 = vadd.f32 0.0, %v7820
      %7822 = vmatmul.f32.gmra.mxu0 %v7711
      %v7823 = vpop.f32.mrf.mxu0
      %v7824 = vadd.f32 0.0, %v7823
      %7825 = vmatmul.f32.gmra.mxu0 %v7714
      %v7826 = vpop.f32.mrf.mxu0
      %v7827 = vadd.f32 0.0, %v7826
      %7828 = vmatmul.f32.gmra.mxu0 %v7717
      %v7829 = vpop.f32.mrf.mxu0
      %v7830 = vadd.f32 0.0, %v7829
      %7831 = vmatmul.f32.gmra.mxu0 %v7720
      %v7832 = vpop.f32.mrf.mxu0
      %v7833 = vadd.f32 0.0, %v7832
      %7834 = vmatmul.f32.gmra.mxu0 %v7723
      %v7835 = vpop.f32.mrf.mxu0
      %v7836 = vadd.f32 0.0, %v7835
      %7837 = vmatmul.f32.gmra.mxu0 %v7726
      %v7838 = vpop.f32.mrf.mxu0
      %v7839 = vadd.f32 0.0, %v7838
      %7840 = vmatmul.f32.gmra.mxu0 %v7729
      %v7841 = vpop.f32.mrf.mxu0
      %v7842 = vadd.f32 0.0, %v7841
      %7843 = vmatmul.f32.gmra.mxu0 %v7732
      %v7844 = vpop.f32.mrf.mxu0
      %v7845 = vadd.f32 0.0, %v7844
      %7846 = vmatmul.f32.gmra.mxu0 %v7735
      %v7847 = vpop.f32.mrf.mxu0
      %v7848 = vadd.f32 0.0, %v7847
      %7849 = vmatmul.f32.gmra.mxu0 %v7738
      %v7850 = vpop.f32.mrf.mxu0
      %v7851 = vadd.f32 0.0, %v7850
      %7852 = vmatmul.f32.gmra.mxu0 %v7741
      %v7853 = vpop.f32.mrf.mxu0
      %v7854 = vadd.f32 0.0, %v7853
      %7855 = vmatmul.f32.gmra.mxu0 %v7744
      %v7856 = vpop.f32.mrf.mxu0
      %v7857 = vadd.f32 0.0, %v7856
      %7858 = vmatmul.f32.gmra.mxu0 %v7747
      %v7859 = vpop.f32.mrf.mxu0
      %v7860 = vadd.f32 0.0, %v7859
      %7861 = vdwg.mxu0
      %v7862 = vadd.f32 %v7584, %v7767
      %v7863 = vadd.f32 %v7585, %v7770
      %v7864 = vadd.f32 %v7586, %v7773
      %v7865 = vadd.f32 %v7587, %v7776
      %v7866 = vadd.f32 %v7588, %v7779
      %v7867 = vadd.f32 %v7589, %v7782
      %v7868 = vadd.f32 %v7590, %v7785
      %v7869 = vadd.f32 %v7591, %v7788
      %v7870 = vadd.f32 %v7592, %v7791
      %v7871 = vadd.f32 %v7593, %v7794
      %v7872 = vadd.f32 %v7594, %v7797
      %v7873 = vadd.f32 %v7595, %v7800
      %v7874 = vadd.f32 %v7596, %v7803
      %v7875 = vadd.f32 %v7597, %v7806
      %v7876 = vadd.f32 %v7598, %v7809
      %v7877 = vadd.f32 %v7599, %v7812
      %v7878 = vadd.f32 %v7600, %v7815
      %v7879 = vadd.f32 %v7601, %v7818
      %v7880 = vadd.f32 %v7602, %v7821
      %v7881 = vadd.f32 %v7603, %v7824
      %v7882 = vadd.f32 %v7604, %v7827
      %v7883 = vadd.f32 %v7605, %v7830
      %v7884 = vadd.f32 %v7606, %v7833
      %v7885 = vadd.f32 %v7607, %v7836
      %v7886 = vadd.f32 %v7608, %v7839
      %v7887 = vadd.f32 %v7609, %v7842
      %v7888 = vadd.f32 %v7610, %v7845
      %v7889 = vadd.f32 %v7611, %v7848
      %v7890 = vadd.f32 %v7612, %v7851
      %v7891 = vadd.f32 %v7613, %v7854
      %v7892 = vadd.f32 %v7614, %v7857
      %v7893 = vadd.f32 %v7615, %v7860
      %v7894 = vld [vmem:[%s6781 + $0xa] sm:$0xff]
      %v7895 = vld [vmem:[%s6781 + $0x12] sm:$0xff]
      %v7896 = vld [vmem:[%s6781 + $0x2a] sm:$0xff]
      %v7897 = vld [vmem:[%s6781 + $0x32] sm:$0xff]
      %v7898 = vld [vmem:[%s6781 + $0x4a] sm:$0xff]
      %v7899 = vld [vmem:[%s6781 + $0x52] sm:$0xff]
      %v7900 = vld [vmem:[%s6781 + $0x6a] sm:$0xff]
      %v7901 = vld [vmem:[%s6781 + $0x72] sm:$0xff]
      %v7902 = vld [vmem:[%s6781 + $0x8a] sm:$0xff]
      %v7903 = vld [vmem:[%s6781 + $0x92] sm:$0xff]
      %v7904 = vld [vmem:[%s6781 + $0xaa] sm:$0xff]
      %v7905 = vld [vmem:[%s6781 + $0xb2] sm:$0xff]
      %v7906 = vld [vmem:[%s6781 + $0xca] sm:$0xff]
      %v7907 = vld [vmem:[%s6781 + $0xd2] sm:$0xff]
      %v7908 = vld [vmem:[%s6781 + $0xea] sm:$0xff]
      %v7909 = vld [vmem:[%s6781 + $0xf2] sm:$0xff]
      %v7910 = vld [vmem:[%s6781 + $0x10a] sm:$0xff]
      %v7911 = vld [vmem:[%s6781 + $0x112] sm:$0xff]
      %v7912 = vld [vmem:[%s6781 + $0x12a] sm:$0xff]
      %v7913 = vld [vmem:[%s6781 + $0x132] sm:$0xff]
      %v7914 = vld [vmem:[%s6781 + $0x14a] sm:$0xff]
      %v7915 = vld [vmem:[%s6781 + $0x152] sm:$0xff]
      %v7916 = vld [vmem:[%s6781 + $0x16a] sm:$0xff]
      %v7917 = vld [vmem:[%s6781 + $0x172] sm:$0xff]
      %v7918 = vld [vmem:[%s6781 + $0x18a] sm:$0xff]
      %v7919 = vld [vmem:[%s6781 + $0x192] sm:$0xff]
      %v7920 = vld [vmem:[%s6781 + $0x1aa] sm:$0xff]
      %v7921 = vld [vmem:[%s6781 + $0x1b2] sm:$0xff]
      %v7922 = vld [vmem:[%s6781 + $0x1ca] sm:$0xff]
      %v7923 = vld [vmem:[%s6781 + $0x1d2] sm:$0xff]
      %v7924 = vld [vmem:[%s6781 + $0x1ea] sm:$0xff]
      %v7925 = vld [vmem:[%s6781 + $0x1f2] sm:$0xff]
      %s7926 = scalar_lea.vmem %s3, 768
      %v7927 = vld [vmem:[%s7926] sm:$0xff]
      %v7928 = vld [vmem:[%s7926 + $0x8] sm:$0xff]
      %v7929 = vld [vmem:[%s7926 + $0x10] sm:$0xff]
      %v7930 = vld [vmem:[%s7926 + $0x18] sm:$0xff]
      %v7932 = vsel %vm1170, %v7894, 0
      %v7935 = vsel %vm1170, %v7895, 0
      %v7938 = vsel %vm1170, %v7896, 0
      %v7941 = vsel %vm1170, %v7897, 0
      %v7944 = vsel %vm1170, %v7898, 0
      %v7947 = vsel %vm1170, %v7899, 0
      %v7950 = vsel %vm1170, %v7900, 0
      %v7953 = vsel %vm1170, %v7901, 0
      %v7956 = vsel %vm1170, %v7902, 0
      %v7959 = vsel %vm1170, %v7903, 0
      %v7962 = vsel %vm1170, %v7904, 0
      %v7965 = vsel %vm1170, %v7905, 0
      %v7968 = vsel %vm1170, %v7906, 0
      %v7971 = vsel %vm1170, %v7907, 0
      %v7974 = vsel %vm1170, %v7908, 0
      %v7977 = vsel %vm1170, %v7909, 0
      %v7980 = vsel %vm1170, %v7910, 0
      %v7983 = vsel %vm1170, %v7911, 0
      %v7986 = vsel %vm1170, %v7912, 0
      %v7989 = vsel %vm1170, %v7913, 0
      %v7992 = vsel %vm1170, %v7914, 0
      %v7995 = vsel %vm1170, %v7915, 0
      %v7998 = vsel %vm1170, %v7916, 0
      %v8001 = vsel %vm1170, %v7917, 0
      %v8004 = vsel %vm1170, %v7918, 0
      %v8007 = vsel %vm1170, %v7919, 0
      %v8010 = vsel %vm1170, %v7920, 0
      %v8013 = vsel %vm1170, %v7921, 0
      %v8016 = vsel %vm1170, %v7922, 0
      %v8019 = vsel %vm1170, %v7923, 0
      %v8022 = vsel %vm1170, %v7924, 0
      %v8025 = vsel %vm1170, %v7925, 0
      %8027 = vmatpush.msra.mxu0 0.0
      %8028 = vmatpush.msra.mxu0 0.0
      %8029 = vmatpush.msra.mxu0 0.0
      %8030 = vmatpush.msra.mxu0 0.0
      %8031 = vmatpush.msra.mxu0 0.0
      %8032 = vmatpush.msra.mxu0 0.0
      %8033 = vmatpush.msra.mxu0 0.0
      %8034 = vmatpush.msra.mxu0 0.0
      %8035 = vmatpush.msra.mxu0 0.0
      %8036 = vmatpush.msra.mxu0 0.0
      %8037 = vmatpush.msra.mxu0 0.0
      %8038 = vmatpush.msra.mxu0 0.0
      %8039 = vmatpush.msra.mxu0 %v7930
      %8040 = vmatpush.msra.mxu0 %v7929
      %8041 = vmatpush.msra.mxu0 %v7928
      %8042 = vmatpush.msra.mxu0 %v7927
      %8043 = vmatmul.f32.gmra.mxu0 %v7932
      %v8044 = vpop.f32.mrf.mxu0
      %v8045 = vadd.f32 0.0, %v8044
      %8046 = vmatmul.f32.gmra.mxu0 %v7935
      %v8047 = vpop.f32.mrf.mxu0
      %v8048 = vadd.f32 0.0, %v8047
      %8049 = vmatmul.f32.gmra.mxu0 %v7938
      %v8050 = vpop.f32.mrf.mxu0
      %v8051 = vadd.f32 0.0, %v8050
      %8052 = vmatmul.f32.gmra.mxu0 %v7941
      %v8053 = vpop.f32.mrf.mxu0
      %v8054 = vadd.f32 0.0, %v8053
      %8055 = vmatmul.f32.gmra.mxu0 %v7944
      %v8056 = vpop.f32.mrf.mxu0
      %v8057 = vadd.f32 0.0, %v8056
      %8058 = vmatmul.f32.gmra.mxu0 %v7947
      %v8059 = vpop.f32.mrf.mxu0
      %v8060 = vadd.f32 0.0, %v8059
      %8061 = vmatmul.f32.gmra.mxu0 %v7950
      %v8062 = vpop.f32.mrf.mxu0
      %v8063 = vadd.f32 0.0, %v8062
      %8064 = vmatmul.f32.gmra.mxu0 %v7953
      %v8065 = vpop.f32.mrf.mxu0
      %v8066 = vadd.f32 0.0, %v8065
      %8067 = vmatmul.f32.gmra.mxu0 %v7956
      %v8068 = vpop.f32.mrf.mxu0
      %v8069 = vadd.f32 0.0, %v8068
      %8070 = vmatmul.f32.gmra.mxu0 %v7959
      %v8071 = vpop.f32.mrf.mxu0
      %v8072 = vadd.f32 0.0, %v8071
      %8073 = vmatmul.f32.gmra.mxu0 %v7962
      %v8074 = vpop.f32.mrf.mxu0
      %v8075 = vadd.f32 0.0, %v8074
      %8076 = vmatmul.f32.gmra.mxu0 %v7965
      %v8077 = vpop.f32.mrf.mxu0
      %v8078 = vadd.f32 0.0, %v8077
      %8079 = vmatmul.f32.gmra.mxu0 %v7968
      %v8080 = vpop.f32.mrf.mxu0
      %v8081 = vadd.f32 0.0, %v8080
      %8082 = vmatmul.f32.gmra.mxu0 %v7971
      %v8083 = vpop.f32.mrf.mxu0
      %v8084 = vadd.f32 0.0, %v8083
      %8085 = vmatmul.f32.gmra.mxu0 %v7974
      %v8086 = vpop.f32.mrf.mxu0
      %v8087 = vadd.f32 0.0, %v8086
      %8088 = vmatmul.f32.gmra.mxu0 %v7977
      %v8089 = vpop.f32.mrf.mxu0
      %v8090 = vadd.f32 0.0, %v8089
      %8091 = vmatmul.f32.gmra.mxu0 %v7980
      %v8092 = vpop.f32.mrf.mxu0
      %v8093 = vadd.f32 0.0, %v8092
      %8094 = vmatmul.f32.gmra.mxu0 %v7983
      %v8095 = vpop.f32.mrf.mxu0
      %v8096 = vadd.f32 0.0, %v8095
      %8097 = vmatmul.f32.gmra.mxu0 %v7986
      %v8098 = vpop.f32.mrf.mxu0
      %v8099 = vadd.f32 0.0, %v8098
      %8100 = vmatmul.f32.gmra.mxu0 %v7989
      %v8101 = vpop.f32.mrf.mxu0
      %v8102 = vadd.f32 0.0, %v8101
      %8103 = vmatmul.f32.gmra.mxu0 %v7992
      %v8104 = vpop.f32.mrf.mxu0
      %v8105 = vadd.f32 0.0, %v8104
      %8106 = vmatmul.f32.gmra.mxu0 %v7995
      %v8107 = vpop.f32.mrf.mxu0
      %v8108 = vadd.f32 0.0, %v8107
      %8109 = vmatmul.f32.gmra.mxu0 %v7998
      %v8110 = vpop.f32.mrf.mxu0
      %v8111 = vadd.f32 0.0, %v8110
      %8112 = vmatmul.f32.gmra.mxu0 %v8001
      %v8113 = vpop.f32.mrf.mxu0
      %v8114 = vadd.f32 0.0, %v8113
      %8115 = vmatmul.f32.gmra.mxu0 %v8004
      %v8116 = vpop.f32.mrf.mxu0
      %v8117 = vadd.f32 0.0, %v8116
      %8118 = vmatmul.f32.gmra.mxu0 %v8007
      %v8119 = vpop.f32.mrf.mxu0
      %v8120 = vadd.f32 0.0, %v8119
      %8121 = vmatmul.f32.gmra.mxu0 %v8010
      %v8122 = vpop.f32.mrf.mxu0
      %v8123 = vadd.f32 0.0, %v8122
      %8124 = vmatmul.f32.gmra.mxu0 %v8013
      %v8125 = vpop.f32.mrf.mxu0
      %v8126 = vadd.f32 0.0, %v8125
      %8127 = vmatmul.f32.gmra.mxu0 %v8016
      %v8128 = vpop.f32.mrf.mxu0
      %v8129 = vadd.f32 0.0, %v8128
      %8130 = vmatmul.f32.gmra.mxu0 %v8019
      %v8131 = vpop.f32.mrf.mxu0
      %v8132 = vadd.f32 0.0, %v8131
      %8133 = vmatmul.f32.gmra.mxu0 %v8022
      %v8134 = vpop.f32.mrf.mxu0
      %v8135 = vadd.f32 0.0, %v8134
      %8136 = vmatmul.f32.gmra.mxu0 %v8025
      %v8137 = vpop.f32.mrf.mxu0
      %v8138 = vadd.f32 0.0, %v8137
      %8139 = vdwg.mxu0
      %v8140 = vadd.f32 %v7862, %v8045
      %v8141 = vadd.f32 %v7863, %v8048
      %v8142 = vadd.f32 %v7864, %v8051
      %v8143 = vadd.f32 %v7865, %v8054
      %v8144 = vadd.f32 %v7866, %v8057
      %v8145 = vadd.f32 %v7867, %v8060
      %v8146 = vadd.f32 %v7868, %v8063
      %v8147 = vadd.f32 %v7869, %v8066
      %v8148 = vadd.f32 %v7870, %v8069
      %v8149 = vadd.f32 %v7871, %v8072
      %v8150 = vadd.f32 %v7872, %v8075
      %v8151 = vadd.f32 %v7873, %v8078
      %v8152 = vadd.f32 %v7874, %v8081
      %v8153 = vadd.f32 %v7875, %v8084
      %v8154 = vadd.f32 %v7876, %v8087
      %v8155 = vadd.f32 %v7877, %v8090
      %v8156 = vadd.f32 %v7878, %v8093
      %v8157 = vadd.f32 %v7879, %v8096
      %v8158 = vadd.f32 %v7880, %v8099
      %v8159 = vadd.f32 %v7881, %v8102
      %v8160 = vadd.f32 %v7882, %v8105
      %v8161 = vadd.f32 %v7883, %v8108
      %v8162 = vadd.f32 %v7884, %v8111
      %v8163 = vadd.f32 %v7885, %v8114
      %v8164 = vadd.f32 %v7886, %v8117
      %v8165 = vadd.f32 %v7887, %v8120
      %v8166 = vadd.f32 %v7888, %v8123
      %v8167 = vadd.f32 %v7889, %v8126
      %v8168 = vadd.f32 %v7890, %v8129
      %v8169 = vadd.f32 %v7891, %v8132
      %v8170 = vadd.f32 %v7892, %v8135
      %v8171 = vadd.f32 %v7893, %v8138
      %v8172 = vld [vmem:[%s7] sm:$0xff]
      %v8173 = vld [vmem:[%s7 + $0x8] sm:$0xff]
      %v8174 = vld [vmem:[%s7 + $0x10] sm:$0xff]
      %v8175 = vld [vmem:[%s7 + $0x18] sm:$0xff]
      %v8176 = vld [vmem:[%s7 + $0x20] sm:$0xff]
      %v8177 = vld [vmem:[%s7 + $0x28] sm:$0xff]
      %v8178 = vld [vmem:[%s7 + $0x30] sm:$0xff]
      %v8179 = vld [vmem:[%s7 + $0x38] sm:$0xff]
      %v8180 = vld [vmem:[%s7 + $0x40] sm:$0xff]
      %v8181 = vld [vmem:[%s7 + $0x48] sm:$0xff]
      %v8182 = vld [vmem:[%s7 + $0x50] sm:$0xff]
      %v8183 = vld [vmem:[%s7 + $0x58] sm:$0xff]
      %v8184 = vld [vmem:[%s7 + $0x60] sm:$0xff]
      %v8185 = vld [vmem:[%s7 + $0x68] sm:$0xff]
      %v8186 = vld [vmem:[%s7 + $0x70] sm:$0xff]
      %v8187 = vld [vmem:[%s7 + $0x78] sm:$0xff]
      %8188 = vmatpush.msra.mxu0 %v8155
      %8189 = vmatpush.msra.mxu0 %v8154
      %8190 = vmatpush.msra.mxu0 %v8153
      %8191 = vmatpush.msra.mxu0 %v8152
      %8192 = vmatpush.msra.mxu0 %v8151
      %8193 = vmatpush.msra.mxu0 %v8150
      %8194 = vmatpush.msra.mxu0 %v8149
      %8195 = vmatpush.msra.mxu0 %v8148
      %8196 = vmatpush.msra.mxu0 %v8147
      %8197 = vmatpush.msra.mxu0 %v8146
      %8198 = vmatpush.msra.mxu0 %v8145
      %8199 = vmatpush.msra.mxu0 %v8144
      %8200 = vmatpush.msra.mxu0 %v8143
      %8201 = vmatpush.msra.mxu0 %v8142
      %8202 = vmatpush.msra.mxu0 %v8141
      %8203 = vmatpush.msra.mxu0 %v8140
      %8204 = vmatmul.f32.gmra.mxu0 %v8172
      %v8205 = vpop.f32.mrf.mxu0
      %v8206 = vadd.f32 0.0, %v8205
      %8207 = vmatmul.f32.gmra.mxu0 %v8174
      %v8208 = vpop.f32.mrf.mxu0
      %v8209 = vadd.f32 0.0, %v8208
      %8210 = vmatmul.f32.gmra.mxu0 %v8176
      %v8211 = vpop.f32.mrf.mxu0
      %v8212 = vadd.f32 0.0, %v8211
      %8213 = vmatmul.f32.gmra.mxu0 %v8178
      %v8214 = vpop.f32.mrf.mxu0
      %v8215 = vadd.f32 0.0, %v8214
      %8216 = vmatmul.f32.gmra.mxu0 %v8180
      %v8217 = vpop.f32.mrf.mxu0
      %v8218 = vadd.f32 0.0, %v8217
      %8219 = vmatmul.f32.gmra.mxu0 %v8182
      %v8220 = vpop.f32.mrf.mxu0
      %v8221 = vadd.f32 0.0, %v8220
      %8222 = vmatmul.f32.gmra.mxu0 %v8184
      %v8223 = vpop.f32.mrf.mxu0
      %v8224 = vadd.f32 0.0, %v8223
      %8225 = vmatmul.f32.gmra.mxu0 %v8186
      %v8226 = vpop.f32.mrf.mxu0
      %v8227 = vadd.f32 0.0, %v8226
      %8228 = vdwg.mxu0
      %8229 = vmatpush.msra.mxu0 %v8171
      %8230 = vmatpush.msra.mxu0 %v8170
      %8231 = vmatpush.msra.mxu0 %v8169
      %8232 = vmatpush.msra.mxu0 %v8168
      %8233 = vmatpush.msra.mxu0 %v8167
      %8234 = vmatpush.msra.mxu0 %v8166
      %8235 = vmatpush.msra.mxu0 %v8165
      %8236 = vmatpush.msra.mxu0 %v8164
      %8237 = vmatpush.msra.mxu0 %v8163
      %8238 = vmatpush.msra.mxu0 %v8162
      %8239 = vmatpush.msra.mxu0 %v8161
      %8240 = vmatpush.msra.mxu0 %v8160
      %8241 = vmatpush.msra.mxu0 %v8159
      %8242 = vmatpush.msra.mxu0 %v8158
      %8243 = vmatpush.msra.mxu0 %v8157
      %8244 = vmatpush.msra.mxu0 %v8156
      %8245 = vmatmul.f32.gmra.mxu0 %v8173
      %v8246 = vpop.f32.mrf.mxu0
      %v8247 = vadd.f32 %v8206, %v8246
      %8248 = vmatmul.f32.gmra.mxu0 %v8175
      %v8249 = vpop.f32.mrf.mxu0
      %v8250 = vadd.f32 %v8209, %v8249
      %8251 = vmatmul.f32.gmra.mxu0 %v8177
      %v8252 = vpop.f32.mrf.mxu0
      %v8253 = vadd.f32 %v8212, %v8252
      %8254 = vmatmul.f32.gmra.mxu0 %v8179
      %v8255 = vpop.f32.mrf.mxu0
      %v8256 = vadd.f32 %v8215, %v8255
      %8257 = vmatmul.f32.gmra.mxu0 %v8181
      %v8258 = vpop.f32.mrf.mxu0
      %v8259 = vadd.f32 %v8218, %v8258
      %8260 = vmatmul.f32.gmra.mxu0 %v8183
      %v8261 = vpop.f32.mrf.mxu0
      %v8262 = vadd.f32 %v8221, %v8261
      %8263 = vmatmul.f32.gmra.mxu0 %v8185
      %v8264 = vpop.f32.mrf.mxu0
      %v8265 = vadd.f32 %v8224, %v8264
      %8266 = vmatmul.f32.gmra.mxu0 %v8187
      %v8267 = vpop.f32.mrf.mxu0
      %v8268 = vadd.f32 %v8227, %v8267
      %8269 = vdwg.mxu0
      %s8270 = scalar_lea.vmem %s7, 128
      %v8271 = vld [vmem:[%s8270] sm:$0xff]
      %v8272 = vld [vmem:[%s8270 + $0x8] sm:$0xff]
      %v8273 = vld [vmem:[%s8270 + $0x10] sm:$0xff]
      %v8274 = vld [vmem:[%s8270 + $0x18] sm:$0xff]
      %v8275 = vld [vmem:[%s8270 + $0x20] sm:$0xff]
      %v8276 = vld [vmem:[%s8270 + $0x28] sm:$0xff]
      %v8277 = vld [vmem:[%s8270 + $0x30] sm:$0xff]
      %v8278 = vld [vmem:[%s8270 + $0x38] sm:$0xff]
      %v8279 = vld [vmem:[%s8270 + $0x40] sm:$0xff]
      %v8280 = vld [vmem:[%s8270 + $0x48] sm:$0xff]
      %v8281 = vld [vmem:[%s8270 + $0x50] sm:$0xff]
      %v8282 = vld [vmem:[%s8270 + $0x58] sm:$0xff]
      %v8283 = vld [vmem:[%s8270 + $0x60] sm:$0xff]
      %v8284 = vld [vmem:[%s8270 + $0x68] sm:$0xff]
      %v8285 = vld [vmem:[%s8270 + $0x70] sm:$0xff]
      %v8286 = vld [vmem:[%s8270 + $0x78] sm:$0xff]
      %8287 = vmatpush.msra.mxu0 %v8155
      %8288 = vmatpush.msra.mxu0 %v8154
      %8289 = vmatpush.msra.mxu0 %v8153
      %8290 = vmatpush.msra.mxu0 %v8152
      %8291 = vmatpush.msra.mxu0 %v8151
      %8292 = vmatpush.msra.mxu0 %v8150
      %8293 = vmatpush.msra.mxu0 %v8149
      %8294 = vmatpush.msra.mxu0 %v8148
      %8295 = vmatpush.msra.mxu0 %v8147
      %8296 = vmatpush.msra.mxu0 %v8146
      %8297 = vmatpush.msra.mxu0 %v8145
      %8298 = vmatpush.msra.mxu0 %v8144
      %8299 = vmatpush.msra.mxu0 %v8143
      %8300 = vmatpush.msra.mxu0 %v8142
      %8301 = vmatpush.msra.mxu0 %v8141
      %8302 = vmatpush.msra.mxu0 %v8140
      %8303 = vmatmul.f32.gmra.mxu0 %v8271
      %v8304 = vpop.f32.mrf.mxu0
      %v8305 = vadd.f32 0.0, %v8304
      %8306 = vmatmul.f32.gmra.mxu0 %v8273
      %v8307 = vpop.f32.mrf.mxu0
      %v8308 = vadd.f32 0.0, %v8307
      %8309 = vmatmul.f32.gmra.mxu0 %v8275
      %v8310 = vpop.f32.mrf.mxu0
      %v8311 = vadd.f32 0.0, %v8310
      %8312 = vmatmul.f32.gmra.mxu0 %v8277
      %v8313 = vpop.f32.mrf.mxu0
      %v8314 = vadd.f32 0.0, %v8313
      %8315 = vmatmul.f32.gmra.mxu0 %v8279
      %v8316 = vpop.f32.mrf.mxu0
      %v8317 = vadd.f32 0.0, %v8316
      %8318 = vmatmul.f32.gmra.mxu0 %v8281
      %v8319 = vpop.f32.mrf.mxu0
      %v8320 = vadd.f32 0.0, %v8319
      %8321 = vmatmul.f32.gmra.mxu0 %v8283
      %v8322 = vpop.f32.mrf.mxu0
      %v8323 = vadd.f32 0.0, %v8322
      %8324 = vmatmul.f32.gmra.mxu0 %v8285
      %v8325 = vpop.f32.mrf.mxu0
      %v8326 = vadd.f32 0.0, %v8325
      %8327 = vdwg.mxu0
      %8328 = vmatpush.msra.mxu0 %v8171
      %8329 = vmatpush.msra.mxu0 %v8170
      %8330 = vmatpush.msra.mxu0 %v8169
      %8331 = vmatpush.msra.mxu0 %v8168
      %8332 = vmatpush.msra.mxu0 %v8167
      %8333 = vmatpush.msra.mxu0 %v8166
      %8334 = vmatpush.msra.mxu0 %v8165
      %8335 = vmatpush.msra.mxu0 %v8164
      %8336 = vmatpush.msra.mxu0 %v8163
      %8337 = vmatpush.msra.mxu0 %v8162
      %8338 = vmatpush.msra.mxu0 %v8161
      %8339 = vmatpush.msra.mxu0 %v8160
      %8340 = vmatpush.msra.mxu0 %v8159
      %8341 = vmatpush.msra.mxu0 %v8158
      %8342 = vmatpush.msra.mxu0 %v8157
      %8343 = vmatpush.msra.mxu0 %v8156
      %8344 = vmatmul.f32.gmra.mxu0 %v8272
      %v8345 = vpop.f32.mrf.mxu0
      %v8346 = vadd.f32 %v8305, %v8345
      %8347 = vmatmul.f32.gmra.mxu0 %v8274
      %v8348 = vpop.f32.mrf.mxu0
      %v8349 = vadd.f32 %v8308, %v8348
      %8350 = vmatmul.f32.gmra.mxu0 %v8276
      %v8351 = vpop.f32.mrf.mxu0
      %v8352 = vadd.f32 %v8311, %v8351
      %8353 = vmatmul.f32.gmra.mxu0 %v8278
      %v8354 = vpop.f32.mrf.mxu0
      %v8355 = vadd.f32 %v8314, %v8354
      %8356 = vmatmul.f32.gmra.mxu0 %v8280
      %v8357 = vpop.f32.mrf.mxu0
      %v8358 = vadd.f32 %v8317, %v8357
      %8359 = vmatmul.f32.gmra.mxu0 %v8282
      %v8360 = vpop.f32.mrf.mxu0
      %v8361 = vadd.f32 %v8320, %v8360
      %8362 = vmatmul.f32.gmra.mxu0 %v8284
      %v8363 = vpop.f32.mrf.mxu0
      %v8364 = vadd.f32 %v8323, %v8363
      %8365 = vmatmul.f32.gmra.mxu0 %v8286
      %v8366 = vpop.f32.mrf.mxu0
      %v8367 = vadd.f32 %v8326, %v8366
      %8368 = vdwg.mxu0
      %v8369 = vmax.f32 %v8247, %v8346
      %v8370 = vmax.f32 %v8250, %v8349
      %v8371 = vmax.f32 %v8253, %v8352
      %v8372 = vmax.f32 %v8256, %v8355
      %v8373 = vmax.f32 %v8259, %v8358
      %v8374 = vmax.f32 %v8262, %v8361
      %v8375 = vmax.f32 %v8265, %v8364
      %v8376 = vmax.f32 %v8268, %v8367
      %s8377 = scalar_lea.vmem %s7, 256
      %v8378 = vld [vmem:[%s8377] sm:$0xff]
      %v8379 = vld [vmem:[%s8377 + $0x8] sm:$0xff]
      %v8380 = vld [vmem:[%s8377 + $0x10] sm:$0xff]
      %v8381 = vld [vmem:[%s8377 + $0x18] sm:$0xff]
      %v8382 = vld [vmem:[%s8377 + $0x20] sm:$0xff]
      %v8383 = vld [vmem:[%s8377 + $0x28] sm:$0xff]
      %v8384 = vld [vmem:[%s8377 + $0x30] sm:$0xff]
      %v8385 = vld [vmem:[%s8377 + $0x38] sm:$0xff]
      %v8386 = vld [vmem:[%s8377 + $0x40] sm:$0xff]
      %v8387 = vld [vmem:[%s8377 + $0x48] sm:$0xff]
      %v8388 = vld [vmem:[%s8377 + $0x50] sm:$0xff]
      %v8389 = vld [vmem:[%s8377 + $0x58] sm:$0xff]
      %v8390 = vld [vmem:[%s8377 + $0x60] sm:$0xff]
      %v8391 = vld [vmem:[%s8377 + $0x68] sm:$0xff]
      %v8392 = vld [vmem:[%s8377 + $0x70] sm:$0xff]
      %v8393 = vld [vmem:[%s8377 + $0x78] sm:$0xff]
      %8394 = vmatpush.msra.mxu0 %v8155
      %8395 = vmatpush.msra.mxu0 %v8154
      %8396 = vmatpush.msra.mxu0 %v8153
      %8397 = vmatpush.msra.mxu0 %v8152
      %8398 = vmatpush.msra.mxu0 %v8151
      %8399 = vmatpush.msra.mxu0 %v8150
      %8400 = vmatpush.msra.mxu0 %v8149
      %8401 = vmatpush.msra.mxu0 %v8148
      %8402 = vmatpush.msra.mxu0 %v8147
      %8403 = vmatpush.msra.mxu0 %v8146
      %8404 = vmatpush.msra.mxu0 %v8145
      %8405 = vmatpush.msra.mxu0 %v8144
      %8406 = vmatpush.msra.mxu0 %v8143
      %8407 = vmatpush.msra.mxu0 %v8142
      %8408 = vmatpush.msra.mxu0 %v8141
      %8409 = vmatpush.msra.mxu0 %v8140
      %8410 = vmatmul.f32.gmra.mxu0 %v8378
      %v8411 = vpop.f32.mrf.mxu0
      %v8412 = vadd.f32 0.0, %v8411
      %8413 = vmatmul.f32.gmra.mxu0 %v8380
      %v8414 = vpop.f32.mrf.mxu0
      %v8415 = vadd.f32 0.0, %v8414
      %8416 = vmatmul.f32.gmra.mxu0 %v8382
      %v8417 = vpop.f32.mrf.mxu0
      %v8418 = vadd.f32 0.0, %v8417
      %8419 = vmatmul.f32.gmra.mxu0 %v8384
      %v8420 = vpop.f32.mrf.mxu0
      %v8421 = vadd.f32 0.0, %v8420
      %8422 = vmatmul.f32.gmra.mxu0 %v8386
      %v8423 = vpop.f32.mrf.mxu0
      %v8424 = vadd.f32 0.0, %v8423
      %8425 = vmatmul.f32.gmra.mxu0 %v8388
      %v8426 = vpop.f32.mrf.mxu0
      %v8427 = vadd.f32 0.0, %v8426
      %8428 = vmatmul.f32.gmra.mxu0 %v8390
      %v8429 = vpop.f32.mrf.mxu0
      %v8430 = vadd.f32 0.0, %v8429
      %8431 = vmatmul.f32.gmra.mxu0 %v8392
      %v8432 = vpop.f32.mrf.mxu0
      %v8433 = vadd.f32 0.0, %v8432
      %8434 = vdwg.mxu0
      %8435 = vmatpush.msra.mxu0 %v8171
      %8436 = vmatpush.msra.mxu0 %v8170
      %8437 = vmatpush.msra.mxu0 %v8169
      %8438 = vmatpush.msra.mxu0 %v8168
      %8439 = vmatpush.msra.mxu0 %v8167
      %8440 = vmatpush.msra.mxu0 %v8166
      %8441 = vmatpush.msra.mxu0 %v8165
      %8442 = vmatpush.msra.mxu0 %v8164
      %8443 = vmatpush.msra.mxu0 %v8163
      %8444 = vmatpush.msra.mxu0 %v8162
      %8445 = vmatpush.msra.mxu0 %v8161
      %8446 = vmatpush.msra.mxu0 %v8160
      %8447 = vmatpush.msra.mxu0 %v8159
      %8448 = vmatpush.msra.mxu0 %v8158
      %8449 = vmatpush.msra.mxu0 %v8157
      %8450 = vmatpush.msra.mxu0 %v8156
      %8451 = vmatmul.f32.gmra.mxu0 %v8379
      %v8452 = vpop.f32.mrf.mxu0
      %v8453 = vadd.f32 %v8412, %v8452
      %8454 = vmatmul.f32.gmra.mxu0 %v8381
      %v8455 = vpop.f32.mrf.mxu0
      %v8456 = vadd.f32 %v8415, %v8455
      %8457 = vmatmul.f32.gmra.mxu0 %v8383
      %v8458 = vpop.f32.mrf.mxu0
      %v8459 = vadd.f32 %v8418, %v8458
      %8460 = vmatmul.f32.gmra.mxu0 %v8385
      %v8461 = vpop.f32.mrf.mxu0
      %v8462 = vadd.f32 %v8421, %v8461
      %8463 = vmatmul.f32.gmra.mxu0 %v8387
      %v8464 = vpop.f32.mrf.mxu0
      %v8465 = vadd.f32 %v8424, %v8464
      %8466 = vmatmul.f32.gmra.mxu0 %v8389
      %v8467 = vpop.f32.mrf.mxu0
      %v8468 = vadd.f32 %v8427, %v8467
      %8469 = vmatmul.f32.gmra.mxu0 %v8391
      %v8470 = vpop.f32.mrf.mxu0
      %v8471 = vadd.f32 %v8430, %v8470
      %8472 = vmatmul.f32.gmra.mxu0 %v8393
      %v8473 = vpop.f32.mrf.mxu0
      %v8474 = vadd.f32 %v8433, %v8473
      %8475 = vdwg.mxu0
      %v8476 = vmax.f32 %v8369, %v8453
      %v8477 = vmax.f32 %v8370, %v8456
      %v8478 = vmax.f32 %v8371, %v8459
      %v8479 = vmax.f32 %v8372, %v8462
      %v8480 = vmax.f32 %v8373, %v8465
      %v8481 = vmax.f32 %v8374, %v8468
      %v8482 = vmax.f32 %v8375, %v8471
      %v8483 = vmax.f32 %v8376, %v8474
      %s8484 = scalar_lea.vmem %s7, 384
      %v8485 = vld [vmem:[%s8484] sm:$0xff]
      %v8486 = vld [vmem:[%s8484 + $0x8] sm:$0xff]
      %v8487 = vld [vmem:[%s8484 + $0x10] sm:$0xff]
      %v8488 = vld [vmem:[%s8484 + $0x18] sm:$0xff]
      %v8489 = vld [vmem:[%s8484 + $0x20] sm:$0xff]
      %v8490 = vld [vmem:[%s8484 + $0x28] sm:$0xff]
      %v8491 = vld [vmem:[%s8484 + $0x30] sm:$0xff]
      %v8492 = vld [vmem:[%s8484 + $0x38] sm:$0xff]
      %v8493 = vld [vmem:[%s8484 + $0x40] sm:$0xff]
      %v8494 = vld [vmem:[%s8484 + $0x48] sm:$0xff]
      %v8495 = vld [vmem:[%s8484 + $0x50] sm:$0xff]
      %v8496 = vld [vmem:[%s8484 + $0x58] sm:$0xff]
      %v8497 = vld [vmem:[%s8484 + $0x60] sm:$0xff]
      %v8498 = vld [vmem:[%s8484 + $0x68] sm:$0xff]
      %v8499 = vld [vmem:[%s8484 + $0x70] sm:$0xff]
      %v8500 = vld [vmem:[%s8484 + $0x78] sm:$0xff]
      %8501 = vmatpush.msra.mxu0 %v8155
      %8502 = vmatpush.msra.mxu0 %v8154
      %8503 = vmatpush.msra.mxu0 %v8153
      %8504 = vmatpush.msra.mxu0 %v8152
      %8505 = vmatpush.msra.mxu0 %v8151
      %8506 = vmatpush.msra.mxu0 %v8150
      %8507 = vmatpush.msra.mxu0 %v8149
      %8508 = vmatpush.msra.mxu0 %v8148
      %8509 = vmatpush.msra.mxu0 %v8147
      %8510 = vmatpush.msra.mxu0 %v8146
      %8511 = vmatpush.msra.mxu0 %v8145
      %8512 = vmatpush.msra.mxu0 %v8144
      %8513 = vmatpush.msra.mxu0 %v8143
      %8514 = vmatpush.msra.mxu0 %v8142
      %8515 = vmatpush.msra.mxu0 %v8141
      %8516 = vmatpush.msra.mxu0 %v8140
      %8517 = vmatmul.f32.gmra.mxu0 %v8485
      %v8518 = vpop.f32.mrf.mxu0
      %v8519 = vadd.f32 0.0, %v8518
      %8520 = vmatmul.f32.gmra.mxu0 %v8487
      %v8521 = vpop.f32.mrf.mxu0
      %v8522 = vadd.f32 0.0, %v8521
      %8523 = vmatmul.f32.gmra.mxu0 %v8489
      %v8524 = vpop.f32.mrf.mxu0
      %v8525 = vadd.f32 0.0, %v8524
      %8526 = vmatmul.f32.gmra.mxu0 %v8491
      %v8527 = vpop.f32.mrf.mxu0
      %v8528 = vadd.f32 0.0, %v8527
      %8529 = vmatmul.f32.gmra.mxu0 %v8493
      %v8530 = vpop.f32.mrf.mxu0
      %v8531 = vadd.f32 0.0, %v8530
      %8532 = vmatmul.f32.gmra.mxu0 %v8495
      %v8533 = vpop.f32.mrf.mxu0
      %v8534 = vadd.f32 0.0, %v8533
      %8535 = vmatmul.f32.gmra.mxu0 %v8497
      %v8536 = vpop.f32.mrf.mxu0
      %v8537 = vadd.f32 0.0, %v8536
      %8538 = vmatmul.f32.gmra.mxu0 %v8499
      %v8539 = vpop.f32.mrf.mxu0
      %v8540 = vadd.f32 0.0, %v8539
      %8541 = vdwg.mxu0
      %8542 = vmatpush.msra.mxu0 %v8171
      %8543 = vmatpush.msra.mxu0 %v8170
      %8544 = vmatpush.msra.mxu0 %v8169
      %8545 = vmatpush.msra.mxu0 %v8168
      %8546 = vmatpush.msra.mxu0 %v8167
      %8547 = vmatpush.msra.mxu0 %v8166
      %8548 = vmatpush.msra.mxu0 %v8165
      %8549 = vmatpush.msra.mxu0 %v8164
      %8550 = vmatpush.msra.mxu0 %v8163
      %8551 = vmatpush.msra.mxu0 %v8162
      %8552 = vmatpush.msra.mxu0 %v8161
      %8553 = vmatpush.msra.mxu0 %v8160
      %8554 = vmatpush.msra.mxu0 %v8159
      %8555 = vmatpush.msra.mxu0 %v8158
      %8556 = vmatpush.msra.mxu0 %v8157
      %8557 = vmatpush.msra.mxu0 %v8156
      %8558 = vmatmul.f32.gmra.mxu0 %v8486
      %v8559 = vpop.f32.mrf.mxu0
      %v8560 = vadd.f32 %v8519, %v8559
      %8561 = vmatmul.f32.gmra.mxu0 %v8488
      %v8562 = vpop.f32.mrf.mxu0
      %v8563 = vadd.f32 %v8522, %v8562
      %8564 = vmatmul.f32.gmra.mxu0 %v8490
      %v8565 = vpop.f32.mrf.mxu0
      %v8566 = vadd.f32 %v8525, %v8565
      %8567 = vmatmul.f32.gmra.mxu0 %v8492
      %v8568 = vpop.f32.mrf.mxu0
      %v8569 = vadd.f32 %v8528, %v8568
      %8570 = vmatmul.f32.gmra.mxu0 %v8494
      %v8571 = vpop.f32.mrf.mxu0
      %v8572 = vadd.f32 %v8531, %v8571
      %8573 = vmatmul.f32.gmra.mxu0 %v8496
      %v8574 = vpop.f32.mrf.mxu0
      %v8575 = vadd.f32 %v8534, %v8574
      %8576 = vmatmul.f32.gmra.mxu0 %v8498
      %v8577 = vpop.f32.mrf.mxu0
      %v8578 = vadd.f32 %v8537, %v8577
      %8579 = vmatmul.f32.gmra.mxu0 %v8500
      %v8580 = vpop.f32.mrf.mxu0
      %v8581 = vadd.f32 %v8540, %v8580
      %8582 = vdwg.mxu0
      %v8583 = vmax.f32 %v8476, %v8560
      %v8584 = vmax.f32 %v8477, %v8563
      %v8585 = vmax.f32 %v8478, %v8566
      %v8586 = vmax.f32 %v8479, %v8569
      %v8587 = vmax.f32 %v8480, %v8572
      %v8588 = vmax.f32 %v8481, %v8575
      %v8589 = vmax.f32 %v8482, %v8578
      %v8590 = vmax.f32 %v8483, %v8581
      %v8591 = vld [vmem:[%s4] sm:$0x1]
      %v8593 = vperm.slane %v8591, 0
      %v8595 = vadd.f32 %v8583, %v8593
      %v8596 = vadd.f32 %v8584, %v8593
      %v8597 = vadd.f32 %v8585, %v8593
      %v8598 = vadd.f32 %v8586, %v8593
      %v8599 = vadd.f32 %v8587, %v8593
      %v8600 = vadd.f32 %v8588, %v8593
      %v8601 = vadd.f32 %v8589, %v8593
      %v8602 = vadd.f32 %v8590, %v8593
      %8603 = vst.msk [vmem:[#allocation3] sm:$0xff] %vm1170, 0.0
      %8604 = vst.msk [vmem:[#allocation3 + $0x8] sm:$0xff] %vm1170, 0.0
      %8605 = vst.msk [vmem:[#allocation3 + $0x10] sm:$0xff] %vm1170, 0.0
      %8606 = vst.msk [vmem:[#allocation3 + $0x18] sm:$0xff] %vm1170, 0.0
      %8607 = vst.msk [vmem:[#allocation3 + $0x20] sm:$0xff] %vm1170, 0.0
      %8608 = vst.msk [vmem:[#allocation3 + $0x28] sm:$0xff] %vm1170, 0.0
      %8609 = vst.msk [vmem:[#allocation3 + $0x30] sm:$0xff] %vm1170, 0.0
      %8610 = vst.msk [vmem:[#allocation3 + $0x38] sm:$0xff] %vm1170, 0.0
      %8611 = vst.msk [vmem:[#allocation3 + $0x40] sm:$0xff] %vm1170, 0.0
      %8612 = vst.msk [vmem:[#allocation3 + $0x48] sm:$0xff] %vm1170, 0.0
      %8613 = vst.msk [vmem:[#allocation3 + $0x50] sm:$0xff] %vm1170, 0.0
      %8614 = vst.msk [vmem:[#allocation3 + $0x58] sm:$0xff] %vm1170, 0.0
      %8615 = vst.msk [vmem:[#allocation3 + $0x60] sm:$0xff] %vm1170, 0.0
      %8616 = vst.msk [vmem:[#allocation3 + $0x68] sm:$0xff] %vm1170, 0.0
      %8617 = vst.msk [vmem:[#allocation3 + $0x70] sm:$0xff] %vm1170, 0.0
      %8618 = vst.msk [vmem:[#allocation3 + $0x78] sm:$0xff] %vm1170, 0.0
      %8619 = vst.msk [vmem:[#allocation3 + $0x80] sm:$0xff] %vm1170, 0.0
      %8620 = vst.msk [vmem:[#allocation3 + $0x88] sm:$0xff] %vm1170, 0.0
      %8621 = vst.msk [vmem:[#allocation3 + $0x90] sm:$0xff] %vm1170, 0.0
      %8622 = vst.msk [vmem:[#allocation3 + $0x98] sm:$0xff] %vm1170, 0.0
      %8623 = vst.msk [vmem:[#allocation3 + $0xa0] sm:$0xff] %vm1170, 0.0
      %8624 = vst.msk [vmem:[#allocation3 + $0xa8] sm:$0xff] %vm1170, 0.0
      %8625 = vst.msk [vmem:[#allocation3 + $0xb0] sm:$0xff] %vm1170, 0.0
      %8626 = vst.msk [vmem:[#allocation3 + $0xb8] sm:$0xff] %vm1170, 0.0
      %8627 = vst.msk [vmem:[#allocation3 + $0xc0] sm:$0xff] %vm1170, 0.0
      %8628 = vst.msk [vmem:[#allocation3 + $0xc8] sm:$0xff] %vm1170, 0.0
      %8629 = vst.msk [vmem:[#allocation3 + $0xd0] sm:$0xff] %vm1170, 0.0
      %8630 = vst.msk [vmem:[#allocation3 + $0xd8] sm:$0xff] %vm1170, 0.0
      %8631 = vst.msk [vmem:[#allocation3 + $0xe0] sm:$0xff] %vm1170, 0.0
      %8632 = vst.msk [vmem:[#allocation3 + $0xe8] sm:$0xff] %vm1170, 0.0
      %8633 = vst.msk [vmem:[#allocation3 + $0xf0] sm:$0xff] %vm1170, 0.0
      %8634 = vst.msk [vmem:[#allocation3 + $0xf8] sm:$0xff] %vm1170, 0.0
      %8635 = vst.msk [vmem:[#allocation3 + $0x100] sm:$0xff] %vm1170, 0.0
      %8636 = vst.msk [vmem:[#allocation3 + $0x108] sm:$0xff] %vm1170, 0.0
      %8637 = vst.msk [vmem:[#allocation3 + $0x110] sm:$0xff] %vm1170, 0.0
      %8638 = vst.msk [vmem:[#allocation3 + $0x118] sm:$0xff] %vm1170, 0.0
      %s8639 = scalar_lea.vmem [#allocation3], 48
      %8640 = vst.msk [vmem:[%s8639 + $0x8] sm:$0xff] %vm1170, %v8595
      %8641 = vst.msk [vmem:[%s8639 + $0x20] sm:$0xff] %vm1170, %v8596
      %8642 = vst.msk [vmem:[%s8639 + $0x38] sm:$0xff] %vm1170, %v8597
      %8643 = vst.msk [vmem:[%s8639 + $0x50] sm:$0xff] %vm1170, %v8598
      %8644 = vst.msk [vmem:[%s8639 + $0x68] sm:$0xff] %vm1170, %v8599
      %8645 = vst.msk [vmem:[%s8639 + $0x80] sm:$0xff] %vm1170, %v8600
      %8646 = vst.msk [vmem:[%s8639 + $0x98] sm:$0xff] %vm1170, %v8601
      %8647 = vst.msk [vmem:[%s8639 + $0xb0] sm:$0xff] %vm1170, %v8602
      %v8648 = vld [vmem:[#allocation3 + $0x6] sm:$0xff]
      %v8649 = vld [vmem:[#allocation3 + $0x1e] sm:$0xff]
      %v8650 = vld [vmem:[#allocation3 + $0x36] sm:$0xff]
      %v8651 = vld [vmem:[#allocation3 + $0x4e] sm:$0xff]
      %v8652 = vld [vmem:[#allocation3 + $0x66] sm:$0xff]
      %v8653 = vld [vmem:[#allocation3 + $0x7e] sm:$0xff]
      %v8654 = vld [vmem:[#allocation3 + $0x96] sm:$0xff]
      %v8655 = vld [vmem:[#allocation3 + $0xae] sm:$0xff]
      %v8656 = vld [vmem:[%s5] sm:$0xff]
      %v8657 = vld [vmem:[%s5 + $0x8] sm:$0xff]
      %v8658 = vld [vmem:[%s5 + $0x10] sm:$0xff]
      %v8659 = vld [vmem:[%s5 + $0x18] sm:$0xff]
      %v8660 = vld [vmem:[#allocation3 + $0x7] sm:$0xff]
      %v8661 = vld [vmem:[#allocation3 + $0x1f] sm:$0xff]
      %v8662 = vld [vmem:[#allocation3 + $0x37] sm:$0xff]
      %v8663 = vld [vmem:[#allocation3 + $0x4f] sm:$0xff]
      %v8664 = vld [vmem:[#allocation3 + $0x67] sm:$0xff]
      %v8665 = vld [vmem:[#allocation3 + $0x7f] sm:$0xff]
      %v8666 = vld [vmem:[#allocation3 + $0x97] sm:$0xff]
      %v8667 = vld [vmem:[#allocation3 + $0xaf] sm:$0xff]
      %s8668 = scalar_lea.vmem %s5, 32
      %v8669 = vld [vmem:[%s8668] sm:$0xff]
      %v8670 = vld [vmem:[%s8668 + $0x8] sm:$0xff]
      %v8671 = vld [vmem:[%s8668 + $0x10] sm:$0xff]
      %v8672 = vld [vmem:[%s8668 + $0x18] sm:$0xff]
      %v8674 = vsel %vm1170, %v8660, 0
      %v8677 = vsel %vm1170, %v8661, 0
      %v8680 = vsel %vm1170, %v8662, 0
      %v8683 = vsel %vm1170, %v8663, 0
      %v8686 = vsel %vm1170, %v8664, 0
      %v8689 = vsel %vm1170, %v8665, 0
      %v8692 = vsel %vm1170, %v8666, 0
      %v8695 = vsel %vm1170, %v8667, 0
      %8697 = vmatpush.msra.mxu0 0.0
      %8698 = vmatpush.msra.mxu0 0.0
      %8699 = vmatpush.msra.mxu0 0.0
      %8700 = vmatpush.msra.mxu0 0.0
      %8701 = vmatpush.msra.mxu0 0.0
      %8702 = vmatpush.msra.mxu0 0.0
      %8703 = vmatpush.msra.mxu0 0.0
      %8704 = vmatpush.msra.mxu0 0.0
      %8705 = vmatpush.msra.mxu0 0.0
      %8706 = vmatpush.msra.mxu0 0.0
      %8707 = vmatpush.msra.mxu0 0.0
      %8708 = vmatpush.msra.mxu0 0.0
      %8709 = vmatpush.msra.mxu0 %v8672
      %8710 = vmatpush.msra.mxu0 %v8671
      %8711 = vmatpush.msra.mxu0 %v8670
      %8712 = vmatpush.msra.mxu0 %v8669
      %8713 = vmatmul.f32.gmra.mxu0 %v8674
      %v8714 = vpop.f32.mrf.mxu0
      %v8715 = vadd.f32 0.0, %v8714
      %8716 = vmatmul.f32.gmra.mxu0 %v8677
      %v8717 = vpop.f32.mrf.mxu0
      %v8718 = vadd.f32 0.0, %v8717
      %8719 = vmatmul.f32.gmra.mxu0 %v8680
      %v8720 = vpop.f32.mrf.mxu0
      %v8721 = vadd.f32 0.0, %v8720
      %8722 = vmatmul.f32.gmra.mxu0 %v8683
      %v8723 = vpop.f32.mrf.mxu0
      %v8724 = vadd.f32 0.0, %v8723
      %8725 = vmatmul.f32.gmra.mxu0 %v8686
      %v8726 = vpop.f32.mrf.mxu0
      %v8727 = vadd.f32 0.0, %v8726
      %8728 = vmatmul.f32.gmra.mxu0 %v8689
      %v8729 = vpop.f32.mrf.mxu0
      %v8730 = vadd.f32 0.0, %v8729
      %8731 = vmatmul.f32.gmra.mxu0 %v8692
      %v8732 = vpop.f32.mrf.mxu0
      %v8733 = vadd.f32 0.0, %v8732
      %8734 = vmatmul.f32.gmra.mxu0 %v8695
      %v8735 = vpop.f32.mrf.mxu0
      %v8736 = vadd.f32 0.0, %v8735
      %8737 = vdwg.mxu0
      %v8739 = vsel %vm1170, %v8648, 0
      %v8742 = vsel %vm1170, %v8649, 0
      %v8745 = vsel %vm1170, %v8650, 0
      %v8748 = vsel %vm1170, %v8651, 0
      %v8751 = vsel %vm1170, %v8652, 0
      %v8754 = vsel %vm1170, %v8653, 0
      %v8757 = vsel %vm1170, %v8654, 0
      %v8760 = vsel %vm1170, %v8655, 0
      %8762 = vmatpush.msra.mxu0 0.0
      %8763 = vmatpush.msra.mxu0 0.0
      %8764 = vmatpush.msra.mxu0 0.0
      %8765 = vmatpush.msra.mxu0 0.0
      %8766 = vmatpush.msra.mxu0 0.0
      %8767 = vmatpush.msra.mxu0 0.0
      %8768 = vmatpush.msra.mxu0 0.0
      %8769 = vmatpush.msra.mxu0 0.0
      %8770 = vmatpush.msra.mxu0 0.0
      %8771 = vmatpush.msra.mxu0 0.0
      %8772 = vmatpush.msra.mxu0 0.0
      %8773 = vmatpush.msra.mxu0 0.0
      %8774 = vmatpush.msra.mxu0 %v8659
      %8775 = vmatpush.msra.mxu0 %v8658
      %8776 = vmatpush.msra.mxu0 %v8657
      %8777 = vmatpush.msra.mxu0 %v8656
      %8778 = vmatmul.f32.gmra.mxu0 %v8739
      %v8779 = vpop.f32.mrf.mxu0
      %v8780 = vadd.f32 %v8715, %v8779
      %8781 = vmatmul.f32.gmra.mxu0 %v8742
      %v8782 = vpop.f32.mrf.mxu0
      %v8783 = vadd.f32 %v8718, %v8782
      %8784 = vmatmul.f32.gmra.mxu0 %v8745
      %v8785 = vpop.f32.mrf.mxu0
      %v8786 = vadd.f32 %v8721, %v8785
      %8787 = vmatmul.f32.gmra.mxu0 %v8748
      %v8788 = vpop.f32.mrf.mxu0
      %v8789 = vadd.f32 %v8724, %v8788
      %8790 = vmatmul.f32.gmra.mxu0 %v8751
      %v8791 = vpop.f32.mrf.mxu0
      %v8792 = vadd.f32 %v8727, %v8791
      %8793 = vmatmul.f32.gmra.mxu0 %v8754
      %v8794 = vpop.f32.mrf.mxu0
      %v8795 = vadd.f32 %v8730, %v8794
      %8796 = vmatmul.f32.gmra.mxu0 %v8757
      %v8797 = vpop.f32.mrf.mxu0
      %v8798 = vadd.f32 %v8733, %v8797
      %8799 = vmatmul.f32.gmra.mxu0 %v8760
      %v8800 = vpop.f32.mrf.mxu0
      %v8801 = vadd.f32 %v8736, %v8800
      %8802 = vdwg.mxu0
      %v8803 = vld [vmem:[#allocation3 + $0x8] sm:$0xff]
      %v8804 = vld [vmem:[#allocation3 + $0x20] sm:$0xff]
      %v8805 = vld [vmem:[#allocation3 + $0x38] sm:$0xff]
      %v8806 = vld [vmem:[#allocation3 + $0x50] sm:$0xff]
      %v8807 = vld [vmem:[#allocation3 + $0x68] sm:$0xff]
      %v8808 = vld [vmem:[#allocation3 + $0x80] sm:$0xff]
      %v8809 = vld [vmem:[#allocation3 + $0x98] sm:$0xff]
      %v8810 = vld [vmem:[#allocation3 + $0xb0] sm:$0xff]
      %s8811 = scalar_lea.vmem %s5, 64
      %v8812 = vld [vmem:[%s8811] sm:$0xff]
      %v8813 = vld [vmem:[%s8811 + $0x8] sm:$0xff]
      %v8814 = vld [vmem:[%s8811 + $0x10] sm:$0xff]
      %v8815 = vld [vmem:[%s8811 + $0x18] sm:$0xff]
      %v8817 = vsel %vm1170, %v8803, 0
      %v8820 = vsel %vm1170, %v8804, 0
      %v8823 = vsel %vm1170, %v8805, 0
      %v8826 = vsel %vm1170, %v8806, 0
      %v8829 = vsel %vm1170, %v8807, 0
      %v8832 = vsel %vm1170, %v8808, 0
      %v8835 = vsel %vm1170, %v8809, 0
      %v8838 = vsel %vm1170, %v8810, 0
      %8840 = vmatpush.msra.mxu0 0.0
      %8841 = vmatpush.msra.mxu0 0.0
      %8842 = vmatpush.msra.mxu0 0.0
      %8843 = vmatpush.msra.mxu0 0.0
      %8844 = vmatpush.msra.mxu0 0.0
      %8845 = vmatpush.msra.mxu0 0.0
      %8846 = vmatpush.msra.mxu0 0.0
      %8847 = vmatpush.msra.mxu0 0.0
      %8848 = vmatpush.msra.mxu0 0.0
      %8849 = vmatpush.msra.mxu0 0.0
      %8850 = vmatpush.msra.mxu0 0.0
      %8851 = vmatpush.msra.mxu0 0.0
      %8852 = vmatpush.msra.mxu0 %v8815
      %8853 = vmatpush.msra.mxu0 %v8814
      %8854 = vmatpush.msra.mxu0 %v8813
      %8855 = vmatpush.msra.mxu0 %v8812
      %8856 = vmatmul.f32.gmra.mxu0 %v8817
      %v8857 = vpop.f32.mrf.mxu0
      %v8858 = vadd.f32 0.0, %v8857
      %8859 = vmatmul.f32.gmra.mxu0 %v8820
      %v8860 = vpop.f32.mrf.mxu0
      %v8861 = vadd.f32 0.0, %v8860
      %8862 = vmatmul.f32.gmra.mxu0 %v8823
      %v8863 = vpop.f32.mrf.mxu0
      %v8864 = vadd.f32 0.0, %v8863
      %8865 = vmatmul.f32.gmra.mxu0 %v8826
      %v8866 = vpop.f32.mrf.mxu0
      %v8867 = vadd.f32 0.0, %v8866
      %8868 = vmatmul.f32.gmra.mxu0 %v8829
      %v8869 = vpop.f32.mrf.mxu0
      %v8870 = vadd.f32 0.0, %v8869
      %8871 = vmatmul.f32.gmra.mxu0 %v8832
      %v8872 = vpop.f32.mrf.mxu0
      %v8873 = vadd.f32 0.0, %v8872
      %8874 = vmatmul.f32.gmra.mxu0 %v8835
      %v8875 = vpop.f32.mrf.mxu0
      %v8876 = vadd.f32 0.0, %v8875
      %8877 = vmatmul.f32.gmra.mxu0 %v8838
      %v8878 = vpop.f32.mrf.mxu0
      %v8879 = vadd.f32 0.0, %v8878
      %8880 = vdwg.mxu0
      %v8881 = vadd.f32 %v8780, %v8858
      %v8882 = vadd.f32 %v8783, %v8861
      %v8883 = vadd.f32 %v8786, %v8864
      %v8884 = vadd.f32 %v8789, %v8867
      %v8885 = vadd.f32 %v8792, %v8870
      %v8886 = vadd.f32 %v8795, %v8873
      %v8887 = vadd.f32 %v8798, %v8876
      %v8888 = vadd.f32 %v8801, %v8879
      %v8889 = vld [vmem:[#allocation3 + $0x9] sm:$0xff]
      %v8890 = vld [vmem:[#allocation3 + $0x21] sm:$0xff]
      %v8891 = vld [vmem:[#allocation3 + $0x39] sm:$0xff]
      %v8892 = vld [vmem:[#allocation3 + $0x51] sm:$0xff]
      %v8893 = vld [vmem:[#allocation3 + $0x69] sm:$0xff]
      %v8894 = vld [vmem:[#allocation3 + $0x81] sm:$0xff]
      %v8895 = vld [vmem:[#allocation3 + $0x99] sm:$0xff]
      %v8896 = vld [vmem:[#allocation3 + $0xb1] sm:$0xff]
      %s8897 = scalar_lea.vmem %s5, 96
      %v8898 = vld [vmem:[%s8897] sm:$0xff]
      %v8899 = vld [vmem:[%s8897 + $0x8] sm:$0xff]
      %v8900 = vld [vmem:[%s8897 + $0x10] sm:$0xff]
      %v8901 = vld [vmem:[%s8897 + $0x18] sm:$0xff]
      %v8903 = vsel %vm1170, %v8889, 0
      %v8906 = vsel %vm1170, %v8890, 0
      %v8909 = vsel %vm1170, %v8891, 0
      %v8912 = vsel %vm1170, %v8892, 0
      %v8915 = vsel %vm1170, %v8893, 0
      %v8918 = vsel %vm1170, %v8894, 0
      %v8921 = vsel %vm1170, %v8895, 0
      %v8924 = vsel %vm1170, %v8896, 0
      %8926 = vmatpush.msra.mxu0 0.0
      %8927 = vmatpush.msra.mxu0 0.0
      %8928 = vmatpush.msra.mxu0 0.0
      %8929 = vmatpush.msra.mxu0 0.0
      %8930 = vmatpush.msra.mxu0 0.0
      %8931 = vmatpush.msra.mxu0 0.0
      %8932 = vmatpush.msra.mxu0 0.0
      %8933 = vmatpush.msra.mxu0 0.0
      %8934 = vmatpush.msra.mxu0 0.0
      %8935 = vmatpush.msra.mxu0 0.0
      %8936 = vmatpush.msra.mxu0 0.0
      %8937 = vmatpush.msra.mxu0 0.0
      %8938 = vmatpush.msra.mxu0 %v8901
      %8939 = vmatpush.msra.mxu0 %v8900
      %8940 = vmatpush.msra.mxu0 %v8899
      %8941 = vmatpush.msra.mxu0 %v8898
      %8942 = vmatmul.f32.gmra.mxu0 %v8903
      %v8943 = vpop.f32.mrf.mxu0
      %v8944 = vadd.f32 0.0, %v8943
      %8945 = vmatmul.f32.gmra.mxu0 %v8906
      %v8946 = vpop.f32.mrf.mxu0
      %v8947 = vadd.f32 0.0, %v8946
      %8948 = vmatmul.f32.gmra.mxu0 %v8909
      %v8949 = vpop.f32.mrf.mxu0
      %v8950 = vadd.f32 0.0, %v8949
      %8951 = vmatmul.f32.gmra.mxu0 %v8912
      %v8952 = vpop.f32.mrf.mxu0
      %v8953 = vadd.f32 0.0, %v8952
      %8954 = vmatmul.f32.gmra.mxu0 %v8915
      %v8955 = vpop.f32.mrf.mxu0
      %v8956 = vadd.f32 0.0, %v8955
      %8957 = vmatmul.f32.gmra.mxu0 %v8918
      %v8958 = vpop.f32.mrf.mxu0
      %v8959 = vadd.f32 0.0, %v8958
      %8960 = vmatmul.f32.gmra.mxu0 %v8921
      %v8961 = vpop.f32.mrf.mxu0
      %v8962 = vadd.f32 0.0, %v8961
      %8963 = vmatmul.f32.gmra.mxu0 %v8924
      %v8964 = vpop.f32.mrf.mxu0
      %v8965 = vadd.f32 0.0, %v8964
      %8966 = vdwg.mxu0
      %v8967 = vadd.f32 %v8881, %v8944
      %v8968 = vadd.f32 %v8882, %v8947
      %v8969 = vadd.f32 %v8883, %v8950
      %v8970 = vadd.f32 %v8884, %v8953
      %v8971 = vadd.f32 %v8885, %v8956
      %v8972 = vadd.f32 %v8886, %v8959
      %v8973 = vadd.f32 %v8887, %v8962
      %v8974 = vadd.f32 %v8888, %v8965
      %v8975 = vld [vmem:[#allocation3 + $0xa] sm:$0xff]
      %v8976 = vld [vmem:[#allocation3 + $0x22] sm:$0xff]
      %v8977 = vld [vmem:[#allocation3 + $0x3a] sm:$0xff]
      %v8978 = vld [vmem:[#allocation3 + $0x52] sm:$0xff]
      %v8979 = vld [vmem:[#allocation3 + $0x6a] sm:$0xff]
      %v8980 = vld [vmem:[#allocation3 + $0x82] sm:$0xff]
      %v8981 = vld [vmem:[#allocation3 + $0x9a] sm:$0xff]
      %v8982 = vld [vmem:[#allocation3 + $0xb2] sm:$0xff]
      %s8983 = scalar_lea.vmem %s5, 128
      %v8984 = vld [vmem:[%s8983] sm:$0xff]
      %v8985 = vld [vmem:[%s8983 + $0x8] sm:$0xff]
      %v8986 = vld [vmem:[%s8983 + $0x10] sm:$0xff]
      %v8987 = vld [vmem:[%s8983 + $0x18] sm:$0xff]
      %v8989 = vsel %vm1170, %v8975, 0
      %v8992 = vsel %vm1170, %v8976, 0
      %v8995 = vsel %vm1170, %v8977, 0
      %v8998 = vsel %vm1170, %v8978, 0
      %v9001 = vsel %vm1170, %v8979, 0
      %v9004 = vsel %vm1170, %v8980, 0
      %v9007 = vsel %vm1170, %v8981, 0
      %v9010 = vsel %vm1170, %v8982, 0
      %9012 = vmatpush.msra.mxu0 0.0
      %9013 = vmatpush.msra.mxu0 0.0
      %9014 = vmatpush.msra.mxu0 0.0
      %9015 = vmatpush.msra.mxu0 0.0
      %9016 = vmatpush.msra.mxu0 0.0
      %9017 = vmatpush.msra.mxu0 0.0
      %9018 = vmatpush.msra.mxu0 0.0
      %9019 = vmatpush.msra.mxu0 0.0
      %9020 = vmatpush.msra.mxu0 0.0
      %9021 = vmatpush.msra.mxu0 0.0
      %9022 = vmatpush.msra.mxu0 0.0
      %9023 = vmatpush.msra.mxu0 0.0
      %9024 = vmatpush.msra.mxu0 %v8987
      %9025 = vmatpush.msra.mxu0 %v8986
      %9026 = vmatpush.msra.mxu0 %v8985
      %9027 = vmatpush.msra.mxu0 %v8984
      %9028 = vmatmul.f32.gmra.mxu0 %v8989
      %v9029 = vpop.f32.mrf.mxu0
      %v9030 = vadd.f32 0.0, %v9029
      %9031 = vmatmul.f32.gmra.mxu0 %v8992
      %v9032 = vpop.f32.mrf.mxu0
      %v9033 = vadd.f32 0.0, %v9032
      %9034 = vmatmul.f32.gmra.mxu0 %v8995
      %v9035 = vpop.f32.mrf.mxu0
      %v9036 = vadd.f32 0.0, %v9035
      %9037 = vmatmul.f32.gmra.mxu0 %v8998
      %v9038 = vpop.f32.mrf.mxu0
      %v9039 = vadd.f32 0.0, %v9038
      %9040 = vmatmul.f32.gmra.mxu0 %v9001
      %v9041 = vpop.f32.mrf.mxu0
      %v9042 = vadd.f32 0.0, %v9041
      %9043 = vmatmul.f32.gmra.mxu0 %v9004
      %v9044 = vpop.f32.mrf.mxu0
      %v9045 = vadd.f32 0.0, %v9044
      %9046 = vmatmul.f32.gmra.mxu0 %v9007
      %v9047 = vpop.f32.mrf.mxu0
      %v9048 = vadd.f32 0.0, %v9047
      %9049 = vmatmul.f32.gmra.mxu0 %v9010
      %v9050 = vpop.f32.mrf.mxu0
      %v9051 = vadd.f32 0.0, %v9050
      %9052 = vdwg.mxu0
      %v9053 = vadd.f32 %v8967, %v9030
      %v9054 = vadd.f32 %v8968, %v9033
      %v9055 = vadd.f32 %v8969, %v9036
      %v9056 = vadd.f32 %v8970, %v9039
      %v9057 = vadd.f32 %v8971, %v9042
      %v9058 = vadd.f32 %v8972, %v9045
      %v9059 = vadd.f32 %v8973, %v9048
      %v9060 = vadd.f32 %v8974, %v9051
      %s9061 = scalar_lea.vmem [#allocation3], 24
      %v9062 = vld [vmem:[%s9061 + $0x6] sm:$0xff]
      %v9063 = vld [vmem:[%s9061 + $0x1e] sm:$0xff]
      %v9064 = vld [vmem:[%s9061 + $0x36] sm:$0xff]
      %v9065 = vld [vmem:[%s9061 + $0x4e] sm:$0xff]
      %v9066 = vld [vmem:[%s9061 + $0x66] sm:$0xff]
      %v9067 = vld [vmem:[%s9061 + $0x7e] sm:$0xff]
      %v9068 = vld [vmem:[%s9061 + $0x96] sm:$0xff]
      %v9069 = vld [vmem:[%s9061 + $0xae] sm:$0xff]
      %s9070 = scalar_lea.vmem %s5, 160
      %v9071 = vld [vmem:[%s9070] sm:$0xff]
      %v9072 = vld [vmem:[%s9070 + $0x8] sm:$0xff]
      %v9073 = vld [vmem:[%s9070 + $0x10] sm:$0xff]
      %v9074 = vld [vmem:[%s9070 + $0x18] sm:$0xff]
      %v9076 = vsel %vm1170, %v9062, 0
      %v9079 = vsel %vm1170, %v9063, 0
      %v9082 = vsel %vm1170, %v9064, 0
      %v9085 = vsel %vm1170, %v9065, 0
      %v9088 = vsel %vm1170, %v9066, 0
      %v9091 = vsel %vm1170, %v9067, 0
      %v9094 = vsel %vm1170, %v9068, 0
      %v9097 = vsel %vm1170, %v9069, 0
      %9099 = vmatpush.msra.mxu0 0.0
      %9100 = vmatpush.msra.mxu0 0.0
      %9101 = vmatpush.msra.mxu0 0.0
      %9102 = vmatpush.msra.mxu0 0.0
      %9103 = vmatpush.msra.mxu0 0.0
      %9104 = vmatpush.msra.mxu0 0.0
      %9105 = vmatpush.msra.mxu0 0.0
      %9106 = vmatpush.msra.mxu0 0.0
      %9107 = vmatpush.msra.mxu0 0.0
      %9108 = vmatpush.msra.mxu0 0.0
      %9109 = vmatpush.msra.mxu0 0.0
      %9110 = vmatpush.msra.mxu0 0.0
      %9111 = vmatpush.msra.mxu0 %v9074
      %9112 = vmatpush.msra.mxu0 %v9073
      %9113 = vmatpush.msra.mxu0 %v9072
      %9114 = vmatpush.msra.mxu0 %v9071
      %9115 = vmatmul.f32.gmra.mxu0 %v9076
      %v9116 = vpop.f32.mrf.mxu0
      %v9117 = vadd.f32 0.0, %v9116
      %9118 = vmatmul.f32.gmra.mxu0 %v9079
      %v9119 = vpop.f32.mrf.mxu0
      %v9120 = vadd.f32 0.0, %v9119
      %9121 = vmatmul.f32.gmra.mxu0 %v9082
      %v9122 = vpop.f32.mrf.mxu0
      %v9123 = vadd.f32 0.0, %v9122
      %9124 = vmatmul.f32.gmra.mxu0 %v9085
      %v9125 = vpop.f32.mrf.mxu0
      %v9126 = vadd.f32 0.0, %v9125
      %9127 = vmatmul.f32.gmra.mxu0 %v9088
      %v9128 = vpop.f32.mrf.mxu0
      %v9129 = vadd.f32 0.0, %v9128
      %9130 = vmatmul.f32.gmra.mxu0 %v9091
      %v9131 = vpop.f32.mrf.mxu0
      %v9132 = vadd.f32 0.0, %v9131
      %9133 = vmatmul.f32.gmra.mxu0 %v9094
      %v9134 = vpop.f32.mrf.mxu0
      %v9135 = vadd.f32 0.0, %v9134
      %9136 = vmatmul.f32.gmra.mxu0 %v9097
      %v9137 = vpop.f32.mrf.mxu0
      %v9138 = vadd.f32 0.0, %v9137
      %9139 = vdwg.mxu0
      %v9140 = vadd.f32 %v9053, %v9117
      %v9141 = vadd.f32 %v9054, %v9120
      %v9142 = vadd.f32 %v9055, %v9123
      %v9143 = vadd.f32 %v9056, %v9126
      %v9144 = vadd.f32 %v9057, %v9129
      %v9145 = vadd.f32 %v9058, %v9132
      %v9146 = vadd.f32 %v9059, %v9135
      %v9147 = vadd.f32 %v9060, %v9138
      %v9148 = vld [vmem:[%s9061 + $0x7] sm:$0xff]
      %v9149 = vld [vmem:[%s9061 + $0x1f] sm:$0xff]
      %v9150 = vld [vmem:[%s9061 + $0x37] sm:$0xff]
      %v9151 = vld [vmem:[%s9061 + $0x4f] sm:$0xff]
      %v9152 = vld [vmem:[%s9061 + $0x67] sm:$0xff]
      %v9153 = vld [vmem:[%s9061 + $0x7f] sm:$0xff]
      %v9154 = vld [vmem:[%s9061 + $0x97] sm:$0xff]
      %v9155 = vld [vmem:[%s9061 + $0xaf] sm:$0xff]
      %s9156 = scalar_lea.vmem %s5, 192
      %v9157 = vld [vmem:[%s9156] sm:$0xff]
      %v9158 = vld [vmem:[%s9156 + $0x8] sm:$0xff]
      %v9159 = vld [vmem:[%s9156 + $0x10] sm:$0xff]
      %v9160 = vld [vmem:[%s9156 + $0x18] sm:$0xff]
      %v9162 = vsel %vm1170, %v9148, 0
      %v9165 = vsel %vm1170, %v9149, 0
      %v9168 = vsel %vm1170, %v9150, 0
      %v9171 = vsel %vm1170, %v9151, 0
      %v9174 = vsel %vm1170, %v9152, 0
      %v9177 = vsel %vm1170, %v9153, 0
      %v9180 = vsel %vm1170, %v9154, 0
      %v9183 = vsel %vm1170, %v9155, 0
      %9185 = vmatpush.msra.mxu0 0.0
      %9186 = vmatpush.msra.mxu0 0.0
      %9187 = vmatpush.msra.mxu0 0.0
      %9188 = vmatpush.msra.mxu0 0.0
      %9189 = vmatpush.msra.mxu0 0.0
      %9190 = vmatpush.msra.mxu0 0.0
      %9191 = vmatpush.msra.mxu0 0.0
      %9192 = vmatpush.msra.mxu0 0.0
      %9193 = vmatpush.msra.mxu0 0.0
      %9194 = vmatpush.msra.mxu0 0.0
      %9195 = vmatpush.msra.mxu0 0.0
      %9196 = vmatpush.msra.mxu0 0.0
      %9197 = vmatpush.msra.mxu0 %v9160
      %9198 = vmatpush.msra.mxu0 %v9159
      %9199 = vmatpush.msra.mxu0 %v9158
      %9200 = vmatpush.msra.mxu0 %v9157
      %9201 = vmatmul.f32.gmra.mxu0 %v9162
      %v9202 = vpop.f32.mrf.mxu0
      %v9203 = vadd.f32 0.0, %v9202
      %9204 = vmatmul.f32.gmra.mxu0 %v9165
      %v9205 = vpop.f32.mrf.mxu0
      %v9206 = vadd.f32 0.0, %v9205
      %9207 = vmatmul.f32.gmra.mxu0 %v9168
      %v9208 = vpop.f32.mrf.mxu0
      %v9209 = vadd.f32 0.0, %v9208
      %9210 = vmatmul.f32.gmra.mxu0 %v9171
      %v9211 = vpop.f32.mrf.mxu0
      %v9212 = vadd.f32 0.0, %v9211
      %9213 = vmatmul.f32.gmra.mxu0 %v9174
      %v9214 = vpop.f32.mrf.mxu0
      %v9215 = vadd.f32 0.0, %v9214
      %9216 = vmatmul.f32.gmra.mxu0 %v9177
      %v9217 = vpop.f32.mrf.mxu0
      %v9218 = vadd.f32 0.0, %v9217
      %9219 = vmatmul.f32.gmra.mxu0 %v9180
      %v9220 = vpop.f32.mrf.mxu0
      %v9221 = vadd.f32 0.0, %v9220
      %9222 = vmatmul.f32.gmra.mxu0 %v9183
      %v9223 = vpop.f32.mrf.mxu0
      %v9224 = vadd.f32 0.0, %v9223
      %9225 = vdwg.mxu0
      %v9226 = vadd.f32 %v9140, %v9203
      %v9227 = vadd.f32 %v9141, %v9206
      %v9228 = vadd.f32 %v9142, %v9209
      %v9229 = vadd.f32 %v9143, %v9212
      %v9230 = vadd.f32 %v9144, %v9215
      %v9231 = vadd.f32 %v9145, %v9218
      %v9232 = vadd.f32 %v9146, %v9221
      %v9233 = vadd.f32 %v9147, %v9224
      %v9234 = vld [vmem:[%s9061 + $0x8] sm:$0xff]
      %v9235 = vld [vmem:[%s9061 + $0x20] sm:$0xff]
      %v9236 = vld [vmem:[%s9061 + $0x38] sm:$0xff]
      %v9237 = vld [vmem:[%s9061 + $0x50] sm:$0xff]
      %v9238 = vld [vmem:[%s9061 + $0x68] sm:$0xff]
      %v9239 = vld [vmem:[%s9061 + $0x80] sm:$0xff]
      %v9240 = vld [vmem:[%s9061 + $0x98] sm:$0xff]
      %v9241 = vld [vmem:[%s9061 + $0xb0] sm:$0xff]
      %s9242 = scalar_lea.vmem %s5, 224
      %v9243 = vld [vmem:[%s9242] sm:$0xff]
      %v9244 = vld [vmem:[%s9242 + $0x8] sm:$0xff]
      %v9245 = vld [vmem:[%s9242 + $0x10] sm:$0xff]
      %v9246 = vld [vmem:[%s9242 + $0x18] sm:$0xff]
      %v9248 = vsel %vm1170, %v9234, 0
      %v9251 = vsel %vm1170, %v9235, 0
      %v9254 = vsel %vm1170, %v9236, 0
      %v9257 = vsel %vm1170, %v9237, 0
      %v9260 = vsel %vm1170, %v9238, 0
      %v9263 = vsel %vm1170, %v9239, 0
      %v9266 = vsel %vm1170, %v9240, 0
      %v9269 = vsel %vm1170, %v9241, 0
      %9271 = vmatpush.msra.mxu0 0.0
      %9272 = vmatpush.msra.mxu0 0.0
      %9273 = vmatpush.msra.mxu0 0.0
      %9274 = vmatpush.msra.mxu0 0.0
      %9275 = vmatpush.msra.mxu0 0.0
      %9276 = vmatpush.msra.mxu0 0.0
      %9277 = vmatpush.msra.mxu0 0.0
      %9278 = vmatpush.msra.mxu0 0.0
      %9279 = vmatpush.msra.mxu0 0.0
      %9280 = vmatpush.msra.mxu0 0.0
      %9281 = vmatpush.msra.mxu0 0.0
      %9282 = vmatpush.msra.mxu0 0.0
      %9283 = vmatpush.msra.mxu0 %v9246
      %9284 = vmatpush.msra.mxu0 %v9245
      %9285 = vmatpush.msra.mxu0 %v9244
      %9286 = vmatpush.msra.mxu0 %v9243
      %9287 = vmatmul.f32.gmra.mxu0 %v9248
      %v9288 = vpop.f32.mrf.mxu0
      %v9289 = vadd.f32 0.0, %v9288
      %9290 = vmatmul.f32.gmra.mxu0 %v9251
      %v9291 = vpop.f32.mrf.mxu0
      %v9292 = vadd.f32 0.0, %v9291
      %9293 = vmatmul.f32.gmra.mxu0 %v9254
      %v9294 = vpop.f32.mrf.mxu0
      %v9295 = vadd.f32 0.0, %v9294
      %9296 = vmatmul.f32.gmra.mxu0 %v9257
      %v9297 = vpop.f32.mrf.mxu0
      %v9298 = vadd.f32 0.0, %v9297
      %9299 = vmatmul.f32.gmra.mxu0 %v9260
      %v9300 = vpop.f32.mrf.mxu0
      %v9301 = vadd.f32 0.0, %v9300
      %9302 = vmatmul.f32.gmra.mxu0 %v9263
      %v9303 = vpop.f32.mrf.mxu0
      %v9304 = vadd.f32 0.0, %v9303
      %9305 = vmatmul.f32.gmra.mxu0 %v9266
      %v9306 = vpop.f32.mrf.mxu0
      %v9307 = vadd.f32 0.0, %v9306
      %9308 = vmatmul.f32.gmra.mxu0 %v9269
      %v9309 = vpop.f32.mrf.mxu0
      %v9310 = vadd.f32 0.0, %v9309
      %9311 = vdwg.mxu0
      %v9312 = vadd.f32 %v9226, %v9289
      %v9313 = vadd.f32 %v9227, %v9292
      %v9314 = vadd.f32 %v9228, %v9295
      %v9315 = vadd.f32 %v9229, %v9298
      %v9316 = vadd.f32 %v9230, %v9301
      %v9317 = vadd.f32 %v9231, %v9304
      %v9318 = vadd.f32 %v9232, %v9307
      %v9319 = vadd.f32 %v9233, %v9310
      %v9320 = vld [vmem:[%s9061 + $0x9] sm:$0xff]
      %v9321 = vld [vmem:[%s9061 + $0x21] sm:$0xff]
      %v9322 = vld [vmem:[%s9061 + $0x39] sm:$0xff]
      %v9323 = vld [vmem:[%s9061 + $0x51] sm:$0xff]
      %v9324 = vld [vmem:[%s9061 + $0x69] sm:$0xff]
      %v9325 = vld [vmem:[%s9061 + $0x81] sm:$0xff]
      %v9326 = vld [vmem:[%s9061 + $0x99] sm:$0xff]
      %v9327 = vld [vmem:[%s9061 + $0xb1] sm:$0xff]
      %s9328 = scalar_lea.vmem %s5, 256
      %v9329 = vld [vmem:[%s9328] sm:$0xff]
      %v9330 = vld [vmem:[%s9328 + $0x8] sm:$0xff]
      %v9331 = vld [vmem:[%s9328 + $0x10] sm:$0xff]
      %v9332 = vld [vmem:[%s9328 + $0x18] sm:$0xff]
      %v9334 = vsel %vm1170, %v9320, 0
      %v9337 = vsel %vm1170, %v9321, 0
      %v9340 = vsel %vm1170, %v9322, 0
      %v9343 = vsel %vm1170, %v9323, 0
      %v9346 = vsel %vm1170, %v9324, 0
      %v9349 = vsel %vm1170, %v9325, 0
      %v9352 = vsel %vm1170, %v9326, 0
      %v9355 = vsel %vm1170, %v9327, 0
      %9357 = vmatpush.msra.mxu0 0.0
      %9358 = vmatpush.msra.mxu0 0.0
      %9359 = vmatpush.msra.mxu0 0.0
      %9360 = vmatpush.msra.mxu0 0.0
      %9361 = vmatpush.msra.mxu0 0.0
      %9362 = vmatpush.msra.mxu0 0.0
      %9363 = vmatpush.msra.mxu0 0.0
      %9364 = vmatpush.msra.mxu0 0.0
      %9365 = vmatpush.msra.mxu0 0.0
      %9366 = vmatpush.msra.mxu0 0.0
      %9367 = vmatpush.msra.mxu0 0.0
      %9368 = vmatpush.msra.mxu0 0.0
      %9369 = vmatpush.msra.mxu0 %v9332
      %9370 = vmatpush.msra.mxu0 %v9331
      %9371 = vmatpush.msra.mxu0 %v9330
      %9372 = vmatpush.msra.mxu0 %v9329
      %9373 = vmatmul.f32.gmra.mxu0 %v9334
      %v9374 = vpop.f32.mrf.mxu0
      %v9375 = vadd.f32 0.0, %v9374
      %9376 = vmatmul.f32.gmra.mxu0 %v9337
      %v9377 = vpop.f32.mrf.mxu0
      %v9378 = vadd.f32 0.0, %v9377
      %9379 = vmatmul.f32.gmra.mxu0 %v9340
      %v9380 = vpop.f32.mrf.mxu0
      %v9381 = vadd.f32 0.0, %v9380
      %9382 = vmatmul.f32.gmra.mxu0 %v9343
      %v9383 = vpop.f32.mrf.mxu0
      %v9384 = vadd.f32 0.0, %v9383
      %9385 = vmatmul.f32.gmra.mxu0 %v9346
      %v9386 = vpop.f32.mrf.mxu0
      %v9387 = vadd.f32 0.0, %v9386
      %9388 = vmatmul.f32.gmra.mxu0 %v9349
      %v9389 = vpop.f32.mrf.mxu0
      %v9390 = vadd.f32 0.0, %v9389
      %9391 = vmatmul.f32.gmra.mxu0 %v9352
      %v9392 = vpop.f32.mrf.mxu0
      %v9393 = vadd.f32 0.0, %v9392
      %9394 = vmatmul.f32.gmra.mxu0 %v9355
      %v9395 = vpop.f32.mrf.mxu0
      %v9396 = vadd.f32 0.0, %v9395
      %9397 = vdwg.mxu0
      %v9398 = vadd.f32 %v9312, %v9375
      %v9399 = vadd.f32 %v9313, %v9378
      %v9400 = vadd.f32 %v9314, %v9381
      %v9401 = vadd.f32 %v9315, %v9384
      %v9402 = vadd.f32 %v9316, %v9387
      %v9403 = vadd.f32 %v9317, %v9390
      %v9404 = vadd.f32 %v9318, %v9393
      %v9405 = vadd.f32 %v9319, %v9396
      %v9406 = vld [vmem:[%s9061 + $0xa] sm:$0xff]
      %v9407 = vld [vmem:[%s9061 + $0x22] sm:$0xff]
      %v9408 = vld [vmem:[%s9061 + $0x3a] sm:$0xff]
      %v9409 = vld [vmem:[%s9061 + $0x52] sm:$0xff]
      %v9410 = vld [vmem:[%s9061 + $0x6a] sm:$0xff]
      %v9411 = vld [vmem:[%s9061 + $0x82] sm:$0xff]
      %v9412 = vld [vmem:[%s9061 + $0x9a] sm:$0xff]
      %v9413 = vld [vmem:[%s9061 + $0xb2] sm:$0xff]
      %s9414 = scalar_lea.vmem %s5, 288
      %v9415 = vld [vmem:[%s9414] sm:$0xff]
      %v9416 = vld [vmem:[%s9414 + $0x8] sm:$0xff]
      %v9417 = vld [vmem:[%s9414 + $0x10] sm:$0xff]
      %v9418 = vld [vmem:[%s9414 + $0x18] sm:$0xff]
      %v9420 = vsel %vm1170, %v9406, 0
      %v9423 = vsel %vm1170, %v9407, 0
      %v9426 = vsel %vm1170, %v9408, 0
      %v9429 = vsel %vm1170, %v9409, 0
      %v9432 = vsel %vm1170, %v9410, 0
      %v9435 = vsel %vm1170, %v9411, 0
      %v9438 = vsel %vm1170, %v9412, 0
      %v9441 = vsel %vm1170, %v9413, 0
      %9443 = vmatpush.msra.mxu0 0.0
      %9444 = vmatpush.msra.mxu0 0.0
      %9445 = vmatpush.msra.mxu0 0.0
      %9446 = vmatpush.msra.mxu0 0.0
      %9447 = vmatpush.msra.mxu0 0.0
      %9448 = vmatpush.msra.mxu0 0.0
      %9449 = vmatpush.msra.mxu0 0.0
      %9450 = vmatpush.msra.mxu0 0.0
      %9451 = vmatpush.msra.mxu0 0.0
      %9452 = vmatpush.msra.mxu0 0.0
      %9453 = vmatpush.msra.mxu0 0.0
      %9454 = vmatpush.msra.mxu0 0.0
      %9455 = vmatpush.msra.mxu0 %v9418
      %9456 = vmatpush.msra.mxu0 %v9417
      %9457 = vmatpush.msra.mxu0 %v9416
      %9458 = vmatpush.msra.mxu0 %v9415
      %9459 = vmatmul.f32.gmra.mxu0 %v9420
      %v9460 = vpop.f32.mrf.mxu0
      %v9461 = vadd.f32 0.0, %v9460
      %9462 = vmatmul.f32.gmra.mxu0 %v9423
      %v9463 = vpop.f32.mrf.mxu0
      %v9464 = vadd.f32 0.0, %v9463
      %9465 = vmatmul.f32.gmra.mxu0 %v9426
      %v9466 = vpop.f32.mrf.mxu0
      %v9467 = vadd.f32 0.0, %v9466
      %9468 = vmatmul.f32.gmra.mxu0 %v9429
      %v9469 = vpop.f32.mrf.mxu0
      %v9470 = vadd.f32 0.0, %v9469
      %9471 = vmatmul.f32.gmra.mxu0 %v9432
      %v9472 = vpop.f32.mrf.mxu0
      %v9473 = vadd.f32 0.0, %v9472
      %9474 = vmatmul.f32.gmra.mxu0 %v9435
      %v9475 = vpop.f32.mrf.mxu0
      %v9476 = vadd.f32 0.0, %v9475
      %9477 = vmatmul.f32.gmra.mxu0 %v9438
      %v9478 = vpop.f32.mrf.mxu0
      %v9479 = vadd.f32 0.0, %v9478
      %9480 = vmatmul.f32.gmra.mxu0 %v9441
      %v9481 = vpop.f32.mrf.mxu0
      %v9482 = vadd.f32 0.0, %v9481
      %9483 = vdwg.mxu0
      %v9484 = vadd.f32 %v9398, %v9461
      %v9485 = vadd.f32 %v9399, %v9464
      %v9486 = vadd.f32 %v9400, %v9467
      %v9487 = vadd.f32 %v9401, %v9470
      %v9488 = vadd.f32 %v9402, %v9473
      %v9489 = vadd.f32 %v9403, %v9476
      %v9490 = vadd.f32 %v9404, %v9479
      %v9491 = vadd.f32 %v9405, %v9482
      %v9492 = vld [vmem:[%s8639 + $0x6] sm:$0xff]
      %v9493 = vld [vmem:[%s8639 + $0x1e] sm:$0xff]
      %v9494 = vld [vmem:[%s8639 + $0x36] sm:$0xff]
      %v9495 = vld [vmem:[%s8639 + $0x4e] sm:$0xff]
      %v9496 = vld [vmem:[%s8639 + $0x66] sm:$0xff]
      %v9497 = vld [vmem:[%s8639 + $0x7e] sm:$0xff]
      %v9498 = vld [vmem:[%s8639 + $0x96] sm:$0xff]
      %v9499 = vld [vmem:[%s8639 + $0xae] sm:$0xff]
      %s9500 = scalar_lea.vmem %s5, 320
      %v9501 = vld [vmem:[%s9500] sm:$0xff]
      %v9502 = vld [vmem:[%s9500 + $0x8] sm:$0xff]
      %v9503 = vld [vmem:[%s9500 + $0x10] sm:$0xff]
      %v9504 = vld [vmem:[%s9500 + $0x18] sm:$0xff]
      %v9506 = vsel %vm1170, %v9492, 0
      %v9509 = vsel %vm1170, %v9493, 0
      %v9512 = vsel %vm1170, %v9494, 0
      %v9515 = vsel %vm1170, %v9495, 0
      %v9518 = vsel %vm1170, %v9496, 0
      %v9521 = vsel %vm1170, %v9497, 0
      %v9524 = vsel %vm1170, %v9498, 0
      %v9527 = vsel %vm1170, %v9499, 0
      %9529 = vmatpush.msra.mxu0 0.0
      %9530 = vmatpush.msra.mxu0 0.0
      %9531 = vmatpush.msra.mxu0 0.0
      %9532 = vmatpush.msra.mxu0 0.0
      %9533 = vmatpush.msra.mxu0 0.0
      %9534 = vmatpush.msra.mxu0 0.0
      %9535 = vmatpush.msra.mxu0 0.0
      %9536 = vmatpush.msra.mxu0 0.0
      %9537 = vmatpush.msra.mxu0 0.0
      %9538 = vmatpush.msra.mxu0 0.0
      %9539 = vmatpush.msra.mxu0 0.0
      %9540 = vmatpush.msra.mxu0 0.0
      %9541 = vmatpush.msra.mxu0 %v9504
      %9542 = vmatpush.msra.mxu0 %v9503
      %9543 = vmatpush.msra.mxu0 %v9502
      %9544 = vmatpush.msra.mxu0 %v9501
      %9545 = vmatmul.f32.gmra.mxu0 %v9506
      %v9546 = vpop.f32.mrf.mxu0
      %v9547 = vadd.f32 0.0, %v9546
      %9548 = vmatmul.f32.gmra.mxu0 %v9509
      %v9549 = vpop.f32.mrf.mxu0
      %v9550 = vadd.f32 0.0, %v9549
      %9551 = vmatmul.f32.gmra.mxu0 %v9512
      %v9552 = vpop.f32.mrf.mxu0
      %v9553 = vadd.f32 0.0, %v9552
      %9554 = vmatmul.f32.gmra.mxu0 %v9515
      %v9555 = vpop.f32.mrf.mxu0
      %v9556 = vadd.f32 0.0, %v9555
      %9557 = vmatmul.f32.gmra.mxu0 %v9518
      %v9558 = vpop.f32.mrf.mxu0
      %v9559 = vadd.f32 0.0, %v9558
      %9560 = vmatmul.f32.gmra.mxu0 %v9521
      %v9561 = vpop.f32.mrf.mxu0
      %v9562 = vadd.f32 0.0, %v9561
      %9563 = vmatmul.f32.gmra.mxu0 %v9524
      %v9564 = vpop.f32.mrf.mxu0
      %v9565 = vadd.f32 0.0, %v9564
      %9566 = vmatmul.f32.gmra.mxu0 %v9527
      %v9567 = vpop.f32.mrf.mxu0
      %v9568 = vadd.f32 0.0, %v9567
      %9569 = vdwg.mxu0
      %v9570 = vadd.f32 %v9484, %v9547
      %v9571 = vadd.f32 %v9485, %v9550
      %v9572 = vadd.f32 %v9486, %v9553
      %v9573 = vadd.f32 %v9487, %v9556
      %v9574 = vadd.f32 %v9488, %v9559
      %v9575 = vadd.f32 %v9489, %v9562
      %v9576 = vadd.f32 %v9490, %v9565
      %v9577 = vadd.f32 %v9491, %v9568
      %v9578 = vld [vmem:[%s8639 + $0x7] sm:$0xff]
      %v9579 = vld [vmem:[%s8639 + $0x1f] sm:$0xff]
      %v9580 = vld [vmem:[%s8639 + $0x37] sm:$0xff]
      %v9581 = vld [vmem:[%s8639 + $0x4f] sm:$0xff]
      %v9582 = vld [vmem:[%s8639 + $0x67] sm:$0xff]
      %v9583 = vld [vmem:[%s8639 + $0x7f] sm:$0xff]
      %v9584 = vld [vmem:[%s8639 + $0x97] sm:$0xff]
      %v9585 = vld [vmem:[%s8639 + $0xaf] sm:$0xff]
      %s9586 = scalar_lea.vmem %s5, 352
      %v9587 = vld [vmem:[%s9586] sm:$0xff]
      %v9588 = vld [vmem:[%s9586 + $0x8] sm:$0xff]
      %v9589 = vld [vmem:[%s9586 + $0x10] sm:$0xff]
      %v9590 = vld [vmem:[%s9586 + $0x18] sm:$0xff]
      %v9592 = vsel %vm1170, %v9578, 0
      %v9595 = vsel %vm1170, %v9579, 0
      %v9598 = vsel %vm1170, %v9580, 0
      %v9601 = vsel %vm1170, %v9581, 0
      %v9604 = vsel %vm1170, %v9582, 0
      %v9607 = vsel %vm1170, %v9583, 0
      %v9610 = vsel %vm1170, %v9584, 0
      %v9613 = vsel %vm1170, %v9585, 0
      %9615 = vmatpush.msra.mxu0 0.0
      %9616 = vmatpush.msra.mxu0 0.0
      %9617 = vmatpush.msra.mxu0 0.0
      %9618 = vmatpush.msra.mxu0 0.0
      %9619 = vmatpush.msra.mxu0 0.0
      %9620 = vmatpush.msra.mxu0 0.0
      %9621 = vmatpush.msra.mxu0 0.0
      %9622 = vmatpush.msra.mxu0 0.0
      %9623 = vmatpush.msra.mxu0 0.0
      %9624 = vmatpush.msra.mxu0 0.0
      %9625 = vmatpush.msra.mxu0 0.0
      %9626 = vmatpush.msra.mxu0 0.0
      %9627 = vmatpush.msra.mxu0 %v9590
      %9628 = vmatpush.msra.mxu0 %v9589
      %9629 = vmatpush.msra.mxu0 %v9588
      %9630 = vmatpush.msra.mxu0 %v9587
      %9631 = vmatmul.f32.gmra.mxu0 %v9592
      %v9632 = vpop.f32.mrf.mxu0
      %v9633 = vadd.f32 0.0, %v9632
      %9634 = vmatmul.f32.gmra.mxu0 %v9595
      %v9635 = vpop.f32.mrf.mxu0
      %v9636 = vadd.f32 0.0, %v9635
      %9637 = vmatmul.f32.gmra.mxu0 %v9598
      %v9638 = vpop.f32.mrf.mxu0
      %v9639 = vadd.f32 0.0, %v9638
      %9640 = vmatmul.f32.gmra.mxu0 %v9601
      %v9641 = vpop.f32.mrf.mxu0
      %v9642 = vadd.f32 0.0, %v9641
      %9643 = vmatmul.f32.gmra.mxu0 %v9604
      %v9644 = vpop.f32.mrf.mxu0
      %v9645 = vadd.f32 0.0, %v9644
      %9646 = vmatmul.f32.gmra.mxu0 %v9607
      %v9647 = vpop.f32.mrf.mxu0
      %v9648 = vadd.f32 0.0, %v9647
      %9649 = vmatmul.f32.gmra.mxu0 %v9610
      %v9650 = vpop.f32.mrf.mxu0
      %v9651 = vadd.f32 0.0, %v9650
      %9652 = vmatmul.f32.gmra.mxu0 %v9613
      %v9653 = vpop.f32.mrf.mxu0
      %v9654 = vadd.f32 0.0, %v9653
      %9655 = vdwg.mxu0
      %v9656 = vadd.f32 %v9570, %v9633
      %v9657 = vadd.f32 %v9571, %v9636
      %v9658 = vadd.f32 %v9572, %v9639
      %v9659 = vadd.f32 %v9573, %v9642
      %v9660 = vadd.f32 %v9574, %v9645
      %v9661 = vadd.f32 %v9575, %v9648
      %v9662 = vadd.f32 %v9576, %v9651
      %v9663 = vadd.f32 %v9577, %v9654
      %v9664 = vld [vmem:[%s8639 + $0x8] sm:$0xff]
      %v9665 = vld [vmem:[%s8639 + $0x20] sm:$0xff]
      %v9666 = vld [vmem:[%s8639 + $0x38] sm:$0xff]
      %v9667 = vld [vmem:[%s8639 + $0x50] sm:$0xff]
      %v9668 = vld [vmem:[%s8639 + $0x68] sm:$0xff]
      %v9669 = vld [vmem:[%s8639 + $0x80] sm:$0xff]
      %v9670 = vld [vmem:[%s8639 + $0x98] sm:$0xff]
      %v9671 = vld [vmem:[%s8639 + $0xb0] sm:$0xff]
      %s9672 = scalar_lea.vmem %s5, 384
      %v9673 = vld [vmem:[%s9672] sm:$0xff]
      %v9674 = vld [vmem:[%s9672 + $0x8] sm:$0xff]
      %v9675 = vld [vmem:[%s9672 + $0x10] sm:$0xff]
      %v9676 = vld [vmem:[%s9672 + $0x18] sm:$0xff]
      %v9678 = vsel %vm1170, %v9664, 0
      %v9681 = vsel %vm1170, %v9665, 0
      %v9684 = vsel %vm1170, %v9666, 0
      %v9687 = vsel %vm1170, %v9667, 0
      %v9690 = vsel %vm1170, %v9668, 0
      %v9693 = vsel %vm1170, %v9669, 0
      %v9696 = vsel %vm1170, %v9670, 0
      %v9699 = vsel %vm1170, %v9671, 0
      %9701 = vmatpush.msra.mxu0 0.0
      %9702 = vmatpush.msra.mxu0 0.0
      %9703 = vmatpush.msra.mxu0 0.0
      %9704 = vmatpush.msra.mxu0 0.0
      %9705 = vmatpush.msra.mxu0 0.0
      %9706 = vmatpush.msra.mxu0 0.0
      %9707 = vmatpush.msra.mxu0 0.0
      %9708 = vmatpush.msra.mxu0 0.0
      %9709 = vmatpush.msra.mxu0 0.0
      %9710 = vmatpush.msra.mxu0 0.0
      %9711 = vmatpush.msra.mxu0 0.0
      %9712 = vmatpush.msra.mxu0 0.0
      %9713 = vmatpush.msra.mxu0 %v9676
      %9714 = vmatpush.msra.mxu0 %v9675
      %9715 = vmatpush.msra.mxu0 %v9674
      %9716 = vmatpush.msra.mxu0 %v9673
      %9717 = vmatmul.f32.gmra.mxu0 %v9678
      %v9718 = vpop.f32.mrf.mxu0
      %v9719 = vadd.f32 0.0, %v9718
      %9720 = vmatmul.f32.gmra.mxu0 %v9681
      %v9721 = vpop.f32.mrf.mxu0
      %v9722 = vadd.f32 0.0, %v9721
      %9723 = vmatmul.f32.gmra.mxu0 %v9684
      %v9724 = vpop.f32.mrf.mxu0
      %v9725 = vadd.f32 0.0, %v9724
      %9726 = vmatmul.f32.gmra.mxu0 %v9687
      %v9727 = vpop.f32.mrf.mxu0
      %v9728 = vadd.f32 0.0, %v9727
      %9729 = vmatmul.f32.gmra.mxu0 %v9690
      %v9730 = vpop.f32.mrf.mxu0
      %v9731 = vadd.f32 0.0, %v9730
      %9732 = vmatmul.f32.gmra.mxu0 %v9693
      %v9733 = vpop.f32.mrf.mxu0
      %v9734 = vadd.f32 0.0, %v9733
      %9735 = vmatmul.f32.gmra.mxu0 %v9696
      %v9736 = vpop.f32.mrf.mxu0
      %v9737 = vadd.f32 0.0, %v9736
      %9738 = vmatmul.f32.gmra.mxu0 %v9699
      %v9739 = vpop.f32.mrf.mxu0
      %v9740 = vadd.f32 0.0, %v9739
      %9741 = vdwg.mxu0
      %v9742 = vadd.f32 %v9656, %v9719
      %v9743 = vadd.f32 %v9657, %v9722
      %v9744 = vadd.f32 %v9658, %v9725
      %v9745 = vadd.f32 %v9659, %v9728
      %v9746 = vadd.f32 %v9660, %v9731
      %v9747 = vadd.f32 %v9661, %v9734
      %v9748 = vadd.f32 %v9662, %v9737
      %v9749 = vadd.f32 %v9663, %v9740
      %v9750 = vld [vmem:[%s8639 + $0x9] sm:$0xff]
      %v9751 = vld [vmem:[%s8639 + $0x21] sm:$0xff]
      %v9752 = vld [vmem:[%s8639 + $0x39] sm:$0xff]
      %v9753 = vld [vmem:[%s8639 + $0x51] sm:$0xff]
      %v9754 = vld [vmem:[%s8639 + $0x69] sm:$0xff]
      %v9755 = vld [vmem:[%s8639 + $0x81] sm:$0xff]
      %v9756 = vld [vmem:[%s8639 + $0x99] sm:$0xff]
      %v9757 = vld [vmem:[%s8639 + $0xb1] sm:$0xff]
      %s9758 = scalar_lea.vmem %s5, 416
      %v9759 = vld [vmem:[%s9758] sm:$0xff]
      %v9760 = vld [vmem:[%s9758 + $0x8] sm:$0xff]
      %v9761 = vld [vmem:[%s9758 + $0x10] sm:$0xff]
      %v9762 = vld [vmem:[%s9758 + $0x18] sm:$0xff]
      %v9764 = vsel %vm1170, %v9750, 0
      %v9767 = vsel %vm1170, %v9751, 0
      %v9770 = vsel %vm1170, %v9752, 0
      %v9773 = vsel %vm1170, %v9753, 0
      %v9776 = vsel %vm1170, %v9754, 0
      %v9779 = vsel %vm1170, %v9755, 0
      %v9782 = vsel %vm1170, %v9756, 0
      %v9785 = vsel %vm1170, %v9757, 0
      %9787 = vmatpush.msra.mxu0 0.0
      %9788 = vmatpush.msra.mxu0 0.0
      %9789 = vmatpush.msra.mxu0 0.0
      %9790 = vmatpush.msra.mxu0 0.0
      %9791 = vmatpush.msra.mxu0 0.0
      %9792 = vmatpush.msra.mxu0 0.0
      %9793 = vmatpush.msra.mxu0 0.0
      %9794 = vmatpush.msra.mxu0 0.0
      %9795 = vmatpush.msra.mxu0 0.0
      %9796 = vmatpush.msra.mxu0 0.0
      %9797 = vmatpush.msra.mxu0 0.0
      %9798 = vmatpush.msra.mxu0 0.0
      %9799 = vmatpush.msra.mxu0 %v9762
      %9800 = vmatpush.msra.mxu0 %v9761
      %9801 = vmatpush.msra.mxu0 %v9760
      %9802 = vmatpush.msra.mxu0 %v9759
      %9803 = vmatmul.f32.gmra.mxu0 %v9764
      %v9804 = vpop.f32.mrf.mxu0
      %v9805 = vadd.f32 0.0, %v9804
      %9806 = vmatmul.f32.gmra.mxu0 %v9767
      %v9807 = vpop.f32.mrf.mxu0
      %v9808 = vadd.f32 0.0, %v9807
      %9809 = vmatmul.f32.gmra.mxu0 %v9770
      %v9810 = vpop.f32.mrf.mxu0
      %v9811 = vadd.f32 0.0, %v9810
      %9812 = vmatmul.f32.gmra.mxu0 %v9773
      %v9813 = vpop.f32.mrf.mxu0
      %v9814 = vadd.f32 0.0, %v9813
      %9815 = vmatmul.f32.gmra.mxu0 %v9776
      %v9816 = vpop.f32.mrf.mxu0
      %v9817 = vadd.f32 0.0, %v9816
      %9818 = vmatmul.f32.gmra.mxu0 %v9779
      %v9819 = vpop.f32.mrf.mxu0
      %v9820 = vadd.f32 0.0, %v9819
      %9821 = vmatmul.f32.gmra.mxu0 %v9782
      %v9822 = vpop.f32.mrf.mxu0
      %v9823 = vadd.f32 0.0, %v9822
      %9824 = vmatmul.f32.gmra.mxu0 %v9785
      %v9825 = vpop.f32.mrf.mxu0
      %v9826 = vadd.f32 0.0, %v9825
      %9827 = vdwg.mxu0
      %v9828 = vadd.f32 %v9742, %v9805
      %v9829 = vadd.f32 %v9743, %v9808
      %v9830 = vadd.f32 %v9744, %v9811
      %v9831 = vadd.f32 %v9745, %v9814
      %v9832 = vadd.f32 %v9746, %v9817
      %v9833 = vadd.f32 %v9747, %v9820
      %v9834 = vadd.f32 %v9748, %v9823
      %v9835 = vadd.f32 %v9749, %v9826
      %v9836 = vld [vmem:[%s8639 + $0xa] sm:$0xff]
      %v9837 = vld [vmem:[%s8639 + $0x22] sm:$0xff]
      %v9838 = vld [vmem:[%s8639 + $0x3a] sm:$0xff]
      %v9839 = vld [vmem:[%s8639 + $0x52] sm:$0xff]
      %v9840 = vld [vmem:[%s8639 + $0x6a] sm:$0xff]
      %v9841 = vld [vmem:[%s8639 + $0x82] sm:$0xff]
      %v9842 = vld [vmem:[%s8639 + $0x9a] sm:$0xff]
      %v9843 = vld [vmem:[%s8639 + $0xb2] sm:$0xff]
      %s9844 = scalar_lea.vmem %s5, 448
      %v9845 = vld [vmem:[%s9844] sm:$0xff]
      %v9846 = vld [vmem:[%s9844 + $0x8] sm:$0xff]
      %v9847 = vld [vmem:[%s9844 + $0x10] sm:$0xff]
      %v9848 = vld [vmem:[%s9844 + $0x18] sm:$0xff]
      %v9850 = vsel %vm1170, %v9836, 0
      %v9853 = vsel %vm1170, %v9837, 0
      %v9856 = vsel %vm1170, %v9838, 0
      %v9859 = vsel %vm1170, %v9839, 0
      %v9862 = vsel %vm1170, %v9840, 0
      %v9865 = vsel %vm1170, %v9841, 0
      %v9868 = vsel %vm1170, %v9842, 0
      %v9871 = vsel %vm1170, %v9843, 0
      %9873 = vmatpush.msra.mxu0 0.0
      %9874 = vmatpush.msra.mxu0 0.0
      %9875 = vmatpush.msra.mxu0 0.0
      %9876 = vmatpush.msra.mxu0 0.0
      %9877 = vmatpush.msra.mxu0 0.0
      %9878 = vmatpush.msra.mxu0 0.0
      %9879 = vmatpush.msra.mxu0 0.0
      %9880 = vmatpush.msra.mxu0 0.0
      %9881 = vmatpush.msra.mxu0 0.0
      %9882 = vmatpush.msra.mxu0 0.0
      %9883 = vmatpush.msra.mxu0 0.0
      %9884 = vmatpush.msra.mxu0 0.0
      %9885 = vmatpush.msra.mxu0 %v9848
      %9886 = vmatpush.msra.mxu0 %v9847
      %9887 = vmatpush.msra.mxu0 %v9846
      %9888 = vmatpush.msra.mxu0 %v9845
      %9889 = vmatmul.f32.gmra.mxu0 %v9850
      %v9890 = vpop.f32.mrf.mxu0
      %v9891 = vadd.f32 0.0, %v9890
      %9892 = vmatmul.f32.gmra.mxu0 %v9853
      %v9893 = vpop.f32.mrf.mxu0
      %v9894 = vadd.f32 0.0, %v9893
      %9895 = vmatmul.f32.gmra.mxu0 %v9856
      %v9896 = vpop.f32.mrf.mxu0
      %v9897 = vadd.f32 0.0, %v9896
      %9898 = vmatmul.f32.gmra.mxu0 %v9859
      %v9899 = vpop.f32.mrf.mxu0
      %v9900 = vadd.f32 0.0, %v9899
      %9901 = vmatmul.f32.gmra.mxu0 %v9862
      %v9902 = vpop.f32.mrf.mxu0
      %v9903 = vadd.f32 0.0, %v9902
      %9904 = vmatmul.f32.gmra.mxu0 %v9865
      %v9905 = vpop.f32.mrf.mxu0
      %v9906 = vadd.f32 0.0, %v9905
      %9907 = vmatmul.f32.gmra.mxu0 %v9868
      %v9908 = vpop.f32.mrf.mxu0
      %v9909 = vadd.f32 0.0, %v9908
      %9910 = vmatmul.f32.gmra.mxu0 %v9871
      %v9911 = vpop.f32.mrf.mxu0
      %v9912 = vadd.f32 0.0, %v9911
      %9913 = vdwg.mxu0
      %v9914 = vadd.f32 %v9828, %v9891
      %v9915 = vadd.f32 %v9829, %v9894
      %v9916 = vadd.f32 %v9830, %v9897
      %v9917 = vadd.f32 %v9831, %v9900
      %v9918 = vadd.f32 %v9832, %v9903
      %v9919 = vadd.f32 %v9833, %v9906
      %v9920 = vadd.f32 %v9834, %v9909
      %v9921 = vadd.f32 %v9835, %v9912
      %s9922 = scalar_lea.vmem [#allocation3], 72
      %v9923 = vld [vmem:[%s9922 + $0x6] sm:$0xff]
      %v9924 = vld [vmem:[%s9922 + $0x1e] sm:$0xff]
      %v9925 = vld [vmem:[%s9922 + $0x36] sm:$0xff]
      %v9926 = vld [vmem:[%s9922 + $0x4e] sm:$0xff]
      %v9927 = vld [vmem:[%s9922 + $0x66] sm:$0xff]
      %v9928 = vld [vmem:[%s9922 + $0x7e] sm:$0xff]
      %v9929 = vld [vmem:[%s9922 + $0x96] sm:$0xff]
      %v9930 = vld [vmem:[%s9922 + $0xae] sm:$0xff]
      %s9931 = scalar_lea.vmem %s5, 480
      %v9932 = vld [vmem:[%s9931] sm:$0xff]
      %v9933 = vld [vmem:[%s9931 + $0x8] sm:$0xff]
      %v9934 = vld [vmem:[%s9931 + $0x10] sm:$0xff]
      %v9935 = vld [vmem:[%s9931 + $0x18] sm:$0xff]
      %v9937 = vsel %vm1170, %v9923, 0
      %v9940 = vsel %vm1170, %v9924, 0
      %v9943 = vsel %vm1170, %v9925, 0
      %v9946 = vsel %vm1170, %v9926, 0
      %v9949 = vsel %vm1170, %v9927, 0
      %v9952 = vsel %vm1170, %v9928, 0
      %v9955 = vsel %vm1170, %v9929, 0
      %v9958 = vsel %vm1170, %v9930, 0
      %9960 = vmatpush.msra.mxu0 0.0
      %9961 = vmatpush.msra.mxu0 0.0
      %9962 = vmatpush.msra.mxu0 0.0
      %9963 = vmatpush.msra.mxu0 0.0
      %9964 = vmatpush.msra.mxu0 0.0
      %9965 = vmatpush.msra.mxu0 0.0
      %9966 = vmatpush.msra.mxu0 0.0
      %9967 = vmatpush.msra.mxu0 0.0
      %9968 = vmatpush.msra.mxu0 0.0
      %9969 = vmatpush.msra.mxu0 0.0
      %9970 = vmatpush.msra.mxu0 0.0
      %9971 = vmatpush.msra.mxu0 0.0
      %9972 = vmatpush.msra.mxu0 %v9935
      %9973 = vmatpush.msra.mxu0 %v9934
      %9974 = vmatpush.msra.mxu0 %v9933
      %9975 = vmatpush.msra.mxu0 %v9932
      %9976 = vmatmul.f32.gmra.mxu0 %v9937
      %v9977 = vpop.f32.mrf.mxu0
      %v9978 = vadd.f32 0.0, %v9977
      %9979 = vmatmul.f32.gmra.mxu0 %v9940
      %v9980 = vpop.f32.mrf.mxu0
      %v9981 = vadd.f32 0.0, %v9980
      %9982 = vmatmul.f32.gmra.mxu0 %v9943
      %v9983 = vpop.f32.mrf.mxu0
      %v9984 = vadd.f32 0.0, %v9983
      %9985 = vmatmul.f32.gmra.mxu0 %v9946
      %v9986 = vpop.f32.mrf.mxu0
      %v9987 = vadd.f32 0.0, %v9986
      %9988 = vmatmul.f32.gmra.mxu0 %v9949
      %v9989 = vpop.f32.mrf.mxu0
      %v9990 = vadd.f32 0.0, %v9989
      %9991 = vmatmul.f32.gmra.mxu0 %v9952
      %v9992 = vpop.f32.mrf.mxu0
      %v9993 = vadd.f32 0.0, %v9992
      %9994 = vmatmul.f32.gmra.mxu0 %v9955
      %v9995 = vpop.f32.mrf.mxu0
      %v9996 = vadd.f32 0.0, %v9995
      %9997 = vmatmul.f32.gmra.mxu0 %v9958
      %v9998 = vpop.f32.mrf.mxu0
      %v9999 = vadd.f32 0.0, %v9998
      %10000 = vdwg.mxu0
      %v10001 = vadd.f32 %v9914, %v9978
      %v10002 = vadd.f32 %v9915, %v9981
      %v10003 = vadd.f32 %v9916, %v9984
      %v10004 = vadd.f32 %v9917, %v9987
      %v10005 = vadd.f32 %v9918, %v9990
      %v10006 = vadd.f32 %v9919, %v9993
      %v10007 = vadd.f32 %v9920, %v9996
      %v10008 = vadd.f32 %v9921, %v9999
      %v10009 = vld [vmem:[%s9922 + $0x7] sm:$0xff]
      %v10010 = vld [vmem:[%s9922 + $0x1f] sm:$0xff]
      %v10011 = vld [vmem:[%s9922 + $0x37] sm:$0xff]
      %v10012 = vld [vmem:[%s9922 + $0x4f] sm:$0xff]
      %v10013 = vld [vmem:[%s9922 + $0x67] sm:$0xff]
      %v10014 = vld [vmem:[%s9922 + $0x7f] sm:$0xff]
      %v10015 = vld [vmem:[%s9922 + $0x97] sm:$0xff]
      %v10016 = vld [vmem:[%s9922 + $0xaf] sm:$0xff]
      %s10017 = scalar_lea.vmem %s5, 512
      %v10018 = vld [vmem:[%s10017] sm:$0xff]
      %v10019 = vld [vmem:[%s10017 + $0x8] sm:$0xff]
      %v10020 = vld [vmem:[%s10017 + $0x10] sm:$0xff]
      %v10021 = vld [vmem:[%s10017 + $0x18] sm:$0xff]
      %v10023 = vsel %vm1170, %v10009, 0
      %v10026 = vsel %vm1170, %v10010, 0
      %v10029 = vsel %vm1170, %v10011, 0
      %v10032 = vsel %vm1170, %v10012, 0
      %v10035 = vsel %vm1170, %v10013, 0
      %v10038 = vsel %vm1170, %v10014, 0
      %v10041 = vsel %vm1170, %v10015, 0
      %v10044 = vsel %vm1170, %v10016, 0
      %10046 = vmatpush.msra.mxu0 0.0
      %10047 = vmatpush.msra.mxu0 0.0
      %10048 = vmatpush.msra.mxu0 0.0
      %10049 = vmatpush.msra.mxu0 0.0
      %10050 = vmatpush.msra.mxu0 0.0
      %10051 = vmatpush.msra.mxu0 0.0
      %10052 = vmatpush.msra.mxu0 0.0
      %10053 = vmatpush.msra.mxu0 0.0
      %10054 = vmatpush.msra.mxu0 0.0
      %10055 = vmatpush.msra.mxu0 0.0
      %10056 = vmatpush.msra.mxu0 0.0
      %10057 = vmatpush.msra.mxu0 0.0
      %10058 = vmatpush.msra.mxu0 %v10021
      %10059 = vmatpush.msra.mxu0 %v10020
      %10060 = vmatpush.msra.mxu0 %v10019
      %10061 = vmatpush.msra.mxu0 %v10018
      %10062 = vmatmul.f32.gmra.mxu0 %v10023
      %v10063 = vpop.f32.mrf.mxu0
      %v10064 = vadd.f32 0.0, %v10063
      %10065 = vmatmul.f32.gmra.mxu0 %v10026
      %v10066 = vpop.f32.mrf.mxu0
      %v10067 = vadd.f32 0.0, %v10066
      %10068 = vmatmul.f32.gmra.mxu0 %v10029
      %v10069 = vpop.f32.mrf.mxu0
      %v10070 = vadd.f32 0.0, %v10069
      %10071 = vmatmul.f32.gmra.mxu0 %v10032
      %v10072 = vpop.f32.mrf.mxu0
      %v10073 = vadd.f32 0.0, %v10072
      %10074 = vmatmul.f32.gmra.mxu0 %v10035
      %v10075 = vpop.f32.mrf.mxu0
      %v10076 = vadd.f32 0.0, %v10075
      %10077 = vmatmul.f32.gmra.mxu0 %v10038
      %v10078 = vpop.f32.mrf.mxu0
      %v10079 = vadd.f32 0.0, %v10078
      %10080 = vmatmul.f32.gmra.mxu0 %v10041
      %v10081 = vpop.f32.mrf.mxu0
      %v10082 = vadd.f32 0.0, %v10081
      %10083 = vmatmul.f32.gmra.mxu0 %v10044
      %v10084 = vpop.f32.mrf.mxu0
      %v10085 = vadd.f32 0.0, %v10084
      %10086 = vdwg.mxu0
      %v10087 = vadd.f32 %v10001, %v10064
      %v10088 = vadd.f32 %v10002, %v10067
      %v10089 = vadd.f32 %v10003, %v10070
      %v10090 = vadd.f32 %v10004, %v10073
      %v10091 = vadd.f32 %v10005, %v10076
      %v10092 = vadd.f32 %v10006, %v10079
      %v10093 = vadd.f32 %v10007, %v10082
      %v10094 = vadd.f32 %v10008, %v10085
      %v10095 = vld [vmem:[%s9922 + $0x8] sm:$0xff]
      %v10096 = vld [vmem:[%s9922 + $0x20] sm:$0xff]
      %v10097 = vld [vmem:[%s9922 + $0x38] sm:$0xff]
      %v10098 = vld [vmem:[%s9922 + $0x50] sm:$0xff]
      %v10099 = vld [vmem:[%s9922 + $0x68] sm:$0xff]
      %v10100 = vld [vmem:[%s9922 + $0x80] sm:$0xff]
      %v10101 = vld [vmem:[%s9922 + $0x98] sm:$0xff]
      %v10102 = vld [vmem:[%s9922 + $0xb0] sm:$0xff]
      %s10103 = scalar_lea.vmem %s5, 544
      %v10104 = vld [vmem:[%s10103] sm:$0xff]
      %v10105 = vld [vmem:[%s10103 + $0x8] sm:$0xff]
      %v10106 = vld [vmem:[%s10103 + $0x10] sm:$0xff]
      %v10107 = vld [vmem:[%s10103 + $0x18] sm:$0xff]
      %v10109 = vsel %vm1170, %v10095, 0
      %v10112 = vsel %vm1170, %v10096, 0
      %v10115 = vsel %vm1170, %v10097, 0
      %v10118 = vsel %vm1170, %v10098, 0
      %v10121 = vsel %vm1170, %v10099, 0
      %v10124 = vsel %vm1170, %v10100, 0
      %v10127 = vsel %vm1170, %v10101, 0
      %v10130 = vsel %vm1170, %v10102, 0
      %10132 = vmatpush.msra.mxu0 0.0
      %10133 = vmatpush.msra.mxu0 0.0
      %10134 = vmatpush.msra.mxu0 0.0
      %10135 = vmatpush.msra.mxu0 0.0
      %10136 = vmatpush.msra.mxu0 0.0
      %10137 = vmatpush.msra.mxu0 0.0
      %10138 = vmatpush.msra.mxu0 0.0
      %10139 = vmatpush.msra.mxu0 0.0
      %10140 = vmatpush.msra.mxu0 0.0
      %10141 = vmatpush.msra.mxu0 0.0
      %10142 = vmatpush.msra.mxu0 0.0
      %10143 = vmatpush.msra.mxu0 0.0
      %10144 = vmatpush.msra.mxu0 %v10107
      %10145 = vmatpush.msra.mxu0 %v10106
      %10146 = vmatpush.msra.mxu0 %v10105
      %10147 = vmatpush.msra.mxu0 %v10104
      %10148 = vmatmul.f32.gmra.mxu0 %v10109
      %v10149 = vpop.f32.mrf.mxu0
      %v10150 = vadd.f32 0.0, %v10149
      %10151 = vmatmul.f32.gmra.mxu0 %v10112
      %v10152 = vpop.f32.mrf.mxu0
      %v10153 = vadd.f32 0.0, %v10152
      %10154 = vmatmul.f32.gmra.mxu0 %v10115
      %v10155 = vpop.f32.mrf.mxu0
      %v10156 = vadd.f32 0.0, %v10155
      %10157 = vmatmul.f32.gmra.mxu0 %v10118
      %v10158 = vpop.f32.mrf.mxu0
      %v10159 = vadd.f32 0.0, %v10158
      %10160 = vmatmul.f32.gmra.mxu0 %v10121
      %v10161 = vpop.f32.mrf.mxu0
      %v10162 = vadd.f32 0.0, %v10161
      %10163 = vmatmul.f32.gmra.mxu0 %v10124
      %v10164 = vpop.f32.mrf.mxu0
      %v10165 = vadd.f32 0.0, %v10164
      %10166 = vmatmul.f32.gmra.mxu0 %v10127
      %v10167 = vpop.f32.mrf.mxu0
      %v10168 = vadd.f32 0.0, %v10167
      %10169 = vmatmul.f32.gmra.mxu0 %v10130
      %v10170 = vpop.f32.mrf.mxu0
      %v10171 = vadd.f32 0.0, %v10170
      %10172 = vdwg.mxu0
      %v10173 = vadd.f32 %v10087, %v10150
      %v10174 = vadd.f32 %v10088, %v10153
      %v10175 = vadd.f32 %v10089, %v10156
      %v10176 = vadd.f32 %v10090, %v10159
      %v10177 = vadd.f32 %v10091, %v10162
      %v10178 = vadd.f32 %v10092, %v10165
      %v10179 = vadd.f32 %v10093, %v10168
      %v10180 = vadd.f32 %v10094, %v10171
      %v10181 = vld [vmem:[%s9922 + $0x9] sm:$0xff]
      %v10182 = vld [vmem:[%s9922 + $0x21] sm:$0xff]
      %v10183 = vld [vmem:[%s9922 + $0x39] sm:$0xff]
      %v10184 = vld [vmem:[%s9922 + $0x51] sm:$0xff]
      %v10185 = vld [vmem:[%s9922 + $0x69] sm:$0xff]
      %v10186 = vld [vmem:[%s9922 + $0x81] sm:$0xff]
      %v10187 = vld [vmem:[%s9922 + $0x99] sm:$0xff]
      %v10188 = vld [vmem:[%s9922 + $0xb1] sm:$0xff]
      %s10189 = scalar_lea.vmem %s5, 576
      %v10190 = vld [vmem:[%s10189] sm:$0xff]
      %v10191 = vld [vmem:[%s10189 + $0x8] sm:$0xff]
      %v10192 = vld [vmem:[%s10189 + $0x10] sm:$0xff]
      %v10193 = vld [vmem:[%s10189 + $0x18] sm:$0xff]
      %v10195 = vsel %vm1170, %v10181, 0
      %v10198 = vsel %vm1170, %v10182, 0
      %v10201 = vsel %vm1170, %v10183, 0
      %v10204 = vsel %vm1170, %v10184, 0
      %v10207 = vsel %vm1170, %v10185, 0
      %v10210 = vsel %vm1170, %v10186, 0
      %v10213 = vsel %vm1170, %v10187, 0
      %v10216 = vsel %vm1170, %v10188, 0
      %10218 = vmatpush.msra.mxu0 0.0
      %10219 = vmatpush.msra.mxu0 0.0
      %10220 = vmatpush.msra.mxu0 0.0
      %10221 = vmatpush.msra.mxu0 0.0
      %10222 = vmatpush.msra.mxu0 0.0
      %10223 = vmatpush.msra.mxu0 0.0
      %10224 = vmatpush.msra.mxu0 0.0
      %10225 = vmatpush.msra.mxu0 0.0
      %10226 = vmatpush.msra.mxu0 0.0
      %10227 = vmatpush.msra.mxu0 0.0
      %10228 = vmatpush.msra.mxu0 0.0
      %10229 = vmatpush.msra.mxu0 0.0
      %10230 = vmatpush.msra.mxu0 %v10193
      %10231 = vmatpush.msra.mxu0 %v10192
      %10232 = vmatpush.msra.mxu0 %v10191
      %10233 = vmatpush.msra.mxu0 %v10190
      %10234 = vmatmul.f32.gmra.mxu0 %v10195
      %v10235 = vpop.f32.mrf.mxu0
      %v10236 = vadd.f32 0.0, %v10235
      %10237 = vmatmul.f32.gmra.mxu0 %v10198
      %v10238 = vpop.f32.mrf.mxu0
      %v10239 = vadd.f32 0.0, %v10238
      %10240 = vmatmul.f32.gmra.mxu0 %v10201
      %v10241 = vpop.f32.mrf.mxu0
      %v10242 = vadd.f32 0.0, %v10241
      %10243 = vmatmul.f32.gmra.mxu0 %v10204
      %v10244 = vpop.f32.mrf.mxu0
      %v10245 = vadd.f32 0.0, %v10244
      %10246 = vmatmul.f32.gmra.mxu0 %v10207
      %v10247 = vpop.f32.mrf.mxu0
      %v10248 = vadd.f32 0.0, %v10247
      %10249 = vmatmul.f32.gmra.mxu0 %v10210
      %v10250 = vpop.f32.mrf.mxu0
      %v10251 = vadd.f32 0.0, %v10250
      %10252 = vmatmul.f32.gmra.mxu0 %v10213
      %v10253 = vpop.f32.mrf.mxu0
      %v10254 = vadd.f32 0.0, %v10253
      %10255 = vmatmul.f32.gmra.mxu0 %v10216
      %v10256 = vpop.f32.mrf.mxu0
      %v10257 = vadd.f32 0.0, %v10256
      %10258 = vdwg.mxu0
      %v10259 = vadd.f32 %v10173, %v10236
      %v10260 = vadd.f32 %v10174, %v10239
      %v10261 = vadd.f32 %v10175, %v10242
      %v10262 = vadd.f32 %v10176, %v10245
      %v10263 = vadd.f32 %v10177, %v10248
      %v10264 = vadd.f32 %v10178, %v10251
      %v10265 = vadd.f32 %v10179, %v10254
      %v10266 = vadd.f32 %v10180, %v10257
      %v10267 = vld [vmem:[%s9922 + $0xa] sm:$0xff]
      %v10268 = vld [vmem:[%s9922 + $0x22] sm:$0xff]
      %v10269 = vld [vmem:[%s9922 + $0x3a] sm:$0xff]
      %v10270 = vld [vmem:[%s9922 + $0x52] sm:$0xff]
      %v10271 = vld [vmem:[%s9922 + $0x6a] sm:$0xff]
      %v10272 = vld [vmem:[%s9922 + $0x82] sm:$0xff]
      %v10273 = vld [vmem:[%s9922 + $0x9a] sm:$0xff]
      %v10274 = vld [vmem:[%s9922 + $0xb2] sm:$0xff]
      %s10275 = scalar_lea.vmem %s5, 608
      %v10276 = vld [vmem:[%s10275] sm:$0xff]
      %v10277 = vld [vmem:[%s10275 + $0x8] sm:$0xff]
      %v10278 = vld [vmem:[%s10275 + $0x10] sm:$0xff]
      %v10279 = vld [vmem:[%s10275 + $0x18] sm:$0xff]
      %v10281 = vsel %vm1170, %v10267, 0
      %v10284 = vsel %vm1170, %v10268, 0
      %v10287 = vsel %vm1170, %v10269, 0
      %v10290 = vsel %vm1170, %v10270, 0
      %v10293 = vsel %vm1170, %v10271, 0
      %v10296 = vsel %vm1170, %v10272, 0
      %v10299 = vsel %vm1170, %v10273, 0
      %v10302 = vsel %vm1170, %v10274, 0
      %10304 = vmatpush.msra.mxu0 0.0
      %10305 = vmatpush.msra.mxu0 0.0
      %10306 = vmatpush.msra.mxu0 0.0
      %10307 = vmatpush.msra.mxu0 0.0
      %10308 = vmatpush.msra.mxu0 0.0
      %10309 = vmatpush.msra.mxu0 0.0
      %10310 = vmatpush.msra.mxu0 0.0
      %10311 = vmatpush.msra.mxu0 0.0
      %10312 = vmatpush.msra.mxu0 0.0
      %10313 = vmatpush.msra.mxu0 0.0
      %10314 = vmatpush.msra.mxu0 0.0
      %10315 = vmatpush.msra.mxu0 0.0
      %10316 = vmatpush.msra.mxu0 %v10279
      %10317 = vmatpush.msra.mxu0 %v10278
      %10318 = vmatpush.msra.mxu0 %v10277
      %10319 = vmatpush.msra.mxu0 %v10276
      %10320 = vmatmul.f32.gmra.mxu0 %v10281
      %v10321 = vpop.f32.mrf.mxu0
      %v10322 = vadd.f32 0.0, %v10321
      %10323 = vmatmul.f32.gmra.mxu0 %v10284
      %v10324 = vpop.f32.mrf.mxu0
      %v10325 = vadd.f32 0.0, %v10324
      %10326 = vmatmul.f32.gmra.mxu0 %v10287
      %v10327 = vpop.f32.mrf.mxu0
      %v10328 = vadd.f32 0.0, %v10327
      %10329 = vmatmul.f32.gmra.mxu0 %v10290
      %v10330 = vpop.f32.mrf.mxu0
      %v10331 = vadd.f32 0.0, %v10330
      %10332 = vmatmul.f32.gmra.mxu0 %v10293
      %v10333 = vpop.f32.mrf.mxu0
      %v10334 = vadd.f32 0.0, %v10333
      %10335 = vmatmul.f32.gmra.mxu0 %v10296
      %v10336 = vpop.f32.mrf.mxu0
      %v10337 = vadd.f32 0.0, %v10336
      %10338 = vmatmul.f32.gmra.mxu0 %v10299
      %v10339 = vpop.f32.mrf.mxu0
      %v10340 = vadd.f32 0.0, %v10339
      %10341 = vmatmul.f32.gmra.mxu0 %v10302
      %v10342 = vpop.f32.mrf.mxu0
      %v10343 = vadd.f32 0.0, %v10342
      %10344 = vdwg.mxu0
      %v10345 = vadd.f32 %v10259, %v10322
      %v10346 = vadd.f32 %v10260, %v10325
      %v10347 = vadd.f32 %v10261, %v10328
      %v10348 = vadd.f32 %v10262, %v10331
      %v10349 = vadd.f32 %v10263, %v10334
      %v10350 = vadd.f32 %v10264, %v10337
      %v10351 = vadd.f32 %v10265, %v10340
      %v10352 = vadd.f32 %v10266, %v10343
      %s10353 = scalar_lea.vmem [#allocation3], 96
      %v10354 = vld [vmem:[%s10353 + $0x6] sm:$0xff]
      %v10355 = vld [vmem:[%s10353 + $0x1e] sm:$0xff]
      %v10356 = vld [vmem:[%s10353 + $0x36] sm:$0xff]
      %v10357 = vld [vmem:[%s10353 + $0x4e] sm:$0xff]
      %v10358 = vld [vmem:[%s10353 + $0x66] sm:$0xff]
      %v10359 = vld [vmem:[%s10353 + $0x7e] sm:$0xff]
      %v10360 = vld [vmem:[%s10353 + $0x96] sm:$0xff]
      %v10361 = vld [vmem:[%s10353 + $0xae] sm:$0xff]
      %s10362 = scalar_lea.vmem %s5, 640
      %v10363 = vld [vmem:[%s10362] sm:$0xff]
      %v10364 = vld [vmem:[%s10362 + $0x8] sm:$0xff]
      %v10365 = vld [vmem:[%s10362 + $0x10] sm:$0xff]
      %v10366 = vld [vmem:[%s10362 + $0x18] sm:$0xff]
      %v10368 = vsel %vm1170, %v10354, 0
      %v10371 = vsel %vm1170, %v10355, 0
      %v10374 = vsel %vm1170, %v10356, 0
      %v10377 = vsel %vm1170, %v10357, 0
      %v10380 = vsel %vm1170, %v10358, 0
      %v10383 = vsel %vm1170, %v10359, 0
      %v10386 = vsel %vm1170, %v10360, 0
      %v10389 = vsel %vm1170, %v10361, 0
      %10391 = vmatpush.msra.mxu0 0.0
      %10392 = vmatpush.msra.mxu0 0.0
      %10393 = vmatpush.msra.mxu0 0.0
      %10394 = vmatpush.msra.mxu0 0.0
      %10395 = vmatpush.msra.mxu0 0.0
      %10396 = vmatpush.msra.mxu0 0.0
      %10397 = vmatpush.msra.mxu0 0.0
      %10398 = vmatpush.msra.mxu0 0.0
      %10399 = vmatpush.msra.mxu0 0.0
      %10400 = vmatpush.msra.mxu0 0.0
      %10401 = vmatpush.msra.mxu0 0.0
      %10402 = vmatpush.msra.mxu0 0.0
      %10403 = vmatpush.msra.mxu0 %v10366
      %10404 = vmatpush.msra.mxu0 %v10365
      %10405 = vmatpush.msra.mxu0 %v10364
      %10406 = vmatpush.msra.mxu0 %v10363
      %10407 = vmatmul.f32.gmra.mxu0 %v10368
      %v10408 = vpop.f32.mrf.mxu0
      %v10409 = vadd.f32 0.0, %v10408
      %10410 = vmatmul.f32.gmra.mxu0 %v10371
      %v10411 = vpop.f32.mrf.mxu0
      %v10412 = vadd.f32 0.0, %v10411
      %10413 = vmatmul.f32.gmra.mxu0 %v10374
      %v10414 = vpop.f32.mrf.mxu0
      %v10415 = vadd.f32 0.0, %v10414
      %10416 = vmatmul.f32.gmra.mxu0 %v10377
      %v10417 = vpop.f32.mrf.mxu0
      %v10418 = vadd.f32 0.0, %v10417
      %10419 = vmatmul.f32.gmra.mxu0 %v10380
      %v10420 = vpop.f32.mrf.mxu0
      %v10421 = vadd.f32 0.0, %v10420
      %10422 = vmatmul.f32.gmra.mxu0 %v10383
      %v10423 = vpop.f32.mrf.mxu0
      %v10424 = vadd.f32 0.0, %v10423
      %10425 = vmatmul.f32.gmra.mxu0 %v10386
      %v10426 = vpop.f32.mrf.mxu0
      %v10427 = vadd.f32 0.0, %v10426
      %10428 = vmatmul.f32.gmra.mxu0 %v10389
      %v10429 = vpop.f32.mrf.mxu0
      %v10430 = vadd.f32 0.0, %v10429
      %10431 = vdwg.mxu0
      %v10432 = vadd.f32 %v10345, %v10409
      %v10433 = vadd.f32 %v10346, %v10412
      %v10434 = vadd.f32 %v10347, %v10415
      %v10435 = vadd.f32 %v10348, %v10418
      %v10436 = vadd.f32 %v10349, %v10421
      %v10437 = vadd.f32 %v10350, %v10424
      %v10438 = vadd.f32 %v10351, %v10427
      %v10439 = vadd.f32 %v10352, %v10430
      %v10440 = vld [vmem:[%s10353 + $0x7] sm:$0xff]
      %v10441 = vld [vmem:[%s10353 + $0x1f] sm:$0xff]
      %v10442 = vld [vmem:[%s10353 + $0x37] sm:$0xff]
      %v10443 = vld [vmem:[%s10353 + $0x4f] sm:$0xff]
      %v10444 = vld [vmem:[%s10353 + $0x67] sm:$0xff]
      %v10445 = vld [vmem:[%s10353 + $0x7f] sm:$0xff]
      %v10446 = vld [vmem:[%s10353 + $0x97] sm:$0xff]
      %v10447 = vld [vmem:[%s10353 + $0xaf] sm:$0xff]
      %s10448 = scalar_lea.vmem %s5, 672
      %v10449 = vld [vmem:[%s10448] sm:$0xff]
      %v10450 = vld [vmem:[%s10448 + $0x8] sm:$0xff]
      %v10451 = vld [vmem:[%s10448 + $0x10] sm:$0xff]
      %v10452 = vld [vmem:[%s10448 + $0x18] sm:$0xff]
      %v10454 = vsel %vm1170, %v10440, 0
      %v10457 = vsel %vm1170, %v10441, 0
      %v10460 = vsel %vm1170, %v10442, 0
      %v10463 = vsel %vm1170, %v10443, 0
      %v10466 = vsel %vm1170, %v10444, 0
      %v10469 = vsel %vm1170, %v10445, 0
      %v10472 = vsel %vm1170, %v10446, 0
      %v10475 = vsel %vm1170, %v10447, 0
      %10477 = vmatpush.msra.mxu0 0.0
      %10478 = vmatpush.msra.mxu0 0.0
      %10479 = vmatpush.msra.mxu0 0.0
      %10480 = vmatpush.msra.mxu0 0.0
      %10481 = vmatpush.msra.mxu0 0.0
      %10482 = vmatpush.msra.mxu0 0.0
      %10483 = vmatpush.msra.mxu0 0.0
      %10484 = vmatpush.msra.mxu0 0.0
      %10485 = vmatpush.msra.mxu0 0.0
      %10486 = vmatpush.msra.mxu0 0.0
      %10487 = vmatpush.msra.mxu0 0.0
      %10488 = vmatpush.msra.mxu0 0.0
      %10489 = vmatpush.msra.mxu0 %v10452
      %10490 = vmatpush.msra.mxu0 %v10451
      %10491 = vmatpush.msra.mxu0 %v10450
      %10492 = vmatpush.msra.mxu0 %v10449
      %10493 = vmatmul.f32.gmra.mxu0 %v10454
      %v10494 = vpop.f32.mrf.mxu0
      %v10495 = vadd.f32 0.0, %v10494
      %10496 = vmatmul.f32.gmra.mxu0 %v10457
      %v10497 = vpop.f32.mrf.mxu0
      %v10498 = vadd.f32 0.0, %v10497
      %10499 = vmatmul.f32.gmra.mxu0 %v10460
      %v10500 = vpop.f32.mrf.mxu0
      %v10501 = vadd.f32 0.0, %v10500
      %10502 = vmatmul.f32.gmra.mxu0 %v10463
      %v10503 = vpop.f32.mrf.mxu0
      %v10504 = vadd.f32 0.0, %v10503
      %10505 = vmatmul.f32.gmra.mxu0 %v10466
      %v10506 = vpop.f32.mrf.mxu0
      %v10507 = vadd.f32 0.0, %v10506
      %10508 = vmatmul.f32.gmra.mxu0 %v10469
      %v10509 = vpop.f32.mrf.mxu0
      %v10510 = vadd.f32 0.0, %v10509
      %10511 = vmatmul.f32.gmra.mxu0 %v10472
      %v10512 = vpop.f32.mrf.mxu0
      %v10513 = vadd.f32 0.0, %v10512
      %10514 = vmatmul.f32.gmra.mxu0 %v10475
      %v10515 = vpop.f32.mrf.mxu0
      %v10516 = vadd.f32 0.0, %v10515
      %10517 = vdwg.mxu0
      %v10518 = vadd.f32 %v10432, %v10495
      %v10519 = vadd.f32 %v10433, %v10498
      %v10520 = vadd.f32 %v10434, %v10501
      %v10521 = vadd.f32 %v10435, %v10504
      %v10522 = vadd.f32 %v10436, %v10507
      %v10523 = vadd.f32 %v10437, %v10510
      %v10524 = vadd.f32 %v10438, %v10513
      %v10525 = vadd.f32 %v10439, %v10516
      %v10526 = vld [vmem:[%s10353 + $0x8] sm:$0xff]
      %v10527 = vld [vmem:[%s10353 + $0x20] sm:$0xff]
      %v10528 = vld [vmem:[%s10353 + $0x38] sm:$0xff]
      %v10529 = vld [vmem:[%s10353 + $0x50] sm:$0xff]
      %v10530 = vld [vmem:[%s10353 + $0x68] sm:$0xff]
      %v10531 = vld [vmem:[%s10353 + $0x80] sm:$0xff]
      %v10532 = vld [vmem:[%s10353 + $0x98] sm:$0xff]
      %v10533 = vld [vmem:[%s10353 + $0xb0] sm:$0xff]
      %s10534 = scalar_lea.vmem %s5, 704
      %v10535 = vld [vmem:[%s10534] sm:$0xff]
      %v10536 = vld [vmem:[%s10534 + $0x8] sm:$0xff]
      %v10537 = vld [vmem:[%s10534 + $0x10] sm:$0xff]
      %v10538 = vld [vmem:[%s10534 + $0x18] sm:$0xff]
      %v10540 = vsel %vm1170, %v10526, 0
      %v10543 = vsel %vm1170, %v10527, 0
      %v10546 = vsel %vm1170, %v10528, 0
      %v10549 = vsel %vm1170, %v10529, 0
      %v10552 = vsel %vm1170, %v10530, 0
      %v10555 = vsel %vm1170, %v10531, 0
      %v10558 = vsel %vm1170, %v10532, 0
      %v10561 = vsel %vm1170, %v10533, 0
      %10563 = vmatpush.msra.mxu0 0.0
      %10564 = vmatpush.msra.mxu0 0.0
      %10565 = vmatpush.msra.mxu0 0.0
      %10566 = vmatpush.msra.mxu0 0.0
      %10567 = vmatpush.msra.mxu0 0.0
      %10568 = vmatpush.msra.mxu0 0.0
      %10569 = vmatpush.msra.mxu0 0.0
      %10570 = vmatpush.msra.mxu0 0.0
      %10571 = vmatpush.msra.mxu0 0.0
      %10572 = vmatpush.msra.mxu0 0.0
      %10573 = vmatpush.msra.mxu0 0.0
      %10574 = vmatpush.msra.mxu0 0.0
      %10575 = vmatpush.msra.mxu0 %v10538
      %10576 = vmatpush.msra.mxu0 %v10537
      %10577 = vmatpush.msra.mxu0 %v10536
      %10578 = vmatpush.msra.mxu0 %v10535
      %10579 = vmatmul.f32.gmra.mxu0 %v10540
      %v10580 = vpop.f32.mrf.mxu0
      %v10581 = vadd.f32 0.0, %v10580
      %10582 = vmatmul.f32.gmra.mxu0 %v10543
      %v10583 = vpop.f32.mrf.mxu0
      %v10584 = vadd.f32 0.0, %v10583
      %10585 = vmatmul.f32.gmra.mxu0 %v10546
      %v10586 = vpop.f32.mrf.mxu0
      %v10587 = vadd.f32 0.0, %v10586
      %10588 = vmatmul.f32.gmra.mxu0 %v10549
      %v10589 = vpop.f32.mrf.mxu0
      %v10590 = vadd.f32 0.0, %v10589
      %10591 = vmatmul.f32.gmra.mxu0 %v10552
      %v10592 = vpop.f32.mrf.mxu0
      %v10593 = vadd.f32 0.0, %v10592
      %10594 = vmatmul.f32.gmra.mxu0 %v10555
      %v10595 = vpop.f32.mrf.mxu0
      %v10596 = vadd.f32 0.0, %v10595
      %10597 = vmatmul.f32.gmra.mxu0 %v10558
      %v10598 = vpop.f32.mrf.mxu0
      %v10599 = vadd.f32 0.0, %v10598
      %10600 = vmatmul.f32.gmra.mxu0 %v10561
      %v10601 = vpop.f32.mrf.mxu0
      %v10602 = vadd.f32 0.0, %v10601
      %10603 = vdwg.mxu0
      %v10604 = vadd.f32 %v10518, %v10581
      %v10605 = vadd.f32 %v10519, %v10584
      %v10606 = vadd.f32 %v10520, %v10587
      %v10607 = vadd.f32 %v10521, %v10590
      %v10608 = vadd.f32 %v10522, %v10593
      %v10609 = vadd.f32 %v10523, %v10596
      %v10610 = vadd.f32 %v10524, %v10599
      %v10611 = vadd.f32 %v10525, %v10602
      %v10612 = vld [vmem:[%s10353 + $0x9] sm:$0xff]
      %v10613 = vld [vmem:[%s10353 + $0x21] sm:$0xff]
      %v10614 = vld [vmem:[%s10353 + $0x39] sm:$0xff]
      %v10615 = vld [vmem:[%s10353 + $0x51] sm:$0xff]
      %v10616 = vld [vmem:[%s10353 + $0x69] sm:$0xff]
      %v10617 = vld [vmem:[%s10353 + $0x81] sm:$0xff]
      %v10618 = vld [vmem:[%s10353 + $0x99] sm:$0xff]
      %v10619 = vld [vmem:[%s10353 + $0xb1] sm:$0xff]
      %s10620 = scalar_lea.vmem %s5, 736
      %v10621 = vld [vmem:[%s10620] sm:$0xff]
      %v10622 = vld [vmem:[%s10620 + $0x8] sm:$0xff]
      %v10623 = vld [vmem:[%s10620 + $0x10] sm:$0xff]
      %v10624 = vld [vmem:[%s10620 + $0x18] sm:$0xff]
      %v10626 = vsel %vm1170, %v10612, 0
      %v10629 = vsel %vm1170, %v10613, 0
      %v10632 = vsel %vm1170, %v10614, 0
      %v10635 = vsel %vm1170, %v10615, 0
      %v10638 = vsel %vm1170, %v10616, 0
      %v10641 = vsel %vm1170, %v10617, 0
      %v10644 = vsel %vm1170, %v10618, 0
      %v10647 = vsel %vm1170, %v10619, 0
      %10649 = vmatpush.msra.mxu0 0.0
      %10650 = vmatpush.msra.mxu0 0.0
      %10651 = vmatpush.msra.mxu0 0.0
      %10652 = vmatpush.msra.mxu0 0.0
      %10653 = vmatpush.msra.mxu0 0.0
      %10654 = vmatpush.msra.mxu0 0.0
      %10655 = vmatpush.msra.mxu0 0.0
      %10656 = vmatpush.msra.mxu0 0.0
      %10657 = vmatpush.msra.mxu0 0.0
      %10658 = vmatpush.msra.mxu0 0.0
      %10659 = vmatpush.msra.mxu0 0.0
      %10660 = vmatpush.msra.mxu0 0.0
      %10661 = vmatpush.msra.mxu0 %v10624
      %10662 = vmatpush.msra.mxu0 %v10623
      %10663 = vmatpush.msra.mxu0 %v10622
      %10664 = vmatpush.msra.mxu0 %v10621
      %10665 = vmatmul.f32.gmra.mxu0 %v10626
      %v10666 = vpop.f32.mrf.mxu0
      %v10667 = vadd.f32 0.0, %v10666
      %10668 = vmatmul.f32.gmra.mxu0 %v10629
      %v10669 = vpop.f32.mrf.mxu0
      %v10670 = vadd.f32 0.0, %v10669
      %10671 = vmatmul.f32.gmra.mxu0 %v10632
      %v10672 = vpop.f32.mrf.mxu0
      %v10673 = vadd.f32 0.0, %v10672
      %10674 = vmatmul.f32.gmra.mxu0 %v10635
      %v10675 = vpop.f32.mrf.mxu0
      %v10676 = vadd.f32 0.0, %v10675
      %10677 = vmatmul.f32.gmra.mxu0 %v10638
      %v10678 = vpop.f32.mrf.mxu0
      %v10679 = vadd.f32 0.0, %v10678
      %10680 = vmatmul.f32.gmra.mxu0 %v10641
      %v10681 = vpop.f32.mrf.mxu0
      %v10682 = vadd.f32 0.0, %v10681
      %10683 = vmatmul.f32.gmra.mxu0 %v10644
      %v10684 = vpop.f32.mrf.mxu0
      %v10685 = vadd.f32 0.0, %v10684
      %10686 = vmatmul.f32.gmra.mxu0 %v10647
      %v10687 = vpop.f32.mrf.mxu0
      %v10688 = vadd.f32 0.0, %v10687
      %10689 = vdwg.mxu0
      %v10690 = vadd.f32 %v10604, %v10667
      %v10691 = vadd.f32 %v10605, %v10670
      %v10692 = vadd.f32 %v10606, %v10673
      %v10693 = vadd.f32 %v10607, %v10676
      %v10694 = vadd.f32 %v10608, %v10679
      %v10695 = vadd.f32 %v10609, %v10682
      %v10696 = vadd.f32 %v10610, %v10685
      %v10697 = vadd.f32 %v10611, %v10688
      %v10698 = vld [vmem:[%s10353 + $0xa] sm:$0xff]
      %v10699 = vld [vmem:[%s10353 + $0x22] sm:$0xff]
      %v10700 = vld [vmem:[%s10353 + $0x3a] sm:$0xff]
      %v10701 = vld [vmem:[%s10353 + $0x52] sm:$0xff]
      %v10702 = vld [vmem:[%s10353 + $0x6a] sm:$0xff]
      %v10703 = vld [vmem:[%s10353 + $0x82] sm:$0xff]
      %v10704 = vld [vmem:[%s10353 + $0x9a] sm:$0xff]
      %v10705 = vld [vmem:[%s10353 + $0xb2] sm:$0xff]
      %s10706 = scalar_lea.vmem %s5, 768
      %v10707 = vld [vmem:[%s10706] sm:$0xff]
      %v10708 = vld [vmem:[%s10706 + $0x8] sm:$0xff]
      %v10709 = vld [vmem:[%s10706 + $0x10] sm:$0xff]
      %v10710 = vld [vmem:[%s10706 + $0x18] sm:$0xff]
      %v10712 = vsel %vm1170, %v10698, 0
      %v10715 = vsel %vm1170, %v10699, 0
      %v10718 = vsel %vm1170, %v10700, 0
      %v10721 = vsel %vm1170, %v10701, 0
      %v10724 = vsel %vm1170, %v10702, 0
      %v10727 = vsel %vm1170, %v10703, 0
      %v10730 = vsel %vm1170, %v10704, 0
      %v10733 = vsel %vm1170, %v10705, 0
      %10735 = vmatpush.msra.mxu0 0.0
      %10736 = vmatpush.msra.mxu0 0.0
      %10737 = vmatpush.msra.mxu0 0.0
      %10738 = vmatpush.msra.mxu0 0.0
      %10739 = vmatpush.msra.mxu0 0.0
      %10740 = vmatpush.msra.mxu0 0.0
      %10741 = vmatpush.msra.mxu0 0.0
      %10742 = vmatpush.msra.mxu0 0.0
      %10743 = vmatpush.msra.mxu0 0.0
      %10744 = vmatpush.msra.mxu0 0.0
      %10745 = vmatpush.msra.mxu0 0.0
      %10746 = vmatpush.msra.mxu0 0.0
      %10747 = vmatpush.msra.mxu0 %v10710
      %10748 = vmatpush.msra.mxu0 %v10709
      %10749 = vmatpush.msra.mxu0 %v10708
      %10750 = vmatpush.msra.mxu0 %v10707
      %10751 = vmatmul.f32.gmra.mxu0 %v10712
      %v10752 = vpop.f32.mrf.mxu0
      %v10753 = vadd.f32 0.0, %v10752
      %10754 = vmatmul.f32.gmra.mxu0 %v10715
      %v10755 = vpop.f32.mrf.mxu0
      %v10756 = vadd.f32 0.0, %v10755
      %10757 = vmatmul.f32.gmra.mxu0 %v10718
      %v10758 = vpop.f32.mrf.mxu0
      %v10759 = vadd.f32 0.0, %v10758
      %10760 = vmatmul.f32.gmra.mxu0 %v10721
      %v10761 = vpop.f32.mrf.mxu0
      %v10762 = vadd.f32 0.0, %v10761
      %10763 = vmatmul.f32.gmra.mxu0 %v10724
      %v10764 = vpop.f32.mrf.mxu0
      %v10765 = vadd.f32 0.0, %v10764
      %10766 = vmatmul.f32.gmra.mxu0 %v10727
      %v10767 = vpop.f32.mrf.mxu0
      %v10768 = vadd.f32 0.0, %v10767
      %10769 = vmatmul.f32.gmra.mxu0 %v10730
      %v10770 = vpop.f32.mrf.mxu0
      %v10771 = vadd.f32 0.0, %v10770
      %10772 = vmatmul.f32.gmra.mxu0 %v10733
      %v10773 = vpop.f32.mrf.mxu0
      %v10774 = vadd.f32 0.0, %v10773
      %10775 = vdwg.mxu0
      %v10776 = vadd.f32 %v10690, %v10753
      %v10777 = vadd.f32 %v10691, %v10756
      %v10778 = vadd.f32 %v10692, %v10759
      %v10779 = vadd.f32 %v10693, %v10762
      %v10780 = vadd.f32 %v10694, %v10765
      %v10781 = vadd.f32 %v10695, %v10768
      %v10782 = vadd.f32 %v10696, %v10771
      %v10783 = vadd.f32 %v10697, %v10774
      %v10784 = vld [vmem:[%s8] sm:$0xff]
      %v10785 = vld [vmem:[%s8 + $0x8] sm:$0xff]
      %vm10786 = vcmask 523264
      %v10788 = vsel %vm10786, %v10784, 0
      %v10791 = vsel %vm10786, %v10785, 0
      %10793 = vmatpush.msra.mxu0 0.0
      %10794 = vmatpush.msra.mxu0 0.0
      %10795 = vmatpush.msra.mxu0 0.0
      %10796 = vmatpush.msra.mxu0 0.0
      %10797 = vmatpush.msra.mxu0 0.0
      %10798 = vmatpush.msra.mxu0 0.0
      %10799 = vmatpush.msra.mxu0 0.0
      %10800 = vmatpush.msra.mxu0 0.0
      %10801 = vmatpush.msra.mxu0 %v10783
      %10802 = vmatpush.msra.mxu0 %v10782
      %10803 = vmatpush.msra.mxu0 %v10781
      %10804 = vmatpush.msra.mxu0 %v10780
      %10805 = vmatpush.msra.mxu0 %v10779
      %10806 = vmatpush.msra.mxu0 %v10778
      %10807 = vmatpush.msra.mxu0 %v10777
      %10808 = vmatpush.msra.mxu0 %v10776
      %10809 = vmatmul.f32.gmra.mxu0 %v10788
      %v10810 = vpop.f32.mrf.mxu0
      %v10811 = vadd.f32 0.0, %v10810
      %10812 = vmatmul.f32.gmra.mxu0 %v10791
      %v10813 = vpop.f32.mrf.mxu0
      %v10814 = vadd.f32 0.0, %v10813
      %10815 = vdwg.mxu0
      %s10816 = scalar_lea.vmem %s8, 16
      %v10817 = vld [vmem:[%s10816] sm:$0xff]
      %v10818 = vld [vmem:[%s10816 + $0x8] sm:$0xff]
      %v10820 = vsel %vm10786, %v10817, 0
      %v10823 = vsel %vm10786, %v10818, 0
      %10825 = vmatpush.msra.mxu0 0.0
      %10826 = vmatpush.msra.mxu0 0.0
      %10827 = vmatpush.msra.mxu0 0.0
      %10828 = vmatpush.msra.mxu0 0.0
      %10829 = vmatpush.msra.mxu0 0.0
      %10830 = vmatpush.msra.mxu0 0.0
      %10831 = vmatpush.msra.mxu0 0.0
      %10832 = vmatpush.msra.mxu0 0.0
      %10833 = vmatpush.msra.mxu0 %v10783
      %10834 = vmatpush.msra.mxu0 %v10782
      %10835 = vmatpush.msra.mxu0 %v10781
      %10836 = vmatpush.msra.mxu0 %v10780
      %10837 = vmatpush.msra.mxu0 %v10779
      %10838 = vmatpush.msra.mxu0 %v10778
      %10839 = vmatpush.msra.mxu0 %v10777
      %10840 = vmatpush.msra.mxu0 %v10776
      %10841 = vmatmul.f32.gmra.mxu0 %v10820
      %v10842 = vpop.f32.mrf.mxu0
      %v10843 = vadd.f32 0.0, %v10842
      %10844 = vmatmul.f32.gmra.mxu0 %v10823
      %v10845 = vpop.f32.mrf.mxu0
      %v10846 = vadd.f32 0.0, %v10845
      %10847 = vdwg.mxu0
      %v10848 = vmax.f32 %v10811, %v10843
      %v10849 = vmax.f32 %v10814, %v10846
      %s10850 = scalar_lea.vmem %s8, 32
      %v10851 = vld [vmem:[%s10850] sm:$0xff]
      %v10852 = vld [vmem:[%s10850 + $0x8] sm:$0xff]
      %v10854 = vsel %vm10786, %v10851, 0
      %v10857 = vsel %vm10786, %v10852, 0
      %10859 = vmatpush.msra.mxu0 0.0
      %10860 = vmatpush.msra.mxu0 0.0
      %10861 = vmatpush.msra.mxu0 0.0
      %10862 = vmatpush.msra.mxu0 0.0
      %10863 = vmatpush.msra.mxu0 0.0
      %10864 = vmatpush.msra.mxu0 0.0
      %10865 = vmatpush.msra.mxu0 0.0
      %10866 = vmatpush.msra.mxu0 0.0
      %10867 = vmatpush.msra.mxu0 %v10783
      %10868 = vmatpush.msra.mxu0 %v10782
      %10869 = vmatpush.msra.mxu0 %v10781
      %10870 = vmatpush.msra.mxu0 %v10780
      %10871 = vmatpush.msra.mxu0 %v10779
      %10872 = vmatpush.msra.mxu0 %v10778
      %10873 = vmatpush.msra.mxu0 %v10777
      %10874 = vmatpush.msra.mxu0 %v10776
      %10875 = vmatmul.f32.gmra.mxu0 %v10854
      %v10876 = vpop.f32.mrf.mxu0
      %v10877 = vadd.f32 0.0, %v10876
      %10878 = vmatmul.f32.gmra.mxu0 %v10857
      %v10879 = vpop.f32.mrf.mxu0
      %v10880 = vadd.f32 0.0, %v10879
      %10881 = vdwg.mxu0
      %v10882 = vmax.f32 %v10848, %v10877
      %v10883 = vmax.f32 %v10849, %v10880
      %s10884 = scalar_lea.vmem %s8, 48
      %v10885 = vld [vmem:[%s10884] sm:$0xff]
      %v10886 = vld [vmem:[%s10884 + $0x8] sm:$0xff]
      %v10888 = vsel %vm10786, %v10885, 0
      %v10891 = vsel %vm10786, %v10886, 0
      %10893 = vmatpush.msra.mxu0 0.0
      %10894 = vmatpush.msra.mxu0 0.0
      %10895 = vmatpush.msra.mxu0 0.0
      %10896 = vmatpush.msra.mxu0 0.0
      %10897 = vmatpush.msra.mxu0 0.0
      %10898 = vmatpush.msra.mxu0 0.0
      %10899 = vmatpush.msra.mxu0 0.0
      %10900 = vmatpush.msra.mxu0 0.0
      %10901 = vmatpush.msra.mxu0 %v10783
      %10902 = vmatpush.msra.mxu0 %v10782
      %10903 = vmatpush.msra.mxu0 %v10781
      %10904 = vmatpush.msra.mxu0 %v10780
      %10905 = vmatpush.msra.mxu0 %v10779
      %10906 = vmatpush.msra.mxu0 %v10778
      %10907 = vmatpush.msra.mxu0 %v10777
      %10908 = vmatpush.msra.mxu0 %v10776
      %10909 = vmatmul.f32.gmra.mxu0 %v10888
      %v10910 = vpop.f32.mrf.mxu0
      %v10911 = vadd.f32 0.0, %v10910
      %10912 = vmatmul.f32.gmra.mxu0 %v10891
      %v10913 = vpop.f32.mrf.mxu0
      %v10914 = vadd.f32 0.0, %v10913
      %10915 = vdwg.mxu0
      %v10916 = vmax.f32 %v10882, %v10911
      %v10917 = vmax.f32 %v10883, %v10914
      %v10918 = vld [vmem:[%s6] sm:$0x1]
      %v10920 = vperm.slane %v10918, 0
      %v10922 = vadd.f32 %v10916, %v10920
      %v10923 = vadd.f32 %v10917, %v10920
      %v10924 = vld [vmem:[%s10] sm:$0x1]
      %v10925 = vld [vmem:[%s9] sm:$0xff]
      %v10926 = vld [vmem:[%s9 + $0x8] sm:$0xff]
      %v10927 = vld [vmem:[%s9 + $0x10] sm:$0xff]
      %v10928 = vld [vmem:[%s9 + $0x18] sm:$0xff]
      %v10929 = vld [vmem:[%s9 + $0x20] sm:$0xff]
      %v10930 = vld [vmem:[%s9 + $0x28] sm:$0xff]
      %v10931 = vld [vmem:[%s9 + $0x30] sm:$0xff]
      %v10932 = vld [vmem:[%s9 + $0x38] sm:$0xff]
      %v10934 = vsel %vm10786, %v10922, 0
      %10936 = vmatpush.msra.mxu0 0.0
      %10937 = vmatpush.msra.mxu0 0.0
      %10938 = vmatpush.msra.mxu0 0.0
      %10939 = vmatpush.msra.mxu0 0.0
      %10940 = vmatpush.msra.mxu0 0.0
      %10941 = vmatpush.msra.mxu0 0.0
      %10942 = vmatpush.msra.mxu0 0.0
      %10943 = vmatpush.msra.mxu0 0.0
      %10944 = vmatpush.msra.mxu0 %v10932
      %10945 = vmatpush.msra.mxu0 %v10931
      %10946 = vmatpush.msra.mxu0 %v10930
      %10947 = vmatpush.msra.mxu0 %v10929
      %10948 = vmatpush.msra.mxu0 %v10928
      %10949 = vmatpush.msra.mxu0 %v10927
      %10950 = vmatpush.msra.mxu0 %v10926
      %10951 = vmatpush.msra.mxu0 %v10925
      %10952 = vmatmul.f32.gmra.mxu0 %v10934
      %v10953 = vpop.f32.mrf.mxu0
      %v10954 = vadd.f32 0.0, %v10953
      %10955 = vdwg.mxu0
      %v10956 = vadd.f32 %v10924, %v10954
      %s10957 = scalar_lea.vmem %s9, 64
      %v10958 = vld [vmem:[%s10957] sm:$0xff]
      %v10959 = vld [vmem:[%s10957 + $0x8] sm:$0xff]
      %v10960 = vld [vmem:[%s10957 + $0x10] sm:$0xff]
      %v10961 = vld [vmem:[%s10957 + $0x18] sm:$0xff]
      %v10962 = vld [vmem:[%s10957 + $0x20] sm:$0xff]
      %v10963 = vld [vmem:[%s10957 + $0x28] sm:$0xff]
      %v10964 = vld [vmem:[%s10957 + $0x30] sm:$0xff]
      %v10965 = vld [vmem:[%s10957 + $0x38] sm:$0xff]
      %v10966 = vrot.slane %v10922, 1
      %v10967 = vsel %vm10786, %v10966, 0
      %10969 = vmatpush.msra.mxu0 0.0
      %10970 = vmatpush.msra.mxu0 0.0
      %10971 = vmatpush.msra.mxu0 0.0
      %10972 = vmatpush.msra.mxu0 0.0
      %10973 = vmatpush.msra.mxu0 0.0
      %10974 = vmatpush.msra.mxu0 0.0
      %10975 = vmatpush.msra.mxu0 0.0
      %10976 = vmatpush.msra.mxu0 0.0
      %10977 = vmatpush.msra.mxu0 %v10965
      %10978 = vmatpush.msra.mxu0 %v10964
      %10979 = vmatpush.msra.mxu0 %v10963
      %10980 = vmatpush.msra.mxu0 %v10962
      %10981 = vmatpush.msra.mxu0 %v10961
      %10982 = vmatpush.msra.mxu0 %v10960
      %10983 = vmatpush.msra.mxu0 %v10959
      %10984 = vmatpush.msra.mxu0 %v10958
      %10985 = vmatmul.f32.gmra.mxu0 %v10967
      %v10986 = vpop.f32.mrf.mxu0
      %v10987 = vadd.f32 0.0, %v10986
      %10988 = vdwg.mxu0
      %v10989 = vadd.f32 %v10956, %v10987
      %s10990 = scalar_lea.vmem %s9, 128
      %v10991 = vld [vmem:[%s10990] sm:$0xff]
      %v10992 = vld [vmem:[%s10990 + $0x8] sm:$0xff]
      %v10993 = vld [vmem:[%s10990 + $0x10] sm:$0xff]
      %v10994 = vld [vmem:[%s10990 + $0x18] sm:$0xff]
      %v10995 = vld [vmem:[%s10990 + $0x20] sm:$0xff]
      %v10996 = vld [vmem:[%s10990 + $0x28] sm:$0xff]
      %v10997 = vld [vmem:[%s10990 + $0x30] sm:$0xff]
      %v10998 = vld [vmem:[%s10990 + $0x38] sm:$0xff]
      %v10999 = vrot.slane %v10922, 2
      %v11000 = vsel %vm10786, %v10999, 0
      %11002 = vmatpush.msra.mxu0 0.0
      %11003 = vmatpush.msra.mxu0 0.0
      %11004 = vmatpush.msra.mxu0 0.0
      %11005 = vmatpush.msra.mxu0 0.0
      %11006 = vmatpush.msra.mxu0 0.0
      %11007 = vmatpush.msra.mxu0 0.0
      %11008 = vmatpush.msra.mxu0 0.0
      %11009 = vmatpush.msra.mxu0 0.0
      %11010 = vmatpush.msra.mxu0 %v10998
      %11011 = vmatpush.msra.mxu0 %v10997
      %11012 = vmatpush.msra.mxu0 %v10996
      %11013 = vmatpush.msra.mxu0 %v10995
      %11014 = vmatpush.msra.mxu0 %v10994
      %11015 = vmatpush.msra.mxu0 %v10993
      %11016 = vmatpush.msra.mxu0 %v10992
      %11017 = vmatpush.msra.mxu0 %v10991
      %11018 = vmatmul.f32.gmra.mxu0 %v11000
      %v11019 = vpop.f32.mrf.mxu0
      %v11020 = vadd.f32 0.0, %v11019
      %11021 = vdwg.mxu0
      %v11022 = vadd.f32 %v10989, %v11020
      %s11023 = scalar_lea.vmem %s9, 192
      %v11024 = vld [vmem:[%s11023] sm:$0xff]
      %v11025 = vld [vmem:[%s11023 + $0x8] sm:$0xff]
      %v11026 = vld [vmem:[%s11023 + $0x10] sm:$0xff]
      %v11027 = vld [vmem:[%s11023 + $0x18] sm:$0xff]
      %v11028 = vld [vmem:[%s11023 + $0x20] sm:$0xff]
      %v11029 = vld [vmem:[%s11023 + $0x28] sm:$0xff]
      %v11030 = vld [vmem:[%s11023 + $0x30] sm:$0xff]
      %v11031 = vld [vmem:[%s11023 + $0x38] sm:$0xff]
      %v11032 = vrot.slane %v10922, 3
      %v11033 = vsel %vm10786, %v11032, 0
      %11035 = vmatpush.msra.mxu0 0.0
      %11036 = vmatpush.msra.mxu0 0.0
      %11037 = vmatpush.msra.mxu0 0.0
      %11038 = vmatpush.msra.mxu0 0.0
      %11039 = vmatpush.msra.mxu0 0.0
      %11040 = vmatpush.msra.mxu0 0.0
      %11041 = vmatpush.msra.mxu0 0.0
      %11042 = vmatpush.msra.mxu0 0.0
      %11043 = vmatpush.msra.mxu0 %v11031
      %11044 = vmatpush.msra.mxu0 %v11030
      %11045 = vmatpush.msra.mxu0 %v11029
      %11046 = vmatpush.msra.mxu0 %v11028
      %11047 = vmatpush.msra.mxu0 %v11027
      %11048 = vmatpush.msra.mxu0 %v11026
      %11049 = vmatpush.msra.mxu0 %v11025
      %11050 = vmatpush.msra.mxu0 %v11024
      %11051 = vmatmul.f32.gmra.mxu0 %v11033
      %v11052 = vpop.f32.mrf.mxu0
      %v11053 = vadd.f32 0.0, %v11052
      %11054 = vdwg.mxu0
      %v11055 = vadd.f32 %v11022, %v11053
      %s11056 = scalar_lea.vmem %s9, 256
      %v11057 = vld [vmem:[%s11056] sm:$0xff]
      %v11058 = vld [vmem:[%s11056 + $0x8] sm:$0xff]
      %v11059 = vld [vmem:[%s11056 + $0x10] sm:$0xff]
      %v11060 = vld [vmem:[%s11056 + $0x18] sm:$0xff]
      %v11061 = vld [vmem:[%s11056 + $0x20] sm:$0xff]
      %v11062 = vld [vmem:[%s11056 + $0x28] sm:$0xff]
      %v11063 = vld [vmem:[%s11056 + $0x30] sm:$0xff]
      %v11064 = vld [vmem:[%s11056 + $0x38] sm:$0xff]
      %v11065 = vrot.slane %v10922, 4
      %v11066 = vsel %vm10786, %v11065, 0
      %11068 = vmatpush.msra.mxu0 0.0
      %11069 = vmatpush.msra.mxu0 0.0
      %11070 = vmatpush.msra.mxu0 0.0
      %11071 = vmatpush.msra.mxu0 0.0
      %11072 = vmatpush.msra.mxu0 0.0
      %11073 = vmatpush.msra.mxu0 0.0
      %11074 = vmatpush.msra.mxu0 0.0
      %11075 = vmatpush.msra.mxu0 0.0
      %11076 = vmatpush.msra.mxu0 %v11064
      %11077 = vmatpush.msra.mxu0 %v11063
      %11078 = vmatpush.msra.mxu0 %v11062
      %11079 = vmatpush.msra.mxu0 %v11061
      %11080 = vmatpush.msra.mxu0 %v11060
      %11081 = vmatpush.msra.mxu0 %v11059
      %11082 = vmatpush.msra.mxu0 %v11058
      %11083 = vmatpush.msra.mxu0 %v11057
      %11084 = vmatmul.f32.gmra.mxu0 %v11066
      %v11085 = vpop.f32.mrf.mxu0
      %v11086 = vadd.f32 0.0, %v11085
      %11087 = vdwg.mxu0
      %v11088 = vadd.f32 %v11055, %v11086
      %s11089 = scalar_lea.vmem %s9, 320
      %v11090 = vld [vmem:[%s11089] sm:$0xff]
      %v11091 = vld [vmem:[%s11089 + $0x8] sm:$0xff]
      %v11092 = vld [vmem:[%s11089 + $0x10] sm:$0xff]
      %v11093 = vld [vmem:[%s11089 + $0x18] sm:$0xff]
      %v11094 = vld [vmem:[%s11089 + $0x20] sm:$0xff]
      %v11095 = vld [vmem:[%s11089 + $0x28] sm:$0xff]
      %v11096 = vld [vmem:[%s11089 + $0x30] sm:$0xff]
      %v11097 = vld [vmem:[%s11089 + $0x38] sm:$0xff]
      %v11098 = vrot.slane %v10922, 5
      %v11099 = vsel %vm10786, %v11098, 0
      %11101 = vmatpush.msra.mxu0 0.0
      %11102 = vmatpush.msra.mxu0 0.0
      %11103 = vmatpush.msra.mxu0 0.0
      %11104 = vmatpush.msra.mxu0 0.0
      %11105 = vmatpush.msra.mxu0 0.0
      %11106 = vmatpush.msra.mxu0 0.0
      %11107 = vmatpush.msra.mxu0 0.0
      %11108 = vmatpush.msra.mxu0 0.0
      %11109 = vmatpush.msra.mxu0 %v11097
      %11110 = vmatpush.msra.mxu0 %v11096
      %11111 = vmatpush.msra.mxu0 %v11095
      %11112 = vmatpush.msra.mxu0 %v11094
      %11113 = vmatpush.msra.mxu0 %v11093
      %11114 = vmatpush.msra.mxu0 %v11092
      %11115 = vmatpush.msra.mxu0 %v11091
      %11116 = vmatpush.msra.mxu0 %v11090
      %11117 = vmatmul.f32.gmra.mxu0 %v11099
      %v11118 = vpop.f32.mrf.mxu0
      %v11119 = vadd.f32 0.0, %v11118
      %11120 = vdwg.mxu0
      %v11121 = vadd.f32 %v11088, %v11119
      %s11122 = scalar_lea.vmem %s9, 384
      %v11123 = vld [vmem:[%s11122] sm:$0xff]
      %v11124 = vld [vmem:[%s11122 + $0x8] sm:$0xff]
      %v11125 = vld [vmem:[%s11122 + $0x10] sm:$0xff]
      %v11126 = vld [vmem:[%s11122 + $0x18] sm:$0xff]
      %v11127 = vld [vmem:[%s11122 + $0x20] sm:$0xff]
      %v11128 = vld [vmem:[%s11122 + $0x28] sm:$0xff]
      %v11129 = vld [vmem:[%s11122 + $0x30] sm:$0xff]
      %v11130 = vld [vmem:[%s11122 + $0x38] sm:$0xff]
      %v11131 = vrot.slane %v10922, 6
      %v11132 = vsel %vm10786, %v11131, 0
      %11134 = vmatpush.msra.mxu0 0.0
      %11135 = vmatpush.msra.mxu0 0.0
      %11136 = vmatpush.msra.mxu0 0.0
      %11137 = vmatpush.msra.mxu0 0.0
      %11138 = vmatpush.msra.mxu0 0.0
      %11139 = vmatpush.msra.mxu0 0.0
      %11140 = vmatpush.msra.mxu0 0.0
      %11141 = vmatpush.msra.mxu0 0.0
      %11142 = vmatpush.msra.mxu0 %v11130
      %11143 = vmatpush.msra.mxu0 %v11129
      %11144 = vmatpush.msra.mxu0 %v11128
      %11145 = vmatpush.msra.mxu0 %v11127
      %11146 = vmatpush.msra.mxu0 %v11126
      %11147 = vmatpush.msra.mxu0 %v11125
      %11148 = vmatpush.msra.mxu0 %v11124
      %11149 = vmatpush.msra.mxu0 %v11123
      %11150 = vmatmul.f32.gmra.mxu0 %v11132
      %v11151 = vpop.f32.mrf.mxu0
      %v11152 = vadd.f32 0.0, %v11151
      %11153 = vdwg.mxu0
      %v11154 = vadd.f32 %v11121, %v11152
      %s11155 = scalar_lea.vmem %s9, 448
      %v11156 = vld [vmem:[%s11155] sm:$0xff]
      %v11157 = vld [vmem:[%s11155 + $0x8] sm:$0xff]
      %v11158 = vld [vmem:[%s11155 + $0x10] sm:$0xff]
      %v11159 = vld [vmem:[%s11155 + $0x18] sm:$0xff]
      %v11160 = vld [vmem:[%s11155 + $0x20] sm:$0xff]
      %v11161 = vld [vmem:[%s11155 + $0x28] sm:$0xff]
      %v11162 = vld [vmem:[%s11155 + $0x30] sm:$0xff]
      %v11163 = vld [vmem:[%s11155 + $0x38] sm:$0xff]
      %v11164 = vrot.slane %v10922, 7
      %v11165 = vsel %vm10786, %v11164, 0
      %11167 = vmatpush.msra.mxu0 0.0
      %11168 = vmatpush.msra.mxu0 0.0
      %11169 = vmatpush.msra.mxu0 0.0
      %11170 = vmatpush.msra.mxu0 0.0
      %11171 = vmatpush.msra.mxu0 0.0
      %11172 = vmatpush.msra.mxu0 0.0
      %11173 = vmatpush.msra.mxu0 0.0
      %11174 = vmatpush.msra.mxu0 0.0
      %11175 = vmatpush.msra.mxu0 %v11163
      %11176 = vmatpush.msra.mxu0 %v11162
      %11177 = vmatpush.msra.mxu0 %v11161
      %11178 = vmatpush.msra.mxu0 %v11160
      %11179 = vmatpush.msra.mxu0 %v11159
      %11180 = vmatpush.msra.mxu0 %v11158
      %11181 = vmatpush.msra.mxu0 %v11157
      %11182 = vmatpush.msra.mxu0 %v11156
      %11183 = vmatmul.f32.gmra.mxu0 %v11165
      %v11184 = vpop.f32.mrf.mxu0
      %v11185 = vadd.f32 0.0, %v11184
      %11186 = vdwg.mxu0
      %v11187 = vadd.f32 %v11154, %v11185
      %s11188 = scalar_lea.vmem %s9, 512
      %v11189 = vld [vmem:[%s11188] sm:$0xff]
      %v11190 = vld [vmem:[%s11188 + $0x8] sm:$0xff]
      %v11191 = vld [vmem:[%s11188 + $0x10] sm:$0xff]
      %v11192 = vld [vmem:[%s11188 + $0x18] sm:$0xff]
      %v11193 = vld [vmem:[%s11188 + $0x20] sm:$0xff]
      %v11194 = vld [vmem:[%s11188 + $0x28] sm:$0xff]
      %v11195 = vld [vmem:[%s11188 + $0x30] sm:$0xff]
      %v11196 = vld [vmem:[%s11188 + $0x38] sm:$0xff]
      %v11198 = vsel %vm10786, %v10923, 0
      %11200 = vmatpush.msra.mxu0 0.0
      %11201 = vmatpush.msra.mxu0 0.0
      %11202 = vmatpush.msra.mxu0 0.0
      %11203 = vmatpush.msra.mxu0 0.0
      %11204 = vmatpush.msra.mxu0 0.0
      %11205 = vmatpush.msra.mxu0 0.0
      %11206 = vmatpush.msra.mxu0 0.0
      %11207 = vmatpush.msra.mxu0 0.0
      %11208 = vmatpush.msra.mxu0 %v11196
      %11209 = vmatpush.msra.mxu0 %v11195
      %11210 = vmatpush.msra.mxu0 %v11194
      %11211 = vmatpush.msra.mxu0 %v11193
      %11212 = vmatpush.msra.mxu0 %v11192
      %11213 = vmatpush.msra.mxu0 %v11191
      %11214 = vmatpush.msra.mxu0 %v11190
      %11215 = vmatpush.msra.mxu0 %v11189
      %11216 = vmatmul.f32.gmra.mxu0 %v11198
      %v11217 = vpop.f32.mrf.mxu0
      %v11218 = vadd.f32 0.0, %v11217
      %11219 = vdwg.mxu0
      %v11220 = vadd.f32 %v11187, %v11218
      %s11221 = scalar_lea.vmem %s9, 576
      %v11222 = vld [vmem:[%s11221] sm:$0xff]
      %v11223 = vld [vmem:[%s11221 + $0x8] sm:$0xff]
      %v11224 = vld [vmem:[%s11221 + $0x10] sm:$0xff]
      %v11225 = vld [vmem:[%s11221 + $0x18] sm:$0xff]
      %v11226 = vld [vmem:[%s11221 + $0x20] sm:$0xff]
      %v11227 = vld [vmem:[%s11221 + $0x28] sm:$0xff]
      %v11228 = vld [vmem:[%s11221 + $0x30] sm:$0xff]
      %v11229 = vld [vmem:[%s11221 + $0x38] sm:$0xff]
      %v11230 = vrot.slane %v10923, 1
      %v11231 = vsel %vm10786, %v11230, 0
      %11233 = vmatpush.msra.mxu0 0.0
      %11234 = vmatpush.msra.mxu0 0.0
      %11235 = vmatpush.msra.mxu0 0.0
      %11236 = vmatpush.msra.mxu0 0.0
      %11237 = vmatpush.msra.mxu0 0.0
      %11238 = vmatpush.msra.mxu0 0.0
      %11239 = vmatpush.msra.mxu0 0.0
      %11240 = vmatpush.msra.mxu0 0.0
      %11241 = vmatpush.msra.mxu0 %v11229
      %11242 = vmatpush.msra.mxu0 %v11228
      %11243 = vmatpush.msra.mxu0 %v11227
      %11244 = vmatpush.msra.mxu0 %v11226
      %11245 = vmatpush.msra.mxu0 %v11225
      %11246 = vmatpush.msra.mxu0 %v11224
      %11247 = vmatpush.msra.mxu0 %v11223
      %11248 = vmatpush.msra.mxu0 %v11222
      %11249 = vmatmul.f32.gmra.mxu0 %v11231
      %v11250 = vpop.f32.mrf.mxu0
      %v11251 = vadd.f32 0.0, %v11250
      %11252 = vdwg.mxu0
      %v11253 = vadd.f32 %v11220, %v11251
      %s11254 = scalar_lea.vmem %s9, 640
      %v11255 = vld [vmem:[%s11254] sm:$0xff]
      %v11256 = vld [vmem:[%s11254 + $0x8] sm:$0xff]
      %v11257 = vld [vmem:[%s11254 + $0x10] sm:$0xff]
      %v11258 = vld [vmem:[%s11254 + $0x18] sm:$0xff]
      %v11259 = vld [vmem:[%s11254 + $0x20] sm:$0xff]
      %v11260 = vld [vmem:[%s11254 + $0x28] sm:$0xff]
      %v11261 = vld [vmem:[%s11254 + $0x30] sm:$0xff]
      %v11262 = vld [vmem:[%s11254 + $0x38] sm:$0xff]
      %v11263 = vrot.slane %v10923, 2
      %v11264 = vsel %vm10786, %v11263, 0
      %11266 = vmatpush.msra.mxu0 0.0
      %11267 = vmatpush.msra.mxu0 0.0
      %11268 = vmatpush.msra.mxu0 0.0
      %11269 = vmatpush.msra.mxu0 0.0
      %11270 = vmatpush.msra.mxu0 0.0
      %11271 = vmatpush.msra.mxu0 0.0
      %11272 = vmatpush.msra.mxu0 0.0
      %11273 = vmatpush.msra.mxu0 0.0
      %11274 = vmatpush.msra.mxu0 %v11262
      %11275 = vmatpush.msra.mxu0 %v11261
      %11276 = vmatpush.msra.mxu0 %v11260
      %11277 = vmatpush.msra.mxu0 %v11259
      %11278 = vmatpush.msra.mxu0 %v11258
      %11279 = vmatpush.msra.mxu0 %v11257
      %11280 = vmatpush.msra.mxu0 %v11256
      %11281 = vmatpush.msra.mxu0 %v11255
      %11282 = vmatmul.f32.gmra.mxu0 %v11264
      %v11283 = vpop.f32.mrf.mxu0
      %v11284 = vadd.f32 0.0, %v11283
      %11285 = vdwg.mxu0
      %v11286 = vadd.f32 %v11253, %v11284
      %s11287 = scalar_lea.vmem %s9, 704
      %v11288 = vld [vmem:[%s11287] sm:$0xff]
      %v11289 = vld [vmem:[%s11287 + $0x8] sm:$0xff]
      %v11290 = vld [vmem:[%s11287 + $0x10] sm:$0xff]
      %v11291 = vld [vmem:[%s11287 + $0x18] sm:$0xff]
      %v11292 = vld [vmem:[%s11287 + $0x20] sm:$0xff]
      %v11293 = vld [vmem:[%s11287 + $0x28] sm:$0xff]
      %v11294 = vld [vmem:[%s11287 + $0x30] sm:$0xff]
      %v11295 = vld [vmem:[%s11287 + $0x38] sm:$0xff]
      %v11296 = vrot.slane %v10923, 3
      %v11297 = vsel %vm10786, %v11296, 0
      %11299 = vmatpush.msra.mxu0 0.0
      %11300 = vmatpush.msra.mxu0 0.0
      %11301 = vmatpush.msra.mxu0 0.0
      %11302 = vmatpush.msra.mxu0 0.0
      %11303 = vmatpush.msra.mxu0 0.0
      %11304 = vmatpush.msra.mxu0 0.0
      %11305 = vmatpush.msra.mxu0 0.0
      %11306 = vmatpush.msra.mxu0 0.0
      %11307 = vmatpush.msra.mxu0 %v11295
      %11308 = vmatpush.msra.mxu0 %v11294
      %11309 = vmatpush.msra.mxu0 %v11293
      %11310 = vmatpush.msra.mxu0 %v11292
      %11311 = vmatpush.msra.mxu0 %v11291
      %11312 = vmatpush.msra.mxu0 %v11290
      %11313 = vmatpush.msra.mxu0 %v11289
      %11314 = vmatpush.msra.mxu0 %v11288
      %11315 = vmatmul.f32.gmra.mxu0 %v11297
      %v11316 = vpop.f32.mrf.mxu0
      %v11317 = vadd.f32 0.0, %v11316
      %11318 = vdwg.mxu0
      %v11319 = vadd.f32 %v11286, %v11317
      %s11320 = scalar_lea.vmem %s9, 768
      %v11321 = vld [vmem:[%s11320] sm:$0xff]
      %v11322 = vld [vmem:[%s11320 + $0x8] sm:$0xff]
      %v11323 = vld [vmem:[%s11320 + $0x10] sm:$0xff]
      %v11324 = vld [vmem:[%s11320 + $0x18] sm:$0xff]
      %v11325 = vld [vmem:[%s11320 + $0x20] sm:$0xff]
      %v11326 = vld [vmem:[%s11320 + $0x28] sm:$0xff]
      %v11327 = vld [vmem:[%s11320 + $0x30] sm:$0xff]
      %v11328 = vld [vmem:[%s11320 + $0x38] sm:$0xff]
      %v11329 = vrot.slane %v10923, 4
      %v11330 = vsel %vm10786, %v11329, 0
      %11332 = vmatpush.msra.mxu0 0.0
      %11333 = vmatpush.msra.mxu0 0.0
      %11334 = vmatpush.msra.mxu0 0.0
      %11335 = vmatpush.msra.mxu0 0.0
      %11336 = vmatpush.msra.mxu0 0.0
      %11337 = vmatpush.msra.mxu0 0.0
      %11338 = vmatpush.msra.mxu0 0.0
      %11339 = vmatpush.msra.mxu0 0.0
      %11340 = vmatpush.msra.mxu0 %v11328
      %11341 = vmatpush.msra.mxu0 %v11327
      %11342 = vmatpush.msra.mxu0 %v11326
      %11343 = vmatpush.msra.mxu0 %v11325
      %11344 = vmatpush.msra.mxu0 %v11324
      %11345 = vmatpush.msra.mxu0 %v11323
      %11346 = vmatpush.msra.mxu0 %v11322
      %11347 = vmatpush.msra.mxu0 %v11321
      %11348 = vmatmul.f32.gmra.mxu0 %v11330
      %v11349 = vpop.f32.mrf.mxu0
      %v11350 = vadd.f32 0.0, %v11349
      %11351 = vdwg.mxu0
      %v11352 = vadd.f32 %v11319, %v11350
      %s11353 = scalar_lea.vmem %s9, 832
      %v11354 = vld [vmem:[%s11353] sm:$0xff]
      %v11355 = vld [vmem:[%s11353 + $0x8] sm:$0xff]
      %v11356 = vld [vmem:[%s11353 + $0x10] sm:$0xff]
      %v11357 = vld [vmem:[%s11353 + $0x18] sm:$0xff]
      %v11358 = vld [vmem:[%s11353 + $0x20] sm:$0xff]
      %v11359 = vld [vmem:[%s11353 + $0x28] sm:$0xff]
      %v11360 = vld [vmem:[%s11353 + $0x30] sm:$0xff]
      %v11361 = vld [vmem:[%s11353 + $0x38] sm:$0xff]
      %v11362 = vrot.slane %v10923, 5
      %v11363 = vsel %vm10786, %v11362, 0
      %11365 = vmatpush.msra.mxu0 0.0
      %11366 = vmatpush.msra.mxu0 0.0
      %11367 = vmatpush.msra.mxu0 0.0
      %11368 = vmatpush.msra.mxu0 0.0
      %11369 = vmatpush.msra.mxu0 0.0
      %11370 = vmatpush.msra.mxu0 0.0
      %11371 = vmatpush.msra.mxu0 0.0
      %11372 = vmatpush.msra.mxu0 0.0
      %11373 = vmatpush.msra.mxu0 %v11361
      %11374 = vmatpush.msra.mxu0 %v11360
      %11375 = vmatpush.msra.mxu0 %v11359
      %11376 = vmatpush.msra.mxu0 %v11358
      %11377 = vmatpush.msra.mxu0 %v11357
      %11378 = vmatpush.msra.mxu0 %v11356
      %11379 = vmatpush.msra.mxu0 %v11355
      %11380 = vmatpush.msra.mxu0 %v11354
      %11381 = vmatmul.f32.gmra.mxu0 %v11363
      %v11382 = vpop.f32.mrf.mxu0
      %v11383 = vadd.f32 0.0, %v11382
      %11384 = vdwg.mxu0
      %v11385 = vadd.f32 %v11352, %v11383
      %s11386 = scalar_lea.vmem %s9, 896
      %v11387 = vld [vmem:[%s11386] sm:$0xff]
      %v11388 = vld [vmem:[%s11386 + $0x8] sm:$0xff]
      %v11389 = vld [vmem:[%s11386 + $0x10] sm:$0xff]
      %v11390 = vld [vmem:[%s11386 + $0x18] sm:$0xff]
      %v11391 = vld [vmem:[%s11386 + $0x20] sm:$0xff]
      %v11392 = vld [vmem:[%s11386 + $0x28] sm:$0xff]
      %v11393 = vld [vmem:[%s11386 + $0x30] sm:$0xff]
      %v11394 = vld [vmem:[%s11386 + $0x38] sm:$0xff]
      %v11395 = vrot.slane %v10923, 6
      %v11396 = vsel %vm10786, %v11395, 0
      %11398 = vmatpush.msra.mxu0 0.0
      %11399 = vmatpush.msra.mxu0 0.0
      %11400 = vmatpush.msra.mxu0 0.0
      %11401 = vmatpush.msra.mxu0 0.0
      %11402 = vmatpush.msra.mxu0 0.0
      %11403 = vmatpush.msra.mxu0 0.0
      %11404 = vmatpush.msra.mxu0 0.0
      %11405 = vmatpush.msra.mxu0 0.0
      %11406 = vmatpush.msra.mxu0 %v11394
      %11407 = vmatpush.msra.mxu0 %v11393
      %11408 = vmatpush.msra.mxu0 %v11392
      %11409 = vmatpush.msra.mxu0 %v11391
      %11410 = vmatpush.msra.mxu0 %v11390
      %11411 = vmatpush.msra.mxu0 %v11389
      %11412 = vmatpush.msra.mxu0 %v11388
      %11413 = vmatpush.msra.mxu0 %v11387
      %11414 = vmatmul.f32.gmra.mxu0 %v11396
      %v11415 = vpop.f32.mrf.mxu0
      %v11416 = vadd.f32 0.0, %v11415
      %11417 = vdwg.mxu0
      %v11418 = vadd.f32 %v11385, %v11416
      %s11419 = scalar_lea.vmem %s9, 960
      %v11420 = vld [vmem:[%s11419] sm:$0xff]
      %v11421 = vld [vmem:[%s11419 + $0x8] sm:$0xff]
      %v11422 = vld [vmem:[%s11419 + $0x10] sm:$0xff]
      %v11423 = vld [vmem:[%s11419 + $0x18] sm:$0xff]
      %v11424 = vld [vmem:[%s11419 + $0x20] sm:$0xff]
      %v11425 = vld [vmem:[%s11419 + $0x28] sm:$0xff]
      %v11426 = vld [vmem:[%s11419 + $0x30] sm:$0xff]
      %v11427 = vld [vmem:[%s11419 + $0x38] sm:$0xff]
      %v11428 = vrot.slane %v10923, 7
      %v11429 = vsel %vm10786, %v11428, 0
      %11431 = vmatpush.msra.mxu0 0.0
      %11432 = vmatpush.msra.mxu0 0.0
      %11433 = vmatpush.msra.mxu0 0.0
      %11434 = vmatpush.msra.mxu0 0.0
      %11435 = vmatpush.msra.mxu0 0.0
      %11436 = vmatpush.msra.mxu0 0.0
      %11437 = vmatpush.msra.mxu0 0.0
      %11438 = vmatpush.msra.mxu0 0.0
      %11439 = vmatpush.msra.mxu0 %v11427
      %11440 = vmatpush.msra.mxu0 %v11426
      %11441 = vmatpush.msra.mxu0 %v11425
      %11442 = vmatpush.msra.mxu0 %v11424
      %11443 = vmatpush.msra.mxu0 %v11423
      %11444 = vmatpush.msra.mxu0 %v11422
      %11445 = vmatpush.msra.mxu0 %v11421
      %11446 = vmatpush.msra.mxu0 %v11420
      %11447 = vmatmul.f32.gmra.mxu0 %v11429
      %v11448 = vpop.f32.mrf.mxu0
      %v11449 = vadd.f32 0.0, %v11448
      %11450 = vdwg.mxu0
      %v11451 = vadd.f32 %v11418, %v11449
      %v11452 = vld [vmem:[%s11] sm:$0xff]
      %v11453 = vld [vmem:[%s11 + $0x8] sm:$0xff]
      %v11454 = vld [vmem:[%s11 + $0x10] sm:$0xff]
      %v11455 = vld [vmem:[%s11 + $0x18] sm:$0xff]
      %v11456 = vld [vmem:[%s11 + $0x20] sm:$0xff]
      %v11457 = vld [vmem:[%s11 + $0x28] sm:$0xff]
      %v11458 = vld [vmem:[%s11 + $0x30] sm:$0xff]
      %v11459 = vld [vmem:[%s11 + $0x38] sm:$0xff]
      %v11460 = vld [vmem:[%s12] sm:$0x1]
      %v11462 = vsel %vm10786, %v11451, 0
      %11464 = vmatpush.msra.mxu0 0.0
      %11465 = vmatpush.msra.mxu0 0.0
      %11466 = vmatpush.msra.mxu0 0.0
      %11467 = vmatpush.msra.mxu0 0.0
      %11468 = vmatpush.msra.mxu0 0.0
      %11469 = vmatpush.msra.mxu0 0.0
      %11470 = vmatpush.msra.mxu0 0.0
      %11471 = vmatpush.msra.mxu0 0.0
      %11472 = vmatpush.msra.mxu0 %v11459
      %11473 = vmatpush.msra.mxu0 %v11458
      %11474 = vmatpush.msra.mxu0 %v11457
      %11475 = vmatpush.msra.mxu0 %v11456
      %11476 = vmatpush.msra.mxu0 %v11455
      %11477 = vmatpush.msra.mxu0 %v11454
      %11478 = vmatpush.msra.mxu0 %v11453
      %11479 = vmatpush.msra.mxu0 %v11452
      %11480 = vmatmul.f32.gmra.mxu0 %v11462
      %v11481 = vpop.f32.mrf.mxu0
      %v11482 = vadd.f32 %v11460, %v11481
      %11483 = vdwg.mxu0
      %v11484 = vperm.slane %v11482, 0
      %11485 = vst [vmem:[%s438] sm:$0xff] %v11484
      %p11486 = scmp.lt.s32.totalorder %s24, 1
      %s11487 = scalar_select %p11486, %s24, 1
      %s11488 = smul.addr %s11487, 8
      %s11489 = scalar_lea.vmem %s13, %s11488
      // Predicated region
      $region73: #{my_model_forward.1} parent=71 // pred_check
        %p11490 = pneg %p320
      $region74: #{my_model_forward.1} parent=71 // pred_check_branch
        %11492 = sbr.rel (%p11490) target = $region76
      $region75: #{my_model_forward.1} parent=71 // pred_region
        _
      $region76: #{my_model_forward.1} parent=71 // pred_fallthru
        _
    $region72: #{my_model_forward.1} parent=5 // pred_fallthru
      _
    %p11493 = scmp.le.s32.totalorder 2, %s19
    // Predicated region
    $region77: #{my_model_forward.1} parent=5 // pred_check
      %p11494 = pneg %p11493
    $region78: #{my_model_forward.1} parent=5 // pred_check_branch
      %11496 = sbr.rel (%p11494) target = $region80
    $region79: #{my_model_forward.1} parent=5 // pred_region
      %s11497 = ssub.s32 %s19, 2
      // Predicated region
      $region81: #{my_model_forward.1} parent=79 // pred_check
        %p11498 = pneg %p326
      $region82: #{my_model_forward.1} parent=79 // pred_check_branch
        %11500 = sbr.rel (%p11498) target = $region84
      $region83: #{my_model_forward.1} parent=79 // pred_region
        %p11501 = scmp.lt.s32.totalorder %s25, 1
        %s11502 = scalar_select %p11501, %s25, 1
        %s11503 = smul.addr %s11502, 8
        %s11504 = scalar_lea.vmem %s13, %s11503
      $region84: #{my_model_forward.1} parent=79 // pred_fallthru
        _
    $region80: #{my_model_forward.1} parent=5 // pred_fallthru
      _
  $region6: #{my_model_forward.1} parent=0 // loop_footer
    %s23 = sadd.s32 1, %s19
  $region7: #{my_model_forward.1} parent=0 // loop_footer_branch
    %18 = sbr.rel target = $region3
  $region8: #{my_model_forward.1} parent=0 // loop_exit
    _

</llo_original>
